<compile_context>
chip_gen: v7x
topology: tpu7x:2x2x1
jax: 0.10.0
libtpu: 0.0.40
codegen_flags: <defaults>
</compile_context>

<pallas_src>
import jax
import jax.numpy as jnp
from jax import lax
from jax.experimental import pallas as pl
from jax.experimental.pallas import tpu as pltpu


_VMEM_LIMIT_CACHE = None


def _vmem_limit_bytes():
    """Per-generation VMEM budget: ~75% of the core's physical VMEM (clamped)."""
    global _VMEM_LIMIT_CACHE
    if _VMEM_LIMIT_CACHE is None:
        cap = 64 * 1024 * 1024            # conservative fallback (v7x per-core VMEM)
        try:
            info = pltpu.get_tpu_info()
            cap = int(getattr(info, "vmem_capacity_bytes", cap)) or cap
        except Exception:
            pass
        _VMEM_LIMIT_CACHE = max(32 * 1024 * 1024,
                                min((cap * 3) // 4, 96 * 1024 * 1024))
    return _VMEM_LIMIT_CACHE


def _pick_tile(dim, target, align=128):
    """Largest multiple of `align` that divides `dim` and is <= target; else full extent."""
    t = min(dim, target)
    t -= t % align
    while t >= align:
        if dim % t == 0:
            return t
        t -= align
    return dim


# --------------------- tiled linear (bf16 MXU operands, f32 acc) ---------------------

def _linear_kernel(x_ref, w_ref, b_ref, o_ref, acc_ref):
    kk = pl.program_id(2)

    @pl.when(kk == 0)
    def _():
        acc_ref[...] = jnp.zeros(acc_ref.shape, acc_ref.dtype)

    # bf16 operands on the MXU, f32 accumulation.
    acc_ref[...] += jnp.dot(x_ref[...].astype(jnp.bfloat16),
                            w_ref[...].astype(jnp.bfloat16),
                            preferred_element_type=jnp.float32)

    @pl.when(kk == pl.num_programs(2) - 1)
    def _():
        o_ref[...] = (acc_ref[...] + b_ref[...].astype(jnp.float32)).astype(o_ref.dtype)


def linear(x2d, w_t, bias, *, out_dtype=None,
           tm_target=512, tn_target=512, tk_target=512):
    """x2d: [M, Cin], w_t: [Cin, Cout] (pre-transposed), bias: [1, Cout] -> [M, Cout]."""
    M, Cin = x2d.shape
    Cout = w_t.shape[1]
    if Cin % 128 != 0 or Cout % 128 != 0:
        raise ValueError("feature dims must be multiples of 128")
    out_dtype = x2d.dtype if out_dtype is None else out_dtype

    # Harden the row axis: pad M to a multiple of 128 (zero rows sliced off after).
    Mp = pl.cdiv(M, 128) * 128
    if Mp != M:
        x2d = jnp.pad(x2d, ((0, Mp - M), (0, 0)))

    tm = _pick_tile(Mp, tm_target)
    tn = _pick_tile(Cout, tn_target)
    tk = _pick_tile(Cin, tk_target)
    grid = (Mp // tm, Cout // tn, Cin // tk)

    out = pl.pallas_call(
        _linear_kernel,
        out_shape=jax.ShapeDtypeStruct((Mp, Cout), out_dtype),
        grid_spec=pltpu.PrefetchScalarGridSpec(
            num_scalar_prefetch=0,
            grid=grid,
            in_specs=[
                pl.BlockSpec((tm, tk), lambda i, j, k: (i, k)),
                pl.BlockSpec((tk, tn), lambda i, j, k: (k, j)),
                pl.BlockSpec((1, tn), lambda i, j, k: (0, j)),
            ],
            out_specs=pl.BlockSpec((tm, tn), lambda i, j, k: (i, j)),
            scratch_shapes=[pltpu.VMEM((tm, tn), jnp.float32)],
        ),
        compiler_params=pltpu.CompilerParams(
            dimension_semantics=("parallel", "parallel", "arbitrary"),
            vmem_limit_bytes=_vmem_limit_bytes(),
        ),
    )(x2d, w_t, bias)
    return out if Mp == M else out[:M]


# ------------- flash attention over packed qkv, heads on a grid axis -------------

def _flash_attn_kernel(q_ref, k_ref, v_ref, o_ref, m_sc, l_sc, acc_sc):
    # One head per grid step.  Blocks: q_ref (1, tq, D), k_ref/v_ref (1, tk, D),
    # o_ref (1, tq, D).  Scratch: m_sc/l_sc (tq, 1) f32, acc_sc (tq, D) f32.
    ki = pl.program_id(3)
    nk = pl.num_programs(3)

    @pl.when(ki == 0)
    def _():
        m_sc[...] = jnp.full(m_sc.shape, -jnp.inf, m_sc.dtype)
        l_sc[...] = jnp.zeros(l_sc.shape, l_sc.dtype)
        acc_sc[...] = jnp.zeros(acc_sc.shape, acc_sc.dtype)

    # Softmax scale is already folded into the q columns of the qkv weights.
    q = q_ref[0].astype(jnp.bfloat16)      # [tq, D]
    k = k_ref[0].astype(jnp.bfloat16)      # [tk, D]
    v = v_ref[0].astype(jnp.bfloat16)      # [tk, D]

    # Scores: contract the head dim of both operands (no explicit k.T); f32 acc.
    s = lax.dot_general(q, k, (((1,), (1,)), ((), ())),
                        preferred_element_type=jnp.float32)       # [tq, tk]

    m_prev = m_sc[...]                                            # [tq, 1]
    m_new = jnp.maximum(m_prev, jnp.max(s, axis=-1, keepdims=True))
    alpha = jnp.exp(m_prev - m_new)
    p = jnp.exp(s - m_new)                                        # [tq, tk] f32

    l_sc[...] = alpha * l_sc[...] + jnp.sum(p, axis=-1, keepdims=True)
    acc_sc[...] = alpha * acc_sc[...] + lax.dot_general(
        p.astype(jnp.bfloat16), v, (((1,), (0,)), ((), ())),
        preferred_element_type=jnp.float32)                       # [tq, D]
    m_sc[...] = m_new

    @pl.when(ki == nk - 1)
    def _():
        inv = pl.reciprocal(l_sc[...], approx=True)               # EUP slot, ~free
        # D is a multiple of 128 -> full-lane, unmasked store straight into [B, N, C].
        o_ref[0] = (acc_sc[...] * inv).astype(o_ref.dtype)


def mha_flash(qkv, num_heads, *, tq_target=512, tkv_target=512):
    """qkv: [B, N, 3C] packed as (q|k|v) x heads on the last dim -> [B, N, C]."""
    B, N, C3 = qkv.shape
    assert C3 % 3 == 0
    C = C3 // 3
    assert C % num_heads == 0
    D = C // num_heads
    H = num_heads
    if D % 128 != 0:
        # TODO(synk): support head_dim that is not a multiple of 128 (needs head
        # grouping / in-kernel lane slicing); configs used here have D=128.
        raise ValueError("head_dim must be a multiple of 128")
    if N % 128 != 0:
        # TODO(synk): pad N to a 128 multiple and mask padded keys in-kernel.
        raise ValueError("sequence length must be a multiple of 128")

    tq = _pick_tile(N, tq_target)
    tk = _pick_tile(N, tkv_target)
    nq, nk = N // tq, N // tk

    return pl.pallas_call(
        _flash_attn_kernel,
        out_shape=jax.ShapeDtypeStruct((B, N, C), qkv.dtype),
        grid_spec=pltpu.PrefetchScalarGridSpec(
            num_scalar_prefetch=0,
            grid=(B, H, nq, nk),
            in_specs=[
                # q / k / v of head h are D-wide lane blocks of the same [B, N, 3C] array.
                pl.BlockSpec((1, tq, D), lambda b, h, qi, ki: (b, qi, h)),
                pl.BlockSpec((1, tk, D), lambda b, h, qi, ki: (b, ki, H + h)),
                pl.BlockSpec((1, tk, D), lambda b, h, qi, ki: (b, ki, 2 * H + h)),
            ],
            out_specs=pl.BlockSpec((1, tq, D), lambda b, h, qi, ki: (b, qi, h)),
            scratch_shapes=[
                pltpu.VMEM((tq, 1), jnp.float32),   # running max (lane-padded to 128)
                pltpu.VMEM((tq, 1), jnp.float32),   # running sum (lane-padded to 128)
                pltpu.VMEM((tq, D), jnp.float32),   # running output
            ],
        ),
        compiler_params=pltpu.CompilerParams(
            dimension_semantics=("parallel", "parallel", "parallel", "arbitrary"),
            vmem_limit_bytes=_vmem_limit_bytes(),
        ),
    )(qkv, qkv, qkv)


# ----------------------------- module wrapper -----------------------------

class AttentionParams:
    """Deterministic synthetic parameters matching nn.Linear shapes (f32 master copies)."""

    def __init__(self, key, dim, num_heads, dtype=jnp.float32):
        assert dim % num_heads == 0
        self.dim = dim
        self.num_heads = num_heads
        self.head_dim = dim // num_heads
        self.scale = self.head_dim ** (-0.5)
        k1, k2, k3 = jax.random.split(key, 3)
        # nn.Linear(dim, 3*dim, bias=False): weight [3*dim, dim]; stored transposed.
        self.w_qkv_t = jax.random.normal(k1, (dim, 3 * dim), dtype) * 0.02
        self.b_qkv = jnp.zeros((1, 3 * dim), dtype)          # qkv_bias=False
        # nn.Linear(dim, dim, bias=True)
        self.w_proj_t = jax.random.normal(k2, (dim, dim), dtype) * 0.02
        self.b_proj = jax.random.normal(k3, (1, dim), dtype) * 0.02


def attention_forward(params: AttentionParams, x):
    B, N, C = x.shape
    H = params.num_heads

    # Fold the softmax scale into the q columns of the qkv projection (one
    # trace-time op on the weights), then cast weights once to bf16 so the MXU
    # runs at its bf16 rate and weight HBM traffic is halved.  Biases stay f32.
    scale_vec = jnp.concatenate([
        jnp.full((C,), params.scale, params.w_qkv_t.dtype),
        jnp.ones((2 * C,), params.w_qkv_t.dtype),
    ])
    w_qkv = (params.w_qkv_t * scale_vec[None, :]).astype(jnp.bfloat16)
    b_qkv = (params.b_qkv * scale_vec[None, :]).astype(jnp.float32)
    w_proj = params.w_proj_t.astype(jnp.bfloat16)
    b_proj = params.b_proj.astype(jnp.float32)

    # qkv projection (tiled Pallas matmul), kept in packed [B, N, 3C] layout
    # (no HBM permute), stored bf16 for the attention kernel.
    # q_norm / k_norm are Identity (qk_norm=False).
    qkv = linear(x.reshape(B * N, C), w_qkv, b_qkv,
                 out_dtype=jnp.bfloat16, tn_target=768)           # [B*N, 3C]
    qkv = qkv.reshape(B, N, 3 * C)                                # free reshape

    # Flash attention (FusedAttn.NONE semantics, attn_drop = 0): one head per
    # grid step, lane-dense [B, N, C] output (no post-attention transpose).
    o = mha_flash(qkv, num_heads=H)                               # [B, N, C] bf16

    # Output projection (tiled Pallas matmul), proj_drop = 0; result in x.dtype.
    # TODO(synk): tensor_par_size > 1 all-reduce path not implemented (tensor_par_size=1).
    y = linear(o.reshape(B * N, C), w_proj, b_proj, out_dtype=x.dtype)
    return y.reshape(B, N, C)


def attention_reference(params: AttentionParams, x):
    """Pure-JAX f32 reference mirroring the PyTorch forward."""
    B, N, C = x.shape
    H, D = params.num_heads, params.head_dim
    qkv = x.reshape(B * N, C) @ params.w_qkv_t + params.b_qkv
    qkv = qkv.reshape(B, N, 3, H, D).transpose(2, 0, 3, 1, 4)
    q, k, v = qkv[0], qkv[1], qkv[2]
    attn = (q * params.scale) @ jnp.swapaxes(k, -2, -1)
    attn = jax.nn.softmax(attn, axis=-1)
    o = attn @ v                                   # [B, H, N, D]
    o = o.transpose(0, 2, 1, 3).reshape(B, N, C)
    return (o.reshape(B * N, C) @ params.w_proj_t + params.b_proj).reshape(B, N, C)


if __name__ == "__main__":
    # dim=512, 4 heads (head_dim=128), seq=1024: multi-tile M/N in the linears
    # and multiple q-tiles / kv accumulation steps in the flash-attention grid.
    B, N, C, H = 2, 1024, 512, 4
    key = jax.random.PRNGKey(0)
    kp, kx = jax.random.split(key)
    params = AttentionParams(kp, dim=C, num_heads=H)
    x = jax.random.normal(kx, (B, N, C), jnp.float32)

    out = jax.block_until_ready(attention_forward(params, x))
    ref = attention_reference(params, x)

    assert out.shape == (B, N, C)
    max_err = float(jnp.max(jnp.abs(out - ref)))
    # bf16 MXU operands / bf16 intermediate activations => compare against the
    # pure-f32 reference at bf16-level tolerance.
    assert jnp.allclose(out, ref, atol=1e-2, rtol=1e-2), (
        f"mismatch vs reference (max abs err {max_err})")
    print("KERNEL_OK")
</pallas_src>

<mosaic_0001>
module attributes {stable_mosaic.version = 11 : i64} {
  func.func @_linear_kernel(%arg0: i32, %arg1: i32, %arg2: i32, %arg3: memref<512x512xf32, #tpu.memory_space<vmem>>, %arg4: memref<512x768xbf16, #tpu.memory_space<vmem>>, %arg5: memref<1x768xf32, #tpu.memory_space<vmem>>, %arg6: memref<512x768xbf16, #tpu.memory_space<vmem>>, %arg7: memref<512x768xf32, #tpu.memory_space<vmem>>) attributes {dimension_semantics = [#tpu.dimension_semantics<parallel>, #tpu.dimension_semantics<parallel>, #tpu.dimension_semantics<arbitrary>], iteration_bounds = array<i64: 4, 2, 1>, scalar_prefetch = 0 : i64, scratch_operands = 1 : i64, tpu.core_type = #tpu.core_type<tc>, window_params = [{transform_indices = @transform_0, window_bounds = array<i64: 512, 512>}, {transform_indices = @transform_1, window_bounds = array<i64: 512, 768>}, {transform_indices = @transform_2, window_bounds = array<i64: 1, 768>}, {transform_indices = @transform_3, window_bounds = array<i64: 512, 768>}]} {
    %c0_i32 = arith.constant 0 : i32
    %0 = arith.cmpi eq, %arg2, %c0_i32 : i32
    %1 = arith.extui %0 : i1 to i32
    %c0_i32_0 = arith.constant 0 : i32
    %2 = arith.cmpi ne, %1, %c0_i32_0 : i32
    scf.if %2 {
      %cst_10 = arith.constant 0.000000e+00 : f32
      %13 = vector.broadcast %cst_10 : f32 to vector<512x768xf32>
      %c0_11 = arith.constant 0 : index
      %c0_12 = arith.constant 0 : index
      %14 = vector.load %arg7[%c0_11, %c0_12] : memref<512x768xf32, #tpu.memory_space<vmem>>, vector<512x768xf32>
      tpu.vector_store %arg7[%c0_11, %c0_12], %13 {strides = array<i32>} : memref<512x768xf32, #tpu.memory_space<vmem>>, vector<512x768xf32>,
    } else {
    }
    %c0 = arith.constant 0 : index
    %c0_1 = arith.constant 0 : index
    %3 = vector.load %arg7[%c0, %c0_1] : memref<512x768xf32, #tpu.memory_space<vmem>>, vector<512x768xf32>
    %c0_2 = arith.constant 0 : index
    %c0_3 = arith.constant 0 : index
    %4 = vector.load %arg3[%c0_2, %c0_3] : memref<512x512xf32, #tpu.memory_space<vmem>>, vector<512x512xf32>
    %5 = arith.truncf %4 : vector<512x512xf32> to vector<512x512xbf16>
    %c0_4 = arith.constant 0 : index
    %c0_5 = arith.constant 0 : index
    %6 = vector.load %arg4[%c0_4, %c0_5] : memref<512x768xbf16, #tpu.memory_space<vmem>>, vector<512x768xbf16>
    %cst = arith.constant dense<0.000000e+00> : vector<512x768xf32>
    %7 = tpu.matmul %5, %6, %cst {dimension_numbers = #tpu.dot_dimension_numbers<[1], [0], [0], [1], [0, 0, 1, 1], [], []>} : vector<512x512xbf16>, vector<512x768xbf16>, vector<512x768xf32> -> vector<512x768xf32>
    %8 = arith.addf %3, %7 : vector<512x768xf32>
    %c0_6 = arith.constant 0 : index
    %c0_7 = arith.constant 0 : index
    %9 = vector.load %arg7[%c0_6, %c0_7] : memref<512x768xf32, #tpu.memory_space<vmem>>, vector<512x768xf32>
    tpu.vector_store %arg7[%c0_6, %c0_7], %8 {strides = array<i32>} : memref<512x768xf32, #tpu.memory_space<vmem>>, vector<512x768xf32>,
    %c0_i32_8 = arith.constant 0 : i32
    %10 = arith.cmpi eq, %arg2, %c0_i32_8 : i32
    %11 = arith.extui %10 : i1 to i32
    %c0_i32_9 = arith.constant 0 : i32
    %12 = arith.cmpi ne, %11, %c0_i32_9 : i32
    scf.if %12 {
      %c0_10 = arith.constant 0 : index
      %c0_11 = arith.constant 0 : index
      %13 = vector.load %arg7[%c0_10, %c0_11] : memref<512x768xf32, #tpu.memory_space<vmem>>, vector<512x768xf32>
      %c0_12 = arith.constant 0 : index
      %c0_13 = arith.constant 0 : index
      %14 = vector.load %arg5[%c0_12, %c0_13] : memref<1x768xf32, #tpu.memory_space<vmem>>, vector<1x768xf32>
      %15 = vector.broadcast %14 : vector<1x768xf32> to vector<512x768xf32>
      %16 = arith.addf %13, %15 : vector<512x768xf32>
      %17 = arith.truncf %16 : vector<512x768xf32> to vector<512x768xbf16>
      %c0_14 = arith.constant 0 : index
      %c0_15 = arith.constant 0 : index
      %18 = vector.load %arg6[%c0_14, %c0_15] : memref<512x768xbf16, #tpu.memory_space<vmem>>, vector<512x768xbf16>
      tpu.vector_store %arg6[%c0_14, %c0_15], %17 {strides = array<i32>} : memref<512x768xbf16, #tpu.memory_space<vmem>>, vector<512x768xbf16>,
    } else {
    }
    return
  }
  func.func @transform_0(%arg0: i32, %arg1: i32, %arg2: i32) -> (i32, i32) {
    %c0_i32 = arith.constant 0 : i32
    return %arg0, %arg2 : i32, i32
  }
  func.func @transform_1(%arg0: i32, %arg1: i32, %arg2: i32) -> (i32, i32) {
    %c0_i32 = arith.constant 0 : i32
    return %arg2, %arg1 : i32, i32
  }
  func.func @transform_2(%arg0: i32, %arg1: i32, %arg2: i32) -> (i32, i32) {
    %c0_i32 = arith.constant 0 : i32
    %c0_i32_0 = arith.constant 0 : i32
    return %c0_i32, %arg1 : i32, i32
  }
  func.func @transform_3(%arg0: i32, %arg1: i32, %arg2: i32) -> (i32, i32) {
    %c0_i32 = arith.constant 0 : i32
    return %arg0, %arg1 : i32, i32
  }
}

</mosaic_0001>

<llo_original>
// kernel: tpu_custom_call.1
$region0: #{tpu_custom_call.1}
  #allocation0 [shape = 'u32[]', space=smem, size = 0x4, offset = 0x4, fixed_abs, tag = 'smem constant byte address 0x4 - core index']
  #allocation1 [shape = 'u32[144,128]{1,0:T(1,128)}', space=vmem, size = 0x12000, scoped, tag = 'internal scratch']
  #allocation2 [shape = 'f32[512,768]{1,0:T(8,128)}', space=vmem, size = 0x180000, scoped, tag = 'scratch operand']
  %s0 = inlined_call_operand.hbm [shape: f32[2048,512], index: 0, kind: input, shape index: {}]
  %s1 = inlined_call_operand.hbm [shape: bf16[512,1536], index: 1, kind: input, shape index: {}]
  %s2 = inlined_call_operand.hbm [shape: f32[1,1536], index: 2, kind: input, shape index: {}]
  %s3 = inlined_call_operand.hbm [shape: bf16[2048,1536], index: 3, kind: output, shape index: {}]
  %s4 = sld [smem:[#allocation0]]
  $region65: #{tpu_custom_call.1} parent=0
    _
  %s6 = ssub.s32 1, %s4
  %s7 = scalar_select 0, %s6, %s4
  $region1: #{tpu_custom_call.1} parent=0
    #allocation3 [shape = 'u8[2097152]{0}', space=vmem, size = 0x200000, scoped, tag = 'input window, operand 0']
    #allocation4 [shape = 's32[2]{0}', space=sflag, size = 0x8, scoped, tag = 'scoped memory for tpu_custom_call.1']
    #allocation5 [shape = 's32[2]{0}', space=sflag, size = 0x8, scoped, tag = 'scoped memory for tpu_custom_call.1']
    #allocation6 [shape = 'u8[1572864]{0}', space=vmem, size = 0x180000, scoped, tag = 'input window, operand 1']
    #allocation7 [shape = 's32[2]{0}', space=sflag, size = 0x8, scoped, tag = 'scoped memory for tpu_custom_call.1']
    #allocation8 [shape = 'u8[6144]{0}', space=vmem, size = 0x1800, scoped, tag = 'input window, operand 2']
    #allocation9 [shape = 'u8[1572864]{0}', space=vmem, size = 0x180000, scoped, tag = 'output window, operand 0']
    %8 = vsyncpa [#allocation4], 0
    %s9 = scalar_lea.sflag [#allocation4], 1
    %10 = vsyncpa %s9, 0
    %11 = vsyncpa [#allocation7], 0
    %s12 = scalar_lea.sflag [#allocation7], 1
    %13 = vsyncpa %s12, 0
    %14 = vsyncpa [#allocation5], 0
    %s15 = scalar_lea.sflag [#allocation5], 1
    %16 = vsyncpa %s15, 0
    loop: start=0, step=1, limit=10
    $region2: #{tpu_custom_call.1} parent=1 // loop_pre_header
      _
    $region3: #{tpu_custom_call.1} parent=1 // loop_header
      %s18 = sphi 0, %s22
      %p19 = scmp.ge.s32.totalorder %s18, 10
      %s25 = sphi 0, %s44
      %s26 = sphi 0, %s40
      %s27 = sphi 0, %s36
      %s28 = sphi 0, %s25
      %s29 = sphi 0, %s26
      %s30 = sphi 0, %s27
      %s31 = sphi 0, %s28
      %s32 = sphi 0, %s29
      %s33 = sphi 0, %s30
      %s49 = sphi 0, %s51
      %s52 = sphi 0, %s49
      %s53 = sphi 0, %s52
      %s69 = sphi 0, %s53
      %s77 = sphi 0, %s79
      %s80 = sphi 0, %s77
      %s81 = sphi 0, %s80
      %s97 = sphi 0, %s81
      %s103 = sphi 0, %s105
      %s106 = sphi 0, %s103
      %s107 = sphi 0, %s106
      %s123 = sphi 0, %s107
      %s131 = sphi 0, %s133
      %s134 = sphi 0, %s131
      %s135 = sphi 0, %s134
      %s151 = sphi 0, %s135
    $region4: #{tpu_custom_call.1} parent=1 // loop_header_branch
      %21 = sbr.rel (%p19) target = $region8
    $region5: #{tpu_custom_call.1} parent=1 // loop_body
      %s23 = ssub.s32 %s18, 1
      %s24 = ssub.s32 %s18, 2
      %s34 = sadd.s32 1, %s27
      %p35 = scmp.ge.s32.totalorder %s34, 1
      %s36 = scalar_select %p35, 0, %s34
      %s37 = sadd.s32 1, %s26
      %s38 = scalar_select %p35, %s37, %s26
      %p39 = scmp.ge.s32.totalorder %s38, 2
      %s40 = scalar_select %p39, 0, %s38
      %s41 = sadd.s32 1, %s25
      %s42 = scalar_select %p39, %s41, %s25
      %p43 = scmp.ge.s32.totalorder %s42, 4
      %s44 = scalar_select %p43, 0, %s42
      %s45 = ssub.s32 %s25, %s44
      %s46 = ssub.s32 %s27, %s36
      %s47 = sor.u32 %s45, %s46
      %p48 = scmp.eq.s32.totalorder %s47, 0
      %s50 = sadd.s32 %s49, 1
      %s51 = scalar_select %p48, %s49, %s50
      %p54 = pneg %p48
      %p55 = scmp.eq.s32.totalorder %s18, 7
      %p56 = por %p54, %p55
      %p57 = scmp.ne.s32.totalorder %s49, %s52
      %p58 = scmp.eq.s32.totalorder %s18, 0
      %p59 = por %p57, %p58
      %p60 = scmp.ne.s32.totalorder %s49, %s52
      %p61 = scmp.eq.s32.totalorder %s23, 7
      %p62 = por %p60, %p61
      %p63 = scmp.ne.s32.totalorder %s52, %s53
      %p64 = scmp.eq.s32.totalorder %s23, 0
      %p65 = por %p63, %p64
      %p66 = scmp.ne.s32.totalorder %s52, %s53
      %p67 = scmp.eq.s32.totalorder %s24, 7
      %p68 = por %p66, %p67
      %p70 = scmp.ne.s32.totalorder %s53, %s69
      %p71 = scmp.eq.s32.totalorder %s24, 0
      %p72 = por %p70, %p71
      %s73 = ssub.s32 %s27, %s36
      %s74 = ssub.s32 %s26, %s40
      %s75 = sor.u32 %s73, %s74
      %p76 = scmp.eq.s32.totalorder %s75, 0
      %s78 = sadd.s32 %s77, 1
      %s79 = scalar_select %p76, %s77, %s78
      %p82 = pneg %p76
      %p83 = scmp.eq.s32.totalorder %s18, 7
      %p84 = por %p82, %p83
      %p85 = scmp.ne.s32.totalorder %s77, %s80
      %p86 = scmp.eq.s32.totalorder %s18, 0
      %p87 = por %p85, %p86
      %p88 = scmp.ne.s32.totalorder %s77, %s80
      %p89 = scmp.eq.s32.totalorder %s23, 7
      %p90 = por %p88, %p89
      %p91 = scmp.ne.s32.totalorder %s80, %s81
      %p92 = scmp.eq.s32.totalorder %s23, 0
      %p93 = por %p91, %p92
      %p94 = scmp.ne.s32.totalorder %s80, %s81
      %p95 = scmp.eq.s32.totalorder %s24, 7
      %p96 = por %p94, %p95
      %p98 = scmp.ne.s32.totalorder %s81, %s97
      %p99 = scmp.eq.s32.totalorder %s24, 0
      %p100 = por %p98, %p99
      %s101 = ssub.s32 %s26, %s40
      %p102 = scmp.eq.s32.totalorder %s101, 0
      %s104 = sadd.s32 %s103, 1
      %s105 = scalar_select %p102, %s103, %s104
      %p108 = pneg %p102
      %p109 = scmp.eq.s32.totalorder %s18, 7
      %p110 = por %p108, %p109
      %p111 = scmp.ne.s32.totalorder %s103, %s106
      %p112 = scmp.eq.s32.totalorder %s18, 0
      %p113 = por %p111, %p112
      %p114 = scmp.ne.s32.totalorder %s103, %s106
      %p115 = scmp.eq.s32.totalorder %s23, 7
      %p116 = por %p114, %p115
      %p117 = scmp.ne.s32.totalorder %s106, %s107
      %p118 = scmp.eq.s32.totalorder %s23, 0
      %p119 = por %p117, %p118
      %p120 = scmp.ne.s32.totalorder %s106, %s107
      %p121 = scmp.eq.s32.totalorder %s24, 7
      %p122 = por %p120, %p121
      %p124 = scmp.ne.s32.totalorder %s107, %s123
      %p125 = scmp.eq.s32.totalorder %s24, 0
      %p126 = por %p124, %p125
      %s127 = ssub.s32 %s25, %s44
      %s128 = ssub.s32 %s26, %s40
      %s129 = sor.u32 %s127, %s128
      %p130 = scmp.eq.s32.totalorder %s129, 0
      %s132 = sadd.s32 %s131, 1
      %s133 = scalar_select %p130, %s131, %s132
      %p136 = pneg %p130
      %p137 = scmp.eq.s32.totalorder %s18, 7
      %p138 = por %p136, %p137
      %p139 = scmp.ne.s32.totalorder %s131, %s134
      %p140 = scmp.eq.s32.totalorder %s18, 0
      %p141 = por %p139, %p140
      %p142 = scmp.ne.s32.totalorder %s131, %s134
      %p143 = scmp.eq.s32.totalorder %s23, 7
      %p144 = por %p142, %p143
      %p145 = scmp.ne.s32.totalorder %s134, %s135
      %p146 = scmp.eq.s32.totalorder %s23, 0
      %p147 = por %p145, %p146
      %p148 = scmp.ne.s32.totalorder %s134, %s135
      %p149 = scmp.eq.s32.totalorder %s24, 7
      %p150 = por %p148, %p149
      %p152 = scmp.ne.s32.totalorder %s135, %s151
      %p153 = scmp.eq.s32.totalorder %s24, 0
      %p154 = por %p152, %p153
      %p155 = scmp.le.s32.totalorder 1, %s18
      %p156 = scmp.lt.s32.totalorder %s18, 9
      %p157 = pnand %p155, %p156
      %p158 = pneg %p157
      // Predicated region
      $region9: #{tpu_custom_call.1} parent=5 // pred_check
        _
      $region10: #{tpu_custom_call.1} parent=5 // pred_check_branch
        %160 = sbr.rel (%p157) target = $region12
      $region11: #{tpu_custom_call.1} parent=5 // pred_region
        %s161 = ssub.s32 %s18, 1
      $region12: #{tpu_custom_call.1} parent=5 // pred_fallthru
        _
      %p162 = scmp.lt.s32.totalorder %s18, 8
      // Predicated region
      $region13: #{tpu_custom_call.1} parent=5 // pred_check
        %p163 = pneg %p162
      $region14: #{tpu_custom_call.1} parent=5 // pred_check_branch
        %165 = sbr.rel (%p163) target = $region16
      $region15: #{tpu_custom_call.1} parent=5 // pred_region
        // Predicated region
        $region17: #{tpu_custom_call.1} parent=15 // pred_check
          %p166 = pneg %p59
        $region18: #{tpu_custom_call.1} parent=15 // pred_check_branch
          %168 = sbr.rel (%p166) target = $region20
        $region19: #{tpu_custom_call.1} parent=15 // pred_region
          %s169 = sand.u32 %s49, 1
          %s170 = scalar_lea.sflag [#allocation4], %s169
          %s171 = sand.u32 %s49, 1
          %s172 = smul.addr %s171, 2048
          %s173 = scalar_lea.vmem [#allocation3], %s172
          %s174 = smul.u32 64, %s25
          %s175 = smul.u32 4, %s27
          %s177 = ssub.s32 32768, 32768
          %178 = vsyncadd %s170, %s177
          %s179 = smul.addr %s174, 4
          %s180 = sadd.s32 %s175, %s179
          %s181 = smul.addr %s180, 128
          %s182 = scalar_lea.hbm %s0, %s181
          %s183 = sshll.u32 %s173, 4
          %s184 = int_to_ptr.vmem [resolvable:$true] %s183
          %189 = dma.hbm_to_vmem [thread:$0]  %s182, 32768, %s184, %s170, 512, 512, 32
        $region20: #{tpu_custom_call.1} parent=15 // pred_fallthru
          _
        // Predicated region
        $region21: #{tpu_custom_call.1} parent=15 // pred_check
          %p190 = pneg %p87
        $region22: #{tpu_custom_call.1} parent=15 // pred_check_branch
          %192 = sbr.rel (%p190) target = $region24
        $region23: #{tpu_custom_call.1} parent=15 // pred_region
          %s193 = sand.u32 %s18, 1
          %s194 = scalar_lea.sflag [#allocation7], %s193
          %s195 = sand.u32 %s77, 1
          %s196 = smul.addr %s195, 1536
          %s197 = scalar_lea.vmem [#allocation6], %s196
          %s198 = smul.u32 64, %s27
          %s199 = smul.u32 6, %s26
          %s201 = ssub.s32 24576, 24576
          %202 = vsyncadd %s194, %s201
          %s203 = smul.addr %s198, 12
          %s204 = sadd.s32 %s199, %s203
          %s205 = smul.addr %s204, 64
          %s206 = scalar_lea.hbm %s1, %s205
          %s207 = sshll.u32 %s197, 4
          %s208 = int_to_ptr.vmem [resolvable:$true] %s207
          %213 = dma.hbm_to_vmem [thread:$0]  %s206, 24576, %s208, %s194, 768, 384, 24
        $region24: #{tpu_custom_call.1} parent=15 // pred_fallthru
          _
        // Predicated region
        $region25: #{tpu_custom_call.1} parent=15 // pred_check
          %p214 = pneg %p113
        $region26: #{tpu_custom_call.1} parent=15 // pred_check_branch
          %216 = sbr.rel (%p214) target = $region28
        $region27: #{tpu_custom_call.1} parent=15 // pred_region
          %s217 = sand.u32 %s18, 1
          %s218 = scalar_lea.sflag [#allocation7], %s217
          %s219 = sand.u32 %s103, 1
          %s220 = smul.addr %s219, 6
          %s221 = scalar_lea.vmem [#allocation8], %s220
          %s222 = smul.u32 6, %s26
          %s224 = ssub.s32 96, 96
          %225 = vsyncadd %s218, %s224
          %s226 = smul.addr %s222, 16
          %s227 = scalar_lea.hbm %s2, %s226
          %s229 = sshll.u32 %s221, 4
          %s230 = int_to_ptr.vmem [resolvable:$true] %s229
          %232 = dma.hbm_to_vmem [thread:$0]  %s227, 96, %s230, %s218
        $region28: #{tpu_custom_call.1} parent=15 // pred_fallthru
          _
      $region16: #{tpu_custom_call.1} parent=5 // pred_fallthru
        _
      %p233 = scmp.le.s32.totalorder 1, %s18
      %p234 = scmp.lt.s32.totalorder %s18, 9
      %p235 = pnand %p233, %p234
      %p236 = pneg %p235
      // Predicated region
      $region29: #{tpu_custom_call.1} parent=5 // pred_check
        _
      $region30: #{tpu_custom_call.1} parent=5 // pred_check_branch
        %238 = sbr.rel (%p235) target = $region32
      $region31: #{tpu_custom_call.1} parent=5 // pred_region
        %s239 = ssub.s32 %s18, 1
        %s240 = sand.u32 %s52, 1
        %s241 = scalar_lea.sflag [#allocation4], %s240
        %s242 = sand.u32 %s52, 1
        %s243 = smul.addr %s242, 2048
        %s244 = scalar_lea.vmem [#allocation3], %s243
        // Predicated region
        $region33: #{tpu_custom_call.1} parent=31 // pred_check
          %p245 = pneg %p65
        $region34: #{tpu_custom_call.1} parent=31 // pred_check_branch
          %247 = sbr.rel (%p245) target = $region36
        $region35: #{tpu_custom_call.1} parent=31 // pred_region
          %248 = dma.done %s241, 32768
        $region36: #{tpu_custom_call.1} parent=31 // pred_fallthru
          _
        %s249 = sand.u32 %s23, 1
        %s250 = scalar_lea.sflag [#allocation7], %s249
        %s251 = sand.u32 %s80, 1
        %s252 = smul.addr %s251, 1536
        %s253 = scalar_lea.vmem [#allocation6], %s252
        // Predicated region
        $region37: #{tpu_custom_call.1} parent=31 // pred_check
          %p254 = pneg %p93
        $region38: #{tpu_custom_call.1} parent=31 // pred_check_branch
          %256 = sbr.rel (%p254) target = $region40
        $region39: #{tpu_custom_call.1} parent=31 // pred_region
          %257 = dma.done %s250, 24576
        $region40: #{tpu_custom_call.1} parent=31 // pred_fallthru
          _
        %s258 = sand.u32 %s23, 1
        %s259 = scalar_lea.sflag [#allocation7], %s258
        %s260 = sand.u32 %s106, 1
        %s261 = smul.addr %s260, 6
        %s262 = scalar_lea.vmem [#allocation8], %s261
        // Predicated region
        $region41: #{tpu_custom_call.1} parent=31 // pred_check
          %p263 = pneg %p119
        $region42: #{tpu_custom_call.1} parent=31 // pred_check_branch
          %265 = sbr.rel (%p263) target = $region44
        $region43: #{tpu_custom_call.1} parent=31 // pred_region
          %266 = dma.done %s259, 96
        $region44: #{tpu_custom_call.1} parent=31 // pred_fallthru
          _
        %s267 = sand.u32 %s52, 1
        %s268 = scalar_lea.sflag [#allocation4], %s267
        %s269 = sand.u32 %s52, 1
        %s270 = smul.addr %s269, 2048
        %s271 = scalar_lea.vmem [#allocation3], %s270
        %p272 = pneg %p65
        %p273 = pneg %p62
        %s274 = sand.u32 %s23, 1
        %s275 = scalar_lea.sflag [#allocation7], %s274
        %s276 = sand.u32 %s80, 1
        %s277 = smul.addr %s276, 1536
        %s278 = scalar_lea.vmem [#allocation6], %s277
        %p279 = pneg %p93
        %p280 = pneg %p90
        %s281 = sand.u32 %s23, 1
        %s282 = scalar_lea.sflag [#allocation7], %s281
        %s283 = sand.u32 %s106, 1
        %s284 = smul.addr %s283, 6
        %s285 = scalar_lea.vmem [#allocation8], %s284
        %p286 = pneg %p119
        %p287 = pneg %p116
        %p288 = pneg %p147
        %p289 = pneg %p144
        %s290 = sand.u32 %s134, 1
        %s291 = scalar_lea.sflag [#allocation5], %s290
        %s292 = sand.u32 %s134, 1
        %s293 = smul.addr %s292, 1536
        %s294 = scalar_lea.vmem [#allocation9], %s293
        %s295 = smul.u32 64, %s28
        %s296 = smul.u32 4, %s30
        %s297 = smul.u32 64, %s30
        %s298 = smul.u32 6, %s29
        %s299 = smul.u32 6, %s29
        %s300 = smul.u32 64, %s28
        %s301 = smul.u32 6, %s29
        %p302 = scmp.eq.s32.totalorder %s30, 0
        // Predicated region
        $region45: #{tpu_custom_call.1} parent=31 // pred_check
          %p303 = pneg %p302
        $region46: #{tpu_custom_call.1} parent=31 // pred_check_branch
          %305 = sbr.rel (%p303) target = $region48
        $region47: #{tpu_custom_call.1} parent=31 // pred_region
          %306 = vst [vmem:[#allocation2] sm:$0xff] 0.0
          %307 = vst [vmem:[#allocation2 + $0x8] sm:$0xff] 0.0
          %308 = vst [vmem:[#allocation2 + $0x10] sm:$0xff] 0.0
          %309 = vst [vmem:[#allocation2 + $0x18] sm:$0xff] 0.0
          %310 = vst [vmem:[#allocation2 + $0x20] sm:$0xff] 0.0
          %311 = vst [vmem:[#allocation2 + $0x28] sm:$0xff] 0.0
          %312 = vst [vmem:[#allocation2 + $0x30] sm:$0xff] 0.0
          %313 = vst [vmem:[#allocation2 + $0x38] sm:$0xff] 0.0
          %314 = vst [vmem:[#allocation2 + $0x40] sm:$0xff] 0.0
          %315 = vst [vmem:[#allocation2 + $0x48] sm:$0xff] 0.0
          %316 = vst [vmem:[#allocation2 + $0x50] sm:$0xff] 0.0
          %317 = vst [vmem:[#allocation2 + $0x58] sm:$0xff] 0.0
          %318 = vst [vmem:[#allocation2 + $0x60] sm:$0xff] 0.0
          %319 = vst [vmem:[#allocation2 + $0x68] sm:$0xff] 0.0
          %320 = vst [vmem:[#allocation2 + $0x70] sm:$0xff] 0.0
          %321 = vst [vmem:[#allocation2 + $0x78] sm:$0xff] 0.0
          %322 = vst [vmem:[#allocation2 + $0x80] sm:$0xff] 0.0
          %323 = vst [vmem:[#allocation2 + $0x88] sm:$0xff] 0.0
          %324 = vst [vmem:[#allocation2 + $0x90] sm:$0xff] 0.0
          %325 = vst [vmem:[#allocation2 + $0x98] sm:$0xff] 0.0
          %326 = vst [vmem:[#allocation2 + $0xa0] sm:$0xff] 0.0
          %327 = vst [vmem:[#allocation2 + $0xa8] sm:$0xff] 0.0
          %328 = vst [vmem:[#allocation2 + $0xb0] sm:$0xff] 0.0
          %329 = vst [vmem:[#allocation2 + $0xb8] sm:$0xff] 0.0
          %330 = vst [vmem:[#allocation2 + $0xc0] sm:$0xff] 0.0
          %331 = vst [vmem:[#allocation2 + $0xc8] sm:$0xff] 0.0
          %332 = vst [vmem:[#allocation2 + $0xd0] sm:$0xff] 0.0
          %333 = vst [vmem:[#allocation2 + $0xd8] sm:$0xff] 0.0
          %334 = vst [vmem:[#allocation2 + $0xe0] sm:$0xff] 0.0
          %335 = vst [vmem:[#allocation2 + $0xe8] sm:$0xff] 0.0
          %336 = vst [vmem:[#allocation2 + $0xf0] sm:$0xff] 0.0
          %337 = vst [vmem:[#allocation2 + $0xf8] sm:$0xff] 0.0
          %338 = vst [vmem:[#allocation2 + $0x100] sm:$0xff] 0.0
          %339 = vst [vmem:[#allocation2 + $0x108] sm:$0xff] 0.0
          %340 = vst [vmem:[#allocation2 + $0x110] sm:$0xff] 0.0
          %341 = vst [vmem:[#allocation2 + $0x118] sm:$0xff] 0.0
          %342 = vst [vmem:[#allocation2 + $0x120] sm:$0xff] 0.0
          %343 = vst [vmem:[#allocation2 + $0x128] sm:$0xff] 0.0
          %344 = vst [vmem:[#allocation2 + $0x130] sm:$0xff] 0.0
          %345 = vst [vmem:[#allocation2 + $0x138] sm:$0xff] 0.0
          %346 = vst [vmem:[#allocation2 + $0x140] sm:$0xff] 0.0
          %347 = vst [vmem:[#allocation2 + $0x148] sm:$0xff] 0.0
          %348 = vst [vmem:[#allocation2 + $0x150] sm:$0xff] 0.0
          %349 = vst [vmem:[#allocation2 + $0x158] sm:$0xff] 0.0
          %350 = vst [vmem:[#allocation2 + $0x160] sm:$0xff] 0.0
          %351 = vst [vmem:[#allocation2 + $0x168] sm:$0xff] 0.0
          %352 = vst [vmem:[#allocation2 + $0x170] sm:$0xff] 0.0
          %353 = vst [vmem:[#allocation2 + $0x178] sm:$0xff] 0.0
          %354 = vst [vmem:[#allocation2 + $0x180] sm:$0xff] 0.0
          %355 = vst [vmem:[#allocation2 + $0x188] sm:$0xff] 0.0
          %356 = vst [vmem:[#allocation2 + $0x190] sm:$0xff] 0.0
          %357 = vst [vmem:[#allocation2 + $0x198] sm:$0xff] 0.0
          %358 = vst [vmem:[#allocation2 + $0x1a0] sm:$0xff] 0.0
          %359 = vst [vmem:[#allocation2 + $0x1a8] sm:$0xff] 0.0
          %360 = vst [vmem:[#allocation2 + $0x1b0] sm:$0xff] 0.0
          %361 = vst [vmem:[#allocation2 + $0x1b8] sm:$0xff] 0.0
          %362 = vst [vmem:[#allocation2 + $0x1c0] sm:$0xff] 0.0
          %363 = vst [vmem:[#allocation2 + $0x1c8] sm:$0xff] 0.0
          %364 = vst [vmem:[#allocation2 + $0x1d0] sm:$0xff] 0.0
          %365 = vst [vmem:[#allocation2 + $0x1d8] sm:$0xff] 0.0
          %366 = vst [vmem:[#allocation2 + $0x1e0] sm:$0xff] 0.0
          %367 = vst [vmem:[#allocation2 + $0x1e8] sm:$0xff] 0.0
          %368 = vst [vmem:[#allocation2 + $0x1f0] sm:$0xff] 0.0
          %369 = vst [vmem:[#allocation2 + $0x1f8] sm:$0xff] 0.0
          %370 = vst [vmem:[#allocation2 + $0x200] sm:$0xff] 0.0
          %371 = vst [vmem:[#allocation2 + $0x208] sm:$0xff] 0.0
          %372 = vst [vmem:[#allocation2 + $0x210] sm:$0xff] 0.0
          %373 = vst [vmem:[#allocation2 + $0x218] sm:$0xff] 0.0
          %374 = vst [vmem:[#allocation2 + $0x220] sm:$0xff] 0.0
          %375 = vst [vmem:[#allocation2 + $0x228] sm:$0xff] 0.0
          %376 = vst [vmem:[#allocation2 + $0x230] sm:$0xff] 0.0
          %377 = vst [vmem:[#allocation2 + $0x238] sm:$0xff] 0.0
          %378 = vst [vmem:[#allocation2 + $0x240] sm:$0xff] 0.0
          %379 = vst [vmem:[#allocation2 + $0x248] sm:$0xff] 0.0
          %380 = vst [vmem:[#allocation2 + $0x250] sm:$0xff] 0.0
          %381 = vst [vmem:[#allocation2 + $0x258] sm:$0xff] 0.0
          %382 = vst [vmem:[#allocation2 + $0x260] sm:$0xff] 0.0
          %383 = vst [vmem:[#allocation2 + $0x268] sm:$0xff] 0.0
          %384 = vst [vmem:[#allocation2 + $0x270] sm:$0xff] 0.0
          %385 = vst [vmem:[#allocation2 + $0x278] sm:$0xff] 0.0
          %386 = vst [vmem:[#allocation2 + $0x280] sm:$0xff] 0.0
          %387 = vst [vmem:[#allocation2 + $0x288] sm:$0xff] 0.0
          %388 = vst [vmem:[#allocation2 + $0x290] sm:$0xff] 0.0
          %389 = vst [vmem:[#allocation2 + $0x298] sm:$0xff] 0.0
          %390 = vst [vmem:[#allocation2 + $0x2a0] sm:$0xff] 0.0
          %391 = vst [vmem:[#allocation2 + $0x2a8] sm:$0xff] 0.0
          %392 = vst [vmem:[#allocation2 + $0x2b0] sm:$0xff] 0.0
          %393 = vst [vmem:[#allocation2 + $0x2b8] sm:$0xff] 0.0
          %394 = vst [vmem:[#allocation2 + $0x2c0] sm:$0xff] 0.0
          %395 = vst [vmem:[#allocation2 + $0x2c8] sm:$0xff] 0.0
          %396 = vst [vmem:[#allocation2 + $0x2d0] sm:$0xff] 0.0
          %397 = vst [vmem:[#allocation2 + $0x2d8] sm:$0xff] 0.0
          %398 = vst [vmem:[#allocation2 + $0x2e0] sm:$0xff] 0.0
          %399 = vst [vmem:[#allocation2 + $0x2e8] sm:$0xff] 0.0
          %400 = vst [vmem:[#allocation2 + $0x2f0] sm:$0xff] 0.0
          %401 = vst [vmem:[#allocation2 + $0x2f8] sm:$0xff] 0.0
          %402 = vst [vmem:[#allocation2 + $0x300] sm:$0xff] 0.0
          %403 = vst [vmem:[#allocation2 + $0x308] sm:$0xff] 0.0
          %404 = vst [vmem:[#allocation2 + $0x310] sm:$0xff] 0.0
          %405 = vst [vmem:[#allocation2 + $0x318] sm:$0xff] 0.0
          %406 = vst [vmem:[#allocation2 + $0x320] sm:$0xff] 0.0
          %407 = vst [vmem:[#allocation2 + $0x328] sm:$0xff] 0.0
          %408 = vst [vmem:[#allocation2 + $0x330] sm:$0xff] 0.0
          %409 = vst [vmem:[#allocation2 + $0x338] sm:$0xff] 0.0
          %410 = vst [vmem:[#allocation2 + $0x340] sm:$0xff] 0.0
          %411 = vst [vmem:[#allocation2 + $0x348] sm:$0xff] 0.0
          %412 = vst [vmem:[#allocation2 + $0x350] sm:$0xff] 0.0
          %413 = vst [vmem:[#allocation2 + $0x358] sm:$0xff] 0.0
          %414 = vst [vmem:[#allocation2 + $0x360] sm:$0xff] 0.0
          %415 = vst [vmem:[#allocation2 + $0x368] sm:$0xff] 0.0
          %416 = vst [vmem:[#allocation2 + $0x370] sm:$0xff] 0.0
          %417 = vst [vmem:[#allocation2 + $0x378] sm:$0xff] 0.0
          %418 = vst [vmem:[#allocation2 + $0x380] sm:$0xff] 0.0
          %419 = vst [vmem:[#allocation2 + $0x388] sm:$0xff] 0.0
          %420 = vst [vmem:[#allocation2 + $0x390] sm:$0xff] 0.0
          %421 = vst [vmem:[#allocation2 + $0x398] sm:$0xff] 0.0
          %422 = vst [vmem:[#allocation2 + $0x3a0] sm:$0xff] 0.0
          %423 = vst [vmem:[#allocation2 + $0x3a8] sm:$0xff] 0.0
          %424 = vst [vmem:[#allocation2 + $0x3b0] sm:$0xff] 0.0
          %425 = vst [vmem:[#allocation2 + $0x3b8] sm:$0xff] 0.0
          %426 = vst [vmem:[#allocation2 + $0x3c0] sm:$0xff] 0.0
          %427 = vst [vmem:[#allocation2 + $0x3c8] sm:$0xff] 0.0
          %428 = vst [vmem:[#allocation2 + $0x3d0] sm:$0xff] 0.0
          %429 = vst [vmem:[#allocation2 + $0x3d8] sm:$0xff] 0.0
          %430 = vst [vmem:[#allocation2 + $0x3e0] sm:$0xff] 0.0
          %431 = vst [vmem:[#allocation2 + $0x3e8] sm:$0xff] 0.0
          %432 = vst [vmem:[#allocation2 + $0x3f0] sm:$0xff] 0.0
          %433 = vst [vmem:[#allocation2 + $0x3f8] sm:$0xff] 0.0
          %434 = vst [vmem:[#allocation2 + $0x400] sm:$0xff] 0.0
          %435 = vst [vmem:[#allocation2 + $0x408] sm:$0xff] 0.0
          %436 = vst [vmem:[#allocation2 + $0x410] sm:$0xff] 0.0
          %437 = vst [vmem:[#allocation2 + $0x418] sm:$0xff] 0.0
          %438 = vst [vmem:[#allocation2 + $0x420] sm:$0xff] 0.0
          %439 = vst [vmem:[#allocation2 + $0x428] sm:$0xff] 0.0
          %440 = vst [vmem:[#allocation2 + $0x430] sm:$0xff] 0.0
          %441 = vst [vmem:[#allocation2 + $0x438] sm:$0xff] 0.0
          %442 = vst [vmem:[#allocation2 + $0x440] sm:$0xff] 0.0
          %443 = vst [vmem:[#allocation2 + $0x448] sm:$0xff] 0.0
          %444 = vst [vmem:[#allocation2 + $0x450] sm:$0xff] 0.0
          %445 = vst [vmem:[#allocation2 + $0x458] sm:$0xff] 0.0
          %446 = vst [vmem:[#allocation2 + $0x460] sm:$0xff] 0.0
          %447 = vst [vmem:[#allocation2 + $0x468] sm:$0xff] 0.0
          %448 = vst [vmem:[#allocation2 + $0x470] sm:$0xff] 0.0
          %449 = vst [vmem:[#allocation2 + $0x478] sm:$0xff] 0.0
          %450 = vst [vmem:[#allocation2 + $0x480] sm:$0xff] 0.0
          %451 = vst [vmem:[#allocation2 + $0x488] sm:$0xff] 0.0
          %452 = vst [vmem:[#allocation2 + $0x490] sm:$0xff] 0.0
          %453 = vst [vmem:[#allocation2 + $0x498] sm:$0xff] 0.0
          %454 = vst [vmem:[#allocation2 + $0x4a0] sm:$0xff] 0.0
          %455 = vst [vmem:[#allocation2 + $0x4a8] sm:$0xff] 0.0
          %456 = vst [vmem:[#allocation2 + $0x4b0] sm:$0xff] 0.0
          %457 = vst [vmem:[#allocation2 + $0x4b8] sm:$0xff] 0.0
          %458 = vst [vmem:[#allocation2 + $0x4c0] sm:$0xff] 0.0
          %459 = vst [vmem:[#allocation2 + $0x4c8] sm:$0xff] 0.0
          %460 = vst [vmem:[#allocation2 + $0x4d0] sm:$0xff] 0.0
          %461 = vst [vmem:[#allocation2 + $0x4d8] sm:$0xff] 0.0
          %462 = vst [vmem:[#allocation2 + $0x4e0] sm:$0xff] 0.0
          %463 = vst [vmem:[#allocation2 + $0x4e8] sm:$0xff] 0.0
          %464 = vst [vmem:[#allocation2 + $0x4f0] sm:$0xff] 0.0
          %465 = vst [vmem:[#allocation2 + $0x4f8] sm:$0xff] 0.0
          %466 = vst [vmem:[#allocation2 + $0x500] sm:$0xff] 0.0
          %467 = vst [vmem:[#allocation2 + $0x508] sm:$0xff] 0.0
          %468 = vst [vmem:[#allocation2 + $0x510] sm:$0xff] 0.0
          %469 = vst [vmem:[#allocation2 + $0x518] sm:$0xff] 0.0
          %470 = vst [vmem:[#allocation2 + $0x520] sm:$0xff] 0.0
          %471 = vst [vmem:[#allocation2 + $0x528] sm:$0xff] 0.0
          %472 = vst [vmem:[#allocation2 + $0x530] sm:$0xff] 0.0
          %473 = vst [vmem:[#allocation2 + $0x538] sm:$0xff] 0.0
          %474 = vst [vmem:[#allocation2 + $0x540] sm:$0xff] 0.0
          %475 = vst [vmem:[#allocation2 + $0x548] sm:$0xff] 0.0
          %476 = vst [vmem:[#allocation2 + $0x550] sm:$0xff] 0.0
          %477 = vst [vmem:[#allocation2 + $0x558] sm:$0xff] 0.0
          %478 = vst [vmem:[#allocation2 + $0x560] sm:$0xff] 0.0
          %479 = vst [vmem:[#allocation2 + $0x568] sm:$0xff] 0.0
          %480 = vst [vmem:[#allocation2 + $0x570] sm:$0xff] 0.0
          %481 = vst [vmem:[#allocation2 + $0x578] sm:$0xff] 0.0
          %482 = vst [vmem:[#allocation2 + $0x580] sm:$0xff] 0.0
          %483 = vst [vmem:[#allocation2 + $0x588] sm:$0xff] 0.0
          %484 = vst [vmem:[#allocation2 + $0x590] sm:$0xff] 0.0
          %485 = vst [vmem:[#allocation2 + $0x598] sm:$0xff] 0.0
          %486 = vst [vmem:[#allocation2 + $0x5a0] sm:$0xff] 0.0
          %487 = vst [vmem:[#allocation2 + $0x5a8] sm:$0xff] 0.0
          %488 = vst [vmem:[#allocation2 + $0x5b0] sm:$0xff] 0.0
          %489 = vst [vmem:[#allocation2 + $0x5b8] sm:$0xff] 0.0
          %490 = vst [vmem:[#allocation2 + $0x5c0] sm:$0xff] 0.0
          %491 = vst [vmem:[#allocation2 + $0x5c8] sm:$0xff] 0.0
          %492 = vst [vmem:[#allocation2 + $0x5d0] sm:$0xff] 0.0
          %493 = vst [vmem:[#allocation2 + $0x5d8] sm:$0xff] 0.0
          %494 = vst [vmem:[#allocation2 + $0x5e0] sm:$0xff] 0.0
          %495 = vst [vmem:[#allocation2 + $0x5e8] sm:$0xff] 0.0
          %496 = vst [vmem:[#allocation2 + $0x5f0] sm:$0xff] 0.0
          %497 = vst [vmem:[#allocation2 + $0x5f8] sm:$0xff] 0.0
          %498 = vst [vmem:[#allocation2 + $0x600] sm:$0xff] 0.0
          %499 = vst [vmem:[#allocation2 + $0x608] sm:$0xff] 0.0
          %500 = vst [vmem:[#allocation2 + $0x610] sm:$0xff] 0.0
          %501 = vst [vmem:[#allocation2 + $0x618] sm:$0xff] 0.0
          %502 = vst [vmem:[#allocation2 + $0x620] sm:$0xff] 0.0
          %503 = vst [vmem:[#allocation2 + $0x628] sm:$0xff] 0.0
          %504 = vst [vmem:[#allocation2 + $0x630] sm:$0xff] 0.0
          %505 = vst [vmem:[#allocation2 + $0x638] sm:$0xff] 0.0
          %506 = vst [vmem:[#allocation2 + $0x640] sm:$0xff] 0.0
          %507 = vst [vmem:[#allocation2 + $0x648] sm:$0xff] 0.0
          %508 = vst [vmem:[#allocation2 + $0x650] sm:$0xff] 0.0
          %509 = vst [vmem:[#allocation2 + $0x658] sm:$0xff] 0.0
          %510 = vst [vmem:[#allocation2 + $0x660] sm:$0xff] 0.0
          %511 = vst [vmem:[#allocation2 + $0x668] sm:$0xff] 0.0
          %512 = vst [vmem:[#allocation2 + $0x670] sm:$0xff] 0.0
          %513 = vst [vmem:[#allocation2 + $0x678] sm:$0xff] 0.0
          %514 = vst [vmem:[#allocation2 + $0x680] sm:$0xff] 0.0
          %515 = vst [vmem:[#allocation2 + $0x688] sm:$0xff] 0.0
          %516 = vst [vmem:[#allocation2 + $0x690] sm:$0xff] 0.0
          %517 = vst [vmem:[#allocation2 + $0x698] sm:$0xff] 0.0
          %518 = vst [vmem:[#allocation2 + $0x6a0] sm:$0xff] 0.0
          %519 = vst [vmem:[#allocation2 + $0x6a8] sm:$0xff] 0.0
          %520 = vst [vmem:[#allocation2 + $0x6b0] sm:$0xff] 0.0
          %521 = vst [vmem:[#allocation2 + $0x6b8] sm:$0xff] 0.0
          %522 = vst [vmem:[#allocation2 + $0x6c0] sm:$0xff] 0.0
          %523 = vst [vmem:[#allocation2 + $0x6c8] sm:$0xff] 0.0
          %524 = vst [vmem:[#allocation2 + $0x6d0] sm:$0xff] 0.0
          %525 = vst [vmem:[#allocation2 + $0x6d8] sm:$0xff] 0.0
          %526 = vst [vmem:[#allocation2 + $0x6e0] sm:$0xff] 0.0
          %527 = vst [vmem:[#allocation2 + $0x6e8] sm:$0xff] 0.0
          %528 = vst [vmem:[#allocation2 + $0x6f0] sm:$0xff] 0.0
          %529 = vst [vmem:[#allocation2 + $0x6f8] sm:$0xff] 0.0
          %530 = vst [vmem:[#allocation2 + $0x700] sm:$0xff] 0.0
          %531 = vst [vmem:[#allocation2 + $0x708] sm:$0xff] 0.0
          %532 = vst [vmem:[#allocation2 + $0x710] sm:$0xff] 0.0
          %533 = vst [vmem:[#allocation2 + $0x718] sm:$0xff] 0.0
          %534 = vst [vmem:[#allocation2 + $0x720] sm:$0xff] 0.0
          %535 = vst [vmem:[#allocation2 + $0x728] sm:$0xff] 0.0
          %536 = vst [vmem:[#allocation2 + $0x730] sm:$0xff] 0.0
          %537 = vst [vmem:[#allocation2 + $0x738] sm:$0xff] 0.0
          %538 = vst [vmem:[#allocation2 + $0x740] sm:$0xff] 0.0
          %539 = vst [vmem:[#allocation2 + $0x748] sm:$0xff] 0.0
          %540 = vst [vmem:[#allocation2 + $0x750] sm:$0xff] 0.0
          %541 = vst [vmem:[#allocation2 + $0x758] sm:$0xff] 0.0
          %542 = vst [vmem:[#allocation2 + $0x760] sm:$0xff] 0.0
          %543 = vst [vmem:[#allocation2 + $0x768] sm:$0xff] 0.0
          %544 = vst [vmem:[#allocation2 + $0x770] sm:$0xff] 0.0
          %545 = vst [vmem:[#allocation2 + $0x778] sm:$0xff] 0.0
          %546 = vst [vmem:[#allocation2 + $0x780] sm:$0xff] 0.0
          %547 = vst [vmem:[#allocation2 + $0x788] sm:$0xff] 0.0
          %548 = vst [vmem:[#allocation2 + $0x790] sm:$0xff] 0.0
          %549 = vst [vmem:[#allocation2 + $0x798] sm:$0xff] 0.0
          %550 = vst [vmem:[#allocation2 + $0x7a0] sm:$0xff] 0.0
          %551 = vst [vmem:[#allocation2 + $0x7a8] sm:$0xff] 0.0
          %552 = vst [vmem:[#allocation2 + $0x7b0] sm:$0xff] 0.0
          %553 = vst [vmem:[#allocation2 + $0x7b8] sm:$0xff] 0.0
          %554 = vst [vmem:[#allocation2 + $0x7c0] sm:$0xff] 0.0
          %555 = vst [vmem:[#allocation2 + $0x7c8] sm:$0xff] 0.0
          %556 = vst [vmem:[#allocation2 + $0x7d0] sm:$0xff] 0.0
          %557 = vst [vmem:[#allocation2 + $0x7d8] sm:$0xff] 0.0
          %558 = vst [vmem:[#allocation2 + $0x7e0] sm:$0xff] 0.0
          %559 = vst [vmem:[#allocation2 + $0x7e8] sm:$0xff] 0.0
          %560 = vst [vmem:[#allocation2 + $0x7f0] sm:$0xff] 0.0
          %561 = vst [vmem:[#allocation2 + $0x7f8] sm:$0xff] 0.0
          %562 = vst [vmem:[#allocation2 + $0x800] sm:$0xff] 0.0
          %563 = vst [vmem:[#allocation2 + $0x808] sm:$0xff] 0.0
          %564 = vst [vmem:[#allocation2 + $0x810] sm:$0xff] 0.0
          %565 = vst [vmem:[#allocation2 + $0x818] sm:$0xff] 0.0
          %566 = vst [vmem:[#allocation2 + $0x820] sm:$0xff] 0.0
          %567 = vst [vmem:[#allocation2 + $0x828] sm:$0xff] 0.0
          %568 = vst [vmem:[#allocation2 + $0x830] sm:$0xff] 0.0
          %569 = vst [vmem:[#allocation2 + $0x838] sm:$0xff] 0.0
          %570 = vst [vmem:[#allocation2 + $0x840] sm:$0xff] 0.0
          %571 = vst [vmem:[#allocation2 + $0x848] sm:$0xff] 0.0
          %572 = vst [vmem:[#allocation2 + $0x850] sm:$0xff] 0.0
          %573 = vst [vmem:[#allocation2 + $0x858] sm:$0xff] 0.0
          %574 = vst [vmem:[#allocation2 + $0x860] sm:$0xff] 0.0
          %575 = vst [vmem:[#allocation2 + $0x868] sm:$0xff] 0.0
          %576 = vst [vmem:[#allocation2 + $0x870] sm:$0xff] 0.0
          %577 = vst [vmem:[#allocation2 + $0x878] sm:$0xff] 0.0
          %578 = vst [vmem:[#allocation2 + $0x880] sm:$0xff] 0.0
          %579 = vst [vmem:[#allocation2 + $0x888] sm:$0xff] 0.0
          %580 = vst [vmem:[#allocation2 + $0x890] sm:$0xff] 0.0
          %581 = vst [vmem:[#allocation2 + $0x898] sm:$0xff] 0.0
          %582 = vst [vmem:[#allocation2 + $0x8a0] sm:$0xff] 0.0
          %583 = vst [vmem:[#allocation2 + $0x8a8] sm:$0xff] 0.0
          %584 = vst [vmem:[#allocation2 + $0x8b0] sm:$0xff] 0.0
          %585 = vst [vmem:[#allocation2 + $0x8b8] sm:$0xff] 0.0
          %586 = vst [vmem:[#allocation2 + $0x8c0] sm:$0xff] 0.0
          %587 = vst [vmem:[#allocation2 + $0x8c8] sm:$0xff] 0.0
          %588 = vst [vmem:[#allocation2 + $0x8d0] sm:$0xff] 0.0
          %589 = vst [vmem:[#allocation2 + $0x8d8] sm:$0xff] 0.0
          %590 = vst [vmem:[#allocation2 + $0x8e0] sm:$0xff] 0.0
          %591 = vst [vmem:[#allocation2 + $0x8e8] sm:$0xff] 0.0
          %592 = vst [vmem:[#allocation2 + $0x8f0] sm:$0xff] 0.0
          %593 = vst [vmem:[#allocation2 + $0x8f8] sm:$0xff] 0.0
          %594 = vst [vmem:[#allocation2 + $0x900] sm:$0xff] 0.0
          %595 = vst [vmem:[#allocation2 + $0x908] sm:$0xff] 0.0
          %596 = vst [vmem:[#allocation2 + $0x910] sm:$0xff] 0.0
          %597 = vst [vmem:[#allocation2 + $0x918] sm:$0xff] 0.0
          %598 = vst [vmem:[#allocation2 + $0x920] sm:$0xff] 0.0
          %599 = vst [vmem:[#allocation2 + $0x928] sm:$0xff] 0.0
          %600 = vst [vmem:[#allocation2 + $0x930] sm:$0xff] 0.0
          %601 = vst [vmem:[#allocation2 + $0x938] sm:$0xff] 0.0
          %602 = vst [vmem:[#allocation2 + $0x940] sm:$0xff] 0.0
          %603 = vst [vmem:[#allocation2 + $0x948] sm:$0xff] 0.0
          %604 = vst [vmem:[#allocation2 + $0x950] sm:$0xff] 0.0
          %605 = vst [vmem:[#allocation2 + $0x958] sm:$0xff] 0.0
          %606 = vst [vmem:[#allocation2 + $0x960] sm:$0xff] 0.0
          %607 = vst [vmem:[#allocation2 + $0x968] sm:$0xff] 0.0
          %608 = vst [vmem:[#allocation2 + $0x970] sm:$0xff] 0.0
          %609 = vst [vmem:[#allocation2 + $0x978] sm:$0xff] 0.0
          %610 = vst [vmem:[#allocation2 + $0x980] sm:$0xff] 0.0
          %611 = vst [vmem:[#allocation2 + $0x988] sm:$0xff] 0.0
          %612 = vst [vmem:[#allocation2 + $0x990] sm:$0xff] 0.0
          %613 = vst [vmem:[#allocation2 + $0x998] sm:$0xff] 0.0
          %614 = vst [vmem:[#allocation2 + $0x9a0] sm:$0xff] 0.0
          %615 = vst [vmem:[#allocation2 + $0x9a8] sm:$0xff] 0.0
          %616 = vst [vmem:[#allocation2 + $0x9b0] sm:$0xff] 0.0
          %617 = vst [vmem:[#allocation2 + $0x9b8] sm:$0xff] 0.0
          %618 = vst [vmem:[#allocation2 + $0x9c0] sm:$0xff] 0.0
          %619 = vst [vmem:[#allocation2 + $0x9c8] sm:$0xff] 0.0
          %620 = vst [vmem:[#allocation2 + $0x9d0] sm:$0xff] 0.0
          %621 = vst [vmem:[#allocation2 + $0x9d8] sm:$0xff] 0.0
          %622 = vst [vmem:[#allocation2 + $0x9e0] sm:$0xff] 0.0
          %623 = vst [vmem:[#allocation2 + $0x9e8] sm:$0xff] 0.0
          %624 = vst [vmem:[#allocation2 + $0x9f0] sm:$0xff] 0.0
          %625 = vst [vmem:[#allocation2 + $0x9f8] sm:$0xff] 0.0
          %626 = vst [vmem:[#allocation2 + $0xa00] sm:$0xff] 0.0
          %627 = vst [vmem:[#allocation2 + $0xa08] sm:$0xff] 0.0
          %628 = vst [vmem:[#allocation2 + $0xa10] sm:$0xff] 0.0
          %629 = vst [vmem:[#allocation2 + $0xa18] sm:$0xff] 0.0
          %630 = vst [vmem:[#allocation2 + $0xa20] sm:$0xff] 0.0
          %631 = vst [vmem:[#allocation2 + $0xa28] sm:$0xff] 0.0
          %632 = vst [vmem:[#allocation2 + $0xa30] sm:$0xff] 0.0
          %633 = vst [vmem:[#allocation2 + $0xa38] sm:$0xff] 0.0
          %634 = vst [vmem:[#allocation2 + $0xa40] sm:$0xff] 0.0
          %635 = vst [vmem:[#allocation2 + $0xa48] sm:$0xff] 0.0
          %636 = vst [vmem:[#allocation2 + $0xa50] sm:$0xff] 0.0
          %637 = vst [vmem:[#allocation2 + $0xa58] sm:$0xff] 0.0
          %638 = vst [vmem:[#allocation2 + $0xa60] sm:$0xff] 0.0
          %639 = vst [vmem:[#allocation2 + $0xa68] sm:$0xff] 0.0
          %640 = vst [vmem:[#allocation2 + $0xa70] sm:$0xff] 0.0
          %641 = vst [vmem:[#allocation2 + $0xa78] sm:$0xff] 0.0
          %642 = vst [vmem:[#allocation2 + $0xa80] sm:$0xff] 0.0
          %643 = vst [vmem:[#allocation2 + $0xa88] sm:$0xff] 0.0
          %644 = vst [vmem:[#allocation2 + $0xa90] sm:$0xff] 0.0
          %645 = vst [vmem:[#allocation2 + $0xa98] sm:$0xff] 0.0
          %646 = vst [vmem:[#allocation2 + $0xaa0] sm:$0xff] 0.0
          %647 = vst [vmem:[#allocation2 + $0xaa8] sm:$0xff] 0.0
          %648 = vst [vmem:[#allocation2 + $0xab0] sm:$0xff] 0.0
          %649 = vst [vmem:[#allocation2 + $0xab8] sm:$0xff] 0.0
          %650 = vst [vmem:[#allocation2 + $0xac0] sm:$0xff] 0.0
          %651 = vst [vmem:[#allocation2 + $0xac8] sm:$0xff] 0.0
          %652 = vst [vmem:[#allocation2 + $0xad0] sm:$0xff] 0.0
          %653 = vst [vmem:[#allocation2 + $0xad8] sm:$0xff] 0.0
          %654 = vst [vmem:[#allocation2 + $0xae0] sm:$0xff] 0.0
          %655 = vst [vmem:[#allocation2 + $0xae8] sm:$0xff] 0.0
          %656 = vst [vmem:[#allocation2 + $0xaf0] sm:$0xff] 0.0
          %657 = vst [vmem:[#allocation2 + $0xaf8] sm:$0xff] 0.0
          %658 = vst [vmem:[#allocation2 + $0xb00] sm:$0xff] 0.0
          %659 = vst [vmem:[#allocation2 + $0xb08] sm:$0xff] 0.0
          %660 = vst [vmem:[#allocation2 + $0xb10] sm:$0xff] 0.0
          %661 = vst [vmem:[#allocation2 + $0xb18] sm:$0xff] 0.0
          %662 = vst [vmem:[#allocation2 + $0xb20] sm:$0xff] 0.0
          %663 = vst [vmem:[#allocation2 + $0xb28] sm:$0xff] 0.0
          %664 = vst [vmem:[#allocation2 + $0xb30] sm:$0xff] 0.0
          %665 = vst [vmem:[#allocation2 + $0xb38] sm:$0xff] 0.0
          %666 = vst [vmem:[#allocation2 + $0xb40] sm:$0xff] 0.0
          %667 = vst [vmem:[#allocation2 + $0xb48] sm:$0xff] 0.0
          %668 = vst [vmem:[#allocation2 + $0xb50] sm:$0xff] 0.0
          %669 = vst [vmem:[#allocation2 + $0xb58] sm:$0xff] 0.0
          %670 = vst [vmem:[#allocation2 + $0xb60] sm:$0xff] 0.0
          %671 = vst [vmem:[#allocation2 + $0xb68] sm:$0xff] 0.0
          %672 = vst [vmem:[#allocation2 + $0xb70] sm:$0xff] 0.0
          %673 = vst [vmem:[#allocation2 + $0xb78] sm:$0xff] 0.0
          %674 = vst [vmem:[#allocation2 + $0xb80] sm:$0xff] 0.0
          %675 = vst [vmem:[#allocation2 + $0xb88] sm:$0xff] 0.0
          %676 = vst [vmem:[#allocation2 + $0xb90] sm:$0xff] 0.0
          %677 = vst [vmem:[#allocation2 + $0xb98] sm:$0xff] 0.0
          %678 = vst [vmem:[#allocation2 + $0xba0] sm:$0xff] 0.0
          %679 = vst [vmem:[#allocation2 + $0xba8] sm:$0xff] 0.0
          %680 = vst [vmem:[#allocation2 + $0xbb0] sm:$0xff] 0.0
          %681 = vst [vmem:[#allocation2 + $0xbb8] sm:$0xff] 0.0
          %682 = vst [vmem:[#allocation2 + $0xbc0] sm:$0xff] 0.0
          %683 = vst [vmem:[#allocation2 + $0xbc8] sm:$0xff] 0.0
          %684 = vst [vmem:[#allocation2 + $0xbd0] sm:$0xff] 0.0
          %685 = vst [vmem:[#allocation2 + $0xbd8] sm:$0xff] 0.0
          %686 = vst [vmem:[#allocation2 + $0xbe0] sm:$0xff] 0.0
          %687 = vst [vmem:[#allocation2 + $0xbe8] sm:$0xff] 0.0
          %688 = vst [vmem:[#allocation2 + $0xbf0] sm:$0xff] 0.0
          %689 = vst [vmem:[#allocation2 + $0xbf8] sm:$0xff] 0.0
        $region48: #{tpu_custom_call.1} parent=31 // pred_fallthru
          _
        %v690 = vld [vmem:[#allocation2] sm:$0xff]
        %v691 = vld [vmem:[#allocation2 + $0x8] sm:$0xff]
        %v692 = vld [vmem:[#allocation2 + $0x10] sm:$0xff]
        %v693 = vld [vmem:[#allocation2 + $0x18] sm:$0xff]
        %v694 = vld [vmem:[#allocation2 + $0x20] sm:$0xff]
        %v695 = vld [vmem:[#allocation2 + $0x28] sm:$0xff]
        %v696 = vld [vmem:[#allocation2 + $0x30] sm:$0xff]
        %v697 = vld [vmem:[#allocation2 + $0x38] sm:$0xff]
        %v698 = vld [vmem:[#allocation2 + $0x40] sm:$0xff]
        %v699 = vld [vmem:[#allocation2 + $0x48] sm:$0xff]
        %v700 = vld [vmem:[#allocation2 + $0x50] sm:$0xff]
        %v701 = vld [vmem:[#allocation2 + $0x58] sm:$0xff]
        %v702 = vld [vmem:[#allocation2 + $0x60] sm:$0xff]
        %v703 = vld [vmem:[#allocation2 + $0x68] sm:$0xff]
        %v704 = vld [vmem:[#allocation2 + $0x70] sm:$0xff]
        %v705 = vld [vmem:[#allocation2 + $0x78] sm:$0xff]
        %v706 = vld [vmem:[#allocation2 + $0x80] sm:$0xff]
        %v707 = vld [vmem:[#allocation2 + $0x88] sm:$0xff]
        %v708 = vld [vmem:[#allocation2 + $0x90] sm:$0xff]
        %v709 = vld [vmem:[#allocation2 + $0x98] sm:$0xff]
        %v710 = vld [vmem:[#allocation2 + $0xa0] sm:$0xff]
        %v711 = vld [vmem:[#allocation2 + $0xa8] sm:$0xff]
        %v712 = vld [vmem:[#allocation2 + $0xb0] sm:$0xff]
        %v713 = vld [vmem:[#allocation2 + $0xb8] sm:$0xff]
        %v714 = vld [vmem:[#allocation2 + $0xc0] sm:$0xff]
        %v715 = vld [vmem:[#allocation2 + $0xc8] sm:$0xff]
        %v716 = vld [vmem:[#allocation2 + $0xd0] sm:$0xff]
        %v717 = vld [vmem:[#allocation2 + $0xd8] sm:$0xff]
        %v718 = vld [vmem:[#allocation2 + $0xe0] sm:$0xff]
        %v719 = vld [vmem:[#allocation2 + $0xe8] sm:$0xff]
        %v720 = vld [vmem:[#allocation2 + $0xf0] sm:$0xff]
        %v721 = vld [vmem:[#allocation2 + $0xf8] sm:$0xff]
        %v722 = vld [vmem:[#allocation2 + $0x100] sm:$0xff]
        %v723 = vld [vmem:[#allocation2 + $0x108] sm:$0xff]
        %v724 = vld [vmem:[#allocation2 + $0x110] sm:$0xff]
        %v725 = vld [vmem:[#allocation2 + $0x118] sm:$0xff]
        %v726 = vld [vmem:[#allocation2 + $0x120] sm:$0xff]
        %v727 = vld [vmem:[#allocation2 + $0x128] sm:$0xff]
        %v728 = vld [vmem:[#allocation2 + $0x130] sm:$0xff]
        %v729 = vld [vmem:[#allocation2 + $0x138] sm:$0xff]
        %v730 = vld [vmem:[#allocation2 + $0x140] sm:$0xff]
        %v731 = vld [vmem:[#allocation2 + $0x148] sm:$0xff]
        %v732 = vld [vmem:[#allocation2 + $0x150] sm:$0xff]
        %v733 = vld [vmem:[#allocation2 + $0x158] sm:$0xff]
        %v734 = vld [vmem:[#allocation2 + $0x160] sm:$0xff]
        %v735 = vld [vmem:[#allocation2 + $0x168] sm:$0xff]
        %v736 = vld [vmem:[#allocation2 + $0x170] sm:$0xff]
        %v737 = vld [vmem:[#allocation2 + $0x178] sm:$0xff]
        %v738 = vld [vmem:[#allocation2 + $0x180] sm:$0xff]
        %v739 = vld [vmem:[#allocation2 + $0x188] sm:$0xff]
        %v740 = vld [vmem:[#allocation2 + $0x190] sm:$0xff]
        %v741 = vld [vmem:[#allocation2 + $0x198] sm:$0xff]
        %v742 = vld [vmem:[#allocation2 + $0x1a0] sm:$0xff]
        %v743 = vld [vmem:[#allocation2 + $0x1a8] sm:$0xff]
        %v744 = vld [vmem:[#allocation2 + $0x1b0] sm:$0xff]
        %v745 = vld [vmem:[#allocation2 + $0x1b8] sm:$0xff]
        %v746 = vld [vmem:[#allocation2 + $0x1c0] sm:$0xff]
        %v747 = vld [vmem:[#allocation2 + $0x1c8] sm:$0xff]
        %v748 = vld [vmem:[#allocation2 + $0x1d0] sm:$0xff]
        %v749 = vld [vmem:[#allocation2 + $0x1d8] sm:$0xff]
        %v750 = vld [vmem:[#allocation2 + $0x1e0] sm:$0xff]
        %v751 = vld [vmem:[#allocation2 + $0x1e8] sm:$0xff]
        %v752 = vld [vmem:[#allocation2 + $0x1f0] sm:$0xff]
        %v753 = vld [vmem:[#allocation2 + $0x1f8] sm:$0xff]
        %v754 = vld [vmem:[#allocation2 + $0x200] sm:$0xff]
        %v755 = vld [vmem:[#allocation2 + $0x208] sm:$0xff]
        %v756 = vld [vmem:[#allocation2 + $0x210] sm:$0xff]
        %v757 = vld [vmem:[#allocation2 + $0x218] sm:$0xff]
        %v758 = vld [vmem:[#allocation2 + $0x220] sm:$0xff]
        %v759 = vld [vmem:[#allocation2 + $0x228] sm:$0xff]
        %v760 = vld [vmem:[#allocation2 + $0x230] sm:$0xff]
        %v761 = vld [vmem:[#allocation2 + $0x238] sm:$0xff]
        %v762 = vld [vmem:[#allocation2 + $0x240] sm:$0xff]
        %v763 = vld [vmem:[#allocation2 + $0x248] sm:$0xff]
        %v764 = vld [vmem:[#allocation2 + $0x250] sm:$0xff]
        %v765 = vld [vmem:[#allocation2 + $0x258] sm:$0xff]
        %v766 = vld [vmem:[#allocation2 + $0x260] sm:$0xff]
        %v767 = vld [vmem:[#allocation2 + $0x268] sm:$0xff]
        %v768 = vld [vmem:[#allocation2 + $0x270] sm:$0xff]
        %v769 = vld [vmem:[#allocation2 + $0x278] sm:$0xff]
        %v770 = vld [vmem:[#allocation2 + $0x280] sm:$0xff]
        %v771 = vld [vmem:[#allocation2 + $0x288] sm:$0xff]
        %v772 = vld [vmem:[#allocation2 + $0x290] sm:$0xff]
        %v773 = vld [vmem:[#allocation2 + $0x298] sm:$0xff]
        %v774 = vld [vmem:[#allocation2 + $0x2a0] sm:$0xff]
        %v775 = vld [vmem:[#allocation2 + $0x2a8] sm:$0xff]
        %v776 = vld [vmem:[#allocation2 + $0x2b0] sm:$0xff]
        %v777 = vld [vmem:[#allocation2 + $0x2b8] sm:$0xff]
        %v778 = vld [vmem:[#allocation2 + $0x2c0] sm:$0xff]
        %v779 = vld [vmem:[#allocation2 + $0x2c8] sm:$0xff]
        %v780 = vld [vmem:[#allocation2 + $0x2d0] sm:$0xff]
        %v781 = vld [vmem:[#allocation2 + $0x2d8] sm:$0xff]
        %v782 = vld [vmem:[#allocation2 + $0x2e0] sm:$0xff]
        %v783 = vld [vmem:[#allocation2 + $0x2e8] sm:$0xff]
        %v784 = vld [vmem:[#allocation2 + $0x2f0] sm:$0xff]
        %v785 = vld [vmem:[#allocation2 + $0x2f8] sm:$0xff]
        %v786 = vld [vmem:[#allocation2 + $0x300] sm:$0xff]
        %v787 = vld [vmem:[#allocation2 + $0x308] sm:$0xff]
        %v788 = vld [vmem:[#allocation2 + $0x310] sm:$0xff]
        %v789 = vld [vmem:[#allocation2 + $0x318] sm:$0xff]
        %v790 = vld [vmem:[#allocation2 + $0x320] sm:$0xff]
        %v791 = vld [vmem:[#allocation2 + $0x328] sm:$0xff]
        %v792 = vld [vmem:[#allocation2 + $0x330] sm:$0xff]
        %v793 = vld [vmem:[#allocation2 + $0x338] sm:$0xff]
        %v794 = vld [vmem:[#allocation2 + $0x340] sm:$0xff]
        %v795 = vld [vmem:[#allocation2 + $0x348] sm:$0xff]
        %v796 = vld [vmem:[#allocation2 + $0x350] sm:$0xff]
        %v797 = vld [vmem:[#allocation2 + $0x358] sm:$0xff]
        %v798 = vld [vmem:[#allocation2 + $0x360] sm:$0xff]
        %v799 = vld [vmem:[#allocation2 + $0x368] sm:$0xff]
        %v800 = vld [vmem:[#allocation2 + $0x370] sm:$0xff]
        %v801 = vld [vmem:[#allocation2 + $0x378] sm:$0xff]
        %v802 = vld [vmem:[#allocation2 + $0x380] sm:$0xff]
        %v803 = vld [vmem:[#allocation2 + $0x388] sm:$0xff]
        %v804 = vld [vmem:[#allocation2 + $0x390] sm:$0xff]
        %v805 = vld [vmem:[#allocation2 + $0x398] sm:$0xff]
        %v806 = vld [vmem:[#allocation2 + $0x3a0] sm:$0xff]
        %v807 = vld [vmem:[#allocation2 + $0x3a8] sm:$0xff]
        %v808 = vld [vmem:[#allocation2 + $0x3b0] sm:$0xff]
        %v809 = vld [vmem:[#allocation2 + $0x3b8] sm:$0xff]
        %v810 = vld [vmem:[#allocation2 + $0x3c0] sm:$0xff]
        %v811 = vld [vmem:[#allocation2 + $0x3c8] sm:$0xff]
        %v812 = vld [vmem:[#allocation2 + $0x3d0] sm:$0xff]
        %v813 = vld [vmem:[#allocation2 + $0x3d8] sm:$0xff]
        %v814 = vld [vmem:[#allocation2 + $0x3e0] sm:$0xff]
        %v815 = vld [vmem:[#allocation2 + $0x3e8] sm:$0xff]
        %v816 = vld [vmem:[#allocation2 + $0x3f0] sm:$0xff]
        %v817 = vld [vmem:[#allocation2 + $0x3f8] sm:$0xff]
        %v818 = vld [vmem:[#allocation2 + $0x400] sm:$0xff]
        %v819 = vld [vmem:[#allocation2 + $0x408] sm:$0xff]
        %v820 = vld [vmem:[#allocation2 + $0x410] sm:$0xff]
        %v821 = vld [vmem:[#allocation2 + $0x418] sm:$0xff]
        %v822 = vld [vmem:[#allocation2 + $0x420] sm:$0xff]
        %v823 = vld [vmem:[#allocation2 + $0x428] sm:$0xff]
        %v824 = vld [vmem:[#allocation2 + $0x430] sm:$0xff]
        %v825 = vld [vmem:[#allocation2 + $0x438] sm:$0xff]
        %v826 = vld [vmem:[#allocation2 + $0x440] sm:$0xff]
        %v827 = vld [vmem:[#allocation2 + $0x448] sm:$0xff]
        %v828 = vld [vmem:[#allocation2 + $0x450] sm:$0xff]
        %v829 = vld [vmem:[#allocation2 + $0x458] sm:$0xff]
        %v830 = vld [vmem:[#allocation2 + $0x460] sm:$0xff]
        %v831 = vld [vmem:[#allocation2 + $0x468] sm:$0xff]
        %v832 = vld [vmem:[#allocation2 + $0x470] sm:$0xff]
        %v833 = vld [vmem:[#allocation2 + $0x478] sm:$0xff]
        %v834 = vld [vmem:[#allocation2 + $0x480] sm:$0xff]
        %v835 = vld [vmem:[#allocation2 + $0x488] sm:$0xff]
        %v836 = vld [vmem:[#allocation2 + $0x490] sm:$0xff]
        %v837 = vld [vmem:[#allocation2 + $0x498] sm:$0xff]
        %v838 = vld [vmem:[#allocation2 + $0x4a0] sm:$0xff]
        %v839 = vld [vmem:[#allocation2 + $0x4a8] sm:$0xff]
        %v840 = vld [vmem:[#allocation2 + $0x4b0] sm:$0xff]
        %v841 = vld [vmem:[#allocation2 + $0x4b8] sm:$0xff]
        %v842 = vld [vmem:[#allocation2 + $0x4c0] sm:$0xff]
        %v843 = vld [vmem:[#allocation2 + $0x4c8] sm:$0xff]
        %v844 = vld [vmem:[#allocation2 + $0x4d0] sm:$0xff]
        %v845 = vld [vmem:[#allocation2 + $0x4d8] sm:$0xff]
        %v846 = vld [vmem:[#allocation2 + $0x4e0] sm:$0xff]
        %v847 = vld [vmem:[#allocation2 + $0x4e8] sm:$0xff]
        %v848 = vld [vmem:[#allocation2 + $0x4f0] sm:$0xff]
        %v849 = vld [vmem:[#allocation2 + $0x4f8] sm:$0xff]
        %v850 = vld [vmem:[#allocation2 + $0x500] sm:$0xff]
        %v851 = vld [vmem:[#allocation2 + $0x508] sm:$0xff]
        %v852 = vld [vmem:[#allocation2 + $0x510] sm:$0xff]
        %v853 = vld [vmem:[#allocation2 + $0x518] sm:$0xff]
        %v854 = vld [vmem:[#allocation2 + $0x520] sm:$0xff]
        %v855 = vld [vmem:[#allocation2 + $0x528] sm:$0xff]
        %v856 = vld [vmem:[#allocation2 + $0x530] sm:$0xff]
        %v857 = vld [vmem:[#allocation2 + $0x538] sm:$0xff]
        %v858 = vld [vmem:[#allocation2 + $0x540] sm:$0xff]
        %v859 = vld [vmem:[#allocation2 + $0x548] sm:$0xff]
        %v860 = vld [vmem:[#allocation2 + $0x550] sm:$0xff]
        %v861 = vld [vmem:[#allocation2 + $0x558] sm:$0xff]
        %v862 = vld [vmem:[#allocation2 + $0x560] sm:$0xff]
        %v863 = vld [vmem:[#allocation2 + $0x568] sm:$0xff]
        %v864 = vld [vmem:[#allocation2 + $0x570] sm:$0xff]
        %v865 = vld [vmem:[#allocation2 + $0x578] sm:$0xff]
        %v866 = vld [vmem:[#allocation2 + $0x580] sm:$0xff]
        %v867 = vld [vmem:[#allocation2 + $0x588] sm:$0xff]
        %v868 = vld [vmem:[#allocation2 + $0x590] sm:$0xff]
        %v869 = vld [vmem:[#allocation2 + $0x598] sm:$0xff]
        %v870 = vld [vmem:[#allocation2 + $0x5a0] sm:$0xff]
        %v871 = vld [vmem:[#allocation2 + $0x5a8] sm:$0xff]
        %v872 = vld [vmem:[#allocation2 + $0x5b0] sm:$0xff]
        %v873 = vld [vmem:[#allocation2 + $0x5b8] sm:$0xff]
        %v874 = vld [vmem:[#allocation2 + $0x5c0] sm:$0xff]
        %v875 = vld [vmem:[#allocation2 + $0x5c8] sm:$0xff]
        %v876 = vld [vmem:[#allocation2 + $0x5d0] sm:$0xff]
        %v877 = vld [vmem:[#allocation2 + $0x5d8] sm:$0xff]
        %v878 = vld [vmem:[#allocation2 + $0x5e0] sm:$0xff]
        %v879 = vld [vmem:[#allocation2 + $0x5e8] sm:$0xff]
        %v880 = vld [vmem:[#allocation2 + $0x5f0] sm:$0xff]
        %v881 = vld [vmem:[#allocation2 + $0x5f8] sm:$0xff]
        %v882 = vld [vmem:[#allocation2 + $0x600] sm:$0xff]
        %v883 = vld [vmem:[#allocation2 + $0x608] sm:$0xff]
        %v884 = vld [vmem:[#allocation2 + $0x610] sm:$0xff]
        %v885 = vld [vmem:[#allocation2 + $0x618] sm:$0xff]
        %v886 = vld [vmem:[#allocation2 + $0x620] sm:$0xff]
        %v887 = vld [vmem:[#allocation2 + $0x628] sm:$0xff]
        %v888 = vld [vmem:[#allocation2 + $0x630] sm:$0xff]
        %v889 = vld [vmem:[#allocation2 + $0x638] sm:$0xff]
        %v890 = vld [vmem:[#allocation2 + $0x640] sm:$0xff]
        %v891 = vld [vmem:[#allocation2 + $0x648] sm:$0xff]
        %v892 = vld [vmem:[#allocation2 + $0x650] sm:$0xff]
        %v893 = vld [vmem:[#allocation2 + $0x658] sm:$0xff]
        %v894 = vld [vmem:[#allocation2 + $0x660] sm:$0xff]
        %v895 = vld [vmem:[#allocation2 + $0x668] sm:$0xff]
        %v896 = vld [vmem:[#allocation2 + $0x670] sm:$0xff]
        %v897 = vld [vmem:[#allocation2 + $0x678] sm:$0xff]
        %v898 = vld [vmem:[#allocation2 + $0x680] sm:$0xff]
        %v899 = vld [vmem:[#allocation2 + $0x688] sm:$0xff]
        %v900 = vld [vmem:[#allocation2 + $0x690] sm:$0xff]
        %v901 = vld [vmem:[#allocation2 + $0x698] sm:$0xff]
        %v902 = vld [vmem:[#allocation2 + $0x6a0] sm:$0xff]
        %v903 = vld [vmem:[#allocation2 + $0x6a8] sm:$0xff]
        %v904 = vld [vmem:[#allocation2 + $0x6b0] sm:$0xff]
        %v905 = vld [vmem:[#allocation2 + $0x6b8] sm:$0xff]
        %v906 = vld [vmem:[#allocation2 + $0x6c0] sm:$0xff]
        %v907 = vld [vmem:[#allocation2 + $0x6c8] sm:$0xff]
        %v908 = vld [vmem:[#allocation2 + $0x6d0] sm:$0xff]
        %v909 = vld [vmem:[#allocation2 + $0x6d8] sm:$0xff]
        %v910 = vld [vmem:[#allocation2 + $0x6e0] sm:$0xff]
        %v911 = vld [vmem:[#allocation2 + $0x6e8] sm:$0xff]
        %v912 = vld [vmem:[#allocation2 + $0x6f0] sm:$0xff]
        %v913 = vld [vmem:[#allocation2 + $0x6f8] sm:$0xff]
        %v914 = vld [vmem:[#allocation2 + $0x700] sm:$0xff]
        %v915 = vld [vmem:[#allocation2 + $0x708] sm:$0xff]
        %v916 = vld [vmem:[#allocation2 + $0x710] sm:$0xff]
        %v917 = vld [vmem:[#allocation2 + $0x718] sm:$0xff]
        %v918 = vld [vmem:[#allocation2 + $0x720] sm:$0xff]
        %v919 = vld [vmem:[#allocation2 + $0x728] sm:$0xff]
        %v920 = vld [vmem:[#allocation2 + $0x730] sm:$0xff]
        %v921 = vld [vmem:[#allocation2 + $0x738] sm:$0xff]
        %v922 = vld [vmem:[#allocation2 + $0x740] sm:$0xff]
        %v923 = vld [vmem:[#allocation2 + $0x748] sm:$0xff]
        %v924 = vld [vmem:[#allocation2 + $0x750] sm:$0xff]
        %v925 = vld [vmem:[#allocation2 + $0x758] sm:$0xff]
        %v926 = vld [vmem:[#allocation2 + $0x760] sm:$0xff]
        %v927 = vld [vmem:[#allocation2 + $0x768] sm:$0xff]
        %v928 = vld [vmem:[#allocation2 + $0x770] sm:$0xff]
        %v929 = vld [vmem:[#allocation2 + $0x778] sm:$0xff]
        %v930 = vld [vmem:[#allocation2 + $0x780] sm:$0xff]
        %v931 = vld [vmem:[#allocation2 + $0x788] sm:$0xff]
        %v932 = vld [vmem:[#allocation2 + $0x790] sm:$0xff]
        %v933 = vld [vmem:[#allocation2 + $0x798] sm:$0xff]
        %v934 = vld [vmem:[#allocation2 + $0x7a0] sm:$0xff]
        %v935 = vld [vmem:[#allocation2 + $0x7a8] sm:$0xff]
        %v936 = vld [vmem:[#allocation2 + $0x7b0] sm:$0xff]
        %v937 = vld [vmem:[#allocation2 + $0x7b8] sm:$0xff]
        %v938 = vld [vmem:[#allocation2 + $0x7c0] sm:$0xff]
        %v939 = vld [vmem:[#allocation2 + $0x7c8] sm:$0xff]
        %v940 = vld [vmem:[#allocation2 + $0x7d0] sm:$0xff]
        %v941 = vld [vmem:[#allocation2 + $0x7d8] sm:$0xff]
        %v942 = vld [vmem:[#allocation2 + $0x7e0] sm:$0xff]
        %v943 = vld [vmem:[#allocation2 + $0x7e8] sm:$0xff]
        %v944 = vld [vmem:[#allocation2 + $0x7f0] sm:$0xff]
        %v945 = vld [vmem:[#allocation2 + $0x7f8] sm:$0xff]
        %v946 = vld [vmem:[#allocation2 + $0x800] sm:$0xff]
        %v947 = vld [vmem:[#allocation2 + $0x808] sm:$0xff]
        %v948 = vld [vmem:[#allocation2 + $0x810] sm:$0xff]
        %v949 = vld [vmem:[#allocation2 + $0x818] sm:$0xff]
        %v950 = vld [vmem:[#allocation2 + $0x820] sm:$0xff]
        %v951 = vld [vmem:[#allocation2 + $0x828] sm:$0xff]
        %v952 = vld [vmem:[#allocation2 + $0x830] sm:$0xff]
        %v953 = vld [vmem:[#allocation2 + $0x838] sm:$0xff]
        %v954 = vld [vmem:[#allocation2 + $0x840] sm:$0xff]
        %v955 = vld [vmem:[#allocation2 + $0x848] sm:$0xff]
        %v956 = vld [vmem:[#allocation2 + $0x850] sm:$0xff]
        %v957 = vld [vmem:[#allocation2 + $0x858] sm:$0xff]
        %v958 = vld [vmem:[#allocation2 + $0x860] sm:$0xff]
        %v959 = vld [vmem:[#allocation2 + $0x868] sm:$0xff]
        %v960 = vld [vmem:[#allocation2 + $0x870] sm:$0xff]
        %v961 = vld [vmem:[#allocation2 + $0x878] sm:$0xff]
        %v962 = vld [vmem:[#allocation2 + $0x880] sm:$0xff]
        %v963 = vld [vmem:[#allocation2 + $0x888] sm:$0xff]
        %v964 = vld [vmem:[#allocation2 + $0x890] sm:$0xff]
        %v965 = vld [vmem:[#allocation2 + $0x898] sm:$0xff]
        %v966 = vld [vmem:[#allocation2 + $0x8a0] sm:$0xff]
        %v967 = vld [vmem:[#allocation2 + $0x8a8] sm:$0xff]
        %v968 = vld [vmem:[#allocation2 + $0x8b0] sm:$0xff]
        %v969 = vld [vmem:[#allocation2 + $0x8b8] sm:$0xff]
        %v970 = vld [vmem:[#allocation2 + $0x8c0] sm:$0xff]
        %v971 = vld [vmem:[#allocation2 + $0x8c8] sm:$0xff]
        %v972 = vld [vmem:[#allocation2 + $0x8d0] sm:$0xff]
        %v973 = vld [vmem:[#allocation2 + $0x8d8] sm:$0xff]
        %v974 = vld [vmem:[#allocation2 + $0x8e0] sm:$0xff]
        %v975 = vld [vmem:[#allocation2 + $0x8e8] sm:$0xff]
        %v976 = vld [vmem:[#allocation2 + $0x8f0] sm:$0xff]
        %v977 = vld [vmem:[#allocation2 + $0x8f8] sm:$0xff]
        %v978 = vld [vmem:[#allocation2 + $0x900] sm:$0xff]
        %v979 = vld [vmem:[#allocation2 + $0x908] sm:$0xff]
        %v980 = vld [vmem:[#allocation2 + $0x910] sm:$0xff]
        %v981 = vld [vmem:[#allocation2 + $0x918] sm:$0xff]
        %v982 = vld [vmem:[#allocation2 + $0x920] sm:$0xff]
        %v983 = vld [vmem:[#allocation2 + $0x928] sm:$0xff]
        %v984 = vld [vmem:[#allocation2 + $0x930] sm:$0xff]
        %v985 = vld [vmem:[#allocation2 + $0x938] sm:$0xff]
        %v986 = vld [vmem:[#allocation2 + $0x940] sm:$0xff]
        %v987 = vld [vmem:[#allocation2 + $0x948] sm:$0xff]
        %v988 = vld [vmem:[#allocation2 + $0x950] sm:$0xff]
        %v989 = vld [vmem:[#allocation2 + $0x958] sm:$0xff]
        %v990 = vld [vmem:[#allocation2 + $0x960] sm:$0xff]
        %v991 = vld [vmem:[#allocation2 + $0x968] sm:$0xff]
        %v992 = vld [vmem:[#allocation2 + $0x970] sm:$0xff]
        %v993 = vld [vmem:[#allocation2 + $0x978] sm:$0xff]
        %v994 = vld [vmem:[#allocation2 + $0x980] sm:$0xff]
        %v995 = vld [vmem:[#allocation2 + $0x988] sm:$0xff]
        %v996 = vld [vmem:[#allocation2 + $0x990] sm:$0xff]
        %v997 = vld [vmem:[#allocation2 + $0x998] sm:$0xff]
        %v998 = vld [vmem:[#allocation2 + $0x9a0] sm:$0xff]
        %v999 = vld [vmem:[#allocation2 + $0x9a8] sm:$0xff]
        %v1000 = vld [vmem:[#allocation2 + $0x9b0] sm:$0xff]
        %v1001 = vld [vmem:[#allocation2 + $0x9b8] sm:$0xff]
        %v1002 = vld [vmem:[#allocation2 + $0x9c0] sm:$0xff]
        %v1003 = vld [vmem:[#allocation2 + $0x9c8] sm:$0xff]
        %v1004 = vld [vmem:[#allocation2 + $0x9d0] sm:$0xff]
        %v1005 = vld [vmem:[#allocation2 + $0x9d8] sm:$0xff]
        %v1006 = vld [vmem:[#allocation2 + $0x9e0] sm:$0xff]
        %v1007 = vld [vmem:[#allocation2 + $0x9e8] sm:$0xff]
        %v1008 = vld [vmem:[#allocation2 + $0x9f0] sm:$0xff]
        %v1009 = vld [vmem:[#allocation2 + $0x9f8] sm:$0xff]
        %v1010 = vld [vmem:[#allocation2 + $0xa00] sm:$0xff]
        %v1011 = vld [vmem:[#allocation2 + $0xa08] sm:$0xff]
        %v1012 = vld [vmem:[#allocation2 + $0xa10] sm:$0xff]
        %v1013 = vld [vmem:[#allocation2 + $0xa18] sm:$0xff]
        %v1014 = vld [vmem:[#allocation2 + $0xa20] sm:$0xff]
        %v1015 = vld [vmem:[#allocation2 + $0xa28] sm:$0xff]
        %v1016 = vld [vmem:[#allocation2 + $0xa30] sm:$0xff]
        %v1017 = vld [vmem:[#allocation2 + $0xa38] sm:$0xff]
        %v1018 = vld [vmem:[#allocation2 + $0xa40] sm:$0xff]
        %v1019 = vld [vmem:[#allocation2 + $0xa48] sm:$0xff]
        %v1020 = vld [vmem:[#allocation2 + $0xa50] sm:$0xff]
        %v1021 = vld [vmem:[#allocation2 + $0xa58] sm:$0xff]
        %v1022 = vld [vmem:[#allocation2 + $0xa60] sm:$0xff]
        %v1023 = vld [vmem:[#allocation2 + $0xa68] sm:$0xff]
        %v1024 = vld [vmem:[#allocation2 + $0xa70] sm:$0xff]
        %v1025 = vld [vmem:[#allocation2 + $0xa78] sm:$0xff]
        %v1026 = vld [vmem:[#allocation2 + $0xa80] sm:$0xff]
        %v1027 = vld [vmem:[#allocation2 + $0xa88] sm:$0xff]
        %v1028 = vld [vmem:[#allocation2 + $0xa90] sm:$0xff]
        %v1029 = vld [vmem:[#allocation2 + $0xa98] sm:$0xff]
        %v1030 = vld [vmem:[#allocation2 + $0xaa0] sm:$0xff]
        %v1031 = vld [vmem:[#allocation2 + $0xaa8] sm:$0xff]
        %v1032 = vld [vmem:[#allocation2 + $0xab0] sm:$0xff]
        %v1033 = vld [vmem:[#allocation2 + $0xab8] sm:$0xff]
        %v1034 = vld [vmem:[#allocation2 + $0xac0] sm:$0xff]
        %v1035 = vld [vmem:[#allocation2 + $0xac8] sm:$0xff]
        %v1036 = vld [vmem:[#allocation2 + $0xad0] sm:$0xff]
        %v1037 = vld [vmem:[#allocation2 + $0xad8] sm:$0xff]
        %v1038 = vld [vmem:[#allocation2 + $0xae0] sm:$0xff]
        %v1039 = vld [vmem:[#allocation2 + $0xae8] sm:$0xff]
        %v1040 = vld [vmem:[#allocation2 + $0xaf0] sm:$0xff]
        %v1041 = vld [vmem:[#allocation2 + $0xaf8] sm:$0xff]
        %v1042 = vld [vmem:[#allocation2 + $0xb00] sm:$0xff]
        %v1043 = vld [vmem:[#allocation2 + $0xb08] sm:$0xff]
        %v1044 = vld [vmem:[#allocation2 + $0xb10] sm:$0xff]
        %v1045 = vld [vmem:[#allocation2 + $0xb18] sm:$0xff]
        %v1046 = vld [vmem:[#allocation2 + $0xb20] sm:$0xff]
        %v1047 = vld [vmem:[#allocation2 + $0xb28] sm:$0xff]
        %v1048 = vld [vmem:[#allocation2 + $0xb30] sm:$0xff]
        %v1049 = vld [vmem:[#allocation2 + $0xb38] sm:$0xff]
        %v1050 = vld [vmem:[#allocation2 + $0xb40] sm:$0xff]
        %v1051 = vld [vmem:[#allocation2 + $0xb48] sm:$0xff]
        %v1052 = vld [vmem:[#allocation2 + $0xb50] sm:$0xff]
        %v1053 = vld [vmem:[#allocation2 + $0xb58] sm:$0xff]
        %v1054 = vld [vmem:[#allocation2 + $0xb60] sm:$0xff]
        %v1055 = vld [vmem:[#allocation2 + $0xb68] sm:$0xff]
        %v1056 = vld [vmem:[#allocation2 + $0xb70] sm:$0xff]
        %v1057 = vld [vmem:[#allocation2 + $0xb78] sm:$0xff]
        %v1058 = vld [vmem:[#allocation2 + $0xb80] sm:$0xff]
        %v1059 = vld [vmem:[#allocation2 + $0xb88] sm:$0xff]
        %v1060 = vld [vmem:[#allocation2 + $0xb90] sm:$0xff]
        %v1061 = vld [vmem:[#allocation2 + $0xb98] sm:$0xff]
        %v1062 = vld [vmem:[#allocation2 + $0xba0] sm:$0xff]
        %v1063 = vld [vmem:[#allocation2 + $0xba8] sm:$0xff]
        %v1064 = vld [vmem:[#allocation2 + $0xbb0] sm:$0xff]
        %v1065 = vld [vmem:[#allocation2 + $0xbb8] sm:$0xff]
        %v1066 = vld [vmem:[#allocation2 + $0xbc0] sm:$0xff]
        %v1067 = vld [vmem:[#allocation2 + $0xbc8] sm:$0xff]
        %v1068 = vld [vmem:[#allocation2 + $0xbd0] sm:$0xff]
        %v1069 = vld [vmem:[#allocation2 + $0xbd8] sm:$0xff]
        %v1070 = vld [vmem:[#allocation2 + $0xbe0] sm:$0xff]
        %v1071 = vld [vmem:[#allocation2 + $0xbe8] sm:$0xff]
        %v1072 = vld [vmem:[#allocation2 + $0xbf0] sm:$0xff]
        %v1073 = vld [vmem:[#allocation2 + $0xbf8] sm:$0xff]
        %v1074 = vld [vmem:[%s244] sm:$0xff]
        %v1075 = vld [vmem:[%s244 + $0x8] sm:$0xff]
        %v1076 = vld [vmem:[%s244 + $0x10] sm:$0xff]
        %v1077 = vld [vmem:[%s244 + $0x18] sm:$0xff]
        %v1078 = vld [vmem:[%s244 + $0x20] sm:$0xff]
        %v1079 = vld [vmem:[%s244 + $0x28] sm:$0xff]
        %v1080 = vld [vmem:[%s244 + $0x30] sm:$0xff]
        %v1081 = vld [vmem:[%s244 + $0x38] sm:$0xff]
        %v1082 = vld [vmem:[%s244 + $0x40] sm:$0xff]
        %v1083 = vld [vmem:[%s244 + $0x48] sm:$0xff]
        %v1084 = vld [vmem:[%s244 + $0x50] sm:$0xff]
        %v1085 = vld [vmem:[%s244 + $0x58] sm:$0xff]
        %v1086 = vld [vmem:[%s244 + $0x60] sm:$0xff]
        %v1087 = vld [vmem:[%s244 + $0x68] sm:$0xff]
        %v1088 = vld [vmem:[%s244 + $0x70] sm:$0xff]
        %v1089 = vld [vmem:[%s244 + $0x78] sm:$0xff]
        %v1090 = vld [vmem:[%s244 + $0x80] sm:$0xff]
        %v1091 = vld [vmem:[%s244 + $0x88] sm:$0xff]
        %v1092 = vld [vmem:[%s244 + $0x90] sm:$0xff]
        %v1093 = vld [vmem:[%s244 + $0x98] sm:$0xff]
        %v1094 = vld [vmem:[%s244 + $0xa0] sm:$0xff]
        %v1095 = vld [vmem:[%s244 + $0xa8] sm:$0xff]
        %v1096 = vld [vmem:[%s244 + $0xb0] sm:$0xff]
        %v1097 = vld [vmem:[%s244 + $0xb8] sm:$0xff]
        %v1098 = vld [vmem:[%s244 + $0xc0] sm:$0xff]
        %v1099 = vld [vmem:[%s244 + $0xc8] sm:$0xff]
        %v1100 = vld [vmem:[%s244 + $0xd0] sm:$0xff]
        %v1101 = vld [vmem:[%s244 + $0xd8] sm:$0xff]
        %v1102 = vld [vmem:[%s244 + $0xe0] sm:$0xff]
        %v1103 = vld [vmem:[%s244 + $0xe8] sm:$0xff]
        %v1104 = vld [vmem:[%s244 + $0xf0] sm:$0xff]
        %v1105 = vld [vmem:[%s244 + $0xf8] sm:$0xff]
        %v1106 = vld [vmem:[%s244 + $0x100] sm:$0xff]
        %v1107 = vld [vmem:[%s244 + $0x108] sm:$0xff]
        %v1108 = vld [vmem:[%s244 + $0x110] sm:$0xff]
        %v1109 = vld [vmem:[%s244 + $0x118] sm:$0xff]
        %v1110 = vld [vmem:[%s244 + $0x120] sm:$0xff]
        %v1111 = vld [vmem:[%s244 + $0x128] sm:$0xff]
        %v1112 = vld [vmem:[%s244 + $0x130] sm:$0xff]
        %v1113 = vld [vmem:[%s244 + $0x138] sm:$0xff]
        %v1114 = vld [vmem:[%s244 + $0x140] sm:$0xff]
        %v1115 = vld [vmem:[%s244 + $0x148] sm:$0xff]
        %v1116 = vld [vmem:[%s244 + $0x150] sm:$0xff]
        %v1117 = vld [vmem:[%s244 + $0x158] sm:$0xff]
        %v1118 = vld [vmem:[%s244 + $0x160] sm:$0xff]
        %v1119 = vld [vmem:[%s244 + $0x168] sm:$0xff]
        %v1120 = vld [vmem:[%s244 + $0x170] sm:$0xff]
        %v1121 = vld [vmem:[%s244 + $0x178] sm:$0xff]
        %v1122 = vld [vmem:[%s244 + $0x180] sm:$0xff]
        %v1123 = vld [vmem:[%s244 + $0x188] sm:$0xff]
        %v1124 = vld [vmem:[%s244 + $0x190] sm:$0xff]
        %v1125 = vld [vmem:[%s244 + $0x198] sm:$0xff]
        %v1126 = vld [vmem:[%s244 + $0x1a0] sm:$0xff]
        %v1127 = vld [vmem:[%s244 + $0x1a8] sm:$0xff]
        %v1128 = vld [vmem:[%s244 + $0x1b0] sm:$0xff]
        %v1129 = vld [vmem:[%s244 + $0x1b8] sm:$0xff]
        %v1130 = vld [vmem:[%s244 + $0x1c0] sm:$0xff]
        %v1131 = vld [vmem:[%s244 + $0x1c8] sm:$0xff]
        %v1132 = vld [vmem:[%s244 + $0x1d0] sm:$0xff]
        %v1133 = vld [vmem:[%s244 + $0x1d8] sm:$0xff]
        %v1134 = vld [vmem:[%s244 + $0x1e0] sm:$0xff]
        %v1135 = vld [vmem:[%s244 + $0x1e8] sm:$0xff]
        %v1136 = vld [vmem:[%s244 + $0x1f0] sm:$0xff]
        %v1137 = vld [vmem:[%s244 + $0x1f8] sm:$0xff]
        %v1138 = vld [vmem:[%s244 + $0x200] sm:$0xff]
        %v1139 = vld [vmem:[%s244 + $0x208] sm:$0xff]
        %v1140 = vld [vmem:[%s244 + $0x210] sm:$0xff]
        %v1141 = vld [vmem:[%s244 + $0x218] sm:$0xff]
        %v1142 = vld [vmem:[%s244 + $0x220] sm:$0xff]
        %v1143 = vld [vmem:[%s244 + $0x228] sm:$0xff]
        %v1144 = vld [vmem:[%s244 + $0x230] sm:$0xff]
        %v1145 = vld [vmem:[%s244 + $0x238] sm:$0xff]
        %v1146 = vld [vmem:[%s244 + $0x240] sm:$0xff]
        %v1147 = vld [vmem:[%s244 + $0x248] sm:$0xff]
        %v1148 = vld [vmem:[%s244 + $0x250] sm:$0xff]
        %v1149 = vld [vmem:[%s244 + $0x258] sm:$0xff]
        %v1150 = vld [vmem:[%s244 + $0x260] sm:$0xff]
        %v1151 = vld [vmem:[%s244 + $0x268] sm:$0xff]
        %v1152 = vld [vmem:[%s244 + $0x270] sm:$0xff]
        %v1153 = vld [vmem:[%s244 + $0x278] sm:$0xff]
        %v1154 = vld [vmem:[%s244 + $0x280] sm:$0xff]
        %v1155 = vld [vmem:[%s244 + $0x288] sm:$0xff]
        %v1156 = vld [vmem:[%s244 + $0x290] sm:$0xff]
        %v1157 = vld [vmem:[%s244 + $0x298] sm:$0xff]
        %v1158 = vld [vmem:[%s244 + $0x2a0] sm:$0xff]
        %v1159 = vld [vmem:[%s244 + $0x2a8] sm:$0xff]
        %v1160 = vld [vmem:[%s244 + $0x2b0] sm:$0xff]
        %v1161 = vld [vmem:[%s244 + $0x2b8] sm:$0xff]
        %v1162 = vld [vmem:[%s244 + $0x2c0] sm:$0xff]
        %v1163 = vld [vmem:[%s244 + $0x2c8] sm:$0xff]
        %v1164 = vld [vmem:[%s244 + $0x2d0] sm:$0xff]
        %v1165 = vld [vmem:[%s244 + $0x2d8] sm:$0xff]
        %v1166 = vld [vmem:[%s244 + $0x2e0] sm:$0xff]
        %v1167 = vld [vmem:[%s244 + $0x2e8] sm:$0xff]
        %v1168 = vld [vmem:[%s244 + $0x2f0] sm:$0xff]
        %v1169 = vld [vmem:[%s244 + $0x2f8] sm:$0xff]
        %v1170 = vld [vmem:[%s244 + $0x300] sm:$0xff]
        %v1171 = vld [vmem:[%s244 + $0x308] sm:$0xff]
        %v1172 = vld [vmem:[%s244 + $0x310] sm:$0xff]
        %v1173 = vld [vmem:[%s244 + $0x318] sm:$0xff]
        %v1174 = vld [vmem:[%s244 + $0x320] sm:$0xff]
        %v1175 = vld [vmem:[%s244 + $0x328] sm:$0xff]
        %v1176 = vld [vmem:[%s244 + $0x330] sm:$0xff]
        %v1177 = vld [vmem:[%s244 + $0x338] sm:$0xff]
        %v1178 = vld [vmem:[%s244 + $0x340] sm:$0xff]
        %v1179 = vld [vmem:[%s244 + $0x348] sm:$0xff]
        %v1180 = vld [vmem:[%s244 + $0x350] sm:$0xff]
        %v1181 = vld [vmem:[%s244 + $0x358] sm:$0xff]
        %v1182 = vld [vmem:[%s244 + $0x360] sm:$0xff]
        %v1183 = vld [vmem:[%s244 + $0x368] sm:$0xff]
        %v1184 = vld [vmem:[%s244 + $0x370] sm:$0xff]
        %v1185 = vld [vmem:[%s244 + $0x378] sm:$0xff]
        %v1186 = vld [vmem:[%s244 + $0x380] sm:$0xff]
        %v1187 = vld [vmem:[%s244 + $0x388] sm:$0xff]
        %v1188 = vld [vmem:[%s244 + $0x390] sm:$0xff]
        %v1189 = vld [vmem:[%s244 + $0x398] sm:$0xff]
        %v1190 = vld [vmem:[%s244 + $0x3a0] sm:$0xff]
        %v1191 = vld [vmem:[%s244 + $0x3a8] sm:$0xff]
        %v1192 = vld [vmem:[%s244 + $0x3b0] sm:$0xff]
        %v1193 = vld [vmem:[%s244 + $0x3b8] sm:$0xff]
        %v1194 = vld [vmem:[%s244 + $0x3c0] sm:$0xff]
        %v1195 = vld [vmem:[%s244 + $0x3c8] sm:$0xff]
        %v1196 = vld [vmem:[%s244 + $0x3d0] sm:$0xff]
        %v1197 = vld [vmem:[%s244 + $0x3d8] sm:$0xff]
        %v1198 = vld [vmem:[%s244 + $0x3e0] sm:$0xff]
        %v1199 = vld [vmem:[%s244 + $0x3e8] sm:$0xff]
        %v1200 = vld [vmem:[%s244 + $0x3f0] sm:$0xff]
        %v1201 = vld [vmem:[%s244 + $0x3f8] sm:$0xff]
        %v1202 = vld [vmem:[%s244 + $0x400] sm:$0xff]
        %v1203 = vld [vmem:[%s244 + $0x408] sm:$0xff]
        %v1204 = vld [vmem:[%s244 + $0x410] sm:$0xff]
        %v1205 = vld [vmem:[%s244 + $0x418] sm:$0xff]
        %v1206 = vld [vmem:[%s244 + $0x420] sm:$0xff]
        %v1207 = vld [vmem:[%s244 + $0x428] sm:$0xff]
        %v1208 = vld [vmem:[%s244 + $0x430] sm:$0xff]
        %v1209 = vld [vmem:[%s244 + $0x438] sm:$0xff]
        %v1210 = vld [vmem:[%s244 + $0x440] sm:$0xff]
        %v1211 = vld [vmem:[%s244 + $0x448] sm:$0xff]
        %v1212 = vld [vmem:[%s244 + $0x450] sm:$0xff]
        %v1213 = vld [vmem:[%s244 + $0x458] sm:$0xff]
        %v1214 = vld [vmem:[%s244 + $0x460] sm:$0xff]
        %v1215 = vld [vmem:[%s244 + $0x468] sm:$0xff]
        %v1216 = vld [vmem:[%s244 + $0x470] sm:$0xff]
        %v1217 = vld [vmem:[%s244 + $0x478] sm:$0xff]
        %v1218 = vld [vmem:[%s244 + $0x480] sm:$0xff]
        %v1219 = vld [vmem:[%s244 + $0x488] sm:$0xff]
        %v1220 = vld [vmem:[%s244 + $0x490] sm:$0xff]
        %v1221 = vld [vmem:[%s244 + $0x498] sm:$0xff]
        %v1222 = vld [vmem:[%s244 + $0x4a0] sm:$0xff]
        %v1223 = vld [vmem:[%s244 + $0x4a8] sm:$0xff]
        %v1224 = vld [vmem:[%s244 + $0x4b0] sm:$0xff]
        %v1225 = vld [vmem:[%s244 + $0x4b8] sm:$0xff]
        %v1226 = vld [vmem:[%s244 + $0x4c0] sm:$0xff]
        %v1227 = vld [vmem:[%s244 + $0x4c8] sm:$0xff]
        %v1228 = vld [vmem:[%s244 + $0x4d0] sm:$0xff]
        %v1229 = vld [vmem:[%s244 + $0x4d8] sm:$0xff]
        %v1230 = vld [vmem:[%s244 + $0x4e0] sm:$0xff]
        %v1231 = vld [vmem:[%s244 + $0x4e8] sm:$0xff]
        %v1232 = vld [vmem:[%s244 + $0x4f0] sm:$0xff]
        %v1233 = vld [vmem:[%s244 + $0x4f8] sm:$0xff]
        %v1234 = vld [vmem:[%s244 + $0x500] sm:$0xff]
        %v1235 = vld [vmem:[%s244 + $0x508] sm:$0xff]
        %v1236 = vld [vmem:[%s244 + $0x510] sm:$0xff]
        %v1237 = vld [vmem:[%s244 + $0x518] sm:$0xff]
        %v1238 = vld [vmem:[%s244 + $0x520] sm:$0xff]
        %v1239 = vld [vmem:[%s244 + $0x528] sm:$0xff]
        %v1240 = vld [vmem:[%s244 + $0x530] sm:$0xff]
        %v1241 = vld [vmem:[%s244 + $0x538] sm:$0xff]
        %v1242 = vld [vmem:[%s244 + $0x540] sm:$0xff]
        %v1243 = vld [vmem:[%s244 + $0x548] sm:$0xff]
        %v1244 = vld [vmem:[%s244 + $0x550] sm:$0xff]
        %v1245 = vld [vmem:[%s244 + $0x558] sm:$0xff]
        %v1246 = vld [vmem:[%s244 + $0x560] sm:$0xff]
        %v1247 = vld [vmem:[%s244 + $0x568] sm:$0xff]
        %v1248 = vld [vmem:[%s244 + $0x570] sm:$0xff]
        %v1249 = vld [vmem:[%s244 + $0x578] sm:$0xff]
        %v1250 = vld [vmem:[%s244 + $0x580] sm:$0xff]
        %v1251 = vld [vmem:[%s244 + $0x588] sm:$0xff]
        %v1252 = vld [vmem:[%s244 + $0x590] sm:$0xff]
        %v1253 = vld [vmem:[%s244 + $0x598] sm:$0xff]
        %v1254 = vld [vmem:[%s244 + $0x5a0] sm:$0xff]
        %v1255 = vld [vmem:[%s244 + $0x5a8] sm:$0xff]
        %v1256 = vld [vmem:[%s244 + $0x5b0] sm:$0xff]
        %v1257 = vld [vmem:[%s244 + $0x5b8] sm:$0xff]
        %v1258 = vld [vmem:[%s244 + $0x5c0] sm:$0xff]
        %v1259 = vld [vmem:[%s244 + $0x5c8] sm:$0xff]
        %v1260 = vld [vmem:[%s244 + $0x5d0] sm:$0xff]
        %v1261 = vld [vmem:[%s244 + $0x5d8] sm:$0xff]
        %v1262 = vld [vmem:[%s244 + $0x5e0] sm:$0xff]
        %v1263 = vld [vmem:[%s244 + $0x5e8] sm:$0xff]
        %v1264 = vld [vmem:[%s244 + $0x5f0] sm:$0xff]
        %v1265 = vld [vmem:[%s244 + $0x5f8] sm:$0xff]
        %v1266 = vld [vmem:[%s244 + $0x600] sm:$0xff]
        %v1267 = vld [vmem:[%s244 + $0x608] sm:$0xff]
        %v1268 = vld [vmem:[%s244 + $0x610] sm:$0xff]
        %v1269 = vld [vmem:[%s244 + $0x618] sm:$0xff]
        %v1270 = vld [vmem:[%s244 + $0x620] sm:$0xff]
        %v1271 = vld [vmem:[%s244 + $0x628] sm:$0xff]
        %v1272 = vld [vmem:[%s244 + $0x630] sm:$0xff]
        %v1273 = vld [vmem:[%s244 + $0x638] sm:$0xff]
        %v1274 = vld [vmem:[%s244 + $0x640] sm:$0xff]
        %v1275 = vld [vmem:[%s244 + $0x648] sm:$0xff]
        %v1276 = vld [vmem:[%s244 + $0x650] sm:$0xff]
        %v1277 = vld [vmem:[%s244 + $0x658] sm:$0xff]
        %v1278 = vld [vmem:[%s244 + $0x660] sm:$0xff]
        %v1279 = vld [vmem:[%s244 + $0x668] sm:$0xff]
        %v1280 = vld [vmem:[%s244 + $0x670] sm:$0xff]
        %v1281 = vld [vmem:[%s244 + $0x678] sm:$0xff]
        %v1282 = vld [vmem:[%s244 + $0x680] sm:$0xff]
        %v1283 = vld [vmem:[%s244 + $0x688] sm:$0xff]
        %v1284 = vld [vmem:[%s244 + $0x690] sm:$0xff]
        %v1285 = vld [vmem:[%s244 + $0x698] sm:$0xff]
        %v1286 = vld [vmem:[%s244 + $0x6a0] sm:$0xff]
        %v1287 = vld [vmem:[%s244 + $0x6a8] sm:$0xff]
        %v1288 = vld [vmem:[%s244 + $0x6b0] sm:$0xff]
        %v1289 = vld [vmem:[%s244 + $0x6b8] sm:$0xff]
        %v1290 = vld [vmem:[%s244 + $0x6c0] sm:$0xff]
        %v1291 = vld [vmem:[%s244 + $0x6c8] sm:$0xff]
        %v1292 = vld [vmem:[%s244 + $0x6d0] sm:$0xff]
        %v1293 = vld [vmem:[%s244 + $0x6d8] sm:$0xff]
        %v1294 = vld [vmem:[%s244 + $0x6e0] sm:$0xff]
        %v1295 = vld [vmem:[%s244 + $0x6e8] sm:$0xff]
        %v1296 = vld [vmem:[%s244 + $0x6f0] sm:$0xff]
        %v1297 = vld [vmem:[%s244 + $0x6f8] sm:$0xff]
        %v1298 = vld [vmem:[%s244 + $0x700] sm:$0xff]
        %v1299 = vld [vmem:[%s244 + $0x708] sm:$0xff]
        %v1300 = vld [vmem:[%s244 + $0x710] sm:$0xff]
        %v1301 = vld [vmem:[%s244 + $0x718] sm:$0xff]
        %v1302 = vld [vmem:[%s244 + $0x720] sm:$0xff]
        %v1303 = vld [vmem:[%s244 + $0x728] sm:$0xff]
        %v1304 = vld [vmem:[%s244 + $0x730] sm:$0xff]
        %v1305 = vld [vmem:[%s244 + $0x738] sm:$0xff]
        %v1306 = vld [vmem:[%s244 + $0x740] sm:$0xff]
        %v1307 = vld [vmem:[%s244 + $0x748] sm:$0xff]
        %v1308 = vld [vmem:[%s244 + $0x750] sm:$0xff]
        %v1309 = vld [vmem:[%s244 + $0x758] sm:$0xff]
        %v1310 = vld [vmem:[%s244 + $0x760] sm:$0xff]
        %v1311 = vld [vmem:[%s244 + $0x768] sm:$0xff]
        %v1312 = vld [vmem:[%s244 + $0x770] sm:$0xff]
        %v1313 = vld [vmem:[%s244 + $0x778] sm:$0xff]
        %v1314 = vld [vmem:[%s244 + $0x780] sm:$0xff]
        %v1315 = vld [vmem:[%s244 + $0x788] sm:$0xff]
        %v1316 = vld [vmem:[%s244 + $0x790] sm:$0xff]
        %v1317 = vld [vmem:[%s244 + $0x798] sm:$0xff]
        %v1318 = vld [vmem:[%s244 + $0x7a0] sm:$0xff]
        %v1319 = vld [vmem:[%s244 + $0x7a8] sm:$0xff]
        %v1320 = vld [vmem:[%s244 + $0x7b0] sm:$0xff]
        %v1321 = vld [vmem:[%s244 + $0x7b8] sm:$0xff]
        %v1322 = vld [vmem:[%s244 + $0x7c0] sm:$0xff]
        %v1323 = vld [vmem:[%s244 + $0x7c8] sm:$0xff]
        %v1324 = vld [vmem:[%s244 + $0x7d0] sm:$0xff]
        %v1325 = vld [vmem:[%s244 + $0x7d8] sm:$0xff]
        %v1326 = vld [vmem:[%s244 + $0x7e0] sm:$0xff]
        %v1327 = vld [vmem:[%s244 + $0x7e8] sm:$0xff]
        %v1328 = vld [vmem:[%s244 + $0x7f0] sm:$0xff]
        %v1329 = vld [vmem:[%s244 + $0x7f8] sm:$0xff]
        %v1330 = vpack.c.bf16 %v1078, %v1074
        %v1331 = vpack.c.bf16 %v1079, %v1075
        %v1332 = vpack.c.bf16 %v1080, %v1076
        %v1333 = vpack.c.bf16 %v1081, %v1077
        %v1334 = vpack.c.bf16 %v1086, %v1082
        %v1335 = vpack.c.bf16 %v1087, %v1083
        %v1336 = vpack.c.bf16 %v1088, %v1084
        %v1337 = vpack.c.bf16 %v1089, %v1085
        %v1338 = vpack.c.bf16 %v1094, %v1090
        %v1339 = vpack.c.bf16 %v1095, %v1091
        %v1340 = vpack.c.bf16 %v1096, %v1092
        %v1341 = vpack.c.bf16 %v1097, %v1093
        %v1342 = vpack.c.bf16 %v1102, %v1098
        %v1343 = vpack.c.bf16 %v1103, %v1099
        %v1344 = vpack.c.bf16 %v1104, %v1100
        %v1345 = vpack.c.bf16 %v1105, %v1101
        %v1346 = vpack.c.bf16 %v1110, %v1106
        %v1347 = vpack.c.bf16 %v1111, %v1107
        %v1348 = vpack.c.bf16 %v1112, %v1108
        %v1349 = vpack.c.bf16 %v1113, %v1109
        %v1350 = vpack.c.bf16 %v1118, %v1114
        %v1351 = vpack.c.bf16 %v1119, %v1115
        %v1352 = vpack.c.bf16 %v1120, %v1116
        %v1353 = vpack.c.bf16 %v1121, %v1117
        %v1354 = vpack.c.bf16 %v1126, %v1122
        %v1355 = vpack.c.bf16 %v1127, %v1123
        %v1356 = vpack.c.bf16 %v1128, %v1124
        %v1357 = vpack.c.bf16 %v1129, %v1125
        %v1358 = vpack.c.bf16 %v1134, %v1130
        %v1359 = vpack.c.bf16 %v1135, %v1131
        %v1360 = vpack.c.bf16 %v1136, %v1132
        %v1361 = vpack.c.bf16 %v1137, %v1133
        %v1362 = vpack.c.bf16 %v1142, %v1138
        %v1363 = vpack.c.bf16 %v1143, %v1139
        %v1364 = vpack.c.bf16 %v1144, %v1140
        %v1365 = vpack.c.bf16 %v1145, %v1141
        %v1366 = vpack.c.bf16 %v1150, %v1146
        %v1367 = vpack.c.bf16 %v1151, %v1147
        %v1368 = vpack.c.bf16 %v1152, %v1148
        %v1369 = vpack.c.bf16 %v1153, %v1149
        %v1370 = vpack.c.bf16 %v1158, %v1154
        %v1371 = vpack.c.bf16 %v1159, %v1155
        %v1372 = vpack.c.bf16 %v1160, %v1156
        %v1373 = vpack.c.bf16 %v1161, %v1157
        %v1374 = vpack.c.bf16 %v1166, %v1162
        %v1375 = vpack.c.bf16 %v1167, %v1163
        %v1376 = vpack.c.bf16 %v1168, %v1164
        %v1377 = vpack.c.bf16 %v1169, %v1165
        %v1378 = vpack.c.bf16 %v1174, %v1170
        %v1379 = vpack.c.bf16 %v1175, %v1171
        %v1380 = vpack.c.bf16 %v1176, %v1172
        %v1381 = vpack.c.bf16 %v1177, %v1173
        %v1382 = vpack.c.bf16 %v1182, %v1178
        %v1383 = vpack.c.bf16 %v1183, %v1179
        %v1384 = vpack.c.bf16 %v1184, %v1180
        %v1385 = vpack.c.bf16 %v1185, %v1181
        %v1386 = vpack.c.bf16 %v1190, %v1186
        %v1387 = vpack.c.bf16 %v1191, %v1187
        %v1388 = vpack.c.bf16 %v1192, %v1188
        %v1389 = vpack.c.bf16 %v1193, %v1189
        %v1390 = vpack.c.bf16 %v1198, %v1194
        %v1391 = vpack.c.bf16 %v1199, %v1195
        %v1392 = vpack.c.bf16 %v1200, %v1196
        %v1393 = vpack.c.bf16 %v1201, %v1197
        %v1394 = vpack.c.bf16 %v1206, %v1202
        %v1395 = vpack.c.bf16 %v1207, %v1203
        %v1396 = vpack.c.bf16 %v1208, %v1204
        %v1397 = vpack.c.bf16 %v1209, %v1205
        %v1398 = vpack.c.bf16 %v1214, %v1210
        %v1399 = vpack.c.bf16 %v1215, %v1211
        %v1400 = vpack.c.bf16 %v1216, %v1212
        %v1401 = vpack.c.bf16 %v1217, %v1213
        %v1402 = vpack.c.bf16 %v1222, %v1218
        %v1403 = vpack.c.bf16 %v1223, %v1219
        %v1404 = vpack.c.bf16 %v1224, %v1220
        %v1405 = vpack.c.bf16 %v1225, %v1221
        %v1406 = vpack.c.bf16 %v1230, %v1226
        %v1407 = vpack.c.bf16 %v1231, %v1227
        %v1408 = vpack.c.bf16 %v1232, %v1228
        %v1409 = vpack.c.bf16 %v1233, %v1229
        %v1410 = vpack.c.bf16 %v1238, %v1234
        %v1411 = vpack.c.bf16 %v1239, %v1235
        %v1412 = vpack.c.bf16 %v1240, %v1236
        %v1413 = vpack.c.bf16 %v1241, %v1237
        %v1414 = vpack.c.bf16 %v1246, %v1242
        %v1415 = vpack.c.bf16 %v1247, %v1243
        %v1416 = vpack.c.bf16 %v1248, %v1244
        %v1417 = vpack.c.bf16 %v1249, %v1245
        %v1418 = vpack.c.bf16 %v1254, %v1250
        %v1419 = vpack.c.bf16 %v1255, %v1251
        %v1420 = vpack.c.bf16 %v1256, %v1252
        %v1421 = vpack.c.bf16 %v1257, %v1253
        %v1422 = vpack.c.bf16 %v1262, %v1258
        %v1423 = vpack.c.bf16 %v1263, %v1259
        %v1424 = vpack.c.bf16 %v1264, %v1260
        %v1425 = vpack.c.bf16 %v1265, %v1261
        %v1426 = vpack.c.bf16 %v1270, %v1266
        %v1427 = vpack.c.bf16 %v1271, %v1267
        %v1428 = vpack.c.bf16 %v1272, %v1268
        %v1429 = vpack.c.bf16 %v1273, %v1269
        %v1430 = vpack.c.bf16 %v1278, %v1274
        %v1431 = vpack.c.bf16 %v1279, %v1275
        %v1432 = vpack.c.bf16 %v1280, %v1276
        %v1433 = vpack.c.bf16 %v1281, %v1277
        %v1434 = vpack.c.bf16 %v1286, %v1282
        %v1435 = vpack.c.bf16 %v1287, %v1283
        %v1436 = vpack.c.bf16 %v1288, %v1284
        %v1437 = vpack.c.bf16 %v1289, %v1285
        %v1438 = vpack.c.bf16 %v1294, %v1290
        %v1439 = vpack.c.bf16 %v1295, %v1291
        %v1440 = vpack.c.bf16 %v1296, %v1292
        %v1441 = vpack.c.bf16 %v1297, %v1293
        %v1442 = vpack.c.bf16 %v1302, %v1298
        %v1443 = vpack.c.bf16 %v1303, %v1299
        %v1444 = vpack.c.bf16 %v1304, %v1300
        %v1445 = vpack.c.bf16 %v1305, %v1301
        %v1446 = vpack.c.bf16 %v1310, %v1306
        %v1447 = vpack.c.bf16 %v1311, %v1307
        %v1448 = vpack.c.bf16 %v1312, %v1308
        %v1449 = vpack.c.bf16 %v1313, %v1309
        %v1450 = vpack.c.bf16 %v1318, %v1314
        %v1451 = vpack.c.bf16 %v1319, %v1315
        %v1452 = vpack.c.bf16 %v1320, %v1316
        %v1453 = vpack.c.bf16 %v1321, %v1317
        %v1454 = vpack.c.bf16 %v1326, %v1322
        %v1455 = vpack.c.bf16 %v1327, %v1323
        %v1456 = vpack.c.bf16 %v1328, %v1324
        %v1457 = vpack.c.bf16 %v1329, %v1325
        %v1458 = vld [vmem:[%s253] sm:$0xff]
        %v1459 = vld [vmem:[%s253 + $0x8] sm:$0xff]
        %v1460 = vld [vmem:[%s253 + $0x10] sm:$0xff]
        %v1461 = vld [vmem:[%s253 + $0x18] sm:$0xff]
        %v1462 = vld [vmem:[%s253 + $0x20] sm:$0xff]
        %v1463 = vld [vmem:[%s253 + $0x28] sm:$0xff]
        %v1464 = vld [vmem:[%s253 + $0x30] sm:$0xff]
        %v1465 = vld [vmem:[%s253 + $0x38] sm:$0xff]
        %v1466 = vld [vmem:[%s253 + $0x40] sm:$0xff]
        %v1467 = vld [vmem:[%s253 + $0x48] sm:$0xff]
        %v1468 = vld [vmem:[%s253 + $0x50] sm:$0xff]
        %v1469 = vld [vmem:[%s253 + $0x58] sm:$0xff]
        %v1470 = vld [vmem:[%s253 + $0x60] sm:$0xff]
        %v1471 = vld [vmem:[%s253 + $0x68] sm:$0xff]
        %v1472 = vld [vmem:[%s253 + $0x70] sm:$0xff]
        %v1473 = vld [vmem:[%s253 + $0x78] sm:$0xff]
        %v1474 = vld [vmem:[%s253 + $0x80] sm:$0xff]
        %v1475 = vld [vmem:[%s253 + $0x88] sm:$0xff]
        %v1476 = vld [vmem:[%s253 + $0x90] sm:$0xff]
        %v1477 = vld [vmem:[%s253 + $0x98] sm:$0xff]
        %v1478 = vld [vmem:[%s253 + $0xa0] sm:$0xff]
        %v1479 = vld [vmem:[%s253 + $0xa8] sm:$0xff]
        %v1480 = vld [vmem:[%s253 + $0xb0] sm:$0xff]
        %v1481 = vld [vmem:[%s253 + $0xb8] sm:$0xff]
        %v1482 = vld [vmem:[%s253 + $0xc0] sm:$0xff]
        %v1483 = vld [vmem:[%s253 + $0xc8] sm:$0xff]
        %v1484 = vld [vmem:[%s253 + $0xd0] sm:$0xff]
        %v1485 = vld [vmem:[%s253 + $0xd8] sm:$0xff]
        %v1486 = vld [vmem:[%s253 + $0xe0] sm:$0xff]
        %v1487 = vld [vmem:[%s253 + $0xe8] sm:$0xff]
        %v1488 = vld [vmem:[%s253 + $0xf0] sm:$0xff]
        %v1489 = vld [vmem:[%s253 + $0xf8] sm:$0xff]
        %v1490 = vld [vmem:[%s253 + $0x100] sm:$0xff]
        %v1491 = vld [vmem:[%s253 + $0x108] sm:$0xff]
        %v1492 = vld [vmem:[%s253 + $0x110] sm:$0xff]
        %v1493 = vld [vmem:[%s253 + $0x118] sm:$0xff]
        %v1494 = vld [vmem:[%s253 + $0x120] sm:$0xff]
        %v1495 = vld [vmem:[%s253 + $0x128] sm:$0xff]
        %v1496 = vld [vmem:[%s253 + $0x130] sm:$0xff]
        %v1497 = vld [vmem:[%s253 + $0x138] sm:$0xff]
        %v1498 = vld [vmem:[%s253 + $0x140] sm:$0xff]
        %v1499 = vld [vmem:[%s253 + $0x148] sm:$0xff]
        %v1500 = vld [vmem:[%s253 + $0x150] sm:$0xff]
        %v1501 = vld [vmem:[%s253 + $0x158] sm:$0xff]
        %v1502 = vld [vmem:[%s253 + $0x160] sm:$0xff]
        %v1503 = vld [vmem:[%s253 + $0x168] sm:$0xff]
        %v1504 = vld [vmem:[%s253 + $0x170] sm:$0xff]
        %v1505 = vld [vmem:[%s253 + $0x178] sm:$0xff]
        %v1506 = vld [vmem:[%s253 + $0x180] sm:$0xff]
        %v1507 = vld [vmem:[%s253 + $0x188] sm:$0xff]
        %v1508 = vld [vmem:[%s253 + $0x190] sm:$0xff]
        %v1509 = vld [vmem:[%s253 + $0x198] sm:$0xff]
        %v1510 = vld [vmem:[%s253 + $0x1a0] sm:$0xff]
        %v1511 = vld [vmem:[%s253 + $0x1a8] sm:$0xff]
        %v1512 = vld [vmem:[%s253 + $0x1b0] sm:$0xff]
        %v1513 = vld [vmem:[%s253 + $0x1b8] sm:$0xff]
        %v1514 = vld [vmem:[%s253 + $0x1c0] sm:$0xff]
        %v1515 = vld [vmem:[%s253 + $0x1c8] sm:$0xff]
        %v1516 = vld [vmem:[%s253 + $0x1d0] sm:$0xff]
        %v1517 = vld [vmem:[%s253 + $0x1d8] sm:$0xff]
        %v1518 = vld [vmem:[%s253 + $0x1e0] sm:$0xff]
        %v1519 = vld [vmem:[%s253 + $0x1e8] sm:$0xff]
        %v1520 = vld [vmem:[%s253 + $0x1f0] sm:$0xff]
        %v1521 = vld [vmem:[%s253 + $0x1f8] sm:$0xff]
        %v1522 = vld [vmem:[%s253 + $0x200] sm:$0xff]
        %v1523 = vld [vmem:[%s253 + $0x208] sm:$0xff]
        %v1524 = vld [vmem:[%s253 + $0x210] sm:$0xff]
        %v1525 = vld [vmem:[%s253 + $0x218] sm:$0xff]
        %v1526 = vld [vmem:[%s253 + $0x220] sm:$0xff]
        %v1527 = vld [vmem:[%s253 + $0x228] sm:$0xff]
        %v1528 = vld [vmem:[%s253 + $0x230] sm:$0xff]
        %v1529 = vld [vmem:[%s253 + $0x238] sm:$0xff]
        %v1530 = vld [vmem:[%s253 + $0x240] sm:$0xff]
        %v1531 = vld [vmem:[%s253 + $0x248] sm:$0xff]
        %v1532 = vld [vmem:[%s253 + $0x250] sm:$0xff]
        %v1533 = vld [vmem:[%s253 + $0x258] sm:$0xff]
        %v1534 = vld [vmem:[%s253 + $0x260] sm:$0xff]
        %v1535 = vld [vmem:[%s253 + $0x268] sm:$0xff]
        %v1536 = vld [vmem:[%s253 + $0x270] sm:$0xff]
        %v1537 = vld [vmem:[%s253 + $0x278] sm:$0xff]
        %v1538 = vld [vmem:[%s253 + $0x280] sm:$0xff]
        %v1539 = vld [vmem:[%s253 + $0x288] sm:$0xff]
        %v1540 = vld [vmem:[%s253 + $0x290] sm:$0xff]
        %v1541 = vld [vmem:[%s253 + $0x298] sm:$0xff]
        %v1542 = vld [vmem:[%s253 + $0x2a0] sm:$0xff]
        %v1543 = vld [vmem:[%s253 + $0x2a8] sm:$0xff]
        %v1544 = vld [vmem:[%s253 + $0x2b0] sm:$0xff]
        %v1545 = vld [vmem:[%s253 + $0x2b8] sm:$0xff]
        %v1546 = vld [vmem:[%s253 + $0x2c0] sm:$0xff]
        %v1547 = vld [vmem:[%s253 + $0x2c8] sm:$0xff]
        %v1548 = vld [vmem:[%s253 + $0x2d0] sm:$0xff]
        %v1549 = vld [vmem:[%s253 + $0x2d8] sm:$0xff]
        %v1550 = vld [vmem:[%s253 + $0x2e0] sm:$0xff]
        %v1551 = vld [vmem:[%s253 + $0x2e8] sm:$0xff]
        %v1552 = vld [vmem:[%s253 + $0x2f0] sm:$0xff]
        %v1553 = vld [vmem:[%s253 + $0x2f8] sm:$0xff]
        %v1554 = vld [vmem:[%s253 + $0x300] sm:$0xff]
        %v1555 = vld [vmem:[%s253 + $0x308] sm:$0xff]
        %v1556 = vld [vmem:[%s253 + $0x310] sm:$0xff]
        %v1557 = vld [vmem:[%s253 + $0x318] sm:$0xff]
        %v1558 = vld [vmem:[%s253 + $0x320] sm:$0xff]
        %v1559 = vld [vmem:[%s253 + $0x328] sm:$0xff]
        %v1560 = vld [vmem:[%s253 + $0x330] sm:$0xff]
        %v1561 = vld [vmem:[%s253 + $0x338] sm:$0xff]
        %v1562 = vld [vmem:[%s253 + $0x340] sm:$0xff]
        %v1563 = vld [vmem:[%s253 + $0x348] sm:$0xff]
        %v1564 = vld [vmem:[%s253 + $0x350] sm:$0xff]
        %v1565 = vld [vmem:[%s253 + $0x358] sm:$0xff]
        %v1566 = vld [vmem:[%s253 + $0x360] sm:$0xff]
        %v1567 = vld [vmem:[%s253 + $0x368] sm:$0xff]
        %v1568 = vld [vmem:[%s253 + $0x370] sm:$0xff]
        %v1569 = vld [vmem:[%s253 + $0x378] sm:$0xff]
        %v1570 = vld [vmem:[%s253 + $0x380] sm:$0xff]
        %v1571 = vld [vmem:[%s253 + $0x388] sm:$0xff]
        %v1572 = vld [vmem:[%s253 + $0x390] sm:$0xff]
        %v1573 = vld [vmem:[%s253 + $0x398] sm:$0xff]
        %v1574 = vld [vmem:[%s253 + $0x3a0] sm:$0xff]
        %v1575 = vld [vmem:[%s253 + $0x3a8] sm:$0xff]
        %v1576 = vld [vmem:[%s253 + $0x3b0] sm:$0xff]
        %v1577 = vld [vmem:[%s253 + $0x3b8] sm:$0xff]
        %v1578 = vld [vmem:[%s253 + $0x3c0] sm:$0xff]
        %v1579 = vld [vmem:[%s253 + $0x3c8] sm:$0xff]
        %v1580 = vld [vmem:[%s253 + $0x3d0] sm:$0xff]
        %v1581 = vld [vmem:[%s253 + $0x3d8] sm:$0xff]
        %v1582 = vld [vmem:[%s253 + $0x3e0] sm:$0xff]
        %v1583 = vld [vmem:[%s253 + $0x3e8] sm:$0xff]
        %v1584 = vld [vmem:[%s253 + $0x3f0] sm:$0xff]
        %v1585 = vld [vmem:[%s253 + $0x3f8] sm:$0xff]
        %v1586 = vld [vmem:[%s253 + $0x400] sm:$0xff]
        %v1587 = vld [vmem:[%s253 + $0x408] sm:$0xff]
        %v1588 = vld [vmem:[%s253 + $0x410] sm:$0xff]
        %v1589 = vld [vmem:[%s253 + $0x418] sm:$0xff]
        %v1590 = vld [vmem:[%s253 + $0x420] sm:$0xff]
        %v1591 = vld [vmem:[%s253 + $0x428] sm:$0xff]
        %v1592 = vld [vmem:[%s253 + $0x430] sm:$0xff]
        %v1593 = vld [vmem:[%s253 + $0x438] sm:$0xff]
        %v1594 = vld [vmem:[%s253 + $0x440] sm:$0xff]
        %v1595 = vld [vmem:[%s253 + $0x448] sm:$0xff]
        %v1596 = vld [vmem:[%s253 + $0x450] sm:$0xff]
        %v1597 = vld [vmem:[%s253 + $0x458] sm:$0xff]
        %v1598 = vld [vmem:[%s253 + $0x460] sm:$0xff]
        %v1599 = vld [vmem:[%s253 + $0x468] sm:$0xff]
        %v1600 = vld [vmem:[%s253 + $0x470] sm:$0xff]
        %v1601 = vld [vmem:[%s253 + $0x478] sm:$0xff]
        %v1602 = vld [vmem:[%s253 + $0x480] sm:$0xff]
        %v1603 = vld [vmem:[%s253 + $0x488] sm:$0xff]
        %v1604 = vld [vmem:[%s253 + $0x490] sm:$0xff]
        %v1605 = vld [vmem:[%s253 + $0x498] sm:$0xff]
        %v1606 = vld [vmem:[%s253 + $0x4a0] sm:$0xff]
        %v1607 = vld [vmem:[%s253 + $0x4a8] sm:$0xff]
        %v1608 = vld [vmem:[%s253 + $0x4b0] sm:$0xff]
        %v1609 = vld [vmem:[%s253 + $0x4b8] sm:$0xff]
        %v1610 = vld [vmem:[%s253 + $0x4c0] sm:$0xff]
        %v1611 = vld [vmem:[%s253 + $0x4c8] sm:$0xff]
        %v1612 = vld [vmem:[%s253 + $0x4d0] sm:$0xff]
        %v1613 = vld [vmem:[%s253 + $0x4d8] sm:$0xff]
        %v1614 = vld [vmem:[%s253 + $0x4e0] sm:$0xff]
        %v1615 = vld [vmem:[%s253 + $0x4e8] sm:$0xff]
        %v1616 = vld [vmem:[%s253 + $0x4f0] sm:$0xff]
        %v1617 = vld [vmem:[%s253 + $0x4f8] sm:$0xff]
        %v1618 = vld [vmem:[%s253 + $0x500] sm:$0xff]
        %v1619 = vld [vmem:[%s253 + $0x508] sm:$0xff]
        %v1620 = vld [vmem:[%s253 + $0x510] sm:$0xff]
        %v1621 = vld [vmem:[%s253 + $0x518] sm:$0xff]
        %v1622 = vld [vmem:[%s253 + $0x520] sm:$0xff]
        %v1623 = vld [vmem:[%s253 + $0x528] sm:$0xff]
        %v1624 = vld [vmem:[%s253 + $0x530] sm:$0xff]
        %v1625 = vld [vmem:[%s253 + $0x538] sm:$0xff]
        %v1626 = vld [vmem:[%s253 + $0x540] sm:$0xff]
        %v1627 = vld [vmem:[%s253 + $0x548] sm:$0xff]
        %v1628 = vld [vmem:[%s253 + $0x550] sm:$0xff]
        %v1629 = vld [vmem:[%s253 + $0x558] sm:$0xff]
        %v1630 = vld [vmem:[%s253 + $0x560] sm:$0xff]
        %v1631 = vld [vmem:[%s253 + $0x568] sm:$0xff]
        %v1632 = vld [vmem:[%s253 + $0x570] sm:$0xff]
        %v1633 = vld [vmem:[%s253 + $0x578] sm:$0xff]
        %v1634 = vld [vmem:[%s253 + $0x580] sm:$0xff]
        %v1635 = vld [vmem:[%s253 + $0x588] sm:$0xff]
        %v1636 = vld [vmem:[%s253 + $0x590] sm:$0xff]
        %v1637 = vld [vmem:[%s253 + $0x598] sm:$0xff]
        %v1638 = vld [vmem:[%s253 + $0x5a0] sm:$0xff]
        %v1639 = vld [vmem:[%s253 + $0x5a8] sm:$0xff]
        %v1640 = vld [vmem:[%s253 + $0x5b0] sm:$0xff]
        %v1641 = vld [vmem:[%s253 + $0x5b8] sm:$0xff]
        %v1642 = vld [vmem:[%s253 + $0x5c0] sm:$0xff]
        %v1643 = vld [vmem:[%s253 + $0x5c8] sm:$0xff]
        %v1644 = vld [vmem:[%s253 + $0x5d0] sm:$0xff]
        %v1645 = vld [vmem:[%s253 + $0x5d8] sm:$0xff]
        %v1646 = vld [vmem:[%s253 + $0x5e0] sm:$0xff]
        %v1647 = vld [vmem:[%s253 + $0x5e8] sm:$0xff]
        %v1648 = vld [vmem:[%s253 + $0x5f0] sm:$0xff]
        %v1649 = vld [vmem:[%s253 + $0x5f8] sm:$0xff]
        %v1842 = vunpack.c.l.b16 %v1458
        %v1843 = vunpack.c.h.b16 %v1458
        %v1844 = vunpack.c.l.b16 %v1459
        %v1845 = vunpack.c.h.b16 %v1459
        %v1846 = vunpack.c.l.b16 %v1460
        %v1847 = vunpack.c.h.b16 %v1460
        %v1848 = vunpack.c.l.b16 %v1461
        %v1849 = vunpack.c.h.b16 %v1461
        %v1850 = vunpack.c.l.b16 %v1462
        %v1851 = vunpack.c.h.b16 %v1462
        %v1852 = vunpack.c.l.b16 %v1463
        %v1853 = vunpack.c.h.b16 %v1463
        %v1854 = vunpack.c.l.b16 %v1464
        %v1855 = vunpack.c.h.b16 %v1464
        %v1856 = vunpack.c.l.b16 %v1465
        %v1857 = vunpack.c.h.b16 %v1465
        %v1858 = vunpack.c.l.b16 %v1466
        %v1859 = vunpack.c.h.b16 %v1466
        %v1860 = vunpack.c.l.b16 %v1467
        %v1861 = vunpack.c.h.b16 %v1467
        %v1862 = vunpack.c.l.b16 %v1468
        %v1863 = vunpack.c.h.b16 %v1468
        %v1864 = vunpack.c.l.b16 %v1469
        %v1865 = vunpack.c.h.b16 %v1469
        %v1866 = vunpack.c.l.b16 %v1470
        %v1867 = vunpack.c.h.b16 %v1470
        %v1868 = vunpack.c.l.b16 %v1471
        %v1869 = vunpack.c.h.b16 %v1471
        %v1870 = vunpack.c.l.b16 %v1472
        %v1871 = vunpack.c.h.b16 %v1472
        %v1872 = vunpack.c.l.b16 %v1473
        %v1873 = vunpack.c.h.b16 %v1473
        %v1874 = vunpack.c.l.b16 %v1474
        %v1875 = vunpack.c.h.b16 %v1474
        %v1876 = vunpack.c.l.b16 %v1475
        %v1877 = vunpack.c.h.b16 %v1475
        %v1878 = vunpack.c.l.b16 %v1476
        %v1879 = vunpack.c.h.b16 %v1476
        %v1880 = vunpack.c.l.b16 %v1477
        %v1881 = vunpack.c.h.b16 %v1477
        %v1882 = vunpack.c.l.b16 %v1478
        %v1883 = vunpack.c.h.b16 %v1478
        %v1884 = vunpack.c.l.b16 %v1479
        %v1885 = vunpack.c.h.b16 %v1479
        %v1886 = vunpack.c.l.b16 %v1480
        %v1887 = vunpack.c.h.b16 %v1480
        %v1888 = vunpack.c.l.b16 %v1481
        %v1889 = vunpack.c.h.b16 %v1481
        %v1890 = vunpack.c.l.b16 %v1482
        %v1891 = vunpack.c.h.b16 %v1482
        %v1892 = vunpack.c.l.b16 %v1483
        %v1893 = vunpack.c.h.b16 %v1483
        %v1894 = vunpack.c.l.b16 %v1484
        %v1895 = vunpack.c.h.b16 %v1484
        %v1896 = vunpack.c.l.b16 %v1485
        %v1897 = vunpack.c.h.b16 %v1485
        %v1898 = vunpack.c.l.b16 %v1486
        %v1899 = vunpack.c.h.b16 %v1486
        %v1900 = vunpack.c.l.b16 %v1487
        %v1901 = vunpack.c.h.b16 %v1487
        %v1902 = vunpack.c.l.b16 %v1488
        %v1903 = vunpack.c.h.b16 %v1488
        %v1904 = vunpack.c.l.b16 %v1489
        %v1905 = vunpack.c.h.b16 %v1489
        %v1906 = vunpack.c.l.b16 %v1490
        %v1907 = vunpack.c.h.b16 %v1490
        %v1908 = vunpack.c.l.b16 %v1491
        %v1909 = vunpack.c.h.b16 %v1491
        %v1910 = vunpack.c.l.b16 %v1492
        %v1911 = vunpack.c.h.b16 %v1492
        %v1912 = vunpack.c.l.b16 %v1493
        %v1913 = vunpack.c.h.b16 %v1493
        %v1914 = vunpack.c.l.b16 %v1494
        %v1915 = vunpack.c.h.b16 %v1494
        %v1916 = vunpack.c.l.b16 %v1495
        %v1917 = vunpack.c.h.b16 %v1495
        %v1918 = vunpack.c.l.b16 %v1496
        %v1919 = vunpack.c.h.b16 %v1496
        %v1920 = vunpack.c.l.b16 %v1497
        %v1921 = vunpack.c.h.b16 %v1497
        %v1922 = vunpack.c.l.b16 %v1498
        %v1923 = vunpack.c.h.b16 %v1498
        %v1924 = vunpack.c.l.b16 %v1499
        %v1925 = vunpack.c.h.b16 %v1499
        %v1926 = vunpack.c.l.b16 %v1500
        %v1927 = vunpack.c.h.b16 %v1500
        %v1928 = vunpack.c.l.b16 %v1501
        %v1929 = vunpack.c.h.b16 %v1501
        %v1930 = vunpack.c.l.b16 %v1502
        %v1931 = vunpack.c.h.b16 %v1502
        %v1932 = vunpack.c.l.b16 %v1503
        %v1933 = vunpack.c.h.b16 %v1503
        %v1934 = vunpack.c.l.b16 %v1504
        %v1935 = vunpack.c.h.b16 %v1504
        %v1936 = vunpack.c.l.b16 %v1505
        %v1937 = vunpack.c.h.b16 %v1505
        %v1938 = vunpack.c.l.b16 %v1506
        %v1939 = vunpack.c.h.b16 %v1506
        %v1940 = vunpack.c.l.b16 %v1507
        %v1941 = vunpack.c.h.b16 %v1507
        %v1942 = vunpack.c.l.b16 %v1508
        %v1943 = vunpack.c.h.b16 %v1508
        %v1944 = vunpack.c.l.b16 %v1509
        %v1945 = vunpack.c.h.b16 %v1509
        %v1946 = vunpack.c.l.b16 %v1510
        %v1947 = vunpack.c.h.b16 %v1510
        %v1948 = vunpack.c.l.b16 %v1511
        %v1949 = vunpack.c.h.b16 %v1511
        %v1950 = vunpack.c.l.b16 %v1512
        %v1951 = vunpack.c.h.b16 %v1512
        %v1952 = vunpack.c.l.b16 %v1513
        %v1953 = vunpack.c.h.b16 %v1513
        %v1954 = vunpack.c.l.b16 %v1514
        %v1955 = vunpack.c.h.b16 %v1514
        %v1956 = vunpack.c.l.b16 %v1515
        %v1957 = vunpack.c.h.b16 %v1515
        %v1958 = vunpack.c.l.b16 %v1516
        %v1959 = vunpack.c.h.b16 %v1516
        %v1960 = vunpack.c.l.b16 %v1517
        %v1961 = vunpack.c.h.b16 %v1517
        %v1962 = vunpack.c.l.b16 %v1518
        %v1963 = vunpack.c.h.b16 %v1518
        %v1964 = vunpack.c.l.b16 %v1519
        %v1965 = vunpack.c.h.b16 %v1519
        %v1966 = vunpack.c.l.b16 %v1520
        %v1967 = vunpack.c.h.b16 %v1520
        %v1968 = vunpack.c.l.b16 %v1521
        %v1969 = vunpack.c.h.b16 %v1521
        %v1970 = vunpack.c.l.b16 %v1522
        %v1971 = vunpack.c.h.b16 %v1522
        %v1972 = vunpack.c.l.b16 %v1523
        %v1973 = vunpack.c.h.b16 %v1523
        %v1974 = vunpack.c.l.b16 %v1524
        %v1975 = vunpack.c.h.b16 %v1524
        %v1976 = vunpack.c.l.b16 %v1525
        %v1977 = vunpack.c.h.b16 %v1525
        %v1978 = vunpack.c.l.b16 %v1526
        %v1979 = vunpack.c.h.b16 %v1526
        %v1980 = vunpack.c.l.b16 %v1527
        %v1981 = vunpack.c.h.b16 %v1527
        %v1982 = vunpack.c.l.b16 %v1528
        %v1983 = vunpack.c.h.b16 %v1528
        %v1984 = vunpack.c.l.b16 %v1529
        %v1985 = vunpack.c.h.b16 %v1529
        %v1986 = vunpack.c.l.b16 %v1530
        %v1987 = vunpack.c.h.b16 %v1530
        %v1988 = vunpack.c.l.b16 %v1531
        %v1989 = vunpack.c.h.b16 %v1531
        %v1990 = vunpack.c.l.b16 %v1532
        %v1991 = vunpack.c.h.b16 %v1532
        %v1992 = vunpack.c.l.b16 %v1533
        %v1993 = vunpack.c.h.b16 %v1533
        %v1994 = vunpack.c.l.b16 %v1534
        %v1995 = vunpack.c.h.b16 %v1534
        %v1996 = vunpack.c.l.b16 %v1535
        %v1997 = vunpack.c.h.b16 %v1535
        %v1998 = vunpack.c.l.b16 %v1536
        %v1999 = vunpack.c.h.b16 %v1536
        %v2000 = vunpack.c.l.b16 %v1537
        %v2001 = vunpack.c.h.b16 %v1537
        %v2002 = vunpack.c.l.b16 %v1538
        %v2003 = vunpack.c.h.b16 %v1538
        %v2004 = vunpack.c.l.b16 %v1539
        %v2005 = vunpack.c.h.b16 %v1539
        %v2006 = vunpack.c.l.b16 %v1540
        %v2007 = vunpack.c.h.b16 %v1540
        %v2008 = vunpack.c.l.b16 %v1541
        %v2009 = vunpack.c.h.b16 %v1541
        %v2010 = vunpack.c.l.b16 %v1542
        %v2011 = vunpack.c.h.b16 %v1542
        %v2012 = vunpack.c.l.b16 %v1543
        %v2013 = vunpack.c.h.b16 %v1543
        %v2014 = vunpack.c.l.b16 %v1544
        %v2015 = vunpack.c.h.b16 %v1544
        %v2016 = vunpack.c.l.b16 %v1545
        %v2017 = vunpack.c.h.b16 %v1545
        %v2018 = vunpack.c.l.b16 %v1546
        %v2019 = vunpack.c.h.b16 %v1546
        %v2020 = vunpack.c.l.b16 %v1547
        %v2021 = vunpack.c.h.b16 %v1547
        %v2022 = vunpack.c.l.b16 %v1548
        %v2023 = vunpack.c.h.b16 %v1548
        %v2024 = vunpack.c.l.b16 %v1549
        %v2025 = vunpack.c.h.b16 %v1549
        %v2026 = vunpack.c.l.b16 %v1550
        %v2027 = vunpack.c.h.b16 %v1550
        %v2028 = vunpack.c.l.b16 %v1551
        %v2029 = vunpack.c.h.b16 %v1551
        %v2030 = vunpack.c.l.b16 %v1552
        %v2031 = vunpack.c.h.b16 %v1552
        %v2032 = vunpack.c.l.b16 %v1553
        %v2033 = vunpack.c.h.b16 %v1553
        %v2034 = vunpack.c.l.b16 %v1554
        %v2035 = vunpack.c.h.b16 %v1554
        %v2036 = vunpack.c.l.b16 %v1555
        %v2037 = vunpack.c.h.b16 %v1555
        %v2038 = vunpack.c.l.b16 %v1556
        %v2039 = vunpack.c.h.b16 %v1556
        %v2040 = vunpack.c.l.b16 %v1557
        %v2041 = vunpack.c.h.b16 %v1557
        %v2042 = vunpack.c.l.b16 %v1558
        %v2043 = vunpack.c.h.b16 %v1558
        %v2044 = vunpack.c.l.b16 %v1559
        %v2045 = vunpack.c.h.b16 %v1559
        %v2046 = vunpack.c.l.b16 %v1560
        %v2047 = vunpack.c.h.b16 %v1560
        %v2048 = vunpack.c.l.b16 %v1561
        %v2049 = vunpack.c.h.b16 %v1561
        %v2050 = vunpack.c.l.b16 %v1562
        %v2051 = vunpack.c.h.b16 %v1562
        %v2052 = vunpack.c.l.b16 %v1563
        %v2053 = vunpack.c.h.b16 %v1563
        %v2054 = vunpack.c.l.b16 %v1564
        %v2055 = vunpack.c.h.b16 %v1564
        %v2056 = vunpack.c.l.b16 %v1565
        %v2057 = vunpack.c.h.b16 %v1565
        %v2058 = vunpack.c.l.b16 %v1566
        %v2059 = vunpack.c.h.b16 %v1566
        %v2060 = vunpack.c.l.b16 %v1567
        %v2061 = vunpack.c.h.b16 %v1567
        %v2062 = vunpack.c.l.b16 %v1568
        %v2063 = vunpack.c.h.b16 %v1568
        %v2064 = vunpack.c.l.b16 %v1569
        %v2065 = vunpack.c.h.b16 %v1569
        %v2066 = vunpack.c.l.b16 %v1570
        %v2067 = vunpack.c.h.b16 %v1570
        %v2068 = vunpack.c.l.b16 %v1571
        %v2069 = vunpack.c.h.b16 %v1571
        %v2070 = vunpack.c.l.b16 %v1572
        %v2071 = vunpack.c.h.b16 %v1572
        %v2072 = vunpack.c.l.b16 %v1573
        %v2073 = vunpack.c.h.b16 %v1573
        %v2074 = vunpack.c.l.b16 %v1574
        %v2075 = vunpack.c.h.b16 %v1574
        %v2076 = vunpack.c.l.b16 %v1575
        %v2077 = vunpack.c.h.b16 %v1575
        %v2078 = vunpack.c.l.b16 %v1576
        %v2079 = vunpack.c.h.b16 %v1576
        %v2080 = vunpack.c.l.b16 %v1577
        %v2081 = vunpack.c.h.b16 %v1577
        %v2082 = vunpack.c.l.b16 %v1578
        %v2083 = vunpack.c.h.b16 %v1578
        %v2084 = vunpack.c.l.b16 %v1579
        %v2085 = vunpack.c.h.b16 %v1579
        %v2086 = vunpack.c.l.b16 %v1580
        %v2087 = vunpack.c.h.b16 %v1580
        %v2088 = vunpack.c.l.b16 %v1581
        %v2089 = vunpack.c.h.b16 %v1581
        %v2090 = vunpack.c.l.b16 %v1582
        %v2091 = vunpack.c.h.b16 %v1582
        %v2092 = vunpack.c.l.b16 %v1583
        %v2093 = vunpack.c.h.b16 %v1583
        %v2094 = vunpack.c.l.b16 %v1584
        %v2095 = vunpack.c.h.b16 %v1584
        %v2096 = vunpack.c.l.b16 %v1585
        %v2097 = vunpack.c.h.b16 %v1585
        %v2098 = vunpack.c.l.b16 %v1586
        %v2099 = vunpack.c.h.b16 %v1586
        %v2100 = vunpack.c.l.b16 %v1587
        %v2101 = vunpack.c.h.b16 %v1587
        %v2102 = vunpack.c.l.b16 %v1588
        %v2103 = vunpack.c.h.b16 %v1588
        %v2104 = vunpack.c.l.b16 %v1589
        %v2105 = vunpack.c.h.b16 %v1589
        %v2106 = vunpack.c.l.b16 %v1590
        %v2107 = vunpack.c.h.b16 %v1590
        %v2108 = vunpack.c.l.b16 %v1591
        %v2109 = vunpack.c.h.b16 %v1591
        %v2110 = vunpack.c.l.b16 %v1592
        %v2111 = vunpack.c.h.b16 %v1592
        %v2112 = vunpack.c.l.b16 %v1593
        %v2113 = vunpack.c.h.b16 %v1593
        %v2114 = vunpack.c.l.b16 %v1594
        %v2115 = vunpack.c.h.b16 %v1594
        %v2116 = vunpack.c.l.b16 %v1595
        %v2117 = vunpack.c.h.b16 %v1595
        %v2118 = vunpack.c.l.b16 %v1596
        %v2119 = vunpack.c.h.b16 %v1596
        %v2120 = vunpack.c.l.b16 %v1597
        %v2121 = vunpack.c.h.b16 %v1597
        %v2122 = vunpack.c.l.b16 %v1598
        %v2123 = vunpack.c.h.b16 %v1598
        %v2124 = vunpack.c.l.b16 %v1599
        %v2125 = vunpack.c.h.b16 %v1599
        %v2126 = vunpack.c.l.b16 %v1600
        %v2127 = vunpack.c.h.b16 %v1600
        %v2128 = vunpack.c.l.b16 %v1601
        %v2129 = vunpack.c.h.b16 %v1601
        %v2130 = vunpack.c.l.b16 %v1602
        %v2131 = vunpack.c.h.b16 %v1602
        %v2132 = vunpack.c.l.b16 %v1603
        %v2133 = vunpack.c.h.b16 %v1603
        %v2134 = vunpack.c.l.b16 %v1604
        %v2135 = vunpack.c.h.b16 %v1604
        %v2136 = vunpack.c.l.b16 %v1605
        %v2137 = vunpack.c.h.b16 %v1605
        %v2138 = vunpack.c.l.b16 %v1606
        %v2139 = vunpack.c.h.b16 %v1606
        %v2140 = vunpack.c.l.b16 %v1607
        %v2141 = vunpack.c.h.b16 %v1607
        %v2142 = vunpack.c.l.b16 %v1608
        %v2143 = vunpack.c.h.b16 %v1608
        %v2144 = vunpack.c.l.b16 %v1609
        %v2145 = vunpack.c.h.b16 %v1609
        %v2146 = vunpack.c.l.b16 %v1610
        %v2147 = vunpack.c.h.b16 %v1610
        %v2148 = vunpack.c.l.b16 %v1611
        %v2149 = vunpack.c.h.b16 %v1611
        %v2150 = vunpack.c.l.b16 %v1612
        %v2151 = vunpack.c.h.b16 %v1612
        %v2152 = vunpack.c.l.b16 %v1613
        %v2153 = vunpack.c.h.b16 %v1613
        %v2154 = vunpack.c.l.b16 %v1614
        %v2155 = vunpack.c.h.b16 %v1614
        %v2156 = vunpack.c.l.b16 %v1615
        %v2157 = vunpack.c.h.b16 %v1615
        %v2158 = vunpack.c.l.b16 %v1616
        %v2159 = vunpack.c.h.b16 %v1616
        %v2160 = vunpack.c.l.b16 %v1617
        %v2161 = vunpack.c.h.b16 %v1617
        %v2162 = vunpack.c.l.b16 %v1618
        %v2163 = vunpack.c.h.b16 %v1618
        %v2164 = vunpack.c.l.b16 %v1619
        %v2165 = vunpack.c.h.b16 %v1619
        %v2166 = vunpack.c.l.b16 %v1620
        %v2167 = vunpack.c.h.b16 %v1620
        %v2168 = vunpack.c.l.b16 %v1621
        %v2169 = vunpack.c.h.b16 %v1621
        %v2170 = vunpack.c.l.b16 %v1622
        %v2171 = vunpack.c.h.b16 %v1622
        %v2172 = vunpack.c.l.b16 %v1623
        %v2173 = vunpack.c.h.b16 %v1623
        %v2174 = vunpack.c.l.b16 %v1624
        %v2175 = vunpack.c.h.b16 %v1624
        %v2176 = vunpack.c.l.b16 %v1625
        %v2177 = vunpack.c.h.b16 %v1625
        %v2178 = vunpack.c.l.b16 %v1626
        %v2179 = vunpack.c.h.b16 %v1626
        %v2180 = vunpack.c.l.b16 %v1627
        %v2181 = vunpack.c.h.b16 %v1627
        %v2182 = vunpack.c.l.b16 %v1628
        %v2183 = vunpack.c.h.b16 %v1628
        %v2184 = vunpack.c.l.b16 %v1629
        %v2185 = vunpack.c.h.b16 %v1629
        %v2186 = vunpack.c.l.b16 %v1630
        %v2187 = vunpack.c.h.b16 %v1630
        %v2188 = vunpack.c.l.b16 %v1631
        %v2189 = vunpack.c.h.b16 %v1631
        %v2190 = vunpack.c.l.b16 %v1632
        %v2191 = vunpack.c.h.b16 %v1632
        %v2192 = vunpack.c.l.b16 %v1633
        %v2193 = vunpack.c.h.b16 %v1633
        %v2194 = vunpack.c.l.b16 %v1634
        %v2195 = vunpack.c.h.b16 %v1634
        %v2196 = vunpack.c.l.b16 %v1635
        %v2197 = vunpack.c.h.b16 %v1635
        %v2198 = vunpack.c.l.b16 %v1636
        %v2199 = vunpack.c.h.b16 %v1636
        %v2200 = vunpack.c.l.b16 %v1637
        %v2201 = vunpack.c.h.b16 %v1637
        %v2202 = vunpack.c.l.b16 %v1638
        %v2203 = vunpack.c.h.b16 %v1638
        %v2204 = vunpack.c.l.b16 %v1639
        %v2205 = vunpack.c.h.b16 %v1639
        %v2206 = vunpack.c.l.b16 %v1640
        %v2207 = vunpack.c.h.b16 %v1640
        %v2208 = vunpack.c.l.b16 %v1641
        %v2209 = vunpack.c.h.b16 %v1641
        %v2210 = vunpack.c.l.b16 %v1642
        %v2211 = vunpack.c.h.b16 %v1642
        %v2212 = vunpack.c.l.b16 %v1643
        %v2213 = vunpack.c.h.b16 %v1643
        %v2214 = vunpack.c.l.b16 %v1644
        %v2215 = vunpack.c.h.b16 %v1644
        %v2216 = vunpack.c.l.b16 %v1645
        %v2217 = vunpack.c.h.b16 %v1645
        %v2218 = vunpack.c.l.b16 %v1646
        %v2219 = vunpack.c.h.b16 %v1646
        %v2220 = vunpack.c.l.b16 %v1647
        %v2221 = vunpack.c.h.b16 %v1647
        %v2222 = vunpack.c.l.b16 %v1648
        %v2223 = vunpack.c.h.b16 %v1648
        %v2224 = vunpack.c.l.b16 %v1649
        %v2225 = vunpack.c.h.b16 %v1649
        %v2226 = vpack.c.b16 %v1848, %v1842
        %v2227 = vpack.c.b16 %v1849, %v1843
        %v2228 = vpack.c.b16 %v1850, %v1844
        %v2229 = vpack.c.b16 %v1851, %v1845
        %v2230 = vpack.c.b16 %v1852, %v1846
        %v2231 = vpack.c.b16 %v1853, %v1847
        %v2232 = vpack.c.b16 %v1860, %v1854
        %v2233 = vpack.c.b16 %v1861, %v1855
        %v2234 = vpack.c.b16 %v1862, %v1856
        %v2235 = vpack.c.b16 %v1863, %v1857
        %v2236 = vpack.c.b16 %v1864, %v1858
        %v2237 = vpack.c.b16 %v1865, %v1859
        %v2238 = vpack.c.b16 %v1872, %v1866
        %v2239 = vpack.c.b16 %v1873, %v1867
        %v2240 = vpack.c.b16 %v1874, %v1868
        %v2241 = vpack.c.b16 %v1875, %v1869
        %v2242 = vpack.c.b16 %v1876, %v1870
        %v2243 = vpack.c.b16 %v1877, %v1871
        %v2244 = vpack.c.b16 %v1884, %v1878
        %v2245 = vpack.c.b16 %v1885, %v1879
        %v2246 = vpack.c.b16 %v1886, %v1880
        %v2247 = vpack.c.b16 %v1887, %v1881
        %v2248 = vpack.c.b16 %v1888, %v1882
        %v2249 = vpack.c.b16 %v1889, %v1883
        %v2250 = vpack.c.b16 %v1896, %v1890
        %v2251 = vpack.c.b16 %v1897, %v1891
        %v2252 = vpack.c.b16 %v1898, %v1892
        %v2253 = vpack.c.b16 %v1899, %v1893
        %v2254 = vpack.c.b16 %v1900, %v1894
        %v2255 = vpack.c.b16 %v1901, %v1895
        %v2256 = vpack.c.b16 %v1908, %v1902
        %v2257 = vpack.c.b16 %v1909, %v1903
        %v2258 = vpack.c.b16 %v1910, %v1904
        %v2259 = vpack.c.b16 %v1911, %v1905
        %v2260 = vpack.c.b16 %v1912, %v1906
        %v2261 = vpack.c.b16 %v1913, %v1907
        %v2262 = vpack.c.b16 %v1920, %v1914
        %v2263 = vpack.c.b16 %v1921, %v1915
        %v2264 = vpack.c.b16 %v1922, %v1916
        %v2265 = vpack.c.b16 %v1923, %v1917
        %v2266 = vpack.c.b16 %v1924, %v1918
        %v2267 = vpack.c.b16 %v1925, %v1919
        %v2268 = vpack.c.b16 %v1932, %v1926
        %v2269 = vpack.c.b16 %v1933, %v1927
        %v2270 = vpack.c.b16 %v1934, %v1928
        %v2271 = vpack.c.b16 %v1935, %v1929
        %v2272 = vpack.c.b16 %v1936, %v1930
        %v2273 = vpack.c.b16 %v1937, %v1931
        %v2274 = vpack.c.b16 %v1944, %v1938
        %v2275 = vpack.c.b16 %v1945, %v1939
        %v2276 = vpack.c.b16 %v1946, %v1940
        %v2277 = vpack.c.b16 %v1947, %v1941
        %v2278 = vpack.c.b16 %v1948, %v1942
        %v2279 = vpack.c.b16 %v1949, %v1943
        %v2280 = vpack.c.b16 %v1956, %v1950
        %v2281 = vpack.c.b16 %v1957, %v1951
        %v2282 = vpack.c.b16 %v1958, %v1952
        %v2283 = vpack.c.b16 %v1959, %v1953
        %v2284 = vpack.c.b16 %v1960, %v1954
        %v2285 = vpack.c.b16 %v1961, %v1955
        %v2286 = vpack.c.b16 %v1968, %v1962
        %v2287 = vpack.c.b16 %v1969, %v1963
        %v2288 = vpack.c.b16 %v1970, %v1964
        %v2289 = vpack.c.b16 %v1971, %v1965
        %v2290 = vpack.c.b16 %v1972, %v1966
        %v2291 = vpack.c.b16 %v1973, %v1967
        %v2292 = vpack.c.b16 %v1980, %v1974
        %v2293 = vpack.c.b16 %v1981, %v1975
        %v2294 = vpack.c.b16 %v1982, %v1976
        %v2295 = vpack.c.b16 %v1983, %v1977
        %v2296 = vpack.c.b16 %v1984, %v1978
        %v2297 = vpack.c.b16 %v1985, %v1979
        %v2298 = vpack.c.b16 %v1992, %v1986
        %v2299 = vpack.c.b16 %v1993, %v1987
        %v2300 = vpack.c.b16 %v1994, %v1988
        %v2301 = vpack.c.b16 %v1995, %v1989
        %v2302 = vpack.c.b16 %v1996, %v1990
        %v2303 = vpack.c.b16 %v1997, %v1991
        %v2304 = vpack.c.b16 %v2004, %v1998
        %v2305 = vpack.c.b16 %v2005, %v1999
        %v2306 = vpack.c.b16 %v2006, %v2000
        %v2307 = vpack.c.b16 %v2007, %v2001
        %v2308 = vpack.c.b16 %v2008, %v2002
        %v2309 = vpack.c.b16 %v2009, %v2003
        %v2310 = vpack.c.b16 %v2016, %v2010
        %v2311 = vpack.c.b16 %v2017, %v2011
        %v2312 = vpack.c.b16 %v2018, %v2012
        %v2313 = vpack.c.b16 %v2019, %v2013
        %v2314 = vpack.c.b16 %v2020, %v2014
        %v2315 = vpack.c.b16 %v2021, %v2015
        %v2316 = vpack.c.b16 %v2028, %v2022
        %v2317 = vpack.c.b16 %v2029, %v2023
        %v2318 = vpack.c.b16 %v2030, %v2024
        %v2319 = vpack.c.b16 %v2031, %v2025
        %v2320 = vpack.c.b16 %v2032, %v2026
        %v2321 = vpack.c.b16 %v2033, %v2027
        %v2322 = vpack.c.b16 %v2040, %v2034
        %v2323 = vpack.c.b16 %v2041, %v2035
        %v2324 = vpack.c.b16 %v2042, %v2036
        %v2325 = vpack.c.b16 %v2043, %v2037
        %v2326 = vpack.c.b16 %v2044, %v2038
        %v2327 = vpack.c.b16 %v2045, %v2039
        %v2328 = vpack.c.b16 %v2052, %v2046
        %v2329 = vpack.c.b16 %v2053, %v2047
        %v2330 = vpack.c.b16 %v2054, %v2048
        %v2331 = vpack.c.b16 %v2055, %v2049
        %v2332 = vpack.c.b16 %v2056, %v2050
        %v2333 = vpack.c.b16 %v2057, %v2051
        %v2334 = vpack.c.b16 %v2064, %v2058
        %v2335 = vpack.c.b16 %v2065, %v2059
        %v2336 = vpack.c.b16 %v2066, %v2060
        %v2337 = vpack.c.b16 %v2067, %v2061
        %v2338 = vpack.c.b16 %v2068, %v2062
        %v2339 = vpack.c.b16 %v2069, %v2063
        %v2340 = vpack.c.b16 %v2076, %v2070
        %v2341 = vpack.c.b16 %v2077, %v2071
        %v2342 = vpack.c.b16 %v2078, %v2072
        %v2343 = vpack.c.b16 %v2079, %v2073
        %v2344 = vpack.c.b16 %v2080, %v2074
        %v2345 = vpack.c.b16 %v2081, %v2075
        %v2346 = vpack.c.b16 %v2088, %v2082
        %v2347 = vpack.c.b16 %v2089, %v2083
        %v2348 = vpack.c.b16 %v2090, %v2084
        %v2349 = vpack.c.b16 %v2091, %v2085
        %v2350 = vpack.c.b16 %v2092, %v2086
        %v2351 = vpack.c.b16 %v2093, %v2087
        %v2352 = vpack.c.b16 %v2100, %v2094
        %v2353 = vpack.c.b16 %v2101, %v2095
        %v2354 = vpack.c.b16 %v2102, %v2096
        %v2355 = vpack.c.b16 %v2103, %v2097
        %v2356 = vpack.c.b16 %v2104, %v2098
        %v2357 = vpack.c.b16 %v2105, %v2099
        %v2358 = vpack.c.b16 %v2112, %v2106
        %v2359 = vpack.c.b16 %v2113, %v2107
        %v2360 = vpack.c.b16 %v2114, %v2108
        %v2361 = vpack.c.b16 %v2115, %v2109
        %v2362 = vpack.c.b16 %v2116, %v2110
        %v2363 = vpack.c.b16 %v2117, %v2111
        %v2364 = vpack.c.b16 %v2124, %v2118
        %v2365 = vpack.c.b16 %v2125, %v2119
        %v2366 = vpack.c.b16 %v2126, %v2120
        %v2367 = vpack.c.b16 %v2127, %v2121
        %v2368 = vpack.c.b16 %v2128, %v2122
        %v2369 = vpack.c.b16 %v2129, %v2123
        %v2370 = vpack.c.b16 %v2136, %v2130
        %v2371 = vpack.c.b16 %v2137, %v2131
        %v2372 = vpack.c.b16 %v2138, %v2132
        %v2373 = vpack.c.b16 %v2139, %v2133
        %v2374 = vpack.c.b16 %v2140, %v2134
        %v2375 = vpack.c.b16 %v2141, %v2135
        %v2376 = vpack.c.b16 %v2148, %v2142
        %v2377 = vpack.c.b16 %v2149, %v2143
        %v2378 = vpack.c.b16 %v2150, %v2144
        %v2379 = vpack.c.b16 %v2151, %v2145
        %v2380 = vpack.c.b16 %v2152, %v2146
        %v2381 = vpack.c.b16 %v2153, %v2147
        %v2382 = vpack.c.b16 %v2160, %v2154
        %v2383 = vpack.c.b16 %v2161, %v2155
        %v2384 = vpack.c.b16 %v2162, %v2156
        %v2385 = vpack.c.b16 %v2163, %v2157
        %v2386 = vpack.c.b16 %v2164, %v2158
        %v2387 = vpack.c.b16 %v2165, %v2159
        %v2388 = vpack.c.b16 %v2172, %v2166
        %v2389 = vpack.c.b16 %v2173, %v2167
        %v2390 = vpack.c.b16 %v2174, %v2168
        %v2391 = vpack.c.b16 %v2175, %v2169
        %v2392 = vpack.c.b16 %v2176, %v2170
        %v2393 = vpack.c.b16 %v2177, %v2171
        %v2394 = vpack.c.b16 %v2184, %v2178
        %v2395 = vpack.c.b16 %v2185, %v2179
        %v2396 = vpack.c.b16 %v2186, %v2180
        %v2397 = vpack.c.b16 %v2187, %v2181
        %v2398 = vpack.c.b16 %v2188, %v2182
        %v2399 = vpack.c.b16 %v2189, %v2183
        %v2400 = vpack.c.b16 %v2196, %v2190
        %v2401 = vpack.c.b16 %v2197, %v2191
        %v2402 = vpack.c.b16 %v2198, %v2192
        %v2403 = vpack.c.b16 %v2199, %v2193
        %v2404 = vpack.c.b16 %v2200, %v2194
        %v2405 = vpack.c.b16 %v2201, %v2195
        %v2406 = vpack.c.b16 %v2208, %v2202
        %v2407 = vpack.c.b16 %v2209, %v2203
        %v2408 = vpack.c.b16 %v2210, %v2204
        %v2409 = vpack.c.b16 %v2211, %v2205
        %v2410 = vpack.c.b16 %v2212, %v2206
        %v2411 = vpack.c.b16 %v2213, %v2207
        %v2412 = vpack.c.b16 %v2220, %v2214
        %v2413 = vpack.c.b16 %v2221, %v2215
        %v2414 = vpack.c.b16 %v2222, %v2216
        %v2415 = vpack.c.b16 %v2223, %v2217
        %v2416 = vpack.c.b16 %v2224, %v2218
        %v2417 = vpack.c.b16 %v2225, %v2219
        %2610 = vmatprep.subr.bf16.mxu0 %v2227
        %2611 = vmatpush1.bf16.msra.mxu0 %v2226
        %2612 = vmatprep.subr.bf16.mxu0 %v2233
        %2613 = vmatpush1.bf16.msra.mxu0 %v2232
        %2614 = vmatprep.subr.bf16.mxu0 %v2239
        %2615 = vmatpush1.bf16.msra.mxu0 %v2238
        %2616 = vmatprep.subr.bf16.mxu0 %v2245
        %2617 = vmatpush1.bf16.msra.mxu0 %v2244
        %2618 = vmatprep.subr.bf16.mxu0 %v2251
        %2619 = vmatpush1.bf16.msra.mxu0 %v2250
        %2620 = vmatprep.subr.bf16.mxu0 %v2257
        %2621 = vmatpush1.bf16.msra.mxu0 %v2256
        %2622 = vmatprep.subr.bf16.mxu0 %v2263
        %2623 = vmatpush1.bf16.msra.mxu0 %v2262
        %2624 = vmatprep.subr.bf16.mxu0 %v2269
        %2625 = vmatpush1.bf16.msra.mxu0 %v2268
        %2626 = vmatprep.subr.bf16.mxu0 %v2275
        %2627 = vmatpush1.bf16.msra.mxu0 %v2274
        %2628 = vmatprep.subr.bf16.mxu0 %v2281
        %2629 = vmatpush1.bf16.msra.mxu0 %v2280
        %2630 = vmatprep.subr.bf16.mxu0 %v2287
        %2631 = vmatpush1.bf16.msra.mxu0 %v2286
        %2632 = vmatprep.subr.bf16.mxu0 %v2293
        %2633 = vmatpush1.bf16.msra.mxu0 %v2292
        %2634 = vmatprep.subr.bf16.mxu0 %v2299
        %2635 = vmatpush1.bf16.msra.mxu0 %v2298
        %2636 = vmatprep.subr.bf16.mxu0 %v2305
        %2637 = vmatpush1.bf16.msra.mxu0 %v2304
        %2638 = vmatprep.subr.bf16.mxu0 %v2311
        %2639 = vmatpush1.bf16.msra.mxu0 %v2310
        %2640 = vmatprep.subr.bf16.mxu0 %v2317
        %2641 = vmatpush1.bf16.msra.mxu0 %v2316
        %2642 = vmatprep.mubr.bf16.mxu0 %v1331
        %2643 = vmatmul.mubr.bf16.gmra.mrb[0].mxu0 %v1330
        %v2644 = vpop.f32.mrb[0].mxu0
        %v2645 = vadd.f32 0.0, %v2644
        %v2646 = vpop.f32.mrb[0].mxu0
        %v2647 = vadd.f32 0.0, %v2646
        %v2648 = vpop.f32.mrb[0].mxu0
        %v2649 = vadd.f32 0.0, %v2648
        %v2650 = vpop.f32.mrb[0].mxu0
        %v2651 = vadd.f32 0.0, %v2650
        %2652 = vmatprep.mubr.bf16.mxu0 %v1335
        %2653 = vmatmul.mubr.bf16.gmra.mrb[0].mxu0 %v1334
        %v2654 = vpop.f32.mrb[0].mxu0
        %v2655 = vadd.f32 0.0, %v2654
        %v2656 = vpop.f32.mrb[0].mxu0
        %v2657 = vadd.f32 0.0, %v2656
        %v2658 = vpop.f32.mrb[0].mxu0
        %v2659 = vadd.f32 0.0, %v2658
        %v2660 = vpop.f32.mrb[0].mxu0
        %v2661 = vadd.f32 0.0, %v2660
        %2662 = vmatprep.mubr.bf16.mxu0 %v1339
        %2663 = vmatmul.mubr.bf16.gmra.mrb[0].mxu0 %v1338
        %v2664 = vpop.f32.mrb[0].mxu0
        %v2665 = vadd.f32 0.0, %v2664
        %v2666 = vpop.f32.mrb[0].mxu0
        %v2667 = vadd.f32 0.0, %v2666
        %v2668 = vpop.f32.mrb[0].mxu0
        %v2669 = vadd.f32 0.0, %v2668
        %v2670 = vpop.f32.mrb[0].mxu0
        %v2671 = vadd.f32 0.0, %v2670
        %2672 = vmatprep.mubr.bf16.mxu0 %v1343
        %2673 = vmatmul.mubr.bf16.gmra.mrb[0].mxu0 %v1342
        %v2674 = vpop.f32.mrb[0].mxu0
        %v2675 = vadd.f32 0.0, %v2674
        %v2676 = vpop.f32.mrb[0].mxu0
        %v2677 = vadd.f32 0.0, %v2676
        %v2678 = vpop.f32.mrb[0].mxu0
        %v2679 = vadd.f32 0.0, %v2678
        %v2680 = vpop.f32.mrb[0].mxu0
        %v2681 = vadd.f32 0.0, %v2680
        %2682 = vmatprep.mubr.bf16.mxu0 %v1347
        %2683 = vmatmul.mubr.bf16.gmra.mrb[0].mxu0 %v1346
        %v2684 = vpop.f32.mrb[0].mxu0
        %v2685 = vadd.f32 0.0, %v2684
        %v2686 = vpop.f32.mrb[0].mxu0
        %v2687 = vadd.f32 0.0, %v2686
        %v2688 = vpop.f32.mrb[0].mxu0
        %v2689 = vadd.f32 0.0, %v2688
        %v2690 = vpop.f32.mrb[0].mxu0
        %v2691 = vadd.f32 0.0, %v2690
        %2692 = vmatprep.mubr.bf16.mxu0 %v1351
        %2693 = vmatmul.mubr.bf16.gmra.mrb[0].mxu0 %v1350
        %v2694 = vpop.f32.mrb[0].mxu0
        %v2695 = vadd.f32 0.0, %v2694
        %v2696 = vpop.f32.mrb[0].mxu0
        %v2697 = vadd.f32 0.0, %v2696
        %v2698 = vpop.f32.mrb[0].mxu0
        %v2699 = vadd.f32 0.0, %v2698
        %v2700 = vpop.f32.mrb[0].mxu0
        %v2701 = vadd.f32 0.0, %v2700
        %2702 = vmatprep.mubr.bf16.mxu0 %v1355
        %2703 = vmatmul.mubr.bf16.gmra.mrb[0].mxu0 %v1354
        %v2704 = vpop.f32.mrb[0].mxu0
        %v2705 = vadd.f32 0.0, %v2704
        %v2706 = vpop.f32.mrb[0].mxu0
        %v2707 = vadd.f32 0.0, %v2706
        %v2708 = vpop.f32.mrb[0].mxu0
        %v2709 = vadd.f32 0.0, %v2708
        %v2710 = vpop.f32.mrb[0].mxu0
        %v2711 = vadd.f32 0.0, %v2710
        %2712 = vmatprep.mubr.bf16.mxu0 %v1359
        %2713 = vmatmul.mubr.bf16.gmra.mrb[0].mxu0 %v1358
        %v2714 = vpop.f32.mrb[0].mxu0
        %v2715 = vadd.f32 0.0, %v2714
        %v2716 = vpop.f32.mrb[0].mxu0
        %v2717 = vadd.f32 0.0, %v2716
        %v2718 = vpop.f32.mrb[0].mxu0
        %v2719 = vadd.f32 0.0, %v2718
        %v2720 = vpop.f32.mrb[0].mxu0
        %v2721 = vadd.f32 0.0, %v2720
        %2722 = vmatprep.mubr.bf16.mxu0 %v1363
        %2723 = vmatmul.mubr.bf16.gmra.mrb[0].mxu0 %v1362
        %v2724 = vpop.f32.mrb[0].mxu0
        %v2725 = vadd.f32 0.0, %v2724
        %v2726 = vpop.f32.mrb[0].mxu0
        %v2727 = vadd.f32 0.0, %v2726
        %v2728 = vpop.f32.mrb[0].mxu0
        %v2729 = vadd.f32 0.0, %v2728
        %v2730 = vpop.f32.mrb[0].mxu0
        %v2731 = vadd.f32 0.0, %v2730
        %2732 = vmatprep.mubr.bf16.mxu0 %v1367
        %2733 = vmatmul.mubr.bf16.gmra.mrb[0].mxu0 %v1366
        %v2734 = vpop.f32.mrb[0].mxu0
        %v2735 = vadd.f32 0.0, %v2734
        %v2736 = vpop.f32.mrb[0].mxu0
        %v2737 = vadd.f32 0.0, %v2736
        %v2738 = vpop.f32.mrb[0].mxu0
        %v2739 = vadd.f32 0.0, %v2738
        %v2740 = vpop.f32.mrb[0].mxu0
        %v2741 = vadd.f32 0.0, %v2740
        %2742 = vmatprep.mubr.bf16.mxu0 %v1371
        %2743 = vmatmul.mubr.bf16.gmra.mrb[0].mxu0 %v1370
        %v2744 = vpop.f32.mrb[0].mxu0
        %v2745 = vadd.f32 0.0, %v2744
        %v2746 = vpop.f32.mrb[0].mxu0
        %v2747 = vadd.f32 0.0, %v2746
        %v2748 = vpop.f32.mrb[0].mxu0
        %v2749 = vadd.f32 0.0, %v2748
        %v2750 = vpop.f32.mrb[0].mxu0
        %v2751 = vadd.f32 0.0, %v2750
        %2752 = vmatprep.mubr.bf16.mxu0 %v1375
        %2753 = vmatmul.mubr.bf16.gmra.mrb[0].mxu0 %v1374
        %v2754 = vpop.f32.mrb[0].mxu0
        %v2755 = vadd.f32 0.0, %v2754
        %v2756 = vpop.f32.mrb[0].mxu0
        %v2757 = vadd.f32 0.0, %v2756
        %v2758 = vpop.f32.mrb[0].mxu0
        %v2759 = vadd.f32 0.0, %v2758
        %v2760 = vpop.f32.mrb[0].mxu0
        %v2761 = vadd.f32 0.0, %v2760
        %2762 = vmatprep.mubr.bf16.mxu0 %v1379
        %2763 = vmatmul.mubr.bf16.gmra.mrb[0].mxu0 %v1378
        %v2764 = vpop.f32.mrb[0].mxu0
        %v2765 = vadd.f32 0.0, %v2764
        %v2766 = vpop.f32.mrb[0].mxu0
        %v2767 = vadd.f32 0.0, %v2766
        %v2768 = vpop.f32.mrb[0].mxu0
        %v2769 = vadd.f32 0.0, %v2768
        %v2770 = vpop.f32.mrb[0].mxu0
        %v2771 = vadd.f32 0.0, %v2770
        %2772 = vmatprep.mubr.bf16.mxu0 %v1383
        %2773 = vmatmul.mubr.bf16.gmra.mrb[0].mxu0 %v1382
        %v2774 = vpop.f32.mrb[0].mxu0
        %v2775 = vadd.f32 0.0, %v2774
        %v2776 = vpop.f32.mrb[0].mxu0
        %v2777 = vadd.f32 0.0, %v2776
        %v2778 = vpop.f32.mrb[0].mxu0
        %v2779 = vadd.f32 0.0, %v2778
        %v2780 = vpop.f32.mrb[0].mxu0
        %v2781 = vadd.f32 0.0, %v2780
        %2782 = vmatprep.mubr.bf16.mxu0 %v1387
        %2783 = vmatmul.mubr.bf16.gmra.mrb[0].mxu0 %v1386
        %v2784 = vpop.f32.mrb[0].mxu0
        %v2785 = vadd.f32 0.0, %v2784
        %v2786 = vpop.f32.mrb[0].mxu0
        %v2787 = vadd.f32 0.0, %v2786
        %v2788 = vpop.f32.mrb[0].mxu0
        %v2789 = vadd.f32 0.0, %v2788
        %v2790 = vpop.f32.mrb[0].mxu0
        %v2791 = vadd.f32 0.0, %v2790
        %2792 = vmatprep.mubr.bf16.mxu0 %v1391
        %2793 = vmatmul.mubr.bf16.gmra.mrb[0].mxu0 %v1390
        %v2794 = vpop.f32.mrb[0].mxu0
        %v2795 = vadd.f32 0.0, %v2794
        %v2796 = vpop.f32.mrb[0].mxu0
        %v2797 = vadd.f32 0.0, %v2796
        %v2798 = vpop.f32.mrb[0].mxu0
        %v2799 = vadd.f32 0.0, %v2798
        %v2800 = vpop.f32.mrb[0].mxu0
        %v2801 = vadd.f32 0.0, %v2800
        %2802 = vmatprep.mubr.bf16.mxu0 %v1395
        %2803 = vmatmul.mubr.bf16.gmra.mrb[0].mxu0 %v1394
        %v2804 = vpop.f32.mrb[0].mxu0
        %v2805 = vadd.f32 0.0, %v2804
        %v2806 = vpop.f32.mrb[0].mxu0
        %v2807 = vadd.f32 0.0, %v2806
        %v2808 = vpop.f32.mrb[0].mxu0
        %v2809 = vadd.f32 0.0, %v2808
        %v2810 = vpop.f32.mrb[0].mxu0
        %v2811 = vadd.f32 0.0, %v2810
        %2812 = vmatprep.mubr.bf16.mxu0 %v1399
        %2813 = vmatmul.mubr.bf16.gmra.mrb[0].mxu0 %v1398
        %v2814 = vpop.f32.mrb[0].mxu0
        %v2815 = vadd.f32 0.0, %v2814
        %v2816 = vpop.f32.mrb[0].mxu0
        %v2817 = vadd.f32 0.0, %v2816
        %v2818 = vpop.f32.mrb[0].mxu0
        %v2819 = vadd.f32 0.0, %v2818
        %v2820 = vpop.f32.mrb[0].mxu0
        %v2821 = vadd.f32 0.0, %v2820
        %2822 = vmatprep.mubr.bf16.mxu0 %v1403
        %2823 = vmatmul.mubr.bf16.gmra.mrb[0].mxu0 %v1402
        %v2824 = vpop.f32.mrb[0].mxu0
        %v2825 = vadd.f32 0.0, %v2824
        %v2826 = vpop.f32.mrb[0].mxu0
        %v2827 = vadd.f32 0.0, %v2826
        %v2828 = vpop.f32.mrb[0].mxu0
        %v2829 = vadd.f32 0.0, %v2828
        %v2830 = vpop.f32.mrb[0].mxu0
        %v2831 = vadd.f32 0.0, %v2830
        %2832 = vmatprep.mubr.bf16.mxu0 %v1407
        %2833 = vmatmul.mubr.bf16.gmra.mrb[0].mxu0 %v1406
        %v2834 = vpop.f32.mrb[0].mxu0
        %v2835 = vadd.f32 0.0, %v2834
        %v2836 = vpop.f32.mrb[0].mxu0
        %v2837 = vadd.f32 0.0, %v2836
        %v2838 = vpop.f32.mrb[0].mxu0
        %v2839 = vadd.f32 0.0, %v2838
        %v2840 = vpop.f32.mrb[0].mxu0
        %v2841 = vadd.f32 0.0, %v2840
        %2842 = vmatprep.mubr.bf16.mxu0 %v1411
        %2843 = vmatmul.mubr.bf16.gmra.mrb[0].mxu0 %v1410
        %v2844 = vpop.f32.mrb[0].mxu0
        %v2845 = vadd.f32 0.0, %v2844
        %v2846 = vpop.f32.mrb[0].mxu0
        %v2847 = vadd.f32 0.0, %v2846
        %v2848 = vpop.f32.mrb[0].mxu0
        %v2849 = vadd.f32 0.0, %v2848
        %v2850 = vpop.f32.mrb[0].mxu0
        %v2851 = vadd.f32 0.0, %v2850
        %2852 = vmatprep.mubr.bf16.mxu0 %v1415
        %2853 = vmatmul.mubr.bf16.gmra.mrb[0].mxu0 %v1414
        %v2854 = vpop.f32.mrb[0].mxu0
        %v2855 = vadd.f32 0.0, %v2854
        %v2856 = vpop.f32.mrb[0].mxu0
        %v2857 = vadd.f32 0.0, %v2856
        %v2858 = vpop.f32.mrb[0].mxu0
        %v2859 = vadd.f32 0.0, %v2858
        %v2860 = vpop.f32.mrb[0].mxu0
        %v2861 = vadd.f32 0.0, %v2860
        %2862 = vmatprep.mubr.bf16.mxu0 %v1419
        %2863 = vmatmul.mubr.bf16.gmra.mrb[0].mxu0 %v1418
        %v2864 = vpop.f32.mrb[0].mxu0
        %v2865 = vadd.f32 0.0, %v2864
        %v2866 = vpop.f32.mrb[0].mxu0
        %v2867 = vadd.f32 0.0, %v2866
        %v2868 = vpop.f32.mrb[0].mxu0
        %v2869 = vadd.f32 0.0, %v2868
        %v2870 = vpop.f32.mrb[0].mxu0
        %v2871 = vadd.f32 0.0, %v2870
        %2872 = vmatprep.mubr.bf16.mxu0 %v1423
        %2873 = vmatmul.mubr.bf16.gmra.mrb[0].mxu0 %v1422
        %v2874 = vpop.f32.mrb[0].mxu0
        %v2875 = vadd.f32 0.0, %v2874
        %v2876 = vpop.f32.mrb[0].mxu0
        %v2877 = vadd.f32 0.0, %v2876
        %v2878 = vpop.f32.mrb[0].mxu0
        %v2879 = vadd.f32 0.0, %v2878
        %v2880 = vpop.f32.mrb[0].mxu0
        %v2881 = vadd.f32 0.0, %v2880
        %2882 = vmatprep.mubr.bf16.mxu0 %v1427
        %2883 = vmatmul.mubr.bf16.gmra.mrb[0].mxu0 %v1426
        %v2884 = vpop.f32.mrb[0].mxu0
        %v2885 = vadd.f32 0.0, %v2884
        %v2886 = vpop.f32.mrb[0].mxu0
        %v2887 = vadd.f32 0.0, %v2886
        %v2888 = vpop.f32.mrb[0].mxu0
        %v2889 = vadd.f32 0.0, %v2888
        %v2890 = vpop.f32.mrb[0].mxu0
        %v2891 = vadd.f32 0.0, %v2890
        %2892 = vmatprep.mubr.bf16.mxu0 %v1431
        %2893 = vmatmul.mubr.bf16.gmra.mrb[0].mxu0 %v1430
        %v2894 = vpop.f32.mrb[0].mxu0
        %v2895 = vadd.f32 0.0, %v2894
        %v2896 = vpop.f32.mrb[0].mxu0
        %v2897 = vadd.f32 0.0, %v2896
        %v2898 = vpop.f32.mrb[0].mxu0
        %v2899 = vadd.f32 0.0, %v2898
        %v2900 = vpop.f32.mrb[0].mxu0
        %v2901 = vadd.f32 0.0, %v2900
        %2902 = vmatprep.mubr.bf16.mxu0 %v1435
        %2903 = vmatmul.mubr.bf16.gmra.mrb[0].mxu0 %v1434
        %v2904 = vpop.f32.mrb[0].mxu0
        %v2905 = vadd.f32 0.0, %v2904
        %v2906 = vpop.f32.mrb[0].mxu0
        %v2907 = vadd.f32 0.0, %v2906
        %v2908 = vpop.f32.mrb[0].mxu0
        %v2909 = vadd.f32 0.0, %v2908
        %v2910 = vpop.f32.mrb[0].mxu0
        %v2911 = vadd.f32 0.0, %v2910
        %2912 = vmatprep.mubr.bf16.mxu0 %v1439
        %2913 = vmatmul.mubr.bf16.gmra.mrb[0].mxu0 %v1438
        %v2914 = vpop.f32.mrb[0].mxu0
        %v2915 = vadd.f32 0.0, %v2914
        %v2916 = vpop.f32.mrb[0].mxu0
        %v2917 = vadd.f32 0.0, %v2916
        %v2918 = vpop.f32.mrb[0].mxu0
        %v2919 = vadd.f32 0.0, %v2918
        %v2920 = vpop.f32.mrb[0].mxu0
        %v2921 = vadd.f32 0.0, %v2920
        %2922 = vmatprep.mubr.bf16.mxu0 %v1443
        %2923 = vmatmul.mubr.bf16.gmra.mrb[0].mxu0 %v1442
        %v2924 = vpop.f32.mrb[0].mxu0
        %v2925 = vadd.f32 0.0, %v2924
        %v2926 = vpop.f32.mrb[0].mxu0
        %v2927 = vadd.f32 0.0, %v2926
        %v2928 = vpop.f32.mrb[0].mxu0
        %v2929 = vadd.f32 0.0, %v2928
        %v2930 = vpop.f32.mrb[0].mxu0
        %v2931 = vadd.f32 0.0, %v2930
        %2932 = vmatprep.mubr.bf16.mxu0 %v1447
        %2933 = vmatmul.mubr.bf16.gmra.mrb[0].mxu0 %v1446
        %v2934 = vpop.f32.mrb[0].mxu0
        %v2935 = vadd.f32 0.0, %v2934
        %v2936 = vpop.f32.mrb[0].mxu0
        %v2937 = vadd.f32 0.0, %v2936
        %v2938 = vpop.f32.mrb[0].mxu0
        %v2939 = vadd.f32 0.0, %v2938
        %v2940 = vpop.f32.mrb[0].mxu0
        %v2941 = vadd.f32 0.0, %v2940
        %2942 = vmatprep.mubr.bf16.mxu0 %v1451
        %2943 = vmatmul.mubr.bf16.gmra.mrb[0].mxu0 %v1450
        %v2944 = vpop.f32.mrb[0].mxu0
        %v2945 = vadd.f32 0.0, %v2944
        %v2946 = vpop.f32.mrb[0].mxu0
        %v2947 = vadd.f32 0.0, %v2946
        %v2948 = vpop.f32.mrb[0].mxu0
        %v2949 = vadd.f32 0.0, %v2948
        %v2950 = vpop.f32.mrb[0].mxu0
        %v2951 = vadd.f32 0.0, %v2950
        %2952 = vmatprep.mubr.bf16.mxu0 %v1455
        %2953 = vmatmul.mubr.bf16.gmra.mrb[0].mxu0 %v1454
        %v2954 = vpop.f32.mrb[0].mxu0
        %v2955 = vadd.f32 0.0, %v2954
        %v2956 = vpop.f32.mrb[0].mxu0
        %v2957 = vadd.f32 0.0, %v2956
        %v2958 = vpop.f32.mrb[0].mxu0
        %v2959 = vadd.f32 0.0, %v2958
        %v2960 = vpop.f32.mrb[0].mxu0
        %v2961 = vadd.f32 0.0, %v2960
        %2962 = vdwg.mxu0
        %2963 = vmatprep.subr.bf16.mxu0 %v2323
        %2964 = vmatpush1.bf16.msra.mxu0 %v2322
        %2965 = vmatprep.subr.bf16.mxu0 %v2329
        %2966 = vmatpush1.bf16.msra.mxu0 %v2328
        %2967 = vmatprep.subr.bf16.mxu0 %v2335
        %2968 = vmatpush1.bf16.msra.mxu0 %v2334
        %2969 = vmatprep.subr.bf16.mxu0 %v2341
        %2970 = vmatpush1.bf16.msra.mxu0 %v2340
        %2971 = vmatprep.subr.bf16.mxu0 %v2347
        %2972 = vmatpush1.bf16.msra.mxu0 %v2346
        %2973 = vmatprep.subr.bf16.mxu0 %v2353
        %2974 = vmatpush1.bf16.msra.mxu0 %v2352
        %2975 = vmatprep.subr.bf16.mxu0 %v2359
        %2976 = vmatpush1.bf16.msra.mxu0 %v2358
        %2977 = vmatprep.subr.bf16.mxu0 %v2365
        %2978 = vmatpush1.bf16.msra.mxu0 %v2364
        %2979 = vmatprep.subr.bf16.mxu0 %v2371
        %2980 = vmatpush1.bf16.msra.mxu0 %v2370
        %2981 = vmatprep.subr.bf16.mxu0 %v2377
        %2982 = vmatpush1.bf16.msra.mxu0 %v2376
        %2983 = vmatprep.subr.bf16.mxu0 %v2383
        %2984 = vmatpush1.bf16.msra.mxu0 %v2382
        %2985 = vmatprep.subr.bf16.mxu0 %v2389
        %2986 = vmatpush1.bf16.msra.mxu0 %v2388
        %2987 = vmatprep.subr.bf16.mxu0 %v2395
        %2988 = vmatpush1.bf16.msra.mxu0 %v2394
        %2989 = vmatprep.subr.bf16.mxu0 %v2401
        %2990 = vmatpush1.bf16.msra.mxu0 %v2400
        %2991 = vmatprep.subr.bf16.mxu0 %v2407
        %2992 = vmatpush1.bf16.msra.mxu0 %v2406
        %2993 = vmatprep.subr.bf16.mxu0 %v2413
        %2994 = vmatpush1.bf16.msra.mxu0 %v2412
        %2995 = vmatprep.mubr.bf16.mxu0 %v1333
        %2996 = vmatmul.mubr.bf16.gmra.mrb[0].mxu0 %v1332
        %v2997 = vpop.f32.mrb[0].mxu0
        %v2998 = vadd.f32 %v2645, %v2997
        %v2999 = vpop.f32.mrb[0].mxu0
        %v3000 = vadd.f32 %v2647, %v2999
        %v3001 = vpop.f32.mrb[0].mxu0
        %v3002 = vadd.f32 %v2649, %v3001
        %v3003 = vpop.f32.mrb[0].mxu0
        %v3004 = vadd.f32 %v2651, %v3003
        %3005 = vmatprep.mubr.bf16.mxu0 %v1337
        %3006 = vmatmul.mubr.bf16.gmra.mrb[0].mxu0 %v1336
        %v3007 = vpop.f32.mrb[0].mxu0
        %v3008 = vadd.f32 %v2655, %v3007
        %v3009 = vpop.f32.mrb[0].mxu0
        %v3010 = vadd.f32 %v2657, %v3009
        %v3011 = vpop.f32.mrb[0].mxu0
        %v3012 = vadd.f32 %v2659, %v3011
        %v3013 = vpop.f32.mrb[0].mxu0
        %v3014 = vadd.f32 %v2661, %v3013
        %3015 = vmatprep.mubr.bf16.mxu0 %v1341
        %3016 = vmatmul.mubr.bf16.gmra.mrb[0].mxu0 %v1340
        %v3017 = vpop.f32.mrb[0].mxu0
        %v3018 = vadd.f32 %v2665, %v3017
        %v3019 = vpop.f32.mrb[0].mxu0
        %v3020 = vadd.f32 %v2667, %v3019
        %v3021 = vpop.f32.mrb[0].mxu0
        %v3022 = vadd.f32 %v2669, %v3021
        %v3023 = vpop.f32.mrb[0].mxu0
        %v3024 = vadd.f32 %v2671, %v3023
        %3025 = vmatprep.mubr.bf16.mxu0 %v1345
        %3026 = vmatmul.mubr.bf16.gmra.mrb[0].mxu0 %v1344
        %v3027 = vpop.f32.mrb[0].mxu0
        %v3028 = vadd.f32 %v2675, %v3027
        %v3029 = vpop.f32.mrb[0].mxu0
        %v3030 = vadd.f32 %v2677, %v3029
        %v3031 = vpop.f32.mrb[0].mxu0
        %v3032 = vadd.f32 %v2679, %v3031
        %v3033 = vpop.f32.mrb[0].mxu0
        %v3034 = vadd.f32 %v2681, %v3033
        %3035 = vmatprep.mubr.bf16.mxu0 %v1349
        %3036 = vmatmul.mubr.bf16.gmra.mrb[0].mxu0 %v1348
        %v3037 = vpop.f32.mrb[0].mxu0
        %v3038 = vadd.f32 %v2685, %v3037
        %v3039 = vpop.f32.mrb[0].mxu0
        %v3040 = vadd.f32 %v2687, %v3039
        %v3041 = vpop.f32.mrb[0].mxu0
        %v3042 = vadd.f32 %v2689, %v3041
        %v3043 = vpop.f32.mrb[0].mxu0
        %v3044 = vadd.f32 %v2691, %v3043
        %3045 = vmatprep.mubr.bf16.mxu0 %v1353
        %3046 = vmatmul.mubr.bf16.gmra.mrb[0].mxu0 %v1352
        %v3047 = vpop.f32.mrb[0].mxu0
        %v3048 = vadd.f32 %v2695, %v3047
        %v3049 = vpop.f32.mrb[0].mxu0
        %v3050 = vadd.f32 %v2697, %v3049
        %v3051 = vpop.f32.mrb[0].mxu0
        %v3052 = vadd.f32 %v2699, %v3051
        %v3053 = vpop.f32.mrb[0].mxu0
        %v3054 = vadd.f32 %v2701, %v3053
        %3055 = vmatprep.mubr.bf16.mxu0 %v1357
        %3056 = vmatmul.mubr.bf16.gmra.mrb[0].mxu0 %v1356
        %v3057 = vpop.f32.mrb[0].mxu0
        %v3058 = vadd.f32 %v2705, %v3057
        %v3059 = vpop.f32.mrb[0].mxu0
        %v3060 = vadd.f32 %v2707, %v3059
        %v3061 = vpop.f32.mrb[0].mxu0
        %v3062 = vadd.f32 %v2709, %v3061
        %v3063 = vpop.f32.mrb[0].mxu0
        %v3064 = vadd.f32 %v2711, %v3063
        %3065 = vmatprep.mubr.bf16.mxu0 %v1361
        %3066 = vmatmul.mubr.bf16.gmra.mrb[0].mxu0 %v1360
        %v3067 = vpop.f32.mrb[0].mxu0
        %v3068 = vadd.f32 %v2715, %v3067
        %v3069 = vpop.f32.mrb[0].mxu0
        %v3070 = vadd.f32 %v2717, %v3069
        %v3071 = vpop.f32.mrb[0].mxu0
        %v3072 = vadd.f32 %v2719, %v3071
        %v3073 = vpop.f32.mrb[0].mxu0
        %v3074 = vadd.f32 %v2721, %v3073
        %3075 = vmatprep.mubr.bf16.mxu0 %v1365
        %3076 = vmatmul.mubr.bf16.gmra.mrb[0].mxu0 %v1364
        %v3077 = vpop.f32.mrb[0].mxu0
        %v3078 = vadd.f32 %v2725, %v3077
        %v3079 = vpop.f32.mrb[0].mxu0
        %v3080 = vadd.f32 %v2727, %v3079
        %v3081 = vpop.f32.mrb[0].mxu0
        %v3082 = vadd.f32 %v2729, %v3081
        %v3083 = vpop.f32.mrb[0].mxu0
        %v3084 = vadd.f32 %v2731, %v3083
        %3085 = vmatprep.mubr.bf16.mxu0 %v1369
        %3086 = vmatmul.mubr.bf16.gmra.mrb[0].mxu0 %v1368
        %v3087 = vpop.f32.mrb[0].mxu0
        %v3088 = vadd.f32 %v2735, %v3087
        %v3089 = vpop.f32.mrb[0].mxu0
        %v3090 = vadd.f32 %v2737, %v3089
        %v3091 = vpop.f32.mrb[0].mxu0
        %v3092 = vadd.f32 %v2739, %v3091
        %v3093 = vpop.f32.mrb[0].mxu0
        %v3094 = vadd.f32 %v2741, %v3093
        %3095 = vmatprep.mubr.bf16.mxu0 %v1373
        %3096 = vmatmul.mubr.bf16.gmra.mrb[0].mxu0 %v1372
        %v3097 = vpop.f32.mrb[0].mxu0
        %v3098 = vadd.f32 %v2745, %v3097
        %v3099 = vpop.f32.mrb[0].mxu0
        %v3100 = vadd.f32 %v2747, %v3099
        %v3101 = vpop.f32.mrb[0].mxu0
        %v3102 = vadd.f32 %v2749, %v3101
        %v3103 = vpop.f32.mrb[0].mxu0
        %v3104 = vadd.f32 %v2751, %v3103
        %3105 = vmatprep.mubr.bf16.mxu0 %v1377
        %3106 = vmatmul.mubr.bf16.gmra.mrb[0].mxu0 %v1376
        %v3107 = vpop.f32.mrb[0].mxu0
        %v3108 = vadd.f32 %v2755, %v3107
        %v3109 = vpop.f32.mrb[0].mxu0
        %v3110 = vadd.f32 %v2757, %v3109
        %v3111 = vpop.f32.mrb[0].mxu0
        %v3112 = vadd.f32 %v2759, %v3111
        %v3113 = vpop.f32.mrb[0].mxu0
        %v3114 = vadd.f32 %v2761, %v3113
        %3115 = vmatprep.mubr.bf16.mxu0 %v1381
        %3116 = vmatmul.mubr.bf16.gmra.mrb[0].mxu0 %v1380
        %v3117 = vpop.f32.mrb[0].mxu0
        %v3118 = vadd.f32 %v2765, %v3117
        %v3119 = vpop.f32.mrb[0].mxu0
        %v3120 = vadd.f32 %v2767, %v3119
        %v3121 = vpop.f32.mrb[0].mxu0
        %v3122 = vadd.f32 %v2769, %v3121
        %v3123 = vpop.f32.mrb[0].mxu0
        %v3124 = vadd.f32 %v2771, %v3123
        %3125 = vmatprep.mubr.bf16.mxu0 %v1385
        %3126 = vmatmul.mubr.bf16.gmra.mrb[0].mxu0 %v1384
        %v3127 = vpop.f32.mrb[0].mxu0
        %v3128 = vadd.f32 %v2775, %v3127
        %v3129 = vpop.f32.mrb[0].mxu0
        %v3130 = vadd.f32 %v2777, %v3129
        %v3131 = vpop.f32.mrb[0].mxu0
        %v3132 = vadd.f32 %v2779, %v3131
        %v3133 = vpop.f32.mrb[0].mxu0
        %v3134 = vadd.f32 %v2781, %v3133
        %3135 = vmatprep.mubr.bf16.mxu0 %v1389
        %3136 = vmatmul.mubr.bf16.gmra.mrb[0].mxu0 %v1388
        %v3137 = vpop.f32.mrb[0].mxu0
        %v3138 = vadd.f32 %v2785, %v3137
        %v3139 = vpop.f32.mrb[0].mxu0
        %v3140 = vadd.f32 %v2787, %v3139
        %v3141 = vpop.f32.mrb[0].mxu0
        %v3142 = vadd.f32 %v2789, %v3141
        %v3143 = vpop.f32.mrb[0].mxu0
        %v3144 = vadd.f32 %v2791, %v3143
        %3145 = vmatprep.mubr.bf16.mxu0 %v1393
        %3146 = vmatmul.mubr.bf16.gmra.mrb[0].mxu0 %v1392
        %v3147 = vpop.f32.mrb[0].mxu0
        %v3148 = vadd.f32 %v2795, %v3147
        %v3149 = vpop.f32.mrb[0].mxu0
        %v3150 = vadd.f32 %v2797, %v3149
        %v3151 = vpop.f32.mrb[0].mxu0
        %v3152 = vadd.f32 %v2799, %v3151
        %v3153 = vpop.f32.mrb[0].mxu0
        %v3154 = vadd.f32 %v2801, %v3153
        %3155 = vmatprep.mubr.bf16.mxu0 %v1397
        %3156 = vmatmul.mubr.bf16.gmra.mrb[0].mxu0 %v1396
        %v3157 = vpop.f32.mrb[0].mxu0
        %v3158 = vadd.f32 %v2805, %v3157
        %v3159 = vpop.f32.mrb[0].mxu0
        %v3160 = vadd.f32 %v2807, %v3159
        %v3161 = vpop.f32.mrb[0].mxu0
        %v3162 = vadd.f32 %v2809, %v3161
        %v3163 = vpop.f32.mrb[0].mxu0
        %v3164 = vadd.f32 %v2811, %v3163
        %3165 = vmatprep.mubr.bf16.mxu0 %v1401
        %3166 = vmatmul.mubr.bf16.gmra.mrb[0].mxu0 %v1400
        %v3167 = vpop.f32.mrb[0].mxu0
        %v3168 = vadd.f32 %v2815, %v3167
        %v3169 = vpop.f32.mrb[0].mxu0
        %v3170 = vadd.f32 %v2817, %v3169
        %v3171 = vpop.f32.mrb[0].mxu0
        %v3172 = vadd.f32 %v2819, %v3171
        %v3173 = vpop.f32.mrb[0].mxu0
        %v3174 = vadd.f32 %v2821, %v3173
        %3175 = vmatprep.mubr.bf16.mxu0 %v1405
        %3176 = vmatmul.mubr.bf16.gmra.mrb[0].mxu0 %v1404
        %v3177 = vpop.f32.mrb[0].mxu0
        %v3178 = vadd.f32 %v2825, %v3177
        %v3179 = vpop.f32.mrb[0].mxu0
        %v3180 = vadd.f32 %v2827, %v3179
        %v3181 = vpop.f32.mrb[0].mxu0
        %v3182 = vadd.f32 %v2829, %v3181
        %v3183 = vpop.f32.mrb[0].mxu0
        %v3184 = vadd.f32 %v2831, %v3183
        %3185 = vmatprep.mubr.bf16.mxu0 %v1409
        %3186 = vmatmul.mubr.bf16.gmra.mrb[0].mxu0 %v1408
        %v3187 = vpop.f32.mrb[0].mxu0
        %v3188 = vadd.f32 %v2835, %v3187
        %v3189 = vpop.f32.mrb[0].mxu0
        %v3190 = vadd.f32 %v2837, %v3189
        %v3191 = vpop.f32.mrb[0].mxu0
        %v3192 = vadd.f32 %v2839, %v3191
        %v3193 = vpop.f32.mrb[0].mxu0
        %v3194 = vadd.f32 %v2841, %v3193
        %3195 = vmatprep.mubr.bf16.mxu0 %v1413
        %3196 = vmatmul.mubr.bf16.gmra.mrb[0].mxu0 %v1412
        %v3197 = vpop.f32.mrb[0].mxu0
        %v3198 = vadd.f32 %v2845, %v3197
        %v3199 = vpop.f32.mrb[0].mxu0
        %v3200 = vadd.f32 %v2847, %v3199
        %v3201 = vpop.f32.mrb[0].mxu0
        %v3202 = vadd.f32 %v2849, %v3201
        %v3203 = vpop.f32.mrb[0].mxu0
        %v3204 = vadd.f32 %v2851, %v3203
        %3205 = vmatprep.mubr.bf16.mxu0 %v1417
        %3206 = vmatmul.mubr.bf16.gmra.mrb[0].mxu0 %v1416
        %v3207 = vpop.f32.mrb[0].mxu0
        %v3208 = vadd.f32 %v2855, %v3207
        %v3209 = vpop.f32.mrb[0].mxu0
        %v3210 = vadd.f32 %v2857, %v3209
        %v3211 = vpop.f32.mrb[0].mxu0
        %v3212 = vadd.f32 %v2859, %v3211
        %v3213 = vpop.f32.mrb[0].mxu0
        %v3214 = vadd.f32 %v2861, %v3213
        %3215 = vmatprep.mubr.bf16.mxu0 %v1421
        %3216 = vmatmul.mubr.bf16.gmra.mrb[0].mxu0 %v1420
        %v3217 = vpop.f32.mrb[0].mxu0
        %v3218 = vadd.f32 %v2865, %v3217
        %v3219 = vpop.f32.mrb[0].mxu0
        %v3220 = vadd.f32 %v2867, %v3219
        %v3221 = vpop.f32.mrb[0].mxu0
        %v3222 = vadd.f32 %v2869, %v3221
        %v3223 = vpop.f32.mrb[0].mxu0
        %v3224 = vadd.f32 %v2871, %v3223
        %3225 = vmatprep.mubr.bf16.mxu0 %v1425
        %3226 = vmatmul.mubr.bf16.gmra.mrb[0].mxu0 %v1424
        %v3227 = vpop.f32.mrb[0].mxu0
        %v3228 = vadd.f32 %v2875, %v3227
        %v3229 = vpop.f32.mrb[0].mxu0
        %v3230 = vadd.f32 %v2877, %v3229
        %v3231 = vpop.f32.mrb[0].mxu0
        %v3232 = vadd.f32 %v2879, %v3231
        %v3233 = vpop.f32.mrb[0].mxu0
        %v3234 = vadd.f32 %v2881, %v3233
        %3235 = vmatprep.mubr.bf16.mxu0 %v1429
        %3236 = vmatmul.mubr.bf16.gmra.mrb[0].mxu0 %v1428
        %v3237 = vpop.f32.mrb[0].mxu0
        %v3238 = vadd.f32 %v2885, %v3237
        %v3239 = vpop.f32.mrb[0].mxu0
        %v3240 = vadd.f32 %v2887, %v3239
        %v3241 = vpop.f32.mrb[0].mxu0
        %v3242 = vadd.f32 %v2889, %v3241
        %v3243 = vpop.f32.mrb[0].mxu0
        %v3244 = vadd.f32 %v2891, %v3243
        %3245 = vmatprep.mubr.bf16.mxu0 %v1433
        %3246 = vmatmul.mubr.bf16.gmra.mrb[0].mxu0 %v1432
        %v3247 = vpop.f32.mrb[0].mxu0
        %v3248 = vadd.f32 %v2895, %v3247
        %v3249 = vpop.f32.mrb[0].mxu0
        %v3250 = vadd.f32 %v2897, %v3249
        %v3251 = vpop.f32.mrb[0].mxu0
        %v3252 = vadd.f32 %v2899, %v3251
        %v3253 = vpop.f32.mrb[0].mxu0
        %v3254 = vadd.f32 %v2901, %v3253
        %3255 = vmatprep.mubr.bf16.mxu0 %v1437
        %3256 = vmatmul.mubr.bf16.gmra.mrb[0].mxu0 %v1436
        %v3257 = vpop.f32.mrb[0].mxu0
        %v3258 = vadd.f32 %v2905, %v3257
        %v3259 = vpop.f32.mrb[0].mxu0
        %v3260 = vadd.f32 %v2907, %v3259
        %v3261 = vpop.f32.mrb[0].mxu0
        %v3262 = vadd.f32 %v2909, %v3261
        %v3263 = vpop.f32.mrb[0].mxu0
        %v3264 = vadd.f32 %v2911, %v3263
        %3265 = vmatprep.mubr.bf16.mxu0 %v1441
        %3266 = vmatmul.mubr.bf16.gmra.mrb[0].mxu0 %v1440
        %v3267 = vpop.f32.mrb[0].mxu0
        %v3268 = vadd.f32 %v2915, %v3267
        %v3269 = vpop.f32.mrb[0].mxu0
        %v3270 = vadd.f32 %v2917, %v3269
        %v3271 = vpop.f32.mrb[0].mxu0
        %v3272 = vadd.f32 %v2919, %v3271
        %v3273 = vpop.f32.mrb[0].mxu0
        %v3274 = vadd.f32 %v2921, %v3273
        %3275 = vmatprep.mubr.bf16.mxu0 %v1445
        %3276 = vmatmul.mubr.bf16.gmra.mrb[0].mxu0 %v1444
        %v3277 = vpop.f32.mrb[0].mxu0
        %v3278 = vadd.f32 %v2925, %v3277
        %v3279 = vpop.f32.mrb[0].mxu0
        %v3280 = vadd.f32 %v2927, %v3279
        %v3281 = vpop.f32.mrb[0].mxu0
        %v3282 = vadd.f32 %v2929, %v3281
        %v3283 = vpop.f32.mrb[0].mxu0
        %v3284 = vadd.f32 %v2931, %v3283
        %3285 = vmatprep.mubr.bf16.mxu0 %v1449
        %3286 = vmatmul.mubr.bf16.gmra.mrb[0].mxu0 %v1448
        %v3287 = vpop.f32.mrb[0].mxu0
        %v3288 = vadd.f32 %v2935, %v3287
        %v3289 = vpop.f32.mrb[0].mxu0
        %v3290 = vadd.f32 %v2937, %v3289
        %v3291 = vpop.f32.mrb[0].mxu0
        %v3292 = vadd.f32 %v2939, %v3291
        %v3293 = vpop.f32.mrb[0].mxu0
        %v3294 = vadd.f32 %v2941, %v3293
        %3295 = vmatprep.mubr.bf16.mxu0 %v1453
        %3296 = vmatmul.mubr.bf16.gmra.mrb[0].mxu0 %v1452
        %v3297 = vpop.f32.mrb[0].mxu0
        %v3298 = vadd.f32 %v2945, %v3297
        %v3299 = vpop.f32.mrb[0].mxu0
        %v3300 = vadd.f32 %v2947, %v3299
        %v3301 = vpop.f32.mrb[0].mxu0
        %v3302 = vadd.f32 %v2949, %v3301
        %v3303 = vpop.f32.mrb[0].mxu0
        %v3304 = vadd.f32 %v2951, %v3303
        %3305 = vmatprep.mubr.bf16.mxu0 %v1457
        %3306 = vmatmul.mubr.bf16.gmra.mrb[0].mxu0 %v1456
        %v3307 = vpop.f32.mrb[0].mxu0
        %v3308 = vadd.f32 %v2955, %v3307
        %v3309 = vpop.f32.mrb[0].mxu0
        %v3310 = vadd.f32 %v2957, %v3309
        %v3311 = vpop.f32.mrb[0].mxu0
        %v3312 = vadd.f32 %v2959, %v3311
        %v3313 = vpop.f32.mrb[0].mxu0
        %v3314 = vadd.f32 %v2961, %v3313
        %3315 = vdwg.mxu0
        %3316 = vmatprep.subr.bf16.mxu0 %v2229
        %3317 = vmatpush1.bf16.msra.mxu0 %v2228
        %3318 = vmatprep.subr.bf16.mxu0 %v2235
        %3319 = vmatpush1.bf16.msra.mxu0 %v2234
        %3320 = vmatprep.subr.bf16.mxu0 %v2241
        %3321 = vmatpush1.bf16.msra.mxu0 %v2240
        %3322 = vmatprep.subr.bf16.mxu0 %v2247
        %3323 = vmatpush1.bf16.msra.mxu0 %v2246
        %3324 = vmatprep.subr.bf16.mxu0 %v2253
        %3325 = vmatpush1.bf16.msra.mxu0 %v2252
        %3326 = vmatprep.subr.bf16.mxu0 %v2259
        %3327 = vmatpush1.bf16.msra.mxu0 %v2258
        %3328 = vmatprep.subr.bf16.mxu0 %v2265
        %3329 = vmatpush1.bf16.msra.mxu0 %v2264
        %3330 = vmatprep.subr.bf16.mxu0 %v2271
        %3331 = vmatpush1.bf16.msra.mxu0 %v2270
        %3332 = vmatprep.subr.bf16.mxu0 %v2277
        %3333 = vmatpush1.bf16.msra.mxu0 %v2276
        %3334 = vmatprep.subr.bf16.mxu0 %v2283
        %3335 = vmatpush1.bf16.msra.mxu0 %v2282
        %3336 = vmatprep.subr.bf16.mxu0 %v2289
        %3337 = vmatpush1.bf16.msra.mxu0 %v2288
        %3338 = vmatprep.subr.bf16.mxu0 %v2295
        %3339 = vmatpush1.bf16.msra.mxu0 %v2294
        %3340 = vmatprep.subr.bf16.mxu0 %v2301
        %3341 = vmatpush1.bf16.msra.mxu0 %v2300
        %3342 = vmatprep.subr.bf16.mxu0 %v2307
        %3343 = vmatpush1.bf16.msra.mxu0 %v2306
        %3344 = vmatprep.subr.bf16.mxu0 %v2313
        %3345 = vmatpush1.bf16.msra.mxu0 %v2312
        %3346 = vmatprep.subr.bf16.mxu0 %v2319
        %3347 = vmatpush1.bf16.msra.mxu0 %v2318
        %3348 = vmatprep.mubr.bf16.mxu0 %v1331
        %3349 = vmatmul.mubr.bf16.gmra.mrb[0].mxu0 %v1330
        %v3350 = vpop.f32.mrb[0].mxu0
        %v3351 = vadd.f32 0.0, %v3350
        %v3352 = vpop.f32.mrb[0].mxu0
        %v3353 = vadd.f32 0.0, %v3352
        %v3354 = vpop.f32.mrb[0].mxu0
        %v3355 = vadd.f32 0.0, %v3354
        %v3356 = vpop.f32.mrb[0].mxu0
        %v3357 = vadd.f32 0.0, %v3356
        %3358 = vmatprep.mubr.bf16.mxu0 %v1335
        %3359 = vmatmul.mubr.bf16.gmra.mrb[0].mxu0 %v1334
        %v3360 = vpop.f32.mrb[0].mxu0
        %v3361 = vadd.f32 0.0, %v3360
        %v3362 = vpop.f32.mrb[0].mxu0
        %v3363 = vadd.f32 0.0, %v3362
        %v3364 = vpop.f32.mrb[0].mxu0
        %v3365 = vadd.f32 0.0, %v3364
        %v3366 = vpop.f32.mrb[0].mxu0
        %v3367 = vadd.f32 0.0, %v3366
        %3368 = vmatprep.mubr.bf16.mxu0 %v1339
        %3369 = vmatmul.mubr.bf16.gmra.mrb[0].mxu0 %v1338
        %v3370 = vpop.f32.mrb[0].mxu0
        %v3371 = vadd.f32 0.0, %v3370
        %v3372 = vpop.f32.mrb[0].mxu0
        %v3373 = vadd.f32 0.0, %v3372
        %v3374 = vpop.f32.mrb[0].mxu0
        %v3375 = vadd.f32 0.0, %v3374
        %v3376 = vpop.f32.mrb[0].mxu0
        %v3377 = vadd.f32 0.0, %v3376
        %3378 = vmatprep.mubr.bf16.mxu0 %v1343
        %3379 = vmatmul.mubr.bf16.gmra.mrb[0].mxu0 %v1342
        %v3380 = vpop.f32.mrb[0].mxu0
        %v3381 = vadd.f32 0.0, %v3380
        %v3382 = vpop.f32.mrb[0].mxu0
        %v3383 = vadd.f32 0.0, %v3382
        %v3384 = vpop.f32.mrb[0].mxu0
        %v3385 = vadd.f32 0.0, %v3384
        %v3386 = vpop.f32.mrb[0].mxu0
        %v3387 = vadd.f32 0.0, %v3386
        %3388 = vmatprep.mubr.bf16.mxu0 %v1347
        %3389 = vmatmul.mubr.bf16.gmra.mrb[0].mxu0 %v1346
        %v3390 = vpop.f32.mrb[0].mxu0
        %v3391 = vadd.f32 0.0, %v3390
        %v3392 = vpop.f32.mrb[0].mxu0
        %v3393 = vadd.f32 0.0, %v3392
        %v3394 = vpop.f32.mrb[0].mxu0
        %v3395 = vadd.f32 0.0, %v3394
        %v3396 = vpop.f32.mrb[0].mxu0
        %v3397 = vadd.f32 0.0, %v3396
        %3398 = vmatprep.mubr.bf16.mxu0 %v1351
        %3399 = vmatmul.mubr.bf16.gmra.mrb[0].mxu0 %v1350
        %v3400 = vpop.f32.mrb[0].mxu0
        %v3401 = vadd.f32 0.0, %v3400
        %v3402 = vpop.f32.mrb[0].mxu0
        %v3403 = vadd.f32 0.0, %v3402
        %v3404 = vpop.f32.mrb[0].mxu0
        %v3405 = vadd.f32 0.0, %v3404
        %v3406 = vpop.f32.mrb[0].mxu0
        %v3407 = vadd.f32 0.0, %v3406
        %3408 = vmatprep.mubr.bf16.mxu0 %v1355
        %3409 = vmatmul.mubr.bf16.gmra.mrb[0].mxu0 %v1354
        %v3410 = vpop.f32.mrb[0].mxu0
        %v3411 = vadd.f32 0.0, %v3410
        %v3412 = vpop.f32.mrb[0].mxu0
        %v3413 = vadd.f32 0.0, %v3412
        %v3414 = vpop.f32.mrb[0].mxu0
        %v3415 = vadd.f32 0.0, %v3414
        %v3416 = vpop.f32.mrb[0].mxu0
        %v3417 = vadd.f32 0.0, %v3416
        %3418 = vmatprep.mubr.bf16.mxu0 %v1359
        %3419 = vmatmul.mubr.bf16.gmra.mrb[0].mxu0 %v1358
        %v3420 = vpop.f32.mrb[0].mxu0
        %v3421 = vadd.f32 0.0, %v3420
        %v3422 = vpop.f32.mrb[0].mxu0
        %v3423 = vadd.f32 0.0, %v3422
        %v3424 = vpop.f32.mrb[0].mxu0
        %v3425 = vadd.f32 0.0, %v3424
        %v3426 = vpop.f32.mrb[0].mxu0
        %v3427 = vadd.f32 0.0, %v3426
        %3428 = vmatprep.mubr.bf16.mxu0 %v1363
        %3429 = vmatmul.mubr.bf16.gmra.mrb[0].mxu0 %v1362
        %v3430 = vpop.f32.mrb[0].mxu0
        %v3431 = vadd.f32 0.0, %v3430
        %v3432 = vpop.f32.mrb[0].mxu0
        %v3433 = vadd.f32 0.0, %v3432
        %v3434 = vpop.f32.mrb[0].mxu0
        %v3435 = vadd.f32 0.0, %v3434
        %v3436 = vpop.f32.mrb[0].mxu0
        %v3437 = vadd.f32 0.0, %v3436
        %3438 = vmatprep.mubr.bf16.mxu0 %v1367
        %3439 = vmatmul.mubr.bf16.gmra.mrb[0].mxu0 %v1366
        %v3440 = vpop.f32.mrb[0].mxu0
        %v3441 = vadd.f32 0.0, %v3440
        %v3442 = vpop.f32.mrb[0].mxu0
        %v3443 = vadd.f32 0.0, %v3442
        %v3444 = vpop.f32.mrb[0].mxu0
        %v3445 = vadd.f32 0.0, %v3444
        %v3446 = vpop.f32.mrb[0].mxu0
        %v3447 = vadd.f32 0.0, %v3446
        %3448 = vmatprep.mubr.bf16.mxu0 %v1371
        %3449 = vmatmul.mubr.bf16.gmra.mrb[0].mxu0 %v1370
        %v3450 = vpop.f32.mrb[0].mxu0
        %v3451 = vadd.f32 0.0, %v3450
        %v3452 = vpop.f32.mrb[0].mxu0
        %v3453 = vadd.f32 0.0, %v3452
        %v3454 = vpop.f32.mrb[0].mxu0
        %v3455 = vadd.f32 0.0, %v3454
        %v3456 = vpop.f32.mrb[0].mxu0
        %v3457 = vadd.f32 0.0, %v3456
        %3458 = vmatprep.mubr.bf16.mxu0 %v1375
        %3459 = vmatmul.mubr.bf16.gmra.mrb[0].mxu0 %v1374
        %v3460 = vpop.f32.mrb[0].mxu0
        %v3461 = vadd.f32 0.0, %v3460
        %v3462 = vpop.f32.mrb[0].mxu0
        %v3463 = vadd.f32 0.0, %v3462
        %v3464 = vpop.f32.mrb[0].mxu0
        %v3465 = vadd.f32 0.0, %v3464
        %v3466 = vpop.f32.mrb[0].mxu0
        %v3467 = vadd.f32 0.0, %v3466
        %3468 = vmatprep.mubr.bf16.mxu0 %v1379
        %3469 = vmatmul.mubr.bf16.gmra.mrb[0].mxu0 %v1378
        %v3470 = vpop.f32.mrb[0].mxu0
        %v3471 = vadd.f32 0.0, %v3470
        %v3472 = vpop.f32.mrb[0].mxu0
        %v3473 = vadd.f32 0.0, %v3472
        %v3474 = vpop.f32.mrb[0].mxu0
        %v3475 = vadd.f32 0.0, %v3474
        %v3476 = vpop.f32.mrb[0].mxu0
        %v3477 = vadd.f32 0.0, %v3476
        %3478 = vmatprep.mubr.bf16.mxu0 %v1383
        %3479 = vmatmul.mubr.bf16.gmra.mrb[0].mxu0 %v1382
        %v3480 = vpop.f32.mrb[0].mxu0
        %v3481 = vadd.f32 0.0, %v3480
        %v3482 = vpop.f32.mrb[0].mxu0
        %v3483 = vadd.f32 0.0, %v3482
        %v3484 = vpop.f32.mrb[0].mxu0
        %v3485 = vadd.f32 0.0, %v3484
        %v3486 = vpop.f32.mrb[0].mxu0
        %v3487 = vadd.f32 0.0, %v3486
        %3488 = vmatprep.mubr.bf16.mxu0 %v1387
        %3489 = vmatmul.mubr.bf16.gmra.mrb[0].mxu0 %v1386
        %v3490 = vpop.f32.mrb[0].mxu0
        %v3491 = vadd.f32 0.0, %v3490
        %v3492 = vpop.f32.mrb[0].mxu0
        %v3493 = vadd.f32 0.0, %v3492
        %v3494 = vpop.f32.mrb[0].mxu0
        %v3495 = vadd.f32 0.0, %v3494
        %v3496 = vpop.f32.mrb[0].mxu0
        %v3497 = vadd.f32 0.0, %v3496
        %3498 = vmatprep.mubr.bf16.mxu0 %v1391
        %3499 = vmatmul.mubr.bf16.gmra.mrb[0].mxu0 %v1390
        %v3500 = vpop.f32.mrb[0].mxu0
        %v3501 = vadd.f32 0.0, %v3500
        %v3502 = vpop.f32.mrb[0].mxu0
        %v3503 = vadd.f32 0.0, %v3502
        %v3504 = vpop.f32.mrb[0].mxu0
        %v3505 = vadd.f32 0.0, %v3504
        %v3506 = vpop.f32.mrb[0].mxu0
        %v3507 = vadd.f32 0.0, %v3506
        %3508 = vmatprep.mubr.bf16.mxu0 %v1395
        %3509 = vmatmul.mubr.bf16.gmra.mrb[0].mxu0 %v1394
        %v3510 = vpop.f32.mrb[0].mxu0
        %v3511 = vadd.f32 0.0, %v3510
        %v3512 = vpop.f32.mrb[0].mxu0
        %v3513 = vadd.f32 0.0, %v3512
        %v3514 = vpop.f32.mrb[0].mxu0
        %v3515 = vadd.f32 0.0, %v3514
        %v3516 = vpop.f32.mrb[0].mxu0
        %v3517 = vadd.f32 0.0, %v3516
        %3518 = vmatprep.mubr.bf16.mxu0 %v1399
        %3519 = vmatmul.mubr.bf16.gmra.mrb[0].mxu0 %v1398
        %v3520 = vpop.f32.mrb[0].mxu0
        %v3521 = vadd.f32 0.0, %v3520
        %v3522 = vpop.f32.mrb[0].mxu0
        %v3523 = vadd.f32 0.0, %v3522
        %v3524 = vpop.f32.mrb[0].mxu0
        %v3525 = vadd.f32 0.0, %v3524
        %v3526 = vpop.f32.mrb[0].mxu0
        %v3527 = vadd.f32 0.0, %v3526
        %3528 = vmatprep.mubr.bf16.mxu0 %v1403
        %3529 = vmatmul.mubr.bf16.gmra.mrb[0].mxu0 %v1402
        %v3530 = vpop.f32.mrb[0].mxu0
        %v3531 = vadd.f32 0.0, %v3530
        %v3532 = vpop.f32.mrb[0].mxu0
        %v3533 = vadd.f32 0.0, %v3532
        %v3534 = vpop.f32.mrb[0].mxu0
        %v3535 = vadd.f32 0.0, %v3534
        %v3536 = vpop.f32.mrb[0].mxu0
        %v3537 = vadd.f32 0.0, %v3536
        %3538 = vmatprep.mubr.bf16.mxu0 %v1407
        %3539 = vmatmul.mubr.bf16.gmra.mrb[0].mxu0 %v1406
        %v3540 = vpop.f32.mrb[0].mxu0
        %v3541 = vadd.f32 0.0, %v3540
        %v3542 = vpop.f32.mrb[0].mxu0
        %v3543 = vadd.f32 0.0, %v3542
        %v3544 = vpop.f32.mrb[0].mxu0
        %v3545 = vadd.f32 0.0, %v3544
        %v3546 = vpop.f32.mrb[0].mxu0
        %v3547 = vadd.f32 0.0, %v3546
        %3548 = vmatprep.mubr.bf16.mxu0 %v1411
        %3549 = vmatmul.mubr.bf16.gmra.mrb[0].mxu0 %v1410
        %v3550 = vpop.f32.mrb[0].mxu0
        %v3551 = vadd.f32 0.0, %v3550
        %v3552 = vpop.f32.mrb[0].mxu0
        %v3553 = vadd.f32 0.0, %v3552
        %v3554 = vpop.f32.mrb[0].mxu0
        %v3555 = vadd.f32 0.0, %v3554
        %v3556 = vpop.f32.mrb[0].mxu0
        %v3557 = vadd.f32 0.0, %v3556
        %3558 = vmatprep.mubr.bf16.mxu0 %v1415
        %3559 = vmatmul.mubr.bf16.gmra.mrb[0].mxu0 %v1414
        %v3560 = vpop.f32.mrb[0].mxu0
        %v3561 = vadd.f32 0.0, %v3560
        %v3562 = vpop.f32.mrb[0].mxu0
        %v3563 = vadd.f32 0.0, %v3562
        %v3564 = vpop.f32.mrb[0].mxu0
        %v3565 = vadd.f32 0.0, %v3564
        %v3566 = vpop.f32.mrb[0].mxu0
        %v3567 = vadd.f32 0.0, %v3566
        %3568 = vmatprep.mubr.bf16.mxu0 %v1419
        %3569 = vmatmul.mubr.bf16.gmra.mrb[0].mxu0 %v1418
        %v3570 = vpop.f32.mrb[0].mxu0
        %v3571 = vadd.f32 0.0, %v3570
        %v3572 = vpop.f32.mrb[0].mxu0
        %v3573 = vadd.f32 0.0, %v3572
        %v3574 = vpop.f32.mrb[0].mxu0
        %v3575 = vadd.f32 0.0, %v3574
        %v3576 = vpop.f32.mrb[0].mxu0
        %v3577 = vadd.f32 0.0, %v3576
        %3578 = vmatprep.mubr.bf16.mxu0 %v1423
        %3579 = vmatmul.mubr.bf16.gmra.mrb[0].mxu0 %v1422
        %v3580 = vpop.f32.mrb[0].mxu0
        %v3581 = vadd.f32 0.0, %v3580
        %v3582 = vpop.f32.mrb[0].mxu0
        %v3583 = vadd.f32 0.0, %v3582
        %v3584 = vpop.f32.mrb[0].mxu0
        %v3585 = vadd.f32 0.0, %v3584
        %v3586 = vpop.f32.mrb[0].mxu0
        %v3587 = vadd.f32 0.0, %v3586
        %3588 = vmatprep.mubr.bf16.mxu0 %v1427
        %3589 = vmatmul.mubr.bf16.gmra.mrb[0].mxu0 %v1426
        %v3590 = vpop.f32.mrb[0].mxu0
        %v3591 = vadd.f32 0.0, %v3590
        %v3592 = vpop.f32.mrb[0].mxu0
        %v3593 = vadd.f32 0.0, %v3592
        %v3594 = vpop.f32.mrb[0].mxu0
        %v3595 = vadd.f32 0.0, %v3594
        %v3596 = vpop.f32.mrb[0].mxu0
        %v3597 = vadd.f32 0.0, %v3596
        %3598 = vmatprep.mubr.bf16.mxu0 %v1431
        %3599 = vmatmul.mubr.bf16.gmra.mrb[0].mxu0 %v1430
        %v3600 = vpop.f32.mrb[0].mxu0
        %v3601 = vadd.f32 0.0, %v3600
        %v3602 = vpop.f32.mrb[0].mxu0
        %v3603 = vadd.f32 0.0, %v3602
        %v3604 = vpop.f32.mrb[0].mxu0
        %v3605 = vadd.f32 0.0, %v3604
        %v3606 = vpop.f32.mrb[0].mxu0
        %v3607 = vadd.f32 0.0, %v3606
        %3608 = vmatprep.mubr.bf16.mxu0 %v1435
        %3609 = vmatmul.mubr.bf16.gmra.mrb[0].mxu0 %v1434
        %v3610 = vpop.f32.mrb[0].mxu0
        %v3611 = vadd.f32 0.0, %v3610
        %v3612 = vpop.f32.mrb[0].mxu0
        %v3613 = vadd.f32 0.0, %v3612
        %v3614 = vpop.f32.mrb[0].mxu0
        %v3615 = vadd.f32 0.0, %v3614
        %v3616 = vpop.f32.mrb[0].mxu0
        %v3617 = vadd.f32 0.0, %v3616
        %3618 = vmatprep.mubr.bf16.mxu0 %v1439
        %3619 = vmatmul.mubr.bf16.gmra.mrb[0].mxu0 %v1438
        %v3620 = vpop.f32.mrb[0].mxu0
        %v3621 = vadd.f32 0.0, %v3620
        %v3622 = vpop.f32.mrb[0].mxu0
        %v3623 = vadd.f32 0.0, %v3622
        %v3624 = vpop.f32.mrb[0].mxu0
        %v3625 = vadd.f32 0.0, %v3624
        %v3626 = vpop.f32.mrb[0].mxu0
        %v3627 = vadd.f32 0.0, %v3626
        %3628 = vmatprep.mubr.bf16.mxu0 %v1443
        %3629 = vmatmul.mubr.bf16.gmra.mrb[0].mxu0 %v1442
        %v3630 = vpop.f32.mrb[0].mxu0
        %v3631 = vadd.f32 0.0, %v3630
        %v3632 = vpop.f32.mrb[0].mxu0
        %v3633 = vadd.f32 0.0, %v3632
        %v3634 = vpop.f32.mrb[0].mxu0
        %v3635 = vadd.f32 0.0, %v3634
        %v3636 = vpop.f32.mrb[0].mxu0
        %v3637 = vadd.f32 0.0, %v3636
        %3638 = vmatprep.mubr.bf16.mxu0 %v1447
        %3639 = vmatmul.mubr.bf16.gmra.mrb[0].mxu0 %v1446
        %v3640 = vpop.f32.mrb[0].mxu0
        %v3641 = vadd.f32 0.0, %v3640
        %v3642 = vpop.f32.mrb[0].mxu0
        %v3643 = vadd.f32 0.0, %v3642
        %v3644 = vpop.f32.mrb[0].mxu0
        %v3645 = vadd.f32 0.0, %v3644
        %v3646 = vpop.f32.mrb[0].mxu0
        %v3647 = vadd.f32 0.0, %v3646
        %3648 = vmatprep.mubr.bf16.mxu0 %v1451
        %3649 = vmatmul.mubr.bf16.gmra.mrb[0].mxu0 %v1450
        %v3650 = vpop.f32.mrb[0].mxu0
        %v3651 = vadd.f32 0.0, %v3650
        %v3652 = vpop.f32.mrb[0].mxu0
        %v3653 = vadd.f32 0.0, %v3652
        %v3654 = vpop.f32.mrb[0].mxu0
        %v3655 = vadd.f32 0.0, %v3654
        %v3656 = vpop.f32.mrb[0].mxu0
        %v3657 = vadd.f32 0.0, %v3656
        %3658 = vmatprep.mubr.bf16.mxu0 %v1455
        %3659 = vmatmul.mubr.bf16.gmra.mrb[0].mxu0 %v1454
        %v3660 = vpop.f32.mrb[0].mxu0
        %v3661 = vadd.f32 0.0, %v3660
        %v3662 = vpop.f32.mrb[0].mxu0
        %v3663 = vadd.f32 0.0, %v3662
        %v3664 = vpop.f32.mrb[0].mxu0
        %v3665 = vadd.f32 0.0, %v3664
        %v3666 = vpop.f32.mrb[0].mxu0
        %v3667 = vadd.f32 0.0, %v3666
        %3668 = vdwg.mxu0
        %3669 = vmatprep.subr.bf16.mxu0 %v2325
        %3670 = vmatpush1.bf16.msra.mxu0 %v2324
        %3671 = vmatprep.subr.bf16.mxu0 %v2331
        %3672 = vmatpush1.bf16.msra.mxu0 %v2330
        %3673 = vmatprep.subr.bf16.mxu0 %v2337
        %3674 = vmatpush1.bf16.msra.mxu0 %v2336
        %3675 = vmatprep.subr.bf16.mxu0 %v2343
        %3676 = vmatpush1.bf16.msra.mxu0 %v2342
        %3677 = vmatprep.subr.bf16.mxu0 %v2349
        %3678 = vmatpush1.bf16.msra.mxu0 %v2348
        %3679 = vmatprep.subr.bf16.mxu0 %v2355
        %3680 = vmatpush1.bf16.msra.mxu0 %v2354
        %3681 = vmatprep.subr.bf16.mxu0 %v2361
        %3682 = vmatpush1.bf16.msra.mxu0 %v2360
        %3683 = vmatprep.subr.bf16.mxu0 %v2367
        %3684 = vmatpush1.bf16.msra.mxu0 %v2366
        %3685 = vmatprep.subr.bf16.mxu0 %v2373
        %3686 = vmatpush1.bf16.msra.mxu0 %v2372
        %3687 = vmatprep.subr.bf16.mxu0 %v2379
        %3688 = vmatpush1.bf16.msra.mxu0 %v2378
        %3689 = vmatprep.subr.bf16.mxu0 %v2385
        %3690 = vmatpush1.bf16.msra.mxu0 %v2384
        %3691 = vmatprep.subr.bf16.mxu0 %v2391
        %3692 = vmatpush1.bf16.msra.mxu0 %v2390
        %3693 = vmatprep.subr.bf16.mxu0 %v2397
        %3694 = vmatpush1.bf16.msra.mxu0 %v2396
        %3695 = vmatprep.subr.bf16.mxu0 %v2403
        %3696 = vmatpush1.bf16.msra.mxu0 %v2402
        %3697 = vmatprep.subr.bf16.mxu0 %v2409
        %3698 = vmatpush1.bf16.msra.mxu0 %v2408
        %3699 = vmatprep.subr.bf16.mxu0 %v2415
        %3700 = vmatpush1.bf16.msra.mxu0 %v2414
        %3701 = vmatprep.mubr.bf16.mxu0 %v1333
        %3702 = vmatmul.mubr.bf16.gmra.mrb[0].mxu0 %v1332
        %v3703 = vpop.f32.mrb[0].mxu0
        %v3704 = vadd.f32 %v3351, %v3703
        %v3705 = vpop.f32.mrb[0].mxu0
        %v3706 = vadd.f32 %v3353, %v3705
        %v3707 = vpop.f32.mrb[0].mxu0
        %v3708 = vadd.f32 %v3355, %v3707
        %v3709 = vpop.f32.mrb[0].mxu0
        %v3710 = vadd.f32 %v3357, %v3709
        %3711 = vmatprep.mubr.bf16.mxu0 %v1337
        %3712 = vmatmul.mubr.bf16.gmra.mrb[0].mxu0 %v1336
        %v3713 = vpop.f32.mrb[0].mxu0
        %v3714 = vadd.f32 %v3361, %v3713
        %v3715 = vpop.f32.mrb[0].mxu0
        %v3716 = vadd.f32 %v3363, %v3715
        %v3717 = vpop.f32.mrb[0].mxu0
        %v3718 = vadd.f32 %v3365, %v3717
        %v3719 = vpop.f32.mrb[0].mxu0
        %v3720 = vadd.f32 %v3367, %v3719
        %3721 = vmatprep.mubr.bf16.mxu0 %v1341
        %3722 = vmatmul.mubr.bf16.gmra.mrb[0].mxu0 %v1340
        %v3723 = vpop.f32.mrb[0].mxu0
        %v3724 = vadd.f32 %v3371, %v3723
        %v3725 = vpop.f32.mrb[0].mxu0
        %v3726 = vadd.f32 %v3373, %v3725
        %v3727 = vpop.f32.mrb[0].mxu0
        %v3728 = vadd.f32 %v3375, %v3727
        %v3729 = vpop.f32.mrb[0].mxu0
        %v3730 = vadd.f32 %v3377, %v3729
        %3731 = vmatprep.mubr.bf16.mxu0 %v1345
        %3732 = vmatmul.mubr.bf16.gmra.mrb[0].mxu0 %v1344
        %v3733 = vpop.f32.mrb[0].mxu0
        %v3734 = vadd.f32 %v3381, %v3733
        %v3735 = vpop.f32.mrb[0].mxu0
        %v3736 = vadd.f32 %v3383, %v3735
        %v3737 = vpop.f32.mrb[0].mxu0
        %v3738 = vadd.f32 %v3385, %v3737
        %v3739 = vpop.f32.mrb[0].mxu0
        %v3740 = vadd.f32 %v3387, %v3739
        %3741 = vmatprep.mubr.bf16.mxu0 %v1349
        %3742 = vmatmul.mubr.bf16.gmra.mrb[0].mxu0 %v1348
        %v3743 = vpop.f32.mrb[0].mxu0
        %v3744 = vadd.f32 %v3391, %v3743
        %v3745 = vpop.f32.mrb[0].mxu0
        %v3746 = vadd.f32 %v3393, %v3745
        %v3747 = vpop.f32.mrb[0].mxu0
        %v3748 = vadd.f32 %v3395, %v3747
        %v3749 = vpop.f32.mrb[0].mxu0
        %v3750 = vadd.f32 %v3397, %v3749
        %3751 = vmatprep.mubr.bf16.mxu0 %v1353
        %3752 = vmatmul.mubr.bf16.gmra.mrb[0].mxu0 %v1352
        %v3753 = vpop.f32.mrb[0].mxu0
        %v3754 = vadd.f32 %v3401, %v3753
        %v3755 = vpop.f32.mrb[0].mxu0
        %v3756 = vadd.f32 %v3403, %v3755
        %v3757 = vpop.f32.mrb[0].mxu0
        %v3758 = vadd.f32 %v3405, %v3757
        %v3759 = vpop.f32.mrb[0].mxu0
        %v3760 = vadd.f32 %v3407, %v3759
        %3761 = vmatprep.mubr.bf16.mxu0 %v1357
        %3762 = vmatmul.mubr.bf16.gmra.mrb[0].mxu0 %v1356
        %v3763 = vpop.f32.mrb[0].mxu0
        %v3764 = vadd.f32 %v3411, %v3763
        %v3765 = vpop.f32.mrb[0].mxu0
        %v3766 = vadd.f32 %v3413, %v3765
        %v3767 = vpop.f32.mrb[0].mxu0
        %v3768 = vadd.f32 %v3415, %v3767
        %v3769 = vpop.f32.mrb[0].mxu0
        %v3770 = vadd.f32 %v3417, %v3769
        %3771 = vmatprep.mubr.bf16.mxu0 %v1361
        %3772 = vmatmul.mubr.bf16.gmra.mrb[0].mxu0 %v1360
        %v3773 = vpop.f32.mrb[0].mxu0
        %v3774 = vadd.f32 %v3421, %v3773
        %v3775 = vpop.f32.mrb[0].mxu0
        %v3776 = vadd.f32 %v3423, %v3775
        %v3777 = vpop.f32.mrb[0].mxu0
        %v3778 = vadd.f32 %v3425, %v3777
        %v3779 = vpop.f32.mrb[0].mxu0
        %v3780 = vadd.f32 %v3427, %v3779
        %3781 = vmatprep.mubr.bf16.mxu0 %v1365
        %3782 = vmatmul.mubr.bf16.gmra.mrb[0].mxu0 %v1364
        %v3783 = vpop.f32.mrb[0].mxu0
        %v3784 = vadd.f32 %v3431, %v3783
        %v3785 = vpop.f32.mrb[0].mxu0
        %v3786 = vadd.f32 %v3433, %v3785
        %v3787 = vpop.f32.mrb[0].mxu0
        %v3788 = vadd.f32 %v3435, %v3787
        %v3789 = vpop.f32.mrb[0].mxu0
        %v3790 = vadd.f32 %v3437, %v3789
        %3791 = vmatprep.mubr.bf16.mxu0 %v1369
        %3792 = vmatmul.mubr.bf16.gmra.mrb[0].mxu0 %v1368
        %v3793 = vpop.f32.mrb[0].mxu0
        %v3794 = vadd.f32 %v3441, %v3793
        %v3795 = vpop.f32.mrb[0].mxu0
        %v3796 = vadd.f32 %v3443, %v3795
        %v3797 = vpop.f32.mrb[0].mxu0
        %v3798 = vadd.f32 %v3445, %v3797
        %v3799 = vpop.f32.mrb[0].mxu0
        %v3800 = vadd.f32 %v3447, %v3799
        %3801 = vmatprep.mubr.bf16.mxu0 %v1373
        %3802 = vmatmul.mubr.bf16.gmra.mrb[0].mxu0 %v1372
        %v3803 = vpop.f32.mrb[0].mxu0
        %v3804 = vadd.f32 %v3451, %v3803
        %v3805 = vpop.f32.mrb[0].mxu0
        %v3806 = vadd.f32 %v3453, %v3805
        %v3807 = vpop.f32.mrb[0].mxu0
        %v3808 = vadd.f32 %v3455, %v3807
        %v3809 = vpop.f32.mrb[0].mxu0
        %v3810 = vadd.f32 %v3457, %v3809
        %3811 = vmatprep.mubr.bf16.mxu0 %v1377
        %3812 = vmatmul.mubr.bf16.gmra.mrb[0].mxu0 %v1376
        %v3813 = vpop.f32.mrb[0].mxu0
        %v3814 = vadd.f32 %v3461, %v3813
        %v3815 = vpop.f32.mrb[0].mxu0
        %v3816 = vadd.f32 %v3463, %v3815
        %v3817 = vpop.f32.mrb[0].mxu0
        %v3818 = vadd.f32 %v3465, %v3817
        %v3819 = vpop.f32.mrb[0].mxu0
        %v3820 = vadd.f32 %v3467, %v3819
        %3821 = vmatprep.mubr.bf16.mxu0 %v1381
        %3822 = vmatmul.mubr.bf16.gmra.mrb[0].mxu0 %v1380
        %v3823 = vpop.f32.mrb[0].mxu0
        %v3824 = vadd.f32 %v3471, %v3823
        %v3825 = vpop.f32.mrb[0].mxu0
        %v3826 = vadd.f32 %v3473, %v3825
        %v3827 = vpop.f32.mrb[0].mxu0
        %v3828 = vadd.f32 %v3475, %v3827
        %v3829 = vpop.f32.mrb[0].mxu0
        %v3830 = vadd.f32 %v3477, %v3829
        %3831 = vmatprep.mubr.bf16.mxu0 %v1385
        %3832 = vmatmul.mubr.bf16.gmra.mrb[0].mxu0 %v1384
        %v3833 = vpop.f32.mrb[0].mxu0
        %v3834 = vadd.f32 %v3481, %v3833
        %v3835 = vpop.f32.mrb[0].mxu0
        %v3836 = vadd.f32 %v3483, %v3835
        %v3837 = vpop.f32.mrb[0].mxu0
        %v3838 = vadd.f32 %v3485, %v3837
        %v3839 = vpop.f32.mrb[0].mxu0
        %v3840 = vadd.f32 %v3487, %v3839
        %3841 = vmatprep.mubr.bf16.mxu0 %v1389
        %3842 = vmatmul.mubr.bf16.gmra.mrb[0].mxu0 %v1388
        %v3843 = vpop.f32.mrb[0].mxu0
        %v3844 = vadd.f32 %v3491, %v3843
        %v3845 = vpop.f32.mrb[0].mxu0
        %v3846 = vadd.f32 %v3493, %v3845
        %v3847 = vpop.f32.mrb[0].mxu0
        %v3848 = vadd.f32 %v3495, %v3847
        %v3849 = vpop.f32.mrb[0].mxu0
        %v3850 = vadd.f32 %v3497, %v3849
        %3851 = vmatprep.mubr.bf16.mxu0 %v1393
        %3852 = vmatmul.mubr.bf16.gmra.mrb[0].mxu0 %v1392
        %v3853 = vpop.f32.mrb[0].mxu0
        %v3854 = vadd.f32 %v3501, %v3853
        %v3855 = vpop.f32.mrb[0].mxu0
        %v3856 = vadd.f32 %v3503, %v3855
        %v3857 = vpop.f32.mrb[0].mxu0
        %v3858 = vadd.f32 %v3505, %v3857
        %v3859 = vpop.f32.mrb[0].mxu0
        %v3860 = vadd.f32 %v3507, %v3859
        %3861 = vmatprep.mubr.bf16.mxu0 %v1397
        %3862 = vmatmul.mubr.bf16.gmra.mrb[0].mxu0 %v1396
        %v3863 = vpop.f32.mrb[0].mxu0
        %v3864 = vadd.f32 %v3511, %v3863
        %v3865 = vpop.f32.mrb[0].mxu0
        %v3866 = vadd.f32 %v3513, %v3865
        %v3867 = vpop.f32.mrb[0].mxu0
        %v3868 = vadd.f32 %v3515, %v3867
        %v3869 = vpop.f32.mrb[0].mxu0
        %v3870 = vadd.f32 %v3517, %v3869
        %3871 = vmatprep.mubr.bf16.mxu0 %v1401
        %3872 = vmatmul.mubr.bf16.gmra.mrb[0].mxu0 %v1400
        %v3873 = vpop.f32.mrb[0].mxu0
        %v3874 = vadd.f32 %v3521, %v3873
        %v3875 = vpop.f32.mrb[0].mxu0
        %v3876 = vadd.f32 %v3523, %v3875
        %v3877 = vpop.f32.mrb[0].mxu0
        %v3878 = vadd.f32 %v3525, %v3877
        %v3879 = vpop.f32.mrb[0].mxu0
        %v3880 = vadd.f32 %v3527, %v3879
        %3881 = vmatprep.mubr.bf16.mxu0 %v1405
        %3882 = vmatmul.mubr.bf16.gmra.mrb[0].mxu0 %v1404
        %v3883 = vpop.f32.mrb[0].mxu0
        %v3884 = vadd.f32 %v3531, %v3883
        %v3885 = vpop.f32.mrb[0].mxu0
        %v3886 = vadd.f32 %v3533, %v3885
        %v3887 = vpop.f32.mrb[0].mxu0
        %v3888 = vadd.f32 %v3535, %v3887
        %v3889 = vpop.f32.mrb[0].mxu0
        %v3890 = vadd.f32 %v3537, %v3889
        %3891 = vmatprep.mubr.bf16.mxu0 %v1409
        %3892 = vmatmul.mubr.bf16.gmra.mrb[0].mxu0 %v1408
        %v3893 = vpop.f32.mrb[0].mxu0
        %v3894 = vadd.f32 %v3541, %v3893
        %v3895 = vpop.f32.mrb[0].mxu0
        %v3896 = vadd.f32 %v3543, %v3895
        %v3897 = vpop.f32.mrb[0].mxu0
        %v3898 = vadd.f32 %v3545, %v3897
        %v3899 = vpop.f32.mrb[0].mxu0
        %v3900 = vadd.f32 %v3547, %v3899
        %3901 = vmatprep.mubr.bf16.mxu0 %v1413
        %3902 = vmatmul.mubr.bf16.gmra.mrb[0].mxu0 %v1412
        %v3903 = vpop.f32.mrb[0].mxu0
        %v3904 = vadd.f32 %v3551, %v3903
        %v3905 = vpop.f32.mrb[0].mxu0
        %v3906 = vadd.f32 %v3553, %v3905
        %v3907 = vpop.f32.mrb[0].mxu0
        %v3908 = vadd.f32 %v3555, %v3907
        %v3909 = vpop.f32.mrb[0].mxu0
        %v3910 = vadd.f32 %v3557, %v3909
        %3911 = vmatprep.mubr.bf16.mxu0 %v1417
        %3912 = vmatmul.mubr.bf16.gmra.mrb[0].mxu0 %v1416
        %v3913 = vpop.f32.mrb[0].mxu0
        %v3914 = vadd.f32 %v3561, %v3913
        %v3915 = vpop.f32.mrb[0].mxu0
        %v3916 = vadd.f32 %v3563, %v3915
        %v3917 = vpop.f32.mrb[0].mxu0
        %v3918 = vadd.f32 %v3565, %v3917
        %v3919 = vpop.f32.mrb[0].mxu0
        %v3920 = vadd.f32 %v3567, %v3919
        %3921 = vmatprep.mubr.bf16.mxu0 %v1421
        %3922 = vmatmul.mubr.bf16.gmra.mrb[0].mxu0 %v1420
        %v3923 = vpop.f32.mrb[0].mxu0
        %v3924 = vadd.f32 %v3571, %v3923
        %v3925 = vpop.f32.mrb[0].mxu0
        %v3926 = vadd.f32 %v3573, %v3925
        %v3927 = vpop.f32.mrb[0].mxu0
        %v3928 = vadd.f32 %v3575, %v3927
        %v3929 = vpop.f32.mrb[0].mxu0
        %v3930 = vadd.f32 %v3577, %v3929
        %3931 = vmatprep.mubr.bf16.mxu0 %v1425
        %3932 = vmatmul.mubr.bf16.gmra.mrb[0].mxu0 %v1424
        %v3933 = vpop.f32.mrb[0].mxu0
        %v3934 = vadd.f32 %v3581, %v3933
        %v3935 = vpop.f32.mrb[0].mxu0
        %v3936 = vadd.f32 %v3583, %v3935
        %v3937 = vpop.f32.mrb[0].mxu0
        %v3938 = vadd.f32 %v3585, %v3937
        %v3939 = vpop.f32.mrb[0].mxu0
        %v3940 = vadd.f32 %v3587, %v3939
        %3941 = vmatprep.mubr.bf16.mxu0 %v1429
        %3942 = vmatmul.mubr.bf16.gmra.mrb[0].mxu0 %v1428
        %v3943 = vpop.f32.mrb[0].mxu0
        %v3944 = vadd.f32 %v3591, %v3943
        %v3945 = vpop.f32.mrb[0].mxu0
        %v3946 = vadd.f32 %v3593, %v3945
        %v3947 = vpop.f32.mrb[0].mxu0
        %v3948 = vadd.f32 %v3595, %v3947
        %v3949 = vpop.f32.mrb[0].mxu0
        %v3950 = vadd.f32 %v3597, %v3949
        %3951 = vmatprep.mubr.bf16.mxu0 %v1433
        %3952 = vmatmul.mubr.bf16.gmra.mrb[0].mxu0 %v1432
        %v3953 = vpop.f32.mrb[0].mxu0
        %v3954 = vadd.f32 %v3601, %v3953
        %v3955 = vpop.f32.mrb[0].mxu0
        %v3956 = vadd.f32 %v3603, %v3955
        %v3957 = vpop.f32.mrb[0].mxu0
        %v3958 = vadd.f32 %v3605, %v3957
        %v3959 = vpop.f32.mrb[0].mxu0
        %v3960 = vadd.f32 %v3607, %v3959
        %3961 = vmatprep.mubr.bf16.mxu0 %v1437
        %3962 = vmatmul.mubr.bf16.gmra.mrb[0].mxu0 %v1436
        %v3963 = vpop.f32.mrb[0].mxu0
        %v3964 = vadd.f32 %v3611, %v3963
        %v3965 = vpop.f32.mrb[0].mxu0
        %v3966 = vadd.f32 %v3613, %v3965
        %v3967 = vpop.f32.mrb[0].mxu0
        %v3968 = vadd.f32 %v3615, %v3967
        %v3969 = vpop.f32.mrb[0].mxu0
        %v3970 = vadd.f32 %v3617, %v3969
        %3971 = vmatprep.mubr.bf16.mxu0 %v1441
        %3972 = vmatmul.mubr.bf16.gmra.mrb[0].mxu0 %v1440
        %v3973 = vpop.f32.mrb[0].mxu0
        %v3974 = vadd.f32 %v3621, %v3973
        %v3975 = vpop.f32.mrb[0].mxu0
        %v3976 = vadd.f32 %v3623, %v3975
        %v3977 = vpop.f32.mrb[0].mxu0
        %v3978 = vadd.f32 %v3625, %v3977
        %v3979 = vpop.f32.mrb[0].mxu0
        %v3980 = vadd.f32 %v3627, %v3979
        %3981 = vmatprep.mubr.bf16.mxu0 %v1445
        %3982 = vmatmul.mubr.bf16.gmra.mrb[0].mxu0 %v1444
        %v3983 = vpop.f32.mrb[0].mxu0
        %v3984 = vadd.f32 %v3631, %v3983
        %v3985 = vpop.f32.mrb[0].mxu0
        %v3986 = vadd.f32 %v3633, %v3985
        %v3987 = vpop.f32.mrb[0].mxu0
        %v3988 = vadd.f32 %v3635, %v3987
        %v3989 = vpop.f32.mrb[0].mxu0
        %v3990 = vadd.f32 %v3637, %v3989
        %3991 = vmatprep.mubr.bf16.mxu0 %v1449
        %3992 = vmatmul.mubr.bf16.gmra.mrb[0].mxu0 %v1448
        %v3993 = vpop.f32.mrb[0].mxu0
        %v3994 = vadd.f32 %v3641, %v3993
        %v3995 = vpop.f32.mrb[0].mxu0
        %v3996 = vadd.f32 %v3643, %v3995
        %v3997 = vpop.f32.mrb[0].mxu0
        %v3998 = vadd.f32 %v3645, %v3997
        %v3999 = vpop.f32.mrb[0].mxu0
        %v4000 = vadd.f32 %v3647, %v3999
        %4001 = vmatprep.mubr.bf16.mxu0 %v1453
        %4002 = vmatmul.mubr.bf16.gmra.mrb[0].mxu0 %v1452
        %v4003 = vpop.f32.mrb[0].mxu0
        %v4004 = vadd.f32 %v3651, %v4003
        %v4005 = vpop.f32.mrb[0].mxu0
        %v4006 = vadd.f32 %v3653, %v4005
        %v4007 = vpop.f32.mrb[0].mxu0
        %v4008 = vadd.f32 %v3655, %v4007
        %v4009 = vpop.f32.mrb[0].mxu0
        %v4010 = vadd.f32 %v3657, %v4009
        %4011 = vmatprep.mubr.bf16.mxu0 %v1457
        %4012 = vmatmul.mubr.bf16.gmra.mrb[0].mxu0 %v1456
        %v4013 = vpop.f32.mrb[0].mxu0
        %v4014 = vadd.f32 %v3661, %v4013
        %v4015 = vpop.f32.mrb[0].mxu0
        %v4016 = vadd.f32 %v3663, %v4015
        %v4017 = vpop.f32.mrb[0].mxu0
        %v4018 = vadd.f32 %v3665, %v4017
        %v4019 = vpop.f32.mrb[0].mxu0
        %v4020 = vadd.f32 %v3667, %v4019
        %4021 = vdwg.mxu0
        %4022 = vmatprep.subr.bf16.mxu0 %v2231
        %4023 = vmatpush1.bf16.msra.mxu0 %v2230
        %4024 = vmatprep.subr.bf16.mxu0 %v2237
        %4025 = vmatpush1.bf16.msra.mxu0 %v2236
        %4026 = vmatprep.subr.bf16.mxu0 %v2243
        %4027 = vmatpush1.bf16.msra.mxu0 %v2242
        %4028 = vmatprep.subr.bf16.mxu0 %v2249
        %4029 = vmatpush1.bf16.msra.mxu0 %v2248
        %4030 = vmatprep.subr.bf16.mxu0 %v2255
        %4031 = vmatpush1.bf16.msra.mxu0 %v2254
        %4032 = vmatprep.subr.bf16.mxu0 %v2261
        %4033 = vmatpush1.bf16.msra.mxu0 %v2260
        %4034 = vmatprep.subr.bf16.mxu0 %v2267
        %4035 = vmatpush1.bf16.msra.mxu0 %v2266
        %4036 = vmatprep.subr.bf16.mxu0 %v2273
        %4037 = vmatpush1.bf16.msra.mxu0 %v2272
        %4038 = vmatprep.subr.bf16.mxu0 %v2279
        %4039 = vmatpush1.bf16.msra.mxu0 %v2278
        %4040 = vmatprep.subr.bf16.mxu0 %v2285
        %4041 = vmatpush1.bf16.msra.mxu0 %v2284
        %4042 = vmatprep.subr.bf16.mxu0 %v2291
        %4043 = vmatpush1.bf16.msra.mxu0 %v2290
        %4044 = vmatprep.subr.bf16.mxu0 %v2297
        %4045 = vmatpush1.bf16.msra.mxu0 %v2296
        %4046 = vmatprep.subr.bf16.mxu0 %v2303
        %4047 = vmatpush1.bf16.msra.mxu0 %v2302
        %4048 = vmatprep.subr.bf16.mxu0 %v2309
        %4049 = vmatpush1.bf16.msra.mxu0 %v2308
        %4050 = vmatprep.subr.bf16.mxu0 %v2315
        %4051 = vmatpush1.bf16.msra.mxu0 %v2314
        %4052 = vmatprep.subr.bf16.mxu0 %v2321
        %4053 = vmatpush1.bf16.msra.mxu0 %v2320
        %4054 = vmatprep.mubr.bf16.mxu0 %v1331
        %4055 = vmatmul.mubr.bf16.gmra.mrb[0].mxu0 %v1330
        %v4056 = vpop.f32.mrb[0].mxu0
        %v4057 = vadd.f32 0.0, %v4056
        %v4058 = vpop.f32.mrb[0].mxu0
        %v4059 = vadd.f32 0.0, %v4058
        %v4060 = vpop.f32.mrb[0].mxu0
        %v4061 = vadd.f32 0.0, %v4060
        %v4062 = vpop.f32.mrb[0].mxu0
        %v4063 = vadd.f32 0.0, %v4062
        %4064 = vmatprep.mubr.bf16.mxu0 %v1335
        %4065 = vmatmul.mubr.bf16.gmra.mrb[0].mxu0 %v1334
        %v4066 = vpop.f32.mrb[0].mxu0
        %v4067 = vadd.f32 0.0, %v4066
        %v4068 = vpop.f32.mrb[0].mxu0
        %v4069 = vadd.f32 0.0, %v4068
        %v4070 = vpop.f32.mrb[0].mxu0
        %v4071 = vadd.f32 0.0, %v4070
        %v4072 = vpop.f32.mrb[0].mxu0
        %v4073 = vadd.f32 0.0, %v4072
        %4074 = vmatprep.mubr.bf16.mxu0 %v1339
        %4075 = vmatmul.mubr.bf16.gmra.mrb[0].mxu0 %v1338
        %v4076 = vpop.f32.mrb[0].mxu0
        %v4077 = vadd.f32 0.0, %v4076
        %v4078 = vpop.f32.mrb[0].mxu0
        %v4079 = vadd.f32 0.0, %v4078
        %v4080 = vpop.f32.mrb[0].mxu0
        %v4081 = vadd.f32 0.0, %v4080
        %v4082 = vpop.f32.mrb[0].mxu0
        %v4083 = vadd.f32 0.0, %v4082
        %4084 = vmatprep.mubr.bf16.mxu0 %v1343
        %4085 = vmatmul.mubr.bf16.gmra.mrb[0].mxu0 %v1342
        %v4086 = vpop.f32.mrb[0].mxu0
        %v4087 = vadd.f32 0.0, %v4086
        %v4088 = vpop.f32.mrb[0].mxu0
        %v4089 = vadd.f32 0.0, %v4088
        %v4090 = vpop.f32.mrb[0].mxu0
        %v4091 = vadd.f32 0.0, %v4090
        %v4092 = vpop.f32.mrb[0].mxu0
        %v4093 = vadd.f32 0.0, %v4092
        %4094 = vmatprep.mubr.bf16.mxu0 %v1347
        %4095 = vmatmul.mubr.bf16.gmra.mrb[0].mxu0 %v1346
        %v4096 = vpop.f32.mrb[0].mxu0
        %v4097 = vadd.f32 0.0, %v4096
        %v4098 = vpop.f32.mrb[0].mxu0
        %v4099 = vadd.f32 0.0, %v4098
        %v4100 = vpop.f32.mrb[0].mxu0
        %v4101 = vadd.f32 0.0, %v4100
        %v4102 = vpop.f32.mrb[0].mxu0
        %v4103 = vadd.f32 0.0, %v4102
        %4104 = vmatprep.mubr.bf16.mxu0 %v1351
        %4105 = vmatmul.mubr.bf16.gmra.mrb[0].mxu0 %v1350
        %v4106 = vpop.f32.mrb[0].mxu0
        %v4107 = vadd.f32 0.0, %v4106
        %v4108 = vpop.f32.mrb[0].mxu0
        %v4109 = vadd.f32 0.0, %v4108
        %v4110 = vpop.f32.mrb[0].mxu0
        %v4111 = vadd.f32 0.0, %v4110
        %v4112 = vpop.f32.mrb[0].mxu0
        %v4113 = vadd.f32 0.0, %v4112
        %4114 = vmatprep.mubr.bf16.mxu0 %v1355
        %4115 = vmatmul.mubr.bf16.gmra.mrb[0].mxu0 %v1354
        %v4116 = vpop.f32.mrb[0].mxu0
        %v4117 = vadd.f32 0.0, %v4116
        %v4118 = vpop.f32.mrb[0].mxu0
        %v4119 = vadd.f32 0.0, %v4118
        %v4120 = vpop.f32.mrb[0].mxu0
        %v4121 = vadd.f32 0.0, %v4120
        %v4122 = vpop.f32.mrb[0].mxu0
        %v4123 = vadd.f32 0.0, %v4122
        %4124 = vmatprep.mubr.bf16.mxu0 %v1359
        %4125 = vmatmul.mubr.bf16.gmra.mrb[0].mxu0 %v1358
        %v4126 = vpop.f32.mrb[0].mxu0
        %v4127 = vadd.f32 0.0, %v4126
        %v4128 = vpop.f32.mrb[0].mxu0
        %v4129 = vadd.f32 0.0, %v4128
        %v4130 = vpop.f32.mrb[0].mxu0
        %v4131 = vadd.f32 0.0, %v4130
        %v4132 = vpop.f32.mrb[0].mxu0
        %v4133 = vadd.f32 0.0, %v4132
        %4134 = vmatprep.mubr.bf16.mxu0 %v1363
        %4135 = vmatmul.mubr.bf16.gmra.mrb[0].mxu0 %v1362
        %v4136 = vpop.f32.mrb[0].mxu0
        %v4137 = vadd.f32 0.0, %v4136
        %v4138 = vpop.f32.mrb[0].mxu0
        %v4139 = vadd.f32 0.0, %v4138
        %v4140 = vpop.f32.mrb[0].mxu0
        %v4141 = vadd.f32 0.0, %v4140
        %v4142 = vpop.f32.mrb[0].mxu0
        %v4143 = vadd.f32 0.0, %v4142
        %4144 = vmatprep.mubr.bf16.mxu0 %v1367
        %4145 = vmatmul.mubr.bf16.gmra.mrb[0].mxu0 %v1366
        %v4146 = vpop.f32.mrb[0].mxu0
        %v4147 = vadd.f32 0.0, %v4146
        %v4148 = vpop.f32.mrb[0].mxu0
        %v4149 = vadd.f32 0.0, %v4148
        %v4150 = vpop.f32.mrb[0].mxu0
        %v4151 = vadd.f32 0.0, %v4150
        %v4152 = vpop.f32.mrb[0].mxu0
        %v4153 = vadd.f32 0.0, %v4152
        %4154 = vmatprep.mubr.bf16.mxu0 %v1371
        %4155 = vmatmul.mubr.bf16.gmra.mrb[0].mxu0 %v1370
        %v4156 = vpop.f32.mrb[0].mxu0
        %v4157 = vadd.f32 0.0, %v4156
        %v4158 = vpop.f32.mrb[0].mxu0
        %v4159 = vadd.f32 0.0, %v4158
        %v4160 = vpop.f32.mrb[0].mxu0
        %v4161 = vadd.f32 0.0, %v4160
        %v4162 = vpop.f32.mrb[0].mxu0
        %v4163 = vadd.f32 0.0, %v4162
        %4164 = vmatprep.mubr.bf16.mxu0 %v1375
        %4165 = vmatmul.mubr.bf16.gmra.mrb[0].mxu0 %v1374
        %v4166 = vpop.f32.mrb[0].mxu0
        %v4167 = vadd.f32 0.0, %v4166
        %v4168 = vpop.f32.mrb[0].mxu0
        %v4169 = vadd.f32 0.0, %v4168
        %v4170 = vpop.f32.mrb[0].mxu0
        %v4171 = vadd.f32 0.0, %v4170
        %v4172 = vpop.f32.mrb[0].mxu0
        %v4173 = vadd.f32 0.0, %v4172
        %4174 = vmatprep.mubr.bf16.mxu0 %v1379
        %4175 = vmatmul.mubr.bf16.gmra.mrb[0].mxu0 %v1378
        %v4176 = vpop.f32.mrb[0].mxu0
        %v4177 = vadd.f32 0.0, %v4176
        %v4178 = vpop.f32.mrb[0].mxu0
        %v4179 = vadd.f32 0.0, %v4178
        %v4180 = vpop.f32.mrb[0].mxu0
        %v4181 = vadd.f32 0.0, %v4180
        %v4182 = vpop.f32.mrb[0].mxu0
        %v4183 = vadd.f32 0.0, %v4182
        %4184 = vmatprep.mubr.bf16.mxu0 %v1383
        %4185 = vmatmul.mubr.bf16.gmra.mrb[0].mxu0 %v1382
        %v4186 = vpop.f32.mrb[0].mxu0
        %v4187 = vadd.f32 0.0, %v4186
        %v4188 = vpop.f32.mrb[0].mxu0
        %v4189 = vadd.f32 0.0, %v4188
        %v4190 = vpop.f32.mrb[0].mxu0
        %v4191 = vadd.f32 0.0, %v4190
        %v4192 = vpop.f32.mrb[0].mxu0
        %v4193 = vadd.f32 0.0, %v4192
        %4194 = vmatprep.mubr.bf16.mxu0 %v1387
        %4195 = vmatmul.mubr.bf16.gmra.mrb[0].mxu0 %v1386
        %v4196 = vpop.f32.mrb[0].mxu0
        %v4197 = vadd.f32 0.0, %v4196
        %v4198 = vpop.f32.mrb[0].mxu0
        %v4199 = vadd.f32 0.0, %v4198
        %v4200 = vpop.f32.mrb[0].mxu0
        %v4201 = vadd.f32 0.0, %v4200
        %v4202 = vpop.f32.mrb[0].mxu0
        %v4203 = vadd.f32 0.0, %v4202
        %4204 = vmatprep.mubr.bf16.mxu0 %v1391
        %4205 = vmatmul.mubr.bf16.gmra.mrb[0].mxu0 %v1390
        %v4206 = vpop.f32.mrb[0].mxu0
        %v4207 = vadd.f32 0.0, %v4206
        %v4208 = vpop.f32.mrb[0].mxu0
        %v4209 = vadd.f32 0.0, %v4208
        %v4210 = vpop.f32.mrb[0].mxu0
        %v4211 = vadd.f32 0.0, %v4210
        %v4212 = vpop.f32.mrb[0].mxu0
        %v4213 = vadd.f32 0.0, %v4212
        %4214 = vmatprep.mubr.bf16.mxu0 %v1395
        %4215 = vmatmul.mubr.bf16.gmra.mrb[0].mxu0 %v1394
        %v4216 = vpop.f32.mrb[0].mxu0
        %v4217 = vadd.f32 0.0, %v4216
        %v4218 = vpop.f32.mrb[0].mxu0
        %v4219 = vadd.f32 0.0, %v4218
        %v4220 = vpop.f32.mrb[0].mxu0
        %v4221 = vadd.f32 0.0, %v4220
        %v4222 = vpop.f32.mrb[0].mxu0
        %v4223 = vadd.f32 0.0, %v4222
        %4224 = vmatprep.mubr.bf16.mxu0 %v1399
        %4225 = vmatmul.mubr.bf16.gmra.mrb[0].mxu0 %v1398
        %v4226 = vpop.f32.mrb[0].mxu0
        %v4227 = vadd.f32 0.0, %v4226
        %v4228 = vpop.f32.mrb[0].mxu0
        %v4229 = vadd.f32 0.0, %v4228
        %v4230 = vpop.f32.mrb[0].mxu0
        %v4231 = vadd.f32 0.0, %v4230
        %v4232 = vpop.f32.mrb[0].mxu0
        %v4233 = vadd.f32 0.0, %v4232
        %4234 = vmatprep.mubr.bf16.mxu0 %v1403
        %4235 = vmatmul.mubr.bf16.gmra.mrb[0].mxu0 %v1402
        %v4236 = vpop.f32.mrb[0].mxu0
        %v4237 = vadd.f32 0.0, %v4236
        %v4238 = vpop.f32.mrb[0].mxu0
        %v4239 = vadd.f32 0.0, %v4238
        %v4240 = vpop.f32.mrb[0].mxu0
        %v4241 = vadd.f32 0.0, %v4240
        %v4242 = vpop.f32.mrb[0].mxu0
        %v4243 = vadd.f32 0.0, %v4242
        %4244 = vmatprep.mubr.bf16.mxu0 %v1407
        %4245 = vmatmul.mubr.bf16.gmra.mrb[0].mxu0 %v1406
        %v4246 = vpop.f32.mrb[0].mxu0
        %v4247 = vadd.f32 0.0, %v4246
        %v4248 = vpop.f32.mrb[0].mxu0
        %v4249 = vadd.f32 0.0, %v4248
        %v4250 = vpop.f32.mrb[0].mxu0
        %v4251 = vadd.f32 0.0, %v4250
        %v4252 = vpop.f32.mrb[0].mxu0
        %v4253 = vadd.f32 0.0, %v4252
        %4254 = vmatprep.mubr.bf16.mxu0 %v1411
        %4255 = vmatmul.mubr.bf16.gmra.mrb[0].mxu0 %v1410
        %v4256 = vpop.f32.mrb[0].mxu0
        %v4257 = vadd.f32 0.0, %v4256
        %v4258 = vpop.f32.mrb[0].mxu0
        %v4259 = vadd.f32 0.0, %v4258
        %v4260 = vpop.f32.mrb[0].mxu0
        %v4261 = vadd.f32 0.0, %v4260
        %v4262 = vpop.f32.mrb[0].mxu0
        %v4263 = vadd.f32 0.0, %v4262
        %4264 = vmatprep.mubr.bf16.mxu0 %v1415
        %4265 = vmatmul.mubr.bf16.gmra.mrb[0].mxu0 %v1414
        %v4266 = vpop.f32.mrb[0].mxu0
        %v4267 = vadd.f32 0.0, %v4266
        %v4268 = vpop.f32.mrb[0].mxu0
        %v4269 = vadd.f32 0.0, %v4268
        %v4270 = vpop.f32.mrb[0].mxu0
        %v4271 = vadd.f32 0.0, %v4270
        %v4272 = vpop.f32.mrb[0].mxu0
        %v4273 = vadd.f32 0.0, %v4272
        %4274 = vmatprep.mubr.bf16.mxu0 %v1419
        %4275 = vmatmul.mubr.bf16.gmra.mrb[0].mxu0 %v1418
        %v4276 = vpop.f32.mrb[0].mxu0
        %v4277 = vadd.f32 0.0, %v4276
        %v4278 = vpop.f32.mrb[0].mxu0
        %v4279 = vadd.f32 0.0, %v4278
        %v4280 = vpop.f32.mrb[0].mxu0
        %v4281 = vadd.f32 0.0, %v4280
        %v4282 = vpop.f32.mrb[0].mxu0
        %v4283 = vadd.f32 0.0, %v4282
        %4284 = vmatprep.mubr.bf16.mxu0 %v1423
        %4285 = vmatmul.mubr.bf16.gmra.mrb[0].mxu0 %v1422
        %v4286 = vpop.f32.mrb[0].mxu0
        %v4287 = vadd.f32 0.0, %v4286
        %v4288 = vpop.f32.mrb[0].mxu0
        %v4289 = vadd.f32 0.0, %v4288
        %v4290 = vpop.f32.mrb[0].mxu0
        %v4291 = vadd.f32 0.0, %v4290
        %v4292 = vpop.f32.mrb[0].mxu0
        %v4293 = vadd.f32 0.0, %v4292
        %4294 = vmatprep.mubr.bf16.mxu0 %v1427
        %4295 = vmatmul.mubr.bf16.gmra.mrb[0].mxu0 %v1426
        %v4296 = vpop.f32.mrb[0].mxu0
        %v4297 = vadd.f32 0.0, %v4296
        %v4298 = vpop.f32.mrb[0].mxu0
        %v4299 = vadd.f32 0.0, %v4298
        %v4300 = vpop.f32.mrb[0].mxu0
        %v4301 = vadd.f32 0.0, %v4300
        %v4302 = vpop.f32.mrb[0].mxu0
        %v4303 = vadd.f32 0.0, %v4302
        %4304 = vmatprep.mubr.bf16.mxu0 %v1431
        %4305 = vmatmul.mubr.bf16.gmra.mrb[0].mxu0 %v1430
        %v4306 = vpop.f32.mrb[0].mxu0
        %v4307 = vadd.f32 0.0, %v4306
        %v4308 = vpop.f32.mrb[0].mxu0
        %v4309 = vadd.f32 0.0, %v4308
        %v4310 = vpop.f32.mrb[0].mxu0
        %v4311 = vadd.f32 0.0, %v4310
        %v4312 = vpop.f32.mrb[0].mxu0
        %v4313 = vadd.f32 0.0, %v4312
        %4314 = vmatprep.mubr.bf16.mxu0 %v1435
        %4315 = vmatmul.mubr.bf16.gmra.mrb[0].mxu0 %v1434
        %v4316 = vpop.f32.mrb[0].mxu0
        %v4317 = vadd.f32 0.0, %v4316
        %v4318 = vpop.f32.mrb[0].mxu0
        %v4319 = vadd.f32 0.0, %v4318
        %v4320 = vpop.f32.mrb[0].mxu0
        %v4321 = vadd.f32 0.0, %v4320
        %v4322 = vpop.f32.mrb[0].mxu0
        %v4323 = vadd.f32 0.0, %v4322
        %4324 = vmatprep.mubr.bf16.mxu0 %v1439
        %4325 = vmatmul.mubr.bf16.gmra.mrb[0].mxu0 %v1438
        %v4326 = vpop.f32.mrb[0].mxu0
        %v4327 = vadd.f32 0.0, %v4326
        %v4328 = vpop.f32.mrb[0].mxu0
        %v4329 = vadd.f32 0.0, %v4328
        %v4330 = vpop.f32.mrb[0].mxu0
        %v4331 = vadd.f32 0.0, %v4330
        %v4332 = vpop.f32.mrb[0].mxu0
        %v4333 = vadd.f32 0.0, %v4332
        %4334 = vmatprep.mubr.bf16.mxu0 %v1443
        %4335 = vmatmul.mubr.bf16.gmra.mrb[0].mxu0 %v1442
        %v4336 = vpop.f32.mrb[0].mxu0
        %v4337 = vadd.f32 0.0, %v4336
        %v4338 = vpop.f32.mrb[0].mxu0
        %v4339 = vadd.f32 0.0, %v4338
        %v4340 = vpop.f32.mrb[0].mxu0
        %v4341 = vadd.f32 0.0, %v4340
        %v4342 = vpop.f32.mrb[0].mxu0
        %v4343 = vadd.f32 0.0, %v4342
        %4344 = vmatprep.mubr.bf16.mxu0 %v1447
        %4345 = vmatmul.mubr.bf16.gmra.mrb[0].mxu0 %v1446
        %v4346 = vpop.f32.mrb[0].mxu0
        %v4347 = vadd.f32 0.0, %v4346
        %v4348 = vpop.f32.mrb[0].mxu0
        %v4349 = vadd.f32 0.0, %v4348
        %v4350 = vpop.f32.mrb[0].mxu0
        %v4351 = vadd.f32 0.0, %v4350
        %v4352 = vpop.f32.mrb[0].mxu0
        %v4353 = vadd.f32 0.0, %v4352
        %4354 = vmatprep.mubr.bf16.mxu0 %v1451
        %4355 = vmatmul.mubr.bf16.gmra.mrb[0].mxu0 %v1450
        %v4356 = vpop.f32.mrb[0].mxu0
        %v4357 = vadd.f32 0.0, %v4356
        %v4358 = vpop.f32.mrb[0].mxu0
        %v4359 = vadd.f32 0.0, %v4358
        %v4360 = vpop.f32.mrb[0].mxu0
        %v4361 = vadd.f32 0.0, %v4360
        %v4362 = vpop.f32.mrb[0].mxu0
        %v4363 = vadd.f32 0.0, %v4362
        %4364 = vmatprep.mubr.bf16.mxu0 %v1455
        %4365 = vmatmul.mubr.bf16.gmra.mrb[0].mxu0 %v1454
        %v4366 = vpop.f32.mrb[0].mxu0
        %v4367 = vadd.f32 0.0, %v4366
        %v4368 = vpop.f32.mrb[0].mxu0
        %v4369 = vadd.f32 0.0, %v4368
        %v4370 = vpop.f32.mrb[0].mxu0
        %v4371 = vadd.f32 0.0, %v4370
        %v4372 = vpop.f32.mrb[0].mxu0
        %v4373 = vadd.f32 0.0, %v4372
        %4374 = vdwg.mxu0
        %4375 = vmatprep.subr.bf16.mxu0 %v2327
        %4376 = vmatpush1.bf16.msra.mxu0 %v2326
        %4377 = vmatprep.subr.bf16.mxu0 %v2333
        %4378 = vmatpush1.bf16.msra.mxu0 %v2332
        %4379 = vmatprep.subr.bf16.mxu0 %v2339
        %4380 = vmatpush1.bf16.msra.mxu0 %v2338
        %4381 = vmatprep.subr.bf16.mxu0 %v2345
        %4382 = vmatpush1.bf16.msra.mxu0 %v2344
        %4383 = vmatprep.subr.bf16.mxu0 %v2351
        %4384 = vmatpush1.bf16.msra.mxu0 %v2350
        %4385 = vmatprep.subr.bf16.mxu0 %v2357
        %4386 = vmatpush1.bf16.msra.mxu0 %v2356
        %4387 = vmatprep.subr.bf16.mxu0 %v2363
        %4388 = vmatpush1.bf16.msra.mxu0 %v2362
        %4389 = vmatprep.subr.bf16.mxu0 %v2369
        %4390 = vmatpush1.bf16.msra.mxu0 %v2368
        %4391 = vmatprep.subr.bf16.mxu0 %v2375
        %4392 = vmatpush1.bf16.msra.mxu0 %v2374
        %4393 = vmatprep.subr.bf16.mxu0 %v2381
        %4394 = vmatpush1.bf16.msra.mxu0 %v2380
        %4395 = vmatprep.subr.bf16.mxu0 %v2387
        %4396 = vmatpush1.bf16.msra.mxu0 %v2386
        %4397 = vmatprep.subr.bf16.mxu0 %v2393
        %4398 = vmatpush1.bf16.msra.mxu0 %v2392
        %4399 = vmatprep.subr.bf16.mxu0 %v2399
        %4400 = vmatpush1.bf16.msra.mxu0 %v2398
        %4401 = vmatprep.subr.bf16.mxu0 %v2405
        %4402 = vmatpush1.bf16.msra.mxu0 %v2404
        %4403 = vmatprep.subr.bf16.mxu0 %v2411
        %4404 = vmatpush1.bf16.msra.mxu0 %v2410
        %4405 = vmatprep.subr.bf16.mxu0 %v2417
        %4406 = vmatpush1.bf16.msra.mxu0 %v2416
        %4407 = vmatprep.mubr.bf16.mxu0 %v1333
        %4408 = vmatmul.mubr.bf16.gmra.mrb[0].mxu0 %v1332
        %v4409 = vpop.f32.mrb[0].mxu0
        %v4410 = vadd.f32 %v4057, %v4409
        %v4411 = vpop.f32.mrb[0].mxu0
        %v4412 = vadd.f32 %v4059, %v4411
        %v4413 = vpop.f32.mrb[0].mxu0
        %v4414 = vadd.f32 %v4061, %v4413
        %v4415 = vpop.f32.mrb[0].mxu0
        %v4416 = vadd.f32 %v4063, %v4415
        %4417 = vmatprep.mubr.bf16.mxu0 %v1337
        %4418 = vmatmul.mubr.bf16.gmra.mrb[0].mxu0 %v1336
        %v4419 = vpop.f32.mrb[0].mxu0
        %v4420 = vadd.f32 %v4067, %v4419
        %v4421 = vpop.f32.mrb[0].mxu0
        %v4422 = vadd.f32 %v4069, %v4421
        %v4423 = vpop.f32.mrb[0].mxu0
        %v4424 = vadd.f32 %v4071, %v4423
        %v4425 = vpop.f32.mrb[0].mxu0
        %v4426 = vadd.f32 %v4073, %v4425
        %4427 = vmatprep.mubr.bf16.mxu0 %v1341
        %4428 = vmatmul.mubr.bf16.gmra.mrb[0].mxu0 %v1340
        %v4429 = vpop.f32.mrb[0].mxu0
        %v4430 = vadd.f32 %v4077, %v4429
        %v4431 = vpop.f32.mrb[0].mxu0
        %v4432 = vadd.f32 %v4079, %v4431
        %v4433 = vpop.f32.mrb[0].mxu0
        %v4434 = vadd.f32 %v4081, %v4433
        %v4435 = vpop.f32.mrb[0].mxu0
        %v4436 = vadd.f32 %v4083, %v4435
        %4437 = vmatprep.mubr.bf16.mxu0 %v1345
        %4438 = vmatmul.mubr.bf16.gmra.mrb[0].mxu0 %v1344
        %v4439 = vpop.f32.mrb[0].mxu0
        %v4440 = vadd.f32 %v4087, %v4439
        %v4441 = vpop.f32.mrb[0].mxu0
        %v4442 = vadd.f32 %v4089, %v4441
        %v4443 = vpop.f32.mrb[0].mxu0
        %v4444 = vadd.f32 %v4091, %v4443
        %v4445 = vpop.f32.mrb[0].mxu0
        %v4446 = vadd.f32 %v4093, %v4445
        %4447 = vmatprep.mubr.bf16.mxu0 %v1349
        %4448 = vmatmul.mubr.bf16.gmra.mrb[0].mxu0 %v1348
        %v4449 = vpop.f32.mrb[0].mxu0
        %v4450 = vadd.f32 %v4097, %v4449
        %v4451 = vpop.f32.mrb[0].mxu0
        %v4452 = vadd.f32 %v4099, %v4451
        %v4453 = vpop.f32.mrb[0].mxu0
        %v4454 = vadd.f32 %v4101, %v4453
        %v4455 = vpop.f32.mrb[0].mxu0
        %v4456 = vadd.f32 %v4103, %v4455
        %4457 = vmatprep.mubr.bf16.mxu0 %v1353
        %4458 = vmatmul.mubr.bf16.gmra.mrb[0].mxu0 %v1352
        %v4459 = vpop.f32.mrb[0].mxu0
        %v4460 = vadd.f32 %v4107, %v4459
        %v4461 = vpop.f32.mrb[0].mxu0
        %v4462 = vadd.f32 %v4109, %v4461
        %v4463 = vpop.f32.mrb[0].mxu0
        %v4464 = vadd.f32 %v4111, %v4463
        %v4465 = vpop.f32.mrb[0].mxu0
        %v4466 = vadd.f32 %v4113, %v4465
        %4467 = vmatprep.mubr.bf16.mxu0 %v1357
        %4468 = vmatmul.mubr.bf16.gmra.mrb[0].mxu0 %v1356
        %v4469 = vpop.f32.mrb[0].mxu0
        %v4470 = vadd.f32 %v4117, %v4469
        %v4471 = vpop.f32.mrb[0].mxu0
        %v4472 = vadd.f32 %v4119, %v4471
        %v4473 = vpop.f32.mrb[0].mxu0
        %v4474 = vadd.f32 %v4121, %v4473
        %v4475 = vpop.f32.mrb[0].mxu0
        %v4476 = vadd.f32 %v4123, %v4475
        %4477 = vmatprep.mubr.bf16.mxu0 %v1361
        %4478 = vmatmul.mubr.bf16.gmra.mrb[0].mxu0 %v1360
        %v4479 = vpop.f32.mrb[0].mxu0
        %v4480 = vadd.f32 %v4127, %v4479
        %v4481 = vpop.f32.mrb[0].mxu0
        %v4482 = vadd.f32 %v4129, %v4481
        %v4483 = vpop.f32.mrb[0].mxu0
        %v4484 = vadd.f32 %v4131, %v4483
        %v4485 = vpop.f32.mrb[0].mxu0
        %v4486 = vadd.f32 %v4133, %v4485
        %4487 = vmatprep.mubr.bf16.mxu0 %v1365
        %4488 = vmatmul.mubr.bf16.gmra.mrb[0].mxu0 %v1364
        %v4489 = vpop.f32.mrb[0].mxu0
        %v4490 = vadd.f32 %v4137, %v4489
        %v4491 = vpop.f32.mrb[0].mxu0
        %v4492 = vadd.f32 %v4139, %v4491
        %v4493 = vpop.f32.mrb[0].mxu0
        %v4494 = vadd.f32 %v4141, %v4493
        %v4495 = vpop.f32.mrb[0].mxu0
        %v4496 = vadd.f32 %v4143, %v4495
        %4497 = vmatprep.mubr.bf16.mxu0 %v1369
        %4498 = vmatmul.mubr.bf16.gmra.mrb[0].mxu0 %v1368
        %v4499 = vpop.f32.mrb[0].mxu0
        %v4500 = vadd.f32 %v4147, %v4499
        %v4501 = vpop.f32.mrb[0].mxu0
        %v4502 = vadd.f32 %v4149, %v4501
        %v4503 = vpop.f32.mrb[0].mxu0
        %v4504 = vadd.f32 %v4151, %v4503
        %v4505 = vpop.f32.mrb[0].mxu0
        %v4506 = vadd.f32 %v4153, %v4505
        %4507 = vmatprep.mubr.bf16.mxu0 %v1373
        %4508 = vmatmul.mubr.bf16.gmra.mrb[0].mxu0 %v1372
        %v4509 = vpop.f32.mrb[0].mxu0
        %v4510 = vadd.f32 %v4157, %v4509
        %v4511 = vpop.f32.mrb[0].mxu0
        %v4512 = vadd.f32 %v4159, %v4511
        %v4513 = vpop.f32.mrb[0].mxu0
        %v4514 = vadd.f32 %v4161, %v4513
        %v4515 = vpop.f32.mrb[0].mxu0
        %v4516 = vadd.f32 %v4163, %v4515
        %4517 = vmatprep.mubr.bf16.mxu0 %v1377
        %4518 = vmatmul.mubr.bf16.gmra.mrb[0].mxu0 %v1376
        %v4519 = vpop.f32.mrb[0].mxu0
        %v4520 = vadd.f32 %v4167, %v4519
        %v4521 = vpop.f32.mrb[0].mxu0
        %v4522 = vadd.f32 %v4169, %v4521
        %v4523 = vpop.f32.mrb[0].mxu0
        %v4524 = vadd.f32 %v4171, %v4523
        %v4525 = vpop.f32.mrb[0].mxu0
        %v4526 = vadd.f32 %v4173, %v4525
        %4527 = vmatprep.mubr.bf16.mxu0 %v1381
        %4528 = vmatmul.mubr.bf16.gmra.mrb[0].mxu0 %v1380
        %v4529 = vpop.f32.mrb[0].mxu0
        %v4530 = vadd.f32 %v4177, %v4529
        %v4531 = vpop.f32.mrb[0].mxu0
        %v4532 = vadd.f32 %v4179, %v4531
        %v4533 = vpop.f32.mrb[0].mxu0
        %v4534 = vadd.f32 %v4181, %v4533
        %v4535 = vpop.f32.mrb[0].mxu0
        %v4536 = vadd.f32 %v4183, %v4535
        %4537 = vmatprep.mubr.bf16.mxu0 %v1385
        %4538 = vmatmul.mubr.bf16.gmra.mrb[0].mxu0 %v1384
        %v4539 = vpop.f32.mrb[0].mxu0
        %v4540 = vadd.f32 %v4187, %v4539
        %v4541 = vpop.f32.mrb[0].mxu0
        %v4542 = vadd.f32 %v4189, %v4541
        %v4543 = vpop.f32.mrb[0].mxu0
        %v4544 = vadd.f32 %v4191, %v4543
        %v4545 = vpop.f32.mrb[0].mxu0
        %v4546 = vadd.f32 %v4193, %v4545
        %4547 = vmatprep.mubr.bf16.mxu0 %v1389
        %4548 = vmatmul.mubr.bf16.gmra.mrb[0].mxu0 %v1388
        %v4549 = vpop.f32.mrb[0].mxu0
        %v4550 = vadd.f32 %v4197, %v4549
        %v4551 = vpop.f32.mrb[0].mxu0
        %v4552 = vadd.f32 %v4199, %v4551
        %v4553 = vpop.f32.mrb[0].mxu0
        %v4554 = vadd.f32 %v4201, %v4553
        %v4555 = vpop.f32.mrb[0].mxu0
        %v4556 = vadd.f32 %v4203, %v4555
        %4557 = vmatprep.mubr.bf16.mxu0 %v1393
        %4558 = vmatmul.mubr.bf16.gmra.mrb[0].mxu0 %v1392
        %v4559 = vpop.f32.mrb[0].mxu0
        %v4560 = vadd.f32 %v4207, %v4559
        %v4561 = vpop.f32.mrb[0].mxu0
        %v4562 = vadd.f32 %v4209, %v4561
        %v4563 = vpop.f32.mrb[0].mxu0
        %v4564 = vadd.f32 %v4211, %v4563
        %v4565 = vpop.f32.mrb[0].mxu0
        %v4566 = vadd.f32 %v4213, %v4565
        %4567 = vmatprep.mubr.bf16.mxu0 %v1397
        %4568 = vmatmul.mubr.bf16.gmra.mrb[0].mxu0 %v1396
        %v4569 = vpop.f32.mrb[0].mxu0
        %v4570 = vadd.f32 %v4217, %v4569
        %v4571 = vpop.f32.mrb[0].mxu0
        %v4572 = vadd.f32 %v4219, %v4571
        %v4573 = vpop.f32.mrb[0].mxu0
        %v4574 = vadd.f32 %v4221, %v4573
        %v4575 = vpop.f32.mrb[0].mxu0
        %v4576 = vadd.f32 %v4223, %v4575
        %4577 = vmatprep.mubr.bf16.mxu0 %v1401
        %4578 = vmatmul.mubr.bf16.gmra.mrb[0].mxu0 %v1400
        %v4579 = vpop.f32.mrb[0].mxu0
        %v4580 = vadd.f32 %v4227, %v4579
        %v4581 = vpop.f32.mrb[0].mxu0
        %v4582 = vadd.f32 %v4229, %v4581
        %v4583 = vpop.f32.mrb[0].mxu0
        %v4584 = vadd.f32 %v4231, %v4583
        %v4585 = vpop.f32.mrb[0].mxu0
        %v4586 = vadd.f32 %v4233, %v4585
        %4587 = vmatprep.mubr.bf16.mxu0 %v1405
        %4588 = vmatmul.mubr.bf16.gmra.mrb[0].mxu0 %v1404
        %v4589 = vpop.f32.mrb[0].mxu0
        %v4590 = vadd.f32 %v4237, %v4589
        %v4591 = vpop.f32.mrb[0].mxu0
        %v4592 = vadd.f32 %v4239, %v4591
        %v4593 = vpop.f32.mrb[0].mxu0
        %v4594 = vadd.f32 %v4241, %v4593
        %v4595 = vpop.f32.mrb[0].mxu0
        %v4596 = vadd.f32 %v4243, %v4595
        %4597 = vmatprep.mubr.bf16.mxu0 %v1409
        %4598 = vmatmul.mubr.bf16.gmra.mrb[0].mxu0 %v1408
        %v4599 = vpop.f32.mrb[0].mxu0
        %v4600 = vadd.f32 %v4247, %v4599
        %v4601 = vpop.f32.mrb[0].mxu0
        %v4602 = vadd.f32 %v4249, %v4601
        %v4603 = vpop.f32.mrb[0].mxu0
        %v4604 = vadd.f32 %v4251, %v4603
        %v4605 = vpop.f32.mrb[0].mxu0
        %v4606 = vadd.f32 %v4253, %v4605
        %4607 = vmatprep.mubr.bf16.mxu0 %v1413
        %4608 = vmatmul.mubr.bf16.gmra.mrb[0].mxu0 %v1412
        %v4609 = vpop.f32.mrb[0].mxu0
        %v4610 = vadd.f32 %v4257, %v4609
        %v4611 = vpop.f32.mrb[0].mxu0
        %v4612 = vadd.f32 %v4259, %v4611
        %v4613 = vpop.f32.mrb[0].mxu0
        %v4614 = vadd.f32 %v4261, %v4613
        %v4615 = vpop.f32.mrb[0].mxu0
        %v4616 = vadd.f32 %v4263, %v4615
        %4617 = vmatprep.mubr.bf16.mxu0 %v1417
        %4618 = vmatmul.mubr.bf16.gmra.mrb[0].mxu0 %v1416
        %v4619 = vpop.f32.mrb[0].mxu0
        %v4620 = vadd.f32 %v4267, %v4619
        %v4621 = vpop.f32.mrb[0].mxu0
        %v4622 = vadd.f32 %v4269, %v4621
        %v4623 = vpop.f32.mrb[0].mxu0
        %v4624 = vadd.f32 %v4271, %v4623
        %v4625 = vpop.f32.mrb[0].mxu0
        %v4626 = vadd.f32 %v4273, %v4625
        %4627 = vmatprep.mubr.bf16.mxu0 %v1421
        %4628 = vmatmul.mubr.bf16.gmra.mrb[0].mxu0 %v1420
        %v4629 = vpop.f32.mrb[0].mxu0
        %v4630 = vadd.f32 %v4277, %v4629
        %v4631 = vpop.f32.mrb[0].mxu0
        %v4632 = vadd.f32 %v4279, %v4631
        %v4633 = vpop.f32.mrb[0].mxu0
        %v4634 = vadd.f32 %v4281, %v4633
        %v4635 = vpop.f32.mrb[0].mxu0
        %v4636 = vadd.f32 %v4283, %v4635
        %4637 = vmatprep.mubr.bf16.mxu0 %v1425
        %4638 = vmatmul.mubr.bf16.gmra.mrb[0].mxu0 %v1424
        %v4639 = vpop.f32.mrb[0].mxu0
        %v4640 = vadd.f32 %v4287, %v4639
        %v4641 = vpop.f32.mrb[0].mxu0
        %v4642 = vadd.f32 %v4289, %v4641
        %v4643 = vpop.f32.mrb[0].mxu0
        %v4644 = vadd.f32 %v4291, %v4643
        %v4645 = vpop.f32.mrb[0].mxu0
        %v4646 = vadd.f32 %v4293, %v4645
        %4647 = vmatprep.mubr.bf16.mxu0 %v1429
        %4648 = vmatmul.mubr.bf16.gmra.mrb[0].mxu0 %v1428
        %v4649 = vpop.f32.mrb[0].mxu0
        %v4650 = vadd.f32 %v4297, %v4649
        %v4651 = vpop.f32.mrb[0].mxu0
        %v4652 = vadd.f32 %v4299, %v4651
        %v4653 = vpop.f32.mrb[0].mxu0
        %v4654 = vadd.f32 %v4301, %v4653
        %v4655 = vpop.f32.mrb[0].mxu0
        %v4656 = vadd.f32 %v4303, %v4655
        %4657 = vmatprep.mubr.bf16.mxu0 %v1433
        %4658 = vmatmul.mubr.bf16.gmra.mrb[0].mxu0 %v1432
        %v4659 = vpop.f32.mrb[0].mxu0
        %v4660 = vadd.f32 %v4307, %v4659
        %v4661 = vpop.f32.mrb[0].mxu0
        %v4662 = vadd.f32 %v4309, %v4661
        %v4663 = vpop.f32.mrb[0].mxu0
        %v4664 = vadd.f32 %v4311, %v4663
        %v4665 = vpop.f32.mrb[0].mxu0
        %v4666 = vadd.f32 %v4313, %v4665
        %4667 = vmatprep.mubr.bf16.mxu0 %v1437
        %4668 = vmatmul.mubr.bf16.gmra.mrb[0].mxu0 %v1436
        %v4669 = vpop.f32.mrb[0].mxu0
        %v4670 = vadd.f32 %v4317, %v4669
        %v4671 = vpop.f32.mrb[0].mxu0
        %v4672 = vadd.f32 %v4319, %v4671
        %v4673 = vpop.f32.mrb[0].mxu0
        %v4674 = vadd.f32 %v4321, %v4673
        %v4675 = vpop.f32.mrb[0].mxu0
        %v4676 = vadd.f32 %v4323, %v4675
        %4677 = vmatprep.mubr.bf16.mxu0 %v1441
        %4678 = vmatmul.mubr.bf16.gmra.mrb[0].mxu0 %v1440
        %v4679 = vpop.f32.mrb[0].mxu0
        %v4680 = vadd.f32 %v4327, %v4679
        %v4681 = vpop.f32.mrb[0].mxu0
        %v4682 = vadd.f32 %v4329, %v4681
        %v4683 = vpop.f32.mrb[0].mxu0
        %v4684 = vadd.f32 %v4331, %v4683
        %v4685 = vpop.f32.mrb[0].mxu0
        %v4686 = vadd.f32 %v4333, %v4685
        %4687 = vmatprep.mubr.bf16.mxu0 %v1445
        %4688 = vmatmul.mubr.bf16.gmra.mrb[0].mxu0 %v1444
        %v4689 = vpop.f32.mrb[0].mxu0
        %v4690 = vadd.f32 %v4337, %v4689
        %v4691 = vpop.f32.mrb[0].mxu0
        %v4692 = vadd.f32 %v4339, %v4691
        %v4693 = vpop.f32.mrb[0].mxu0
        %v4694 = vadd.f32 %v4341, %v4693
        %v4695 = vpop.f32.mrb[0].mxu0
        %v4696 = vadd.f32 %v4343, %v4695
        %4697 = vmatprep.mubr.bf16.mxu0 %v1449
        %4698 = vmatmul.mubr.bf16.gmra.mrb[0].mxu0 %v1448
        %v4699 = vpop.f32.mrb[0].mxu0
        %v4700 = vadd.f32 %v4347, %v4699
        %v4701 = vpop.f32.mrb[0].mxu0
        %v4702 = vadd.f32 %v4349, %v4701
        %v4703 = vpop.f32.mrb[0].mxu0
        %v4704 = vadd.f32 %v4351, %v4703
        %v4705 = vpop.f32.mrb[0].mxu0
        %v4706 = vadd.f32 %v4353, %v4705
        %4707 = vmatprep.mubr.bf16.mxu0 %v1453
        %4708 = vmatmul.mubr.bf16.gmra.mrb[0].mxu0 %v1452
        %v4709 = vpop.f32.mrb[0].mxu0
        %v4710 = vadd.f32 %v4357, %v4709
        %v4711 = vpop.f32.mrb[0].mxu0
        %v4712 = vadd.f32 %v4359, %v4711
        %v4713 = vpop.f32.mrb[0].mxu0
        %v4714 = vadd.f32 %v4361, %v4713
        %v4715 = vpop.f32.mrb[0].mxu0
        %v4716 = vadd.f32 %v4363, %v4715
        %4717 = vmatprep.mubr.bf16.mxu0 %v1457
        %4718 = vmatmul.mubr.bf16.gmra.mrb[0].mxu0 %v1456
        %v4719 = vpop.f32.mrb[0].mxu0
        %v4720 = vadd.f32 %v4367, %v4719
        %v4721 = vpop.f32.mrb[0].mxu0
        %v4722 = vadd.f32 %v4369, %v4721
        %v4723 = vpop.f32.mrb[0].mxu0
        %v4724 = vadd.f32 %v4371, %v4723
        %v4725 = vpop.f32.mrb[0].mxu0
        %v4726 = vadd.f32 %v4373, %v4725
        %4727 = vdwg.mxu0
        %v4728 = vadd.f32 %v690, %v2998
        %v4729 = vadd.f32 %v691, %v3000
        %v4730 = vadd.f32 %v692, %v3704
        %v4731 = vadd.f32 %v693, %v3706
        %v4732 = vadd.f32 %v694, %v4410
        %v4733 = vadd.f32 %v695, %v4412
        %v4734 = vadd.f32 %v696, %v3002
        %v4735 = vadd.f32 %v697, %v3004
        %v4736 = vadd.f32 %v698, %v3708
        %v4737 = vadd.f32 %v699, %v3710
        %v4738 = vadd.f32 %v700, %v4414
        %v4739 = vadd.f32 %v701, %v4416
        %v4740 = vadd.f32 %v702, %v3008
        %v4741 = vadd.f32 %v703, %v3010
        %v4742 = vadd.f32 %v704, %v3714
        %v4743 = vadd.f32 %v705, %v3716
        %v4744 = vadd.f32 %v706, %v4420
        %v4745 = vadd.f32 %v707, %v4422
        %v4746 = vadd.f32 %v708, %v3012
        %v4747 = vadd.f32 %v709, %v3014
        %v4748 = vadd.f32 %v710, %v3718
        %v4749 = vadd.f32 %v711, %v3720
        %v4750 = vadd.f32 %v712, %v4424
        %v4751 = vadd.f32 %v713, %v4426
        %v4752 = vadd.f32 %v714, %v3018
        %v4753 = vadd.f32 %v715, %v3020
        %v4754 = vadd.f32 %v716, %v3724
        %v4755 = vadd.f32 %v717, %v3726
        %v4756 = vadd.f32 %v718, %v4430
        %v4757 = vadd.f32 %v719, %v4432
        %v4758 = vadd.f32 %v720, %v3022
        %v4759 = vadd.f32 %v721, %v3024
        %v4760 = vadd.f32 %v722, %v3728
        %v4761 = vadd.f32 %v723, %v3730
        %v4762 = vadd.f32 %v724, %v4434
        %v4763 = vadd.f32 %v725, %v4436
        %v4764 = vadd.f32 %v726, %v3028
        %v4765 = vadd.f32 %v727, %v3030
        %v4766 = vadd.f32 %v728, %v3734
        %v4767 = vadd.f32 %v729, %v3736
        %v4768 = vadd.f32 %v730, %v4440
        %v4769 = vadd.f32 %v731, %v4442
        %v4770 = vadd.f32 %v732, %v3032
        %v4771 = vadd.f32 %v733, %v3034
        %v4772 = vadd.f32 %v734, %v3738
        %v4773 = vadd.f32 %v735, %v3740
        %v4774 = vadd.f32 %v736, %v4444
        %v4775 = vadd.f32 %v737, %v4446
        %v4776 = vadd.f32 %v738, %v3038
        %v4777 = vadd.f32 %v739, %v3040
        %v4778 = vadd.f32 %v740, %v3744
        %v4779 = vadd.f32 %v741, %v3746
        %v4780 = vadd.f32 %v742, %v4450
        %v4781 = vadd.f32 %v743, %v4452
        %v4782 = vadd.f32 %v744, %v3042
        %v4783 = vadd.f32 %v745, %v3044
        %v4784 = vadd.f32 %v746, %v3748
        %v4785 = vadd.f32 %v747, %v3750
        %v4786 = vadd.f32 %v748, %v4454
        %v4787 = vadd.f32 %v749, %v4456
        %v4788 = vadd.f32 %v750, %v3048
        %v4789 = vadd.f32 %v751, %v3050
        %v4790 = vadd.f32 %v752, %v3754
        %v4791 = vadd.f32 %v753, %v3756
        %v4792 = vadd.f32 %v754, %v4460
        %v4793 = vadd.f32 %v755, %v4462
        %v4794 = vadd.f32 %v756, %v3052
        %v4795 = vadd.f32 %v757, %v3054
        %v4796 = vadd.f32 %v758, %v3758
        %v4797 = vadd.f32 %v759, %v3760
        %v4798 = vadd.f32 %v760, %v4464
        %v4799 = vadd.f32 %v761, %v4466
        %v4800 = vadd.f32 %v762, %v3058
        %v4801 = vadd.f32 %v763, %v3060
        %v4802 = vadd.f32 %v764, %v3764
        %v4803 = vadd.f32 %v765, %v3766
        %v4804 = vadd.f32 %v766, %v4470
        %v4805 = vadd.f32 %v767, %v4472
        %v4806 = vadd.f32 %v768, %v3062
        %v4807 = vadd.f32 %v769, %v3064
        %v4808 = vadd.f32 %v770, %v3768
        %v4809 = vadd.f32 %v771, %v3770
        %v4810 = vadd.f32 %v772, %v4474
        %v4811 = vadd.f32 %v773, %v4476
        %v4812 = vadd.f32 %v774, %v3068
        %v4813 = vadd.f32 %v775, %v3070
        %v4814 = vadd.f32 %v776, %v3774
        %v4815 = vadd.f32 %v777, %v3776
        %v4816 = vadd.f32 %v778, %v4480
        %v4817 = vadd.f32 %v779, %v4482
        %v4818 = vadd.f32 %v780, %v3072
        %v4819 = vadd.f32 %v781, %v3074
        %v4820 = vadd.f32 %v782, %v3778
        %v4821 = vadd.f32 %v783, %v3780
        %v4822 = vadd.f32 %v784, %v4484
        %v4823 = vadd.f32 %v785, %v4486
        %v4824 = vadd.f32 %v786, %v3078
        %v4825 = vadd.f32 %v787, %v3080
        %v4826 = vadd.f32 %v788, %v3784
        %v4827 = vadd.f32 %v789, %v3786
        %v4828 = vadd.f32 %v790, %v4490
        %v4829 = vadd.f32 %v791, %v4492
        %v4830 = vadd.f32 %v792, %v3082
        %v4831 = vadd.f32 %v793, %v3084
        %v4832 = vadd.f32 %v794, %v3788
        %v4833 = vadd.f32 %v795, %v3790
        %v4834 = vadd.f32 %v796, %v4494
        %v4835 = vadd.f32 %v797, %v4496
        %v4836 = vadd.f32 %v798, %v3088
        %v4837 = vadd.f32 %v799, %v3090
        %v4838 = vadd.f32 %v800, %v3794
        %v4839 = vadd.f32 %v801, %v3796
        %v4840 = vadd.f32 %v802, %v4500
        %v4841 = vadd.f32 %v803, %v4502
        %v4842 = vadd.f32 %v804, %v3092
        %v4843 = vadd.f32 %v805, %v3094
        %v4844 = vadd.f32 %v806, %v3798
        %v4845 = vadd.f32 %v807, %v3800
        %v4846 = vadd.f32 %v808, %v4504
        %v4847 = vadd.f32 %v809, %v4506
        %v4848 = vadd.f32 %v810, %v3098
        %v4849 = vadd.f32 %v811, %v3100
        %v4850 = vadd.f32 %v812, %v3804
        %v4851 = vadd.f32 %v813, %v3806
        %v4852 = vadd.f32 %v814, %v4510
        %v4853 = vadd.f32 %v815, %v4512
        %v4854 = vadd.f32 %v816, %v3102
        %v4855 = vadd.f32 %v817, %v3104
        %v4856 = vadd.f32 %v818, %v3808
        %v4857 = vadd.f32 %v819, %v3810
        %v4858 = vadd.f32 %v820, %v4514
        %v4859 = vadd.f32 %v821, %v4516
        %v4860 = vadd.f32 %v822, %v3108
        %v4861 = vadd.f32 %v823, %v3110
        %v4862 = vadd.f32 %v824, %v3814
        %v4863 = vadd.f32 %v825, %v3816
        %v4864 = vadd.f32 %v826, %v4520
        %v4865 = vadd.f32 %v827, %v4522
        %v4866 = vadd.f32 %v828, %v3112
        %v4867 = vadd.f32 %v829, %v3114
        %v4868 = vadd.f32 %v830, %v3818
        %v4869 = vadd.f32 %v831, %v3820
        %v4870 = vadd.f32 %v832, %v4524
        %v4871 = vadd.f32 %v833, %v4526
        %v4872 = vadd.f32 %v834, %v3118
        %v4873 = vadd.f32 %v835, %v3120
        %v4874 = vadd.f32 %v836, %v3824
        %v4875 = vadd.f32 %v837, %v3826
        %v4876 = vadd.f32 %v838, %v4530
        %v4877 = vadd.f32 %v839, %v4532
        %v4878 = vadd.f32 %v840, %v3122
        %v4879 = vadd.f32 %v841, %v3124
        %v4880 = vadd.f32 %v842, %v3828
        %v4881 = vadd.f32 %v843, %v3830
        %v4882 = vadd.f32 %v844, %v4534
        %v4883 = vadd.f32 %v845, %v4536
        %v4884 = vadd.f32 %v846, %v3128
        %v4885 = vadd.f32 %v847, %v3130
        %v4886 = vadd.f32 %v848, %v3834
        %v4887 = vadd.f32 %v849, %v3836
        %v4888 = vadd.f32 %v850, %v4540
        %v4889 = vadd.f32 %v851, %v4542
        %v4890 = vadd.f32 %v852, %v3132
        %v4891 = vadd.f32 %v853, %v3134
        %v4892 = vadd.f32 %v854, %v3838
        %v4893 = vadd.f32 %v855, %v3840
        %v4894 = vadd.f32 %v856, %v4544
        %v4895 = vadd.f32 %v857, %v4546
        %v4896 = vadd.f32 %v858, %v3138
        %v4897 = vadd.f32 %v859, %v3140
        %v4898 = vadd.f32 %v860, %v3844
        %v4899 = vadd.f32 %v861, %v3846
        %v4900 = vadd.f32 %v862, %v4550
        %v4901 = vadd.f32 %v863, %v4552
        %v4902 = vadd.f32 %v864, %v3142
        %v4903 = vadd.f32 %v865, %v3144
        %v4904 = vadd.f32 %v866, %v3848
        %v4905 = vadd.f32 %v867, %v3850
        %v4906 = vadd.f32 %v868, %v4554
        %v4907 = vadd.f32 %v869, %v4556
        %v4908 = vadd.f32 %v870, %v3148
        %v4909 = vadd.f32 %v871, %v3150
        %v4910 = vadd.f32 %v872, %v3854
        %v4911 = vadd.f32 %v873, %v3856
        %v4912 = vadd.f32 %v874, %v4560
        %v4913 = vadd.f32 %v875, %v4562
        %v4914 = vadd.f32 %v876, %v3152
        %v4915 = vadd.f32 %v877, %v3154
        %v4916 = vadd.f32 %v878, %v3858
        %v4917 = vadd.f32 %v879, %v3860
        %v4918 = vadd.f32 %v880, %v4564
        %v4919 = vadd.f32 %v881, %v4566
        %v4920 = vadd.f32 %v882, %v3158
        %v4921 = vadd.f32 %v883, %v3160
        %v4922 = vadd.f32 %v884, %v3864
        %v4923 = vadd.f32 %v885, %v3866
        %v4924 = vadd.f32 %v886, %v4570
        %v4925 = vadd.f32 %v887, %v4572
        %v4926 = vadd.f32 %v888, %v3162
        %v4927 = vadd.f32 %v889, %v3164
        %v4928 = vadd.f32 %v890, %v3868
        %v4929 = vadd.f32 %v891, %v3870
        %v4930 = vadd.f32 %v892, %v4574
        %v4931 = vadd.f32 %v893, %v4576
        %v4932 = vadd.f32 %v894, %v3168
        %v4933 = vadd.f32 %v895, %v3170
        %v4934 = vadd.f32 %v896, %v3874
        %v4935 = vadd.f32 %v897, %v3876
        %v4936 = vadd.f32 %v898, %v4580
        %v4937 = vadd.f32 %v899, %v4582
        %v4938 = vadd.f32 %v900, %v3172
        %v4939 = vadd.f32 %v901, %v3174
        %v4940 = vadd.f32 %v902, %v3878
        %v4941 = vadd.f32 %v903, %v3880
        %v4942 = vadd.f32 %v904, %v4584
        %v4943 = vadd.f32 %v905, %v4586
        %v4944 = vadd.f32 %v906, %v3178
        %v4945 = vadd.f32 %v907, %v3180
        %v4946 = vadd.f32 %v908, %v3884
        %v4947 = vadd.f32 %v909, %v3886
        %v4948 = vadd.f32 %v910, %v4590
        %v4949 = vadd.f32 %v911, %v4592
        %v4950 = vadd.f32 %v912, %v3182
        %v4951 = vadd.f32 %v913, %v3184
        %v4952 = vadd.f32 %v914, %v3888
        %v4953 = vadd.f32 %v915, %v3890
        %v4954 = vadd.f32 %v916, %v4594
        %v4955 = vadd.f32 %v917, %v4596
        %v4956 = vadd.f32 %v918, %v3188
        %v4957 = vadd.f32 %v919, %v3190
        %v4958 = vadd.f32 %v920, %v3894
        %v4959 = vadd.f32 %v921, %v3896
        %v4960 = vadd.f32 %v922, %v4600
        %v4961 = vadd.f32 %v923, %v4602
        %v4962 = vadd.f32 %v924, %v3192
        %v4963 = vadd.f32 %v925, %v3194
        %v4964 = vadd.f32 %v926, %v3898
        %v4965 = vadd.f32 %v927, %v3900
        %v4966 = vadd.f32 %v928, %v4604
        %v4967 = vadd.f32 %v929, %v4606
        %v4968 = vadd.f32 %v930, %v3198
        %v4969 = vadd.f32 %v931, %v3200
        %v4970 = vadd.f32 %v932, %v3904
        %v4971 = vadd.f32 %v933, %v3906
        %v4972 = vadd.f32 %v934, %v4610
        %v4973 = vadd.f32 %v935, %v4612
        %v4974 = vadd.f32 %v936, %v3202
        %v4975 = vadd.f32 %v937, %v3204
        %v4976 = vadd.f32 %v938, %v3908
        %v4977 = vadd.f32 %v939, %v3910
        %v4978 = vadd.f32 %v940, %v4614
        %v4979 = vadd.f32 %v941, %v4616
        %v4980 = vadd.f32 %v942, %v3208
        %v4981 = vadd.f32 %v943, %v3210
        %v4982 = vadd.f32 %v944, %v3914
        %v4983 = vadd.f32 %v945, %v3916
        %v4984 = vadd.f32 %v946, %v4620
        %v4985 = vadd.f32 %v947, %v4622
        %v4986 = vadd.f32 %v948, %v3212
        %v4987 = vadd.f32 %v949, %v3214
        %v4988 = vadd.f32 %v950, %v3918
        %v4989 = vadd.f32 %v951, %v3920
        %v4990 = vadd.f32 %v952, %v4624
        %v4991 = vadd.f32 %v953, %v4626
        %v4992 = vadd.f32 %v954, %v3218
        %v4993 = vadd.f32 %v955, %v3220
        %v4994 = vadd.f32 %v956, %v3924
        %v4995 = vadd.f32 %v957, %v3926
        %v4996 = vadd.f32 %v958, %v4630
        %v4997 = vadd.f32 %v959, %v4632
        %v4998 = vadd.f32 %v960, %v3222
        %v4999 = vadd.f32 %v961, %v3224
        %v5000 = vadd.f32 %v962, %v3928
        %v5001 = vadd.f32 %v963, %v3930
        %v5002 = vadd.f32 %v964, %v4634
        %v5003 = vadd.f32 %v965, %v4636
        %v5004 = vadd.f32 %v966, %v3228
        %v5005 = vadd.f32 %v967, %v3230
        %v5006 = vadd.f32 %v968, %v3934
        %v5007 = vadd.f32 %v969, %v3936
        %v5008 = vadd.f32 %v970, %v4640
        %v5009 = vadd.f32 %v971, %v4642
        %v5010 = vadd.f32 %v972, %v3232
        %v5011 = vadd.f32 %v973, %v3234
        %v5012 = vadd.f32 %v974, %v3938
        %v5013 = vadd.f32 %v975, %v3940
        %v5014 = vadd.f32 %v976, %v4644
        %v5015 = vadd.f32 %v977, %v4646
        %v5016 = vadd.f32 %v978, %v3238
        %v5017 = vadd.f32 %v979, %v3240
        %v5018 = vadd.f32 %v980, %v3944
        %v5019 = vadd.f32 %v981, %v3946
        %v5020 = vadd.f32 %v982, %v4650
        %v5021 = vadd.f32 %v983, %v4652
        %v5022 = vadd.f32 %v984, %v3242
        %v5023 = vadd.f32 %v985, %v3244
        %v5024 = vadd.f32 %v986, %v3948
        %v5025 = vadd.f32 %v987, %v3950
        %v5026 = vadd.f32 %v988, %v4654
        %v5027 = vadd.f32 %v989, %v4656
        %v5028 = vadd.f32 %v990, %v3248
        %v5029 = vadd.f32 %v991, %v3250
        %v5030 = vadd.f32 %v992, %v3954
        %v5031 = vadd.f32 %v993, %v3956
        %v5032 = vadd.f32 %v994, %v4660
        %v5033 = vadd.f32 %v995, %v4662
        %v5034 = vadd.f32 %v996, %v3252
        %v5035 = vadd.f32 %v997, %v3254
        %v5036 = vadd.f32 %v998, %v3958
        %v5037 = vadd.f32 %v999, %v3960
        %v5038 = vadd.f32 %v1000, %v4664
        %v5039 = vadd.f32 %v1001, %v4666
        %v5040 = vadd.f32 %v1002, %v3258
        %v5041 = vadd.f32 %v1003, %v3260
        %v5042 = vadd.f32 %v1004, %v3964
        %v5043 = vadd.f32 %v1005, %v3966
        %v5044 = vadd.f32 %v1006, %v4670
        %v5045 = vadd.f32 %v1007, %v4672
        %v5046 = vadd.f32 %v1008, %v3262
        %v5047 = vadd.f32 %v1009, %v3264
        %v5048 = vadd.f32 %v1010, %v3968
        %v5049 = vadd.f32 %v1011, %v3970
        %v5050 = vadd.f32 %v1012, %v4674
        %v5051 = vadd.f32 %v1013, %v4676
        %v5052 = vadd.f32 %v1014, %v3268
        %v5053 = vadd.f32 %v1015, %v3270
        %v5054 = vadd.f32 %v1016, %v3974
        %v5055 = vadd.f32 %v1017, %v3976
        %v5056 = vadd.f32 %v1018, %v4680
        %v5057 = vadd.f32 %v1019, %v4682
        %v5058 = vadd.f32 %v1020, %v3272
        %v5059 = vadd.f32 %v1021, %v3274
        %v5060 = vadd.f32 %v1022, %v3978
        %v5061 = vadd.f32 %v1023, %v3980
        %v5062 = vadd.f32 %v1024, %v4684
        %v5063 = vadd.f32 %v1025, %v4686
        %v5064 = vadd.f32 %v1026, %v3278
        %v5065 = vadd.f32 %v1027, %v3280
        %v5066 = vadd.f32 %v1028, %v3984
        %v5067 = vadd.f32 %v1029, %v3986
        %v5068 = vadd.f32 %v1030, %v4690
        %v5069 = vadd.f32 %v1031, %v4692
        %v5070 = vadd.f32 %v1032, %v3282
        %v5071 = vadd.f32 %v1033, %v3284
        %v5072 = vadd.f32 %v1034, %v3988
        %v5073 = vadd.f32 %v1035, %v3990
        %v5074 = vadd.f32 %v1036, %v4694
        %v5075 = vadd.f32 %v1037, %v4696
        %v5076 = vadd.f32 %v1038, %v3288
        %v5077 = vadd.f32 %v1039, %v3290
        %v5078 = vadd.f32 %v1040, %v3994
        %v5079 = vadd.f32 %v1041, %v3996
        %v5080 = vadd.f32 %v1042, %v4700
        %v5081 = vadd.f32 %v1043, %v4702
        %v5082 = vadd.f32 %v1044, %v3292
        %v5083 = vadd.f32 %v1045, %v3294
        %v5084 = vadd.f32 %v1046, %v3998
        %v5085 = vadd.f32 %v1047, %v4000
        %v5086 = vadd.f32 %v1048, %v4704
        %v5087 = vadd.f32 %v1049, %v4706
        %v5088 = vadd.f32 %v1050, %v3298
        %v5089 = vadd.f32 %v1051, %v3300
        %v5090 = vadd.f32 %v1052, %v4004
        %v5091 = vadd.f32 %v1053, %v4006
        %v5092 = vadd.f32 %v1054, %v4710
        %v5093 = vadd.f32 %v1055, %v4712
        %v5094 = vadd.f32 %v1056, %v3302
        %v5095 = vadd.f32 %v1057, %v3304
        %v5096 = vadd.f32 %v1058, %v4008
        %v5097 = vadd.f32 %v1059, %v4010
        %v5098 = vadd.f32 %v1060, %v4714
        %v5099 = vadd.f32 %v1061, %v4716
        %v5100 = vadd.f32 %v1062, %v3308
        %v5101 = vadd.f32 %v1063, %v3310
        %v5102 = vadd.f32 %v1064, %v4014
        %v5103 = vadd.f32 %v1065, %v4016
        %v5104 = vadd.f32 %v1066, %v4720
        %v5105 = vadd.f32 %v1067, %v4722
        %v5106 = vadd.f32 %v1068, %v3312
        %v5107 = vadd.f32 %v1069, %v3314
        %v5108 = vadd.f32 %v1070, %v4018
        %v5109 = vadd.f32 %v1071, %v4020
        %v5110 = vadd.f32 %v1072, %v4724
        %v5111 = vadd.f32 %v1073, %v4726
        %5112 = vst [vmem:[#allocation2] sm:$0xff] %v4728
        %5113 = vst [vmem:[#allocation2 + $0x8] sm:$0xff] %v4729
        %5114 = vst [vmem:[#allocation2 + $0x10] sm:$0xff] %v4730
        %5115 = vst [vmem:[#allocation2 + $0x18] sm:$0xff] %v4731
        %5116 = vst [vmem:[#allocation2 + $0x20] sm:$0xff] %v4732
        %5117 = vst [vmem:[#allocation2 + $0x28] sm:$0xff] %v4733
        %5118 = vst [vmem:[#allocation2 + $0x30] sm:$0xff] %v4734
        %5119 = vst [vmem:[#allocation2 + $0x38] sm:$0xff] %v4735
        %5120 = vst [vmem:[#allocation2 + $0x40] sm:$0xff] %v4736
        %5121 = vst [vmem:[#allocation2 + $0x48] sm:$0xff] %v4737
        %5122 = vst [vmem:[#allocation2 + $0x50] sm:$0xff] %v4738
        %5123 = vst [vmem:[#allocation2 + $0x58] sm:$0xff] %v4739
        %5124 = vst [vmem:[#allocation2 + $0x60] sm:$0xff] %v4740
        %5125 = vst [vmem:[#allocation2 + $0x68] sm:$0xff] %v4741
        %5126 = vst [vmem:[#allocation2 + $0x70] sm:$0xff] %v4742
        %5127 = vst [vmem:[#allocation2 + $0x78] sm:$0xff] %v4743
        %5128 = vst [vmem:[#allocation2 + $0x80] sm:$0xff] %v4744
        %5129 = vst [vmem:[#allocation2 + $0x88] sm:$0xff] %v4745
        %5130 = vst [vmem:[#allocation2 + $0x90] sm:$0xff] %v4746
        %5131 = vst [vmem:[#allocation2 + $0x98] sm:$0xff] %v4747
        %5132 = vst [vmem:[#allocation2 + $0xa0] sm:$0xff] %v4748
        %5133 = vst [vmem:[#allocation2 + $0xa8] sm:$0xff] %v4749
        %5134 = vst [vmem:[#allocation2 + $0xb0] sm:$0xff] %v4750
        %5135 = vst [vmem:[#allocation2 + $0xb8] sm:$0xff] %v4751
        %5136 = vst [vmem:[#allocation2 + $0xc0] sm:$0xff] %v4752
        %5137 = vst [vmem:[#allocation2 + $0xc8] sm:$0xff] %v4753
        %5138 = vst [vmem:[#allocation2 + $0xd0] sm:$0xff] %v4754
        %5139 = vst [vmem:[#allocation2 + $0xd8] sm:$0xff] %v4755
        %5140 = vst [vmem:[#allocation2 + $0xe0] sm:$0xff] %v4756
        %5141 = vst [vmem:[#allocation2 + $0xe8] sm:$0xff] %v4757
        %5142 = vst [vmem:[#allocation2 + $0xf0] sm:$0xff] %v4758
        %5143 = vst [vmem:[#allocation2 + $0xf8] sm:$0xff] %v4759
        %5144 = vst [vmem:[#allocation2 + $0x100] sm:$0xff] %v4760
        %5145 = vst [vmem:[#allocation2 + $0x108] sm:$0xff] %v4761
        %5146 = vst [vmem:[#allocation2 + $0x110] sm:$0xff] %v4762
        %5147 = vst [vmem:[#allocation2 + $0x118] sm:$0xff] %v4763
        %5148 = vst [vmem:[#allocation2 + $0x120] sm:$0xff] %v4764
        %5149 = vst [vmem:[#allocation2 + $0x128] sm:$0xff] %v4765
        %5150 = vst [vmem:[#allocation2 + $0x130] sm:$0xff] %v4766
        %5151 = vst [vmem:[#allocation2 + $0x138] sm:$0xff] %v4767
        %5152 = vst [vmem:[#allocation2 + $0x140] sm:$0xff] %v4768
        %5153 = vst [vmem:[#allocation2 + $0x148] sm:$0xff] %v4769
        %5154 = vst [vmem:[#allocation2 + $0x150] sm:$0xff] %v4770
        %5155 = vst [vmem:[#allocation2 + $0x158] sm:$0xff] %v4771
        %5156 = vst [vmem:[#allocation2 + $0x160] sm:$0xff] %v4772
        %5157 = vst [vmem:[#allocation2 + $0x168] sm:$0xff] %v4773
        %5158 = vst [vmem:[#allocation2 + $0x170] sm:$0xff] %v4774
        %5159 = vst [vmem:[#allocation2 + $0x178] sm:$0xff] %v4775
        %5160 = vst [vmem:[#allocation2 + $0x180] sm:$0xff] %v4776
        %5161 = vst [vmem:[#allocation2 + $0x188] sm:$0xff] %v4777
        %5162 = vst [vmem:[#allocation2 + $0x190] sm:$0xff] %v4778
        %5163 = vst [vmem:[#allocation2 + $0x198] sm:$0xff] %v4779
        %5164 = vst [vmem:[#allocation2 + $0x1a0] sm:$0xff] %v4780
        %5165 = vst [vmem:[#allocation2 + $0x1a8] sm:$0xff] %v4781
        %5166 = vst [vmem:[#allocation2 + $0x1b0] sm:$0xff] %v4782
        %5167 = vst [vmem:[#allocation2 + $0x1b8] sm:$0xff] %v4783
        %5168 = vst [vmem:[#allocation2 + $0x1c0] sm:$0xff] %v4784
        %5169 = vst [vmem:[#allocation2 + $0x1c8] sm:$0xff] %v4785
        %5170 = vst [vmem:[#allocation2 + $0x1d0] sm:$0xff] %v4786
        %5171 = vst [vmem:[#allocation2 + $0x1d8] sm:$0xff] %v4787
        %5172 = vst [vmem:[#allocation2 + $0x1e0] sm:$0xff] %v4788
        %5173 = vst [vmem:[#allocation2 + $0x1e8] sm:$0xff] %v4789
        %5174 = vst [vmem:[#allocation2 + $0x1f0] sm:$0xff] %v4790
        %5175 = vst [vmem:[#allocation2 + $0x1f8] sm:$0xff] %v4791
        %5176 = vst [vmem:[#allocation2 + $0x200] sm:$0xff] %v4792
        %5177 = vst [vmem:[#allocation2 + $0x208] sm:$0xff] %v4793
        %5178 = vst [vmem:[#allocation2 + $0x210] sm:$0xff] %v4794
        %5179 = vst [vmem:[#allocation2 + $0x218] sm:$0xff] %v4795
        %5180 = vst [vmem:[#allocation2 + $0x220] sm:$0xff] %v4796
        %5181 = vst [vmem:[#allocation2 + $0x228] sm:$0xff] %v4797
        %5182 = vst [vmem:[#allocation2 + $0x230] sm:$0xff] %v4798
        %5183 = vst [vmem:[#allocation2 + $0x238] sm:$0xff] %v4799
        %5184 = vst [vmem:[#allocation2 + $0x240] sm:$0xff] %v4800
        %5185 = vst [vmem:[#allocation2 + $0x248] sm:$0xff] %v4801
        %5186 = vst [vmem:[#allocation2 + $0x250] sm:$0xff] %v4802
        %5187 = vst [vmem:[#allocation2 + $0x258] sm:$0xff] %v4803
        %5188 = vst [vmem:[#allocation2 + $0x260] sm:$0xff] %v4804
        %5189 = vst [vmem:[#allocation2 + $0x268] sm:$0xff] %v4805
        %5190 = vst [vmem:[#allocation2 + $0x270] sm:$0xff] %v4806
        %5191 = vst [vmem:[#allocation2 + $0x278] sm:$0xff] %v4807
        %5192 = vst [vmem:[#allocation2 + $0x280] sm:$0xff] %v4808
        %5193 = vst [vmem:[#allocation2 + $0x288] sm:$0xff] %v4809
        %5194 = vst [vmem:[#allocation2 + $0x290] sm:$0xff] %v4810
        %5195 = vst [vmem:[#allocation2 + $0x298] sm:$0xff] %v4811
        %5196 = vst [vmem:[#allocation2 + $0x2a0] sm:$0xff] %v4812
        %5197 = vst [vmem:[#allocation2 + $0x2a8] sm:$0xff] %v4813
        %5198 = vst [vmem:[#allocation2 + $0x2b0] sm:$0xff] %v4814
        %5199 = vst [vmem:[#allocation2 + $0x2b8] sm:$0xff] %v4815
        %5200 = vst [vmem:[#allocation2 + $0x2c0] sm:$0xff] %v4816
        %5201 = vst [vmem:[#allocation2 + $0x2c8] sm:$0xff] %v4817
        %5202 = vst [vmem:[#allocation2 + $0x2d0] sm:$0xff] %v4818
        %5203 = vst [vmem:[#allocation2 + $0x2d8] sm:$0xff] %v4819
        %5204 = vst [vmem:[#allocation2 + $0x2e0] sm:$0xff] %v4820
        %5205 = vst [vmem:[#allocation2 + $0x2e8] sm:$0xff] %v4821
        %5206 = vst [vmem:[#allocation2 + $0x2f0] sm:$0xff] %v4822
        %5207 = vst [vmem:[#allocation2 + $0x2f8] sm:$0xff] %v4823
        %5208 = vst [vmem:[#allocation2 + $0x300] sm:$0xff] %v4824
        %5209 = vst [vmem:[#allocation2 + $0x308] sm:$0xff] %v4825
        %5210 = vst [vmem:[#allocation2 + $0x310] sm:$0xff] %v4826
        %5211 = vst [vmem:[#allocation2 + $0x318] sm:$0xff] %v4827
        %5212 = vst [vmem:[#allocation2 + $0x320] sm:$0xff] %v4828
        %5213 = vst [vmem:[#allocation2 + $0x328] sm:$0xff] %v4829
        %5214 = vst [vmem:[#allocation2 + $0x330] sm:$0xff] %v4830
        %5215 = vst [vmem:[#allocation2 + $0x338] sm:$0xff] %v4831
        %5216 = vst [vmem:[#allocation2 + $0x340] sm:$0xff] %v4832
        %5217 = vst [vmem:[#allocation2 + $0x348] sm:$0xff] %v4833
        %5218 = vst [vmem:[#allocation2 + $0x350] sm:$0xff] %v4834
        %5219 = vst [vmem:[#allocation2 + $0x358] sm:$0xff] %v4835
        %5220 = vst [vmem:[#allocation2 + $0x360] sm:$0xff] %v4836
        %5221 = vst [vmem:[#allocation2 + $0x368] sm:$0xff] %v4837
        %5222 = vst [vmem:[#allocation2 + $0x370] sm:$0xff] %v4838
        %5223 = vst [vmem:[#allocation2 + $0x378] sm:$0xff] %v4839
        %5224 = vst [vmem:[#allocation2 + $0x380] sm:$0xff] %v4840
        %5225 = vst [vmem:[#allocation2 + $0x388] sm:$0xff] %v4841
        %5226 = vst [vmem:[#allocation2 + $0x390] sm:$0xff] %v4842
        %5227 = vst [vmem:[#allocation2 + $0x398] sm:$0xff] %v4843
        %5228 = vst [vmem:[#allocation2 + $0x3a0] sm:$0xff] %v4844
        %5229 = vst [vmem:[#allocation2 + $0x3a8] sm:$0xff] %v4845
        %5230 = vst [vmem:[#allocation2 + $0x3b0] sm:$0xff] %v4846
        %5231 = vst [vmem:[#allocation2 + $0x3b8] sm:$0xff] %v4847
        %5232 = vst [vmem:[#allocation2 + $0x3c0] sm:$0xff] %v4848
        %5233 = vst [vmem:[#allocation2 + $0x3c8] sm:$0xff] %v4849
        %5234 = vst [vmem:[#allocation2 + $0x3d0] sm:$0xff] %v4850
        %5235 = vst [vmem:[#allocation2 + $0x3d8] sm:$0xff] %v4851
        %5236 = vst [vmem:[#allocation2 + $0x3e0] sm:$0xff] %v4852
        %5237 = vst [vmem:[#allocation2 + $0x3e8] sm:$0xff] %v4853
        %5238 = vst [vmem:[#allocation2 + $0x3f0] sm:$0xff] %v4854
        %5239 = vst [vmem:[#allocation2 + $0x3f8] sm:$0xff] %v4855
        %5240 = vst [vmem:[#allocation2 + $0x400] sm:$0xff] %v4856
        %5241 = vst [vmem:[#allocation2 + $0x408] sm:$0xff] %v4857
        %5242 = vst [vmem:[#allocation2 + $0x410] sm:$0xff] %v4858
        %5243 = vst [vmem:[#allocation2 + $0x418] sm:$0xff] %v4859
        %5244 = vst [vmem:[#allocation2 + $0x420] sm:$0xff] %v4860
        %5245 = vst [vmem:[#allocation2 + $0x428] sm:$0xff] %v4861
        %5246 = vst [vmem:[#allocation2 + $0x430] sm:$0xff] %v4862
        %5247 = vst [vmem:[#allocation2 + $0x438] sm:$0xff] %v4863
        %5248 = vst [vmem:[#allocation2 + $0x440] sm:$0xff] %v4864
        %5249 = vst [vmem:[#allocation2 + $0x448] sm:$0xff] %v4865
        %5250 = vst [vmem:[#allocation2 + $0x450] sm:$0xff] %v4866
        %5251 = vst [vmem:[#allocation2 + $0x458] sm:$0xff] %v4867
        %5252 = vst [vmem:[#allocation2 + $0x460] sm:$0xff] %v4868
        %5253 = vst [vmem:[#allocation2 + $0x468] sm:$0xff] %v4869
        %5254 = vst [vmem:[#allocation2 + $0x470] sm:$0xff] %v4870
        %5255 = vst [vmem:[#allocation2 + $0x478] sm:$0xff] %v4871
        %5256 = vst [vmem:[#allocation2 + $0x480] sm:$0xff] %v4872
        %5257 = vst [vmem:[#allocation2 + $0x488] sm:$0xff] %v4873
        %5258 = vst [vmem:[#allocation2 + $0x490] sm:$0xff] %v4874
        %5259 = vst [vmem:[#allocation2 + $0x498] sm:$0xff] %v4875
        %5260 = vst [vmem:[#allocation2 + $0x4a0] sm:$0xff] %v4876
        %5261 = vst [vmem:[#allocation2 + $0x4a8] sm:$0xff] %v4877
        %5262 = vst [vmem:[#allocation2 + $0x4b0] sm:$0xff] %v4878
        %5263 = vst [vmem:[#allocation2 + $0x4b8] sm:$0xff] %v4879
        %5264 = vst [vmem:[#allocation2 + $0x4c0] sm:$0xff] %v4880
        %5265 = vst [vmem:[#allocation2 + $0x4c8] sm:$0xff] %v4881
        %5266 = vst [vmem:[#allocation2 + $0x4d0] sm:$0xff] %v4882
        %5267 = vst [vmem:[#allocation2 + $0x4d8] sm:$0xff] %v4883
        %5268 = vst [vmem:[#allocation2 + $0x4e0] sm:$0xff] %v4884
        %5269 = vst [vmem:[#allocation2 + $0x4e8] sm:$0xff] %v4885
        %5270 = vst [vmem:[#allocation2 + $0x4f0] sm:$0xff] %v4886
        %5271 = vst [vmem:[#allocation2 + $0x4f8] sm:$0xff] %v4887
        %5272 = vst [vmem:[#allocation2 + $0x500] sm:$0xff] %v4888
        %5273 = vst [vmem:[#allocation2 + $0x508] sm:$0xff] %v4889
        %5274 = vst [vmem:[#allocation2 + $0x510] sm:$0xff] %v4890
        %5275 = vst [vmem:[#allocation2 + $0x518] sm:$0xff] %v4891
        %5276 = vst [vmem:[#allocation2 + $0x520] sm:$0xff] %v4892
        %5277 = vst [vmem:[#allocation2 + $0x528] sm:$0xff] %v4893
        %5278 = vst [vmem:[#allocation2 + $0x530] sm:$0xff] %v4894
        %5279 = vst [vmem:[#allocation2 + $0x538] sm:$0xff] %v4895
        %5280 = vst [vmem:[#allocation2 + $0x540] sm:$0xff] %v4896
        %5281 = vst [vmem:[#allocation2 + $0x548] sm:$0xff] %v4897
        %5282 = vst [vmem:[#allocation2 + $0x550] sm:$0xff] %v4898
        %5283 = vst [vmem:[#allocation2 + $0x558] sm:$0xff] %v4899
        %5284 = vst [vmem:[#allocation2 + $0x560] sm:$0xff] %v4900
        %5285 = vst [vmem:[#allocation2 + $0x568] sm:$0xff] %v4901
        %5286 = vst [vmem:[#allocation2 + $0x570] sm:$0xff] %v4902
        %5287 = vst [vmem:[#allocation2 + $0x578] sm:$0xff] %v4903
        %5288 = vst [vmem:[#allocation2 + $0x580] sm:$0xff] %v4904
        %5289 = vst [vmem:[#allocation2 + $0x588] sm:$0xff] %v4905
        %5290 = vst [vmem:[#allocation2 + $0x590] sm:$0xff] %v4906
        %5291 = vst [vmem:[#allocation2 + $0x598] sm:$0xff] %v4907
        %5292 = vst [vmem:[#allocation2 + $0x5a0] sm:$0xff] %v4908
        %5293 = vst [vmem:[#allocation2 + $0x5a8] sm:$0xff] %v4909
        %5294 = vst [vmem:[#allocation2 + $0x5b0] sm:$0xff] %v4910
        %5295 = vst [vmem:[#allocation2 + $0x5b8] sm:$0xff] %v4911
        %5296 = vst [vmem:[#allocation2 + $0x5c0] sm:$0xff] %v4912
        %5297 = vst [vmem:[#allocation2 + $0x5c8] sm:$0xff] %v4913
        %5298 = vst [vmem:[#allocation2 + $0x5d0] sm:$0xff] %v4914
        %5299 = vst [vmem:[#allocation2 + $0x5d8] sm:$0xff] %v4915
        %5300 = vst [vmem:[#allocation2 + $0x5e0] sm:$0xff] %v4916
        %5301 = vst [vmem:[#allocation2 + $0x5e8] sm:$0xff] %v4917
        %5302 = vst [vmem:[#allocation2 + $0x5f0] sm:$0xff] %v4918
        %5303 = vst [vmem:[#allocation2 + $0x5f8] sm:$0xff] %v4919
        %5304 = vst [vmem:[#allocation2 + $0x600] sm:$0xff] %v4920
        %5305 = vst [vmem:[#allocation2 + $0x608] sm:$0xff] %v4921
        %5306 = vst [vmem:[#allocation2 + $0x610] sm:$0xff] %v4922
        %5307 = vst [vmem:[#allocation2 + $0x618] sm:$0xff] %v4923
        %5308 = vst [vmem:[#allocation2 + $0x620] sm:$0xff] %v4924
        %5309 = vst [vmem:[#allocation2 + $0x628] sm:$0xff] %v4925
        %5310 = vst [vmem:[#allocation2 + $0x630] sm:$0xff] %v4926
        %5311 = vst [vmem:[#allocation2 + $0x638] sm:$0xff] %v4927
        %5312 = vst [vmem:[#allocation2 + $0x640] sm:$0xff] %v4928
        %5313 = vst [vmem:[#allocation2 + $0x648] sm:$0xff] %v4929
        %5314 = vst [vmem:[#allocation2 + $0x650] sm:$0xff] %v4930
        %5315 = vst [vmem:[#allocation2 + $0x658] sm:$0xff] %v4931
        %5316 = vst [vmem:[#allocation2 + $0x660] sm:$0xff] %v4932
        %5317 = vst [vmem:[#allocation2 + $0x668] sm:$0xff] %v4933
        %5318 = vst [vmem:[#allocation2 + $0x670] sm:$0xff] %v4934
        %5319 = vst [vmem:[#allocation2 + $0x678] sm:$0xff] %v4935
        %5320 = vst [vmem:[#allocation2 + $0x680] sm:$0xff] %v4936
        %5321 = vst [vmem:[#allocation2 + $0x688] sm:$0xff] %v4937
        %5322 = vst [vmem:[#allocation2 + $0x690] sm:$0xff] %v4938
        %5323 = vst [vmem:[#allocation2 + $0x698] sm:$0xff] %v4939
        %5324 = vst [vmem:[#allocation2 + $0x6a0] sm:$0xff] %v4940
        %5325 = vst [vmem:[#allocation2 + $0x6a8] sm:$0xff] %v4941
        %5326 = vst [vmem:[#allocation2 + $0x6b0] sm:$0xff] %v4942
        %5327 = vst [vmem:[#allocation2 + $0x6b8] sm:$0xff] %v4943
        %5328 = vst [vmem:[#allocation2 + $0x6c0] sm:$0xff] %v4944
        %5329 = vst [vmem:[#allocation2 + $0x6c8] sm:$0xff] %v4945
        %5330 = vst [vmem:[#allocation2 + $0x6d0] sm:$0xff] %v4946
        %5331 = vst [vmem:[#allocation2 + $0x6d8] sm:$0xff] %v4947
        %5332 = vst [vmem:[#allocation2 + $0x6e0] sm:$0xff] %v4948
        %5333 = vst [vmem:[#allocation2 + $0x6e8] sm:$0xff] %v4949
        %5334 = vst [vmem:[#allocation2 + $0x6f0] sm:$0xff] %v4950
        %5335 = vst [vmem:[#allocation2 + $0x6f8] sm:$0xff] %v4951
        %5336 = vst [vmem:[#allocation2 + $0x700] sm:$0xff] %v4952
        %5337 = vst [vmem:[#allocation2 + $0x708] sm:$0xff] %v4953
        %5338 = vst [vmem:[#allocation2 + $0x710] sm:$0xff] %v4954
        %5339 = vst [vmem:[#allocation2 + $0x718] sm:$0xff] %v4955
        %5340 = vst [vmem:[#allocation2 + $0x720] sm:$0xff] %v4956
        %5341 = vst [vmem:[#allocation2 + $0x728] sm:$0xff] %v4957
        %5342 = vst [vmem:[#allocation2 + $0x730] sm:$0xff] %v4958
        %5343 = vst [vmem:[#allocation2 + $0x738] sm:$0xff] %v4959
        %5344 = vst [vmem:[#allocation2 + $0x740] sm:$0xff] %v4960
        %5345 = vst [vmem:[#allocation2 + $0x748] sm:$0xff] %v4961
        %5346 = vst [vmem:[#allocation2 + $0x750] sm:$0xff] %v4962
        %5347 = vst [vmem:[#allocation2 + $0x758] sm:$0xff] %v4963
        %5348 = vst [vmem:[#allocation2 + $0x760] sm:$0xff] %v4964
        %5349 = vst [vmem:[#allocation2 + $0x768] sm:$0xff] %v4965
        %5350 = vst [vmem:[#allocation2 + $0x770] sm:$0xff] %v4966
        %5351 = vst [vmem:[#allocation2 + $0x778] sm:$0xff] %v4967
        %5352 = vst [vmem:[#allocation2 + $0x780] sm:$0xff] %v4968
        %5353 = vst [vmem:[#allocation2 + $0x788] sm:$0xff] %v4969
        %5354 = vst [vmem:[#allocation2 + $0x790] sm:$0xff] %v4970
        %5355 = vst [vmem:[#allocation2 + $0x798] sm:$0xff] %v4971
        %5356 = vst [vmem:[#allocation2 + $0x7a0] sm:$0xff] %v4972
        %5357 = vst [vmem:[#allocation2 + $0x7a8] sm:$0xff] %v4973
        %5358 = vst [vmem:[#allocation2 + $0x7b0] sm:$0xff] %v4974
        %5359 = vst [vmem:[#allocation2 + $0x7b8] sm:$0xff] %v4975
        %5360 = vst [vmem:[#allocation2 + $0x7c0] sm:$0xff] %v4976
        %5361 = vst [vmem:[#allocation2 + $0x7c8] sm:$0xff] %v4977
        %5362 = vst [vmem:[#allocation2 + $0x7d0] sm:$0xff] %v4978
        %5363 = vst [vmem:[#allocation2 + $0x7d8] sm:$0xff] %v4979
        %5364 = vst [vmem:[#allocation2 + $0x7e0] sm:$0xff] %v4980
        %5365 = vst [vmem:[#allocation2 + $0x7e8] sm:$0xff] %v4981
        %5366 = vst [vmem:[#allocation2 + $0x7f0] sm:$0xff] %v4982
        %5367 = vst [vmem:[#allocation2 + $0x7f8] sm:$0xff] %v4983
        %5368 = vst [vmem:[#allocation2 + $0x800] sm:$0xff] %v4984
        %5369 = vst [vmem:[#allocation2 + $0x808] sm:$0xff] %v4985
        %5370 = vst [vmem:[#allocation2 + $0x810] sm:$0xff] %v4986
        %5371 = vst [vmem:[#allocation2 + $0x818] sm:$0xff] %v4987
        %5372 = vst [vmem:[#allocation2 + $0x820] sm:$0xff] %v4988
        %5373 = vst [vmem:[#allocation2 + $0x828] sm:$0xff] %v4989
        %5374 = vst [vmem:[#allocation2 + $0x830] sm:$0xff] %v4990
        %5375 = vst [vmem:[#allocation2 + $0x838] sm:$0xff] %v4991
        %5376 = vst [vmem:[#allocation2 + $0x840] sm:$0xff] %v4992
        %5377 = vst [vmem:[#allocation2 + $0x848] sm:$0xff] %v4993
        %5378 = vst [vmem:[#allocation2 + $0x850] sm:$0xff] %v4994
        %5379 = vst [vmem:[#allocation2 + $0x858] sm:$0xff] %v4995
        %5380 = vst [vmem:[#allocation2 + $0x860] sm:$0xff] %v4996
        %5381 = vst [vmem:[#allocation2 + $0x868] sm:$0xff] %v4997
        %5382 = vst [vmem:[#allocation2 + $0x870] sm:$0xff] %v4998
        %5383 = vst [vmem:[#allocation2 + $0x878] sm:$0xff] %v4999
        %5384 = vst [vmem:[#allocation2 + $0x880] sm:$0xff] %v5000
        %5385 = vst [vmem:[#allocation2 + $0x888] sm:$0xff] %v5001
        %5386 = vst [vmem:[#allocation2 + $0x890] sm:$0xff] %v5002
        %5387 = vst [vmem:[#allocation2 + $0x898] sm:$0xff] %v5003
        %5388 = vst [vmem:[#allocation2 + $0x8a0] sm:$0xff] %v5004
        %5389 = vst [vmem:[#allocation2 + $0x8a8] sm:$0xff] %v5005
        %5390 = vst [vmem:[#allocation2 + $0x8b0] sm:$0xff] %v5006
        %5391 = vst [vmem:[#allocation2 + $0x8b8] sm:$0xff] %v5007
        %5392 = vst [vmem:[#allocation2 + $0x8c0] sm:$0xff] %v5008
        %5393 = vst [vmem:[#allocation2 + $0x8c8] sm:$0xff] %v5009
        %5394 = vst [vmem:[#allocation2 + $0x8d0] sm:$0xff] %v5010
        %5395 = vst [vmem:[#allocation2 + $0x8d8] sm:$0xff] %v5011
        %5396 = vst [vmem:[#allocation2 + $0x8e0] sm:$0xff] %v5012
        %5397 = vst [vmem:[#allocation2 + $0x8e8] sm:$0xff] %v5013
        %5398 = vst [vmem:[#allocation2 + $0x8f0] sm:$0xff] %v5014
        %5399 = vst [vmem:[#allocation2 + $0x8f8] sm:$0xff] %v5015
        %5400 = vst [vmem:[#allocation2 + $0x900] sm:$0xff] %v5016
        %5401 = vst [vmem:[#allocation2 + $0x908] sm:$0xff] %v5017
        %5402 = vst [vmem:[#allocation2 + $0x910] sm:$0xff] %v5018
        %5403 = vst [vmem:[#allocation2 + $0x918] sm:$0xff] %v5019
        %5404 = vst [vmem:[#allocation2 + $0x920] sm:$0xff] %v5020
        %5405 = vst [vmem:[#allocation2 + $0x928] sm:$0xff] %v5021
        %5406 = vst [vmem:[#allocation2 + $0x930] sm:$0xff] %v5022
        %5407 = vst [vmem:[#allocation2 + $0x938] sm:$0xff] %v5023
        %5408 = vst [vmem:[#allocation2 + $0x940] sm:$0xff] %v5024
        %5409 = vst [vmem:[#allocation2 + $0x948] sm:$0xff] %v5025
        %5410 = vst [vmem:[#allocation2 + $0x950] sm:$0xff] %v5026
        %5411 = vst [vmem:[#allocation2 + $0x958] sm:$0xff] %v5027
        %5412 = vst [vmem:[#allocation2 + $0x960] sm:$0xff] %v5028
        %5413 = vst [vmem:[#allocation2 + $0x968] sm:$0xff] %v5029
        %5414 = vst [vmem:[#allocation2 + $0x970] sm:$0xff] %v5030
        %5415 = vst [vmem:[#allocation2 + $0x978] sm:$0xff] %v5031
        %5416 = vst [vmem:[#allocation2 + $0x980] sm:$0xff] %v5032
        %5417 = vst [vmem:[#allocation2 + $0x988] sm:$0xff] %v5033
        %5418 = vst [vmem:[#allocation2 + $0x990] sm:$0xff] %v5034
        %5419 = vst [vmem:[#allocation2 + $0x998] sm:$0xff] %v5035
        %5420 = vst [vmem:[#allocation2 + $0x9a0] sm:$0xff] %v5036
        %5421 = vst [vmem:[#allocation2 + $0x9a8] sm:$0xff] %v5037
        %5422 = vst [vmem:[#allocation2 + $0x9b0] sm:$0xff] %v5038
        %5423 = vst [vmem:[#allocation2 + $0x9b8] sm:$0xff] %v5039
        %5424 = vst [vmem:[#allocation2 + $0x9c0] sm:$0xff] %v5040
        %5425 = vst [vmem:[#allocation2 + $0x9c8] sm:$0xff] %v5041
        %5426 = vst [vmem:[#allocation2 + $0x9d0] sm:$0xff] %v5042
        %5427 = vst [vmem:[#allocation2 + $0x9d8] sm:$0xff] %v5043
        %5428 = vst [vmem:[#allocation2 + $0x9e0] sm:$0xff] %v5044
        %5429 = vst [vmem:[#allocation2 + $0x9e8] sm:$0xff] %v5045
        %5430 = vst [vmem:[#allocation2 + $0x9f0] sm:$0xff] %v5046
        %5431 = vst [vmem:[#allocation2 + $0x9f8] sm:$0xff] %v5047
        %5432 = vst [vmem:[#allocation2 + $0xa00] sm:$0xff] %v5048
        %5433 = vst [vmem:[#allocation2 + $0xa08] sm:$0xff] %v5049
        %5434 = vst [vmem:[#allocation2 + $0xa10] sm:$0xff] %v5050
        %5435 = vst [vmem:[#allocation2 + $0xa18] sm:$0xff] %v5051
        %5436 = vst [vmem:[#allocation2 + $0xa20] sm:$0xff] %v5052
        %5437 = vst [vmem:[#allocation2 + $0xa28] sm:$0xff] %v5053
        %5438 = vst [vmem:[#allocation2 + $0xa30] sm:$0xff] %v5054
        %5439 = vst [vmem:[#allocation2 + $0xa38] sm:$0xff] %v5055
        %5440 = vst [vmem:[#allocation2 + $0xa40] sm:$0xff] %v5056
        %5441 = vst [vmem:[#allocation2 + $0xa48] sm:$0xff] %v5057
        %5442 = vst [vmem:[#allocation2 + $0xa50] sm:$0xff] %v5058
        %5443 = vst [vmem:[#allocation2 + $0xa58] sm:$0xff] %v5059
        %5444 = vst [vmem:[#allocation2 + $0xa60] sm:$0xff] %v5060
        %5445 = vst [vmem:[#allocation2 + $0xa68] sm:$0xff] %v5061
        %5446 = vst [vmem:[#allocation2 + $0xa70] sm:$0xff] %v5062
        %5447 = vst [vmem:[#allocation2 + $0xa78] sm:$0xff] %v5063
        %5448 = vst [vmem:[#allocation2 + $0xa80] sm:$0xff] %v5064
        %5449 = vst [vmem:[#allocation2 + $0xa88] sm:$0xff] %v5065
        %5450 = vst [vmem:[#allocation2 + $0xa90] sm:$0xff] %v5066
        %5451 = vst [vmem:[#allocation2 + $0xa98] sm:$0xff] %v5067
        %5452 = vst [vmem:[#allocation2 + $0xaa0] sm:$0xff] %v5068
        %5453 = vst [vmem:[#allocation2 + $0xaa8] sm:$0xff] %v5069
        %5454 = vst [vmem:[#allocation2 + $0xab0] sm:$0xff] %v5070
        %5455 = vst [vmem:[#allocation2 + $0xab8] sm:$0xff] %v5071
        %5456 = vst [vmem:[#allocation2 + $0xac0] sm:$0xff] %v5072
        %5457 = vst [vmem:[#allocation2 + $0xac8] sm:$0xff] %v5073
        %5458 = vst [vmem:[#allocation2 + $0xad0] sm:$0xff] %v5074
        %5459 = vst [vmem:[#allocation2 + $0xad8] sm:$0xff] %v5075
        %5460 = vst [vmem:[#allocation2 + $0xae0] sm:$0xff] %v5076
        %5461 = vst [vmem:[#allocation2 + $0xae8] sm:$0xff] %v5077
        %5462 = vst [vmem:[#allocation2 + $0xaf0] sm:$0xff] %v5078
        %5463 = vst [vmem:[#allocation2 + $0xaf8] sm:$0xff] %v5079
        %5464 = vst [vmem:[#allocation2 + $0xb00] sm:$0xff] %v5080
        %5465 = vst [vmem:[#allocation2 + $0xb08] sm:$0xff] %v5081
        %5466 = vst [vmem:[#allocation2 + $0xb10] sm:$0xff] %v5082
        %5467 = vst [vmem:[#allocation2 + $0xb18] sm:$0xff] %v5083
        %5468 = vst [vmem:[#allocation2 + $0xb20] sm:$0xff] %v5084
        %5469 = vst [vmem:[#allocation2 + $0xb28] sm:$0xff] %v5085
        %5470 = vst [vmem:[#allocation2 + $0xb30] sm:$0xff] %v5086
        %5471 = vst [vmem:[#allocation2 + $0xb38] sm:$0xff] %v5087
        %5472 = vst [vmem:[#allocation2 + $0xb40] sm:$0xff] %v5088
        %5473 = vst [vmem:[#allocation2 + $0xb48] sm:$0xff] %v5089
        %5474 = vst [vmem:[#allocation2 + $0xb50] sm:$0xff] %v5090
        %5475 = vst [vmem:[#allocation2 + $0xb58] sm:$0xff] %v5091
        %5476 = vst [vmem:[#allocation2 + $0xb60] sm:$0xff] %v5092
        %5477 = vst [vmem:[#allocation2 + $0xb68] sm:$0xff] %v5093
        %5478 = vst [vmem:[#allocation2 + $0xb70] sm:$0xff] %v5094
        %5479 = vst [vmem:[#allocation2 + $0xb78] sm:$0xff] %v5095
        %5480 = vst [vmem:[#allocation2 + $0xb80] sm:$0xff] %v5096
        %5481 = vst [vmem:[#allocation2 + $0xb88] sm:$0xff] %v5097
        %5482 = vst [vmem:[#allocation2 + $0xb90] sm:$0xff] %v5098
        %5483 = vst [vmem:[#allocation2 + $0xb98] sm:$0xff] %v5099
        %5484 = vst [vmem:[#allocation2 + $0xba0] sm:$0xff] %v5100
        %5485 = vst [vmem:[#allocation2 + $0xba8] sm:$0xff] %v5101
        %5486 = vst [vmem:[#allocation2 + $0xbb0] sm:$0xff] %v5102
        %5487 = vst [vmem:[#allocation2 + $0xbb8] sm:$0xff] %v5103
        %5488 = vst [vmem:[#allocation2 + $0xbc0] sm:$0xff] %v5104
        %5489 = vst [vmem:[#allocation2 + $0xbc8] sm:$0xff] %v5105
        %5490 = vst [vmem:[#allocation2 + $0xbd0] sm:$0xff] %v5106
        %5491 = vst [vmem:[#allocation2 + $0xbd8] sm:$0xff] %v5107
        %5492 = vst [vmem:[#allocation2 + $0xbe0] sm:$0xff] %v5108
        %5493 = vst [vmem:[#allocation2 + $0xbe8] sm:$0xff] %v5109
        %5494 = vst [vmem:[#allocation2 + $0xbf0] sm:$0xff] %v5110
        %5495 = vst [vmem:[#allocation2 + $0xbf8] sm:$0xff] %v5111
        // Predicated region
        $region49: #{tpu_custom_call.1} parent=31 // pred_check
          %p5496 = pneg %p302
        $region50: #{tpu_custom_call.1} parent=31 // pred_check_branch
          %5498 = sbr.rel (%p5496) target = $region52
        $region51: #{tpu_custom_call.1} parent=31 // pred_region
          %v5499 = vld [vmem:[#allocation2] sm:$0xff]
          %v5500 = vld [vmem:[#allocation2 + $0x8] sm:$0xff]
          %v5501 = vld [vmem:[#allocation2 + $0x10] sm:$0xff]
          %v5502 = vld [vmem:[#allocation2 + $0x18] sm:$0xff]
          %v5503 = vld [vmem:[#allocation2 + $0x20] sm:$0xff]
          %v5504 = vld [vmem:[#allocation2 + $0x28] sm:$0xff]
          %v5505 = vld [vmem:[#allocation2 + $0x30] sm:$0xff]
          %v5506 = vld [vmem:[#allocation2 + $0x38] sm:$0xff]
          %v5507 = vld [vmem:[#allocation2 + $0x40] sm:$0xff]
          %v5508 = vld [vmem:[#allocation2 + $0x48] sm:$0xff]
          %v5509 = vld [vmem:[#allocation2 + $0x50] sm:$0xff]
          %v5510 = vld [vmem:[#allocation2 + $0x58] sm:$0xff]
          %v5511 = vld [vmem:[#allocation2 + $0x60] sm:$0xff]
          %v5512 = vld [vmem:[#allocation2 + $0x68] sm:$0xff]
          %v5513 = vld [vmem:[#allocation2 + $0x70] sm:$0xff]
          %v5514 = vld [vmem:[#allocation2 + $0x78] sm:$0xff]
          %v5515 = vld [vmem:[#allocation2 + $0x80] sm:$0xff]
          %v5516 = vld [vmem:[#allocation2 + $0x88] sm:$0xff]
          %v5517 = vld [vmem:[#allocation2 + $0x90] sm:$0xff]
          %v5518 = vld [vmem:[#allocation2 + $0x98] sm:$0xff]
          %v5519 = vld [vmem:[#allocation2 + $0xa0] sm:$0xff]
          %v5520 = vld [vmem:[#allocation2 + $0xa8] sm:$0xff]
          %v5521 = vld [vmem:[#allocation2 + $0xb0] sm:$0xff]
          %v5522 = vld [vmem:[#allocation2 + $0xb8] sm:$0xff]
          %v5523 = vld [vmem:[#allocation2 + $0xc0] sm:$0xff]
          %v5524 = vld [vmem:[#allocation2 + $0xc8] sm:$0xff]
          %v5525 = vld [vmem:[#allocation2 + $0xd0] sm:$0xff]
          %v5526 = vld [vmem:[#allocation2 + $0xd8] sm:$0xff]
          %v5527 = vld [vmem:[#allocation2 + $0xe0] sm:$0xff]
          %v5528 = vld [vmem:[#allocation2 + $0xe8] sm:$0xff]
          %v5529 = vld [vmem:[#allocation2 + $0xf0] sm:$0xff]
          %v5530 = vld [vmem:[#allocation2 + $0xf8] sm:$0xff]
          %v5531 = vld [vmem:[#allocation2 + $0x100] sm:$0xff]
          %v5532 = vld [vmem:[#allocation2 + $0x108] sm:$0xff]
          %v5533 = vld [vmem:[#allocation2 + $0x110] sm:$0xff]
          %v5534 = vld [vmem:[#allocation2 + $0x118] sm:$0xff]
          %v5535 = vld [vmem:[#allocation2 + $0x120] sm:$0xff]
          %v5536 = vld [vmem:[#allocation2 + $0x128] sm:$0xff]
          %v5537 = vld [vmem:[#allocation2 + $0x130] sm:$0xff]
          %v5538 = vld [vmem:[#allocation2 + $0x138] sm:$0xff]
          %v5539 = vld [vmem:[#allocation2 + $0x140] sm:$0xff]
          %v5540 = vld [vmem:[#allocation2 + $0x148] sm:$0xff]
          %v5541 = vld [vmem:[#allocation2 + $0x150] sm:$0xff]
          %v5542 = vld [vmem:[#allocation2 + $0x158] sm:$0xff]
          %v5543 = vld [vmem:[#allocation2 + $0x160] sm:$0xff]
          %v5544 = vld [vmem:[#allocation2 + $0x168] sm:$0xff]
          %v5545 = vld [vmem:[#allocation2 + $0x170] sm:$0xff]
          %v5546 = vld [vmem:[#allocation2 + $0x178] sm:$0xff]
          %v5547 = vld [vmem:[#allocation2 + $0x180] sm:$0xff]
          %v5548 = vld [vmem:[#allocation2 + $0x188] sm:$0xff]
          %v5549 = vld [vmem:[#allocation2 + $0x190] sm:$0xff]
          %v5550 = vld [vmem:[#allocation2 + $0x198] sm:$0xff]
          %v5551 = vld [vmem:[#allocation2 + $0x1a0] sm:$0xff]
          %v5552 = vld [vmem:[#allocation2 + $0x1a8] sm:$0xff]
          %v5553 = vld [vmem:[#allocation2 + $0x1b0] sm:$0xff]
          %v5554 = vld [vmem:[#allocation2 + $0x1b8] sm:$0xff]
          %v5555 = vld [vmem:[#allocation2 + $0x1c0] sm:$0xff]
          %v5556 = vld [vmem:[#allocation2 + $0x1c8] sm:$0xff]
          %v5557 = vld [vmem:[#allocation2 + $0x1d0] sm:$0xff]
          %v5558 = vld [vmem:[#allocation2 + $0x1d8] sm:$0xff]
          %v5559 = vld [vmem:[#allocation2 + $0x1e0] sm:$0xff]
          %v5560 = vld [vmem:[#allocation2 + $0x1e8] sm:$0xff]
          %v5561 = vld [vmem:[#allocation2 + $0x1f0] sm:$0xff]
          %v5562 = vld [vmem:[#allocation2 + $0x1f8] sm:$0xff]
          %v5563 = vld [vmem:[#allocation2 + $0x200] sm:$0xff]
          %v5564 = vld [vmem:[#allocation2 + $0x208] sm:$0xff]
          %v5565 = vld [vmem:[#allocation2 + $0x210] sm:$0xff]
          %v5566 = vld [vmem:[#allocation2 + $0x218] sm:$0xff]
          %v5567 = vld [vmem:[#allocation2 + $0x220] sm:$0xff]
          %v5568 = vld [vmem:[#allocation2 + $0x228] sm:$0xff]
          %v5569 = vld [vmem:[#allocation2 + $0x230] sm:$0xff]
          %v5570 = vld [vmem:[#allocation2 + $0x238] sm:$0xff]
          %v5571 = vld [vmem:[#allocation2 + $0x240] sm:$0xff]
          %v5572 = vld [vmem:[#allocation2 + $0x248] sm:$0xff]
          %v5573 = vld [vmem:[#allocation2 + $0x250] sm:$0xff]
          %v5574 = vld [vmem:[#allocation2 + $0x258] sm:$0xff]
          %v5575 = vld [vmem:[#allocation2 + $0x260] sm:$0xff]
          %v5576 = vld [vmem:[#allocation2 + $0x268] sm:$0xff]
          %v5577 = vld [vmem:[#allocation2 + $0x270] sm:$0xff]
          %v5578 = vld [vmem:[#allocation2 + $0x278] sm:$0xff]
          %v5579 = vld [vmem:[#allocation2 + $0x280] sm:$0xff]
          %v5580 = vld [vmem:[#allocation2 + $0x288] sm:$0xff]
          %v5581 = vld [vmem:[#allocation2 + $0x290] sm:$0xff]
          %v5582 = vld [vmem:[#allocation2 + $0x298] sm:$0xff]
          %v5583 = vld [vmem:[#allocation2 + $0x2a0] sm:$0xff]
          %v5584 = vld [vmem:[#allocation2 + $0x2a8] sm:$0xff]
          %v5585 = vld [vmem:[#allocation2 + $0x2b0] sm:$0xff]
          %v5586 = vld [vmem:[#allocation2 + $0x2b8] sm:$0xff]
          %v5587 = vld [vmem:[#allocation2 + $0x2c0] sm:$0xff]
          %v5588 = vld [vmem:[#allocation2 + $0x2c8] sm:$0xff]
          %v5589 = vld [vmem:[#allocation2 + $0x2d0] sm:$0xff]
          %v5590 = vld [vmem:[#allocation2 + $0x2d8] sm:$0xff]
          %v5591 = vld [vmem:[#allocation2 + $0x2e0] sm:$0xff]
          %v5592 = vld [vmem:[#allocation2 + $0x2e8] sm:$0xff]
          %v5593 = vld [vmem:[#allocation2 + $0x2f0] sm:$0xff]
          %v5594 = vld [vmem:[#allocation2 + $0x2f8] sm:$0xff]
          %v5595 = vld [vmem:[#allocation2 + $0x300] sm:$0xff]
          %v5596 = vld [vmem:[#allocation2 + $0x308] sm:$0xff]
          %v5597 = vld [vmem:[#allocation2 + $0x310] sm:$0xff]
          %v5598 = vld [vmem:[#allocation2 + $0x318] sm:$0xff]
          %v5599 = vld [vmem:[#allocation2 + $0x320] sm:$0xff]
          %v5600 = vld [vmem:[#allocation2 + $0x328] sm:$0xff]
          %v5601 = vld [vmem:[#allocation2 + $0x330] sm:$0xff]
          %v5602 = vld [vmem:[#allocation2 + $0x338] sm:$0xff]
          %v5603 = vld [vmem:[#allocation2 + $0x340] sm:$0xff]
          %v5604 = vld [vmem:[#allocation2 + $0x348] sm:$0xff]
          %v5605 = vld [vmem:[#allocation2 + $0x350] sm:$0xff]
          %v5606 = vld [vmem:[#allocation2 + $0x358] sm:$0xff]
          %v5607 = vld [vmem:[#allocation2 + $0x360] sm:$0xff]
          %v5608 = vld [vmem:[#allocation2 + $0x368] sm:$0xff]
          %v5609 = vld [vmem:[#allocation2 + $0x370] sm:$0xff]
          %v5610 = vld [vmem:[#allocation2 + $0x378] sm:$0xff]
          %v5611 = vld [vmem:[#allocation2 + $0x380] sm:$0xff]
          %v5612 = vld [vmem:[#allocation2 + $0x388] sm:$0xff]
          %v5613 = vld [vmem:[#allocation2 + $0x390] sm:$0xff]
          %v5614 = vld [vmem:[#allocation2 + $0x398] sm:$0xff]
          %v5615 = vld [vmem:[#allocation2 + $0x3a0] sm:$0xff]
          %v5616 = vld [vmem:[#allocation2 + $0x3a8] sm:$0xff]
          %v5617 = vld [vmem:[#allocation2 + $0x3b0] sm:$0xff]
          %v5618 = vld [vmem:[#allocation2 + $0x3b8] sm:$0xff]
          %v5619 = vld [vmem:[#allocation2 + $0x3c0] sm:$0xff]
          %v5620 = vld [vmem:[#allocation2 + $0x3c8] sm:$0xff]
          %v5621 = vld [vmem:[#allocation2 + $0x3d0] sm:$0xff]
          %v5622 = vld [vmem:[#allocation2 + $0x3d8] sm:$0xff]
          %v5623 = vld [vmem:[#allocation2 + $0x3e0] sm:$0xff]
          %v5624 = vld [vmem:[#allocation2 + $0x3e8] sm:$0xff]
          %v5625 = vld [vmem:[#allocation2 + $0x3f0] sm:$0xff]
          %v5626 = vld [vmem:[#allocation2 + $0x3f8] sm:$0xff]
          %v5627 = vld [vmem:[#allocation2 + $0x400] sm:$0xff]
          %v5628 = vld [vmem:[#allocation2 + $0x408] sm:$0xff]
          %v5629 = vld [vmem:[#allocation2 + $0x410] sm:$0xff]
          %v5630 = vld [vmem:[#allocation2 + $0x418] sm:$0xff]
          %v5631 = vld [vmem:[#allocation2 + $0x420] sm:$0xff]
          %v5632 = vld [vmem:[#allocation2 + $0x428] sm:$0xff]
          %v5633 = vld [vmem:[#allocation2 + $0x430] sm:$0xff]
          %v5634 = vld [vmem:[#allocation2 + $0x438] sm:$0xff]
          %v5635 = vld [vmem:[#allocation2 + $0x440] sm:$0xff]
          %v5636 = vld [vmem:[#allocation2 + $0x448] sm:$0xff]
          %v5637 = vld [vmem:[#allocation2 + $0x450] sm:$0xff]
          %v5638 = vld [vmem:[#allocation2 + $0x458] sm:$0xff]
          %v5639 = vld [vmem:[#allocation2 + $0x460] sm:$0xff]
          %v5640 = vld [vmem:[#allocation2 + $0x468] sm:$0xff]
          %v5641 = vld [vmem:[#allocation2 + $0x470] sm:$0xff]
          %v5642 = vld [vmem:[#allocation2 + $0x478] sm:$0xff]
          %v5643 = vld [vmem:[#allocation2 + $0x480] sm:$0xff]
          %v5644 = vld [vmem:[#allocation2 + $0x488] sm:$0xff]
          %v5645 = vld [vmem:[#allocation2 + $0x490] sm:$0xff]
          %v5646 = vld [vmem:[#allocation2 + $0x498] sm:$0xff]
          %v5647 = vld [vmem:[#allocation2 + $0x4a0] sm:$0xff]
          %v5648 = vld [vmem:[#allocation2 + $0x4a8] sm:$0xff]
          %v5649 = vld [vmem:[#allocation2 + $0x4b0] sm:$0xff]
          %v5650 = vld [vmem:[#allocation2 + $0x4b8] sm:$0xff]
          %v5651 = vld [vmem:[#allocation2 + $0x4c0] sm:$0xff]
          %v5652 = vld [vmem:[#allocation2 + $0x4c8] sm:$0xff]
          %v5653 = vld [vmem:[#allocation2 + $0x4d0] sm:$0xff]
          %v5654 = vld [vmem:[#allocation2 + $0x4d8] sm:$0xff]
          %v5655 = vld [vmem:[#allocation2 + $0x4e0] sm:$0xff]
          %v5656 = vld [vmem:[#allocation2 + $0x4e8] sm:$0xff]
          %v5657 = vld [vmem:[#allocation2 + $0x4f0] sm:$0xff]
          %v5658 = vld [vmem:[#allocation2 + $0x4f8] sm:$0xff]
          %v5659 = vld [vmem:[#allocation2 + $0x500] sm:$0xff]
          %v5660 = vld [vmem:[#allocation2 + $0x508] sm:$0xff]
          %v5661 = vld [vmem:[#allocation2 + $0x510] sm:$0xff]
          %v5662 = vld [vmem:[#allocation2 + $0x518] sm:$0xff]
          %v5663 = vld [vmem:[#allocation2 + $0x520] sm:$0xff]
          %v5664 = vld [vmem:[#allocation2 + $0x528] sm:$0xff]
          %v5665 = vld [vmem:[#allocation2 + $0x530] sm:$0xff]
          %v5666 = vld [vmem:[#allocation2 + $0x538] sm:$0xff]
          %v5667 = vld [vmem:[#allocation2 + $0x540] sm:$0xff]
          %v5668 = vld [vmem:[#allocation2 + $0x548] sm:$0xff]
          %v5669 = vld [vmem:[#allocation2 + $0x550] sm:$0xff]
          %v5670 = vld [vmem:[#allocation2 + $0x558] sm:$0xff]
          %v5671 = vld [vmem:[#allocation2 + $0x560] sm:$0xff]
          %v5672 = vld [vmem:[#allocation2 + $0x568] sm:$0xff]
          %v5673 = vld [vmem:[#allocation2 + $0x570] sm:$0xff]
          %v5674 = vld [vmem:[#allocation2 + $0x578] sm:$0xff]
          %v5675 = vld [vmem:[#allocation2 + $0x580] sm:$0xff]
          %v5676 = vld [vmem:[#allocation2 + $0x588] sm:$0xff]
          %v5677 = vld [vmem:[#allocation2 + $0x590] sm:$0xff]
          %v5678 = vld [vmem:[#allocation2 + $0x598] sm:$0xff]
          %v5679 = vld [vmem:[#allocation2 + $0x5a0] sm:$0xff]
          %v5680 = vld [vmem:[#allocation2 + $0x5a8] sm:$0xff]
          %v5681 = vld [vmem:[#allocation2 + $0x5b0] sm:$0xff]
          %v5682 = vld [vmem:[#allocation2 + $0x5b8] sm:$0xff]
          %v5683 = vld [vmem:[#allocation2 + $0x5c0] sm:$0xff]
          %v5684 = vld [vmem:[#allocation2 + $0x5c8] sm:$0xff]
          %v5685 = vld [vmem:[#allocation2 + $0x5d0] sm:$0xff]
          %v5686 = vld [vmem:[#allocation2 + $0x5d8] sm:$0xff]
          %v5687 = vld [vmem:[#allocation2 + $0x5e0] sm:$0xff]
          %v5688 = vld [vmem:[#allocation2 + $0x5e8] sm:$0xff]
          %v5689 = vld [vmem:[#allocation2 + $0x5f0] sm:$0xff]
          %v5690 = vld [vmem:[#allocation2 + $0x5f8] sm:$0xff]
          %v5691 = vld [vmem:[#allocation2 + $0x600] sm:$0xff]
          %v5692 = vld [vmem:[#allocation2 + $0x608] sm:$0xff]
          %v5693 = vld [vmem:[#allocation2 + $0x610] sm:$0xff]
          %v5694 = vld [vmem:[#allocation2 + $0x618] sm:$0xff]
          %v5695 = vld [vmem:[#allocation2 + $0x620] sm:$0xff]
          %v5696 = vld [vmem:[#allocation2 + $0x628] sm:$0xff]
          %v5697 = vld [vmem:[#allocation2 + $0x630] sm:$0xff]
          %v5698 = vld [vmem:[#allocation2 + $0x638] sm:$0xff]
          %v5699 = vld [vmem:[#allocation2 + $0x640] sm:$0xff]
          %v5700 = vld [vmem:[#allocation2 + $0x648] sm:$0xff]
          %v5701 = vld [vmem:[#allocation2 + $0x650] sm:$0xff]
          %v5702 = vld [vmem:[#allocation2 + $0x658] sm:$0xff]
          %v5703 = vld [vmem:[#allocation2 + $0x660] sm:$0xff]
          %v5704 = vld [vmem:[#allocation2 + $0x668] sm:$0xff]
          %v5705 = vld [vmem:[#allocation2 + $0x670] sm:$0xff]
          %v5706 = vld [vmem:[#allocation2 + $0x678] sm:$0xff]
          %v5707 = vld [vmem:[#allocation2 + $0x680] sm:$0xff]
          %v5708 = vld [vmem:[#allocation2 + $0x688] sm:$0xff]
          %v5709 = vld [vmem:[#allocation2 + $0x690] sm:$0xff]
          %v5710 = vld [vmem:[#allocation2 + $0x698] sm:$0xff]
          %v5711 = vld [vmem:[#allocation2 + $0x6a0] sm:$0xff]
          %v5712 = vld [vmem:[#allocation2 + $0x6a8] sm:$0xff]
          %v5713 = vld [vmem:[#allocation2 + $0x6b0] sm:$0xff]
          %v5714 = vld [vmem:[#allocation2 + $0x6b8] sm:$0xff]
          %v5715 = vld [vmem:[#allocation2 + $0x6c0] sm:$0xff]
          %v5716 = vld [vmem:[#allocation2 + $0x6c8] sm:$0xff]
          %v5717 = vld [vmem:[#allocation2 + $0x6d0] sm:$0xff]
          %v5718 = vld [vmem:[#allocation2 + $0x6d8] sm:$0xff]
          %v5719 = vld [vmem:[#allocation2 + $0x6e0] sm:$0xff]
          %v5720 = vld [vmem:[#allocation2 + $0x6e8] sm:$0xff]
          %v5721 = vld [vmem:[#allocation2 + $0x6f0] sm:$0xff]
          %v5722 = vld [vmem:[#allocation2 + $0x6f8] sm:$0xff]
          %v5723 = vld [vmem:[#allocation2 + $0x700] sm:$0xff]
          %v5724 = vld [vmem:[#allocation2 + $0x708] sm:$0xff]
          %v5725 = vld [vmem:[#allocation2 + $0x710] sm:$0xff]
          %v5726 = vld [vmem:[#allocation2 + $0x718] sm:$0xff]
          %v5727 = vld [vmem:[#allocation2 + $0x720] sm:$0xff]
          %v5728 = vld [vmem:[#allocation2 + $0x728] sm:$0xff]
          %v5729 = vld [vmem:[#allocation2 + $0x730] sm:$0xff]
          %v5730 = vld [vmem:[#allocation2 + $0x738] sm:$0xff]
          %v5731 = vld [vmem:[#allocation2 + $0x740] sm:$0xff]
          %v5732 = vld [vmem:[#allocation2 + $0x748] sm:$0xff]
          %v5733 = vld [vmem:[#allocation2 + $0x750] sm:$0xff]
          %v5734 = vld [vmem:[#allocation2 + $0x758] sm:$0xff]
          %v5735 = vld [vmem:[#allocation2 + $0x760] sm:$0xff]
          %v5736 = vld [vmem:[#allocation2 + $0x768] sm:$0xff]
          %v5737 = vld [vmem:[#allocation2 + $0x770] sm:$0xff]
          %v5738 = vld [vmem:[#allocation2 + $0x778] sm:$0xff]
          %v5739 = vld [vmem:[#allocation2 + $0x780] sm:$0xff]
          %v5740 = vld [vmem:[#allocation2 + $0x788] sm:$0xff]
          %v5741 = vld [vmem:[#allocation2 + $0x790] sm:$0xff]
          %v5742 = vld [vmem:[#allocation2 + $0x798] sm:$0xff]
          %v5743 = vld [vmem:[#allocation2 + $0x7a0] sm:$0xff]
          %v5744 = vld [vmem:[#allocation2 + $0x7a8] sm:$0xff]
          %v5745 = vld [vmem:[#allocation2 + $0x7b0] sm:$0xff]
          %v5746 = vld [vmem:[#allocation2 + $0x7b8] sm:$0xff]
          %v5747 = vld [vmem:[#allocation2 + $0x7c0] sm:$0xff]
          %v5748 = vld [vmem:[#allocation2 + $0x7c8] sm:$0xff]
          %v5749 = vld [vmem:[#allocation2 + $0x7d0] sm:$0xff]
          %v5750 = vld [vmem:[#allocation2 + $0x7d8] sm:$0xff]
          %v5751 = vld [vmem:[#allocation2 + $0x7e0] sm:$0xff]
          %v5752 = vld [vmem:[#allocation2 + $0x7e8] sm:$0xff]
          %v5753 = vld [vmem:[#allocation2 + $0x7f0] sm:$0xff]
          %v5754 = vld [vmem:[#allocation2 + $0x7f8] sm:$0xff]
          %v5755 = vld [vmem:[#allocation2 + $0x800] sm:$0xff]
          %v5756 = vld [vmem:[#allocation2 + $0x808] sm:$0xff]
          %v5757 = vld [vmem:[#allocation2 + $0x810] sm:$0xff]
          %v5758 = vld [vmem:[#allocation2 + $0x818] sm:$0xff]
          %v5759 = vld [vmem:[#allocation2 + $0x820] sm:$0xff]
          %v5760 = vld [vmem:[#allocation2 + $0x828] sm:$0xff]
          %v5761 = vld [vmem:[#allocation2 + $0x830] sm:$0xff]
          %v5762 = vld [vmem:[#allocation2 + $0x838] sm:$0xff]
          %v5763 = vld [vmem:[#allocation2 + $0x840] sm:$0xff]
          %v5764 = vld [vmem:[#allocation2 + $0x848] sm:$0xff]
          %v5765 = vld [vmem:[#allocation2 + $0x850] sm:$0xff]
          %v5766 = vld [vmem:[#allocation2 + $0x858] sm:$0xff]
          %v5767 = vld [vmem:[#allocation2 + $0x860] sm:$0xff]
          %v5768 = vld [vmem:[#allocation2 + $0x868] sm:$0xff]
          %v5769 = vld [vmem:[#allocation2 + $0x870] sm:$0xff]
          %v5770 = vld [vmem:[#allocation2 + $0x878] sm:$0xff]
          %v5771 = vld [vmem:[#allocation2 + $0x880] sm:$0xff]
          %v5772 = vld [vmem:[#allocation2 + $0x888] sm:$0xff]
          %v5773 = vld [vmem:[#allocation2 + $0x890] sm:$0xff]
          %v5774 = vld [vmem:[#allocation2 + $0x898] sm:$0xff]
          %v5775 = vld [vmem:[#allocation2 + $0x8a0] sm:$0xff]
          %v5776 = vld [vmem:[#allocation2 + $0x8a8] sm:$0xff]
          %v5777 = vld [vmem:[#allocation2 + $0x8b0] sm:$0xff]
          %v5778 = vld [vmem:[#allocation2 + $0x8b8] sm:$0xff]
          %v5779 = vld [vmem:[#allocation2 + $0x8c0] sm:$0xff]
          %v5780 = vld [vmem:[#allocation2 + $0x8c8] sm:$0xff]
          %v5781 = vld [vmem:[#allocation2 + $0x8d0] sm:$0xff]
          %v5782 = vld [vmem:[#allocation2 + $0x8d8] sm:$0xff]
          %v5783 = vld [vmem:[#allocation2 + $0x8e0] sm:$0xff]
          %v5784 = vld [vmem:[#allocation2 + $0x8e8] sm:$0xff]
          %v5785 = vld [vmem:[#allocation2 + $0x8f0] sm:$0xff]
          %v5786 = vld [vmem:[#allocation2 + $0x8f8] sm:$0xff]
          %v5787 = vld [vmem:[#allocation2 + $0x900] sm:$0xff]
          %v5788 = vld [vmem:[#allocation2 + $0x908] sm:$0xff]
          %v5789 = vld [vmem:[#allocation2 + $0x910] sm:$0xff]
          %v5790 = vld [vmem:[#allocation2 + $0x918] sm:$0xff]
          %v5791 = vld [vmem:[#allocation2 + $0x920] sm:$0xff]
          %v5792 = vld [vmem:[#allocation2 + $0x928] sm:$0xff]
          %v5793 = vld [vmem:[#allocation2 + $0x930] sm:$0xff]
          %v5794 = vld [vmem:[#allocation2 + $0x938] sm:$0xff]
          %v5795 = vld [vmem:[#allocation2 + $0x940] sm:$0xff]
          %v5796 = vld [vmem:[#allocation2 + $0x948] sm:$0xff]
          %v5797 = vld [vmem:[#allocation2 + $0x950] sm:$0xff]
          %v5798 = vld [vmem:[#allocation2 + $0x958] sm:$0xff]
          %v5799 = vld [vmem:[#allocation2 + $0x960] sm:$0xff]
          %v5800 = vld [vmem:[#allocation2 + $0x968] sm:$0xff]
          %v5801 = vld [vmem:[#allocation2 + $0x970] sm:$0xff]
          %v5802 = vld [vmem:[#allocation2 + $0x978] sm:$0xff]
          %v5803 = vld [vmem:[#allocation2 + $0x980] sm:$0xff]
          %v5804 = vld [vmem:[#allocation2 + $0x988] sm:$0xff]
          %v5805 = vld [vmem:[#allocation2 + $0x990] sm:$0xff]
          %v5806 = vld [vmem:[#allocation2 + $0x998] sm:$0xff]
          %v5807 = vld [vmem:[#allocation2 + $0x9a0] sm:$0xff]
          %v5808 = vld [vmem:[#allocation2 + $0x9a8] sm:$0xff]
          %v5809 = vld [vmem:[#allocation2 + $0x9b0] sm:$0xff]
          %v5810 = vld [vmem:[#allocation2 + $0x9b8] sm:$0xff]
          %v5811 = vld [vmem:[#allocation2 + $0x9c0] sm:$0xff]
          %v5812 = vld [vmem:[#allocation2 + $0x9c8] sm:$0xff]
          %v5813 = vld [vmem:[#allocation2 + $0x9d0] sm:$0xff]
          %v5814 = vld [vmem:[#allocation2 + $0x9d8] sm:$0xff]
          %v5815 = vld [vmem:[#allocation2 + $0x9e0] sm:$0xff]
          %v5816 = vld [vmem:[#allocation2 + $0x9e8] sm:$0xff]
          %v5817 = vld [vmem:[#allocation2 + $0x9f0] sm:$0xff]
          %v5818 = vld [vmem:[#allocation2 + $0x9f8] sm:$0xff]
          %v5819 = vld [vmem:[#allocation2 + $0xa00] sm:$0xff]
          %v5820 = vld [vmem:[#allocation2 + $0xa08] sm:$0xff]
          %v5821 = vld [vmem:[#allocation2 + $0xa10] sm:$0xff]
          %v5822 = vld [vmem:[#allocation2 + $0xa18] sm:$0xff]
          %v5823 = vld [vmem:[#allocation2 + $0xa20] sm:$0xff]
          %v5824 = vld [vmem:[#allocation2 + $0xa28] sm:$0xff]
          %v5825 = vld [vmem:[#allocation2 + $0xa30] sm:$0xff]
          %v5826 = vld [vmem:[#allocation2 + $0xa38] sm:$0xff]
          %v5827 = vld [vmem:[#allocation2 + $0xa40] sm:$0xff]
          %v5828 = vld [vmem:[#allocation2 + $0xa48] sm:$0xff]
          %v5829 = vld [vmem:[#allocation2 + $0xa50] sm:$0xff]
          %v5830 = vld [vmem:[#allocation2 + $0xa58] sm:$0xff]
          %v5831 = vld [vmem:[#allocation2 + $0xa60] sm:$0xff]
          %v5832 = vld [vmem:[#allocation2 + $0xa68] sm:$0xff]
          %v5833 = vld [vmem:[#allocation2 + $0xa70] sm:$0xff]
          %v5834 = vld [vmem:[#allocation2 + $0xa78] sm:$0xff]
          %v5835 = vld [vmem:[#allocation2 + $0xa80] sm:$0xff]
          %v5836 = vld [vmem:[#allocation2 + $0xa88] sm:$0xff]
          %v5837 = vld [vmem:[#allocation2 + $0xa90] sm:$0xff]
          %v5838 = vld [vmem:[#allocation2 + $0xa98] sm:$0xff]
          %v5839 = vld [vmem:[#allocation2 + $0xaa0] sm:$0xff]
          %v5840 = vld [vmem:[#allocation2 + $0xaa8] sm:$0xff]
          %v5841 = vld [vmem:[#allocation2 + $0xab0] sm:$0xff]
          %v5842 = vld [vmem:[#allocation2 + $0xab8] sm:$0xff]
          %v5843 = vld [vmem:[#allocation2 + $0xac0] sm:$0xff]
          %v5844 = vld [vmem:[#allocation2 + $0xac8] sm:$0xff]
          %v5845 = vld [vmem:[#allocation2 + $0xad0] sm:$0xff]
          %v5846 = vld [vmem:[#allocation2 + $0xad8] sm:$0xff]
          %v5847 = vld [vmem:[#allocation2 + $0xae0] sm:$0xff]
          %v5848 = vld [vmem:[#allocation2 + $0xae8] sm:$0xff]
          %v5849 = vld [vmem:[#allocation2 + $0xaf0] sm:$0xff]
          %v5850 = vld [vmem:[#allocation2 + $0xaf8] sm:$0xff]
          %v5851 = vld [vmem:[#allocation2 + $0xb00] sm:$0xff]
          %v5852 = vld [vmem:[#allocation2 + $0xb08] sm:$0xff]
          %v5853 = vld [vmem:[#allocation2 + $0xb10] sm:$0xff]
          %v5854 = vld [vmem:[#allocation2 + $0xb18] sm:$0xff]
          %v5855 = vld [vmem:[#allocation2 + $0xb20] sm:$0xff]
          %v5856 = vld [vmem:[#allocation2 + $0xb28] sm:$0xff]
          %v5857 = vld [vmem:[#allocation2 + $0xb30] sm:$0xff]
          %v5858 = vld [vmem:[#allocation2 + $0xb38] sm:$0xff]
          %v5859 = vld [vmem:[#allocation2 + $0xb40] sm:$0xff]
          %v5860 = vld [vmem:[#allocation2 + $0xb48] sm:$0xff]
          %v5861 = vld [vmem:[#allocation2 + $0xb50] sm:$0xff]
          %v5862 = vld [vmem:[#allocation2 + $0xb58] sm:$0xff]
          %v5863 = vld [vmem:[#allocation2 + $0xb60] sm:$0xff]
          %v5864 = vld [vmem:[#allocation2 + $0xb68] sm:$0xff]
          %v5865 = vld [vmem:[#allocation2 + $0xb70] sm:$0xff]
          %v5866 = vld [vmem:[#allocation2 + $0xb78] sm:$0xff]
          %v5867 = vld [vmem:[#allocation2 + $0xb80] sm:$0xff]
          %v5868 = vld [vmem:[#allocation2 + $0xb88] sm:$0xff]
          %v5869 = vld [vmem:[#allocation2 + $0xb90] sm:$0xff]
          %v5870 = vld [vmem:[#allocation2 + $0xb98] sm:$0xff]
          %v5871 = vld [vmem:[#allocation2 + $0xba0] sm:$0xff]
          %v5872 = vld [vmem:[#allocation2 + $0xba8] sm:$0xff]
          %v5873 = vld [vmem:[#allocation2 + $0xbb0] sm:$0xff]
          %v5874 = vld [vmem:[#allocation2 + $0xbb8] sm:$0xff]
          %v5875 = vld [vmem:[#allocation2 + $0xbc0] sm:$0xff]
          %v5876 = vld [vmem:[#allocation2 + $0xbc8] sm:$0xff]
          %v5877 = vld [vmem:[#allocation2 + $0xbd0] sm:$0xff]
          %v5878 = vld [vmem:[#allocation2 + $0xbd8] sm:$0xff]
          %v5879 = vld [vmem:[#allocation2 + $0xbe0] sm:$0xff]
          %v5880 = vld [vmem:[#allocation2 + $0xbe8] sm:$0xff]
          %v5881 = vld [vmem:[#allocation2 + $0xbf0] sm:$0xff]
          %v5882 = vld [vmem:[#allocation2 + $0xbf8] sm:$0xff]
          %v5883 = vld [vmem:[%s262] sm:$0x3f]
          %v5885 = vlaneseq
          %v5886 = vshrl.u32 %v5885, 7
          %v5887 = vsub.s32 0, %v5886
          %v5888 = vrot.slane %v5883, %v5887
          %v5889 = vlaneseq
          %v5890 = vshrl.u32 %v5889, 7
          %v5891 = vsub.s32 1, %v5890
          %v5892 = vrot.slane %v5883, %v5891
          %v5893 = vlaneseq
          %v5894 = vshrl.u32 %v5893, 7
          %v5895 = vsub.s32 2, %v5894
          %v5896 = vrot.slane %v5883, %v5895
          %v5897 = vlaneseq
          %v5898 = vshrl.u32 %v5897, 7
          %v5899 = vsub.s32 3, %v5898
          %v5900 = vrot.slane %v5883, %v5899
          %v5901 = vlaneseq
          %v5902 = vshrl.u32 %v5901, 7
          %v5903 = vsub.s32 4, %v5902
          %v5904 = vrot.slane %v5883, %v5903
          %v5905 = vlaneseq
          %v5906 = vshrl.u32 %v5905, 7
          %v5907 = vsub.s32 5, %v5906
          %v5908 = vrot.slane %v5883, %v5907
          %v5915 = vadd.f32 %v5499, %v5888
          %v5916 = vadd.f32 %v5500, %v5892
          %v5917 = vadd.f32 %v5501, %v5896
          %v5918 = vadd.f32 %v5502, %v5900
          %v5919 = vadd.f32 %v5503, %v5904
          %v5920 = vadd.f32 %v5504, %v5908
          %v5921 = vadd.f32 %v5505, %v5888
          %v5922 = vadd.f32 %v5506, %v5892
          %v5923 = vadd.f32 %v5507, %v5896
          %v5924 = vadd.f32 %v5508, %v5900
          %v5925 = vadd.f32 %v5509, %v5904
          %v5926 = vadd.f32 %v5510, %v5908
          %v5927 = vadd.f32 %v5511, %v5888
          %v5928 = vadd.f32 %v5512, %v5892
          %v5929 = vadd.f32 %v5513, %v5896
          %v5930 = vadd.f32 %v5514, %v5900
          %v5931 = vadd.f32 %v5515, %v5904
          %v5932 = vadd.f32 %v5516, %v5908
          %v5933 = vadd.f32 %v5517, %v5888
          %v5934 = vadd.f32 %v5518, %v5892
          %v5935 = vadd.f32 %v5519, %v5896
          %v5936 = vadd.f32 %v5520, %v5900
          %v5937 = vadd.f32 %v5521, %v5904
          %v5938 = vadd.f32 %v5522, %v5908
          %v5939 = vadd.f32 %v5523, %v5888
          %v5940 = vadd.f32 %v5524, %v5892
          %v5941 = vadd.f32 %v5525, %v5896
          %v5942 = vadd.f32 %v5526, %v5900
          %v5943 = vadd.f32 %v5527, %v5904
          %v5944 = vadd.f32 %v5528, %v5908
          %v5945 = vadd.f32 %v5529, %v5888
          %v5946 = vadd.f32 %v5530, %v5892
          %v5947 = vadd.f32 %v5531, %v5896
          %v5948 = vadd.f32 %v5532, %v5900
          %v5949 = vadd.f32 %v5533, %v5904
          %v5950 = vadd.f32 %v5534, %v5908
          %v5951 = vadd.f32 %v5535, %v5888
          %v5952 = vadd.f32 %v5536, %v5892
          %v5953 = vadd.f32 %v5537, %v5896
          %v5954 = vadd.f32 %v5538, %v5900
          %v5955 = vadd.f32 %v5539, %v5904
          %v5956 = vadd.f32 %v5540, %v5908
          %v5957 = vadd.f32 %v5541, %v5888
          %v5958 = vadd.f32 %v5542, %v5892
          %v5959 = vadd.f32 %v5543, %v5896
          %v5960 = vadd.f32 %v5544, %v5900
          %v5961 = vadd.f32 %v5545, %v5904
          %v5962 = vadd.f32 %v5546, %v5908
          %v5963 = vadd.f32 %v5547, %v5888
          %v5964 = vadd.f32 %v5548, %v5892
          %v5965 = vadd.f32 %v5549, %v5896
          %v5966 = vadd.f32 %v5550, %v5900
          %v5967 = vadd.f32 %v5551, %v5904
          %v5968 = vadd.f32 %v5552, %v5908
          %v5969 = vadd.f32 %v5553, %v5888
          %v5970 = vadd.f32 %v5554, %v5892
          %v5971 = vadd.f32 %v5555, %v5896
          %v5972 = vadd.f32 %v5556, %v5900
          %v5973 = vadd.f32 %v5557, %v5904
          %v5974 = vadd.f32 %v5558, %v5908
          %v5975 = vadd.f32 %v5559, %v5888
          %v5976 = vadd.f32 %v5560, %v5892
          %v5977 = vadd.f32 %v5561, %v5896
          %v5978 = vadd.f32 %v5562, %v5900
          %v5979 = vadd.f32 %v5563, %v5904
          %v5980 = vadd.f32 %v5564, %v5908
          %v5981 = vadd.f32 %v5565, %v5888
          %v5982 = vadd.f32 %v5566, %v5892
          %v5983 = vadd.f32 %v5567, %v5896
          %v5984 = vadd.f32 %v5568, %v5900
          %v5985 = vadd.f32 %v5569, %v5904
          %v5986 = vadd.f32 %v5570, %v5908
          %v5987 = vadd.f32 %v5571, %v5888
          %v5988 = vadd.f32 %v5572, %v5892
          %v5989 = vadd.f32 %v5573, %v5896
          %v5990 = vadd.f32 %v5574, %v5900
          %v5991 = vadd.f32 %v5575, %v5904
          %v5992 = vadd.f32 %v5576, %v5908
          %v5993 = vadd.f32 %v5577, %v5888
          %v5994 = vadd.f32 %v5578, %v5892
          %v5995 = vadd.f32 %v5579, %v5896
          %v5996 = vadd.f32 %v5580, %v5900
          %v5997 = vadd.f32 %v5581, %v5904
          %v5998 = vadd.f32 %v5582, %v5908
          %v5999 = vadd.f32 %v5583, %v5888
          %v6000 = vadd.f32 %v5584, %v5892
          %v6001 = vadd.f32 %v5585, %v5896
          %v6002 = vadd.f32 %v5586, %v5900
          %v6003 = vadd.f32 %v5587, %v5904
          %v6004 = vadd.f32 %v5588, %v5908
          %v6005 = vadd.f32 %v5589, %v5888
          %v6006 = vadd.f32 %v5590, %v5892
          %v6007 = vadd.f32 %v5591, %v5896
          %v6008 = vadd.f32 %v5592, %v5900
          %v6009 = vadd.f32 %v5593, %v5904
          %v6010 = vadd.f32 %v5594, %v5908
          %v6011 = vadd.f32 %v5595, %v5888
          %v6012 = vadd.f32 %v5596, %v5892
          %v6013 = vadd.f32 %v5597, %v5896
          %v6014 = vadd.f32 %v5598, %v5900
          %v6015 = vadd.f32 %v5599, %v5904
          %v6016 = vadd.f32 %v5600, %v5908
          %v6017 = vadd.f32 %v5601, %v5888
          %v6018 = vadd.f32 %v5602, %v5892
          %v6019 = vadd.f32 %v5603, %v5896
          %v6020 = vadd.f32 %v5604, %v5900
          %v6021 = vadd.f32 %v5605, %v5904
          %v6022 = vadd.f32 %v5606, %v5908
          %v6023 = vadd.f32 %v5607, %v5888
          %v6024 = vadd.f32 %v5608, %v5892
          %v6025 = vadd.f32 %v5609, %v5896
          %v6026 = vadd.f32 %v5610, %v5900
          %v6027 = vadd.f32 %v5611, %v5904
          %v6028 = vadd.f32 %v5612, %v5908
          %v6029 = vadd.f32 %v5613, %v5888
          %v6030 = vadd.f32 %v5614, %v5892
          %v6031 = vadd.f32 %v5615, %v5896
          %v6032 = vadd.f32 %v5616, %v5900
          %v6033 = vadd.f32 %v5617, %v5904
          %v6034 = vadd.f32 %v5618, %v5908
          %v6035 = vadd.f32 %v5619, %v5888
          %v6036 = vadd.f32 %v5620, %v5892
          %v6037 = vadd.f32 %v5621, %v5896
          %v6038 = vadd.f32 %v5622, %v5900
          %v6039 = vadd.f32 %v5623, %v5904
          %v6040 = vadd.f32 %v5624, %v5908
          %v6041 = vadd.f32 %v5625, %v5888
          %v6042 = vadd.f32 %v5626, %v5892
          %v6043 = vadd.f32 %v5627, %v5896
          %v6044 = vadd.f32 %v5628, %v5900
          %v6045 = vadd.f32 %v5629, %v5904
          %v6046 = vadd.f32 %v5630, %v5908
          %v6047 = vadd.f32 %v5631, %v5888
          %v6048 = vadd.f32 %v5632, %v5892
          %v6049 = vadd.f32 %v5633, %v5896
          %v6050 = vadd.f32 %v5634, %v5900
          %v6051 = vadd.f32 %v5635, %v5904
          %v6052 = vadd.f32 %v5636, %v5908
          %v6053 = vadd.f32 %v5637, %v5888
          %v6054 = vadd.f32 %v5638, %v5892
          %v6055 = vadd.f32 %v5639, %v5896
          %v6056 = vadd.f32 %v5640, %v5900
          %v6057 = vadd.f32 %v5641, %v5904
          %v6058 = vadd.f32 %v5642, %v5908
          %v6059 = vadd.f32 %v5643, %v5888
          %v6060 = vadd.f32 %v5644, %v5892
          %v6061 = vadd.f32 %v5645, %v5896
          %v6062 = vadd.f32 %v5646, %v5900
          %v6063 = vadd.f32 %v5647, %v5904
          %v6064 = vadd.f32 %v5648, %v5908
          %v6065 = vadd.f32 %v5649, %v5888
          %v6066 = vadd.f32 %v5650, %v5892
          %v6067 = vadd.f32 %v5651, %v5896
          %v6068 = vadd.f32 %v5652, %v5900
          %v6069 = vadd.f32 %v5653, %v5904
          %v6070 = vadd.f32 %v5654, %v5908
          %v6071 = vadd.f32 %v5655, %v5888
          %v6072 = vadd.f32 %v5656, %v5892
          %v6073 = vadd.f32 %v5657, %v5896
          %v6074 = vadd.f32 %v5658, %v5900
          %v6075 = vadd.f32 %v5659, %v5904
          %v6076 = vadd.f32 %v5660, %v5908
          %v6077 = vadd.f32 %v5661, %v5888
          %v6078 = vadd.f32 %v5662, %v5892
          %v6079 = vadd.f32 %v5663, %v5896
          %v6080 = vadd.f32 %v5664, %v5900
          %v6081 = vadd.f32 %v5665, %v5904
          %v6082 = vadd.f32 %v5666, %v5908
          %v6083 = vadd.f32 %v5667, %v5888
          %v6084 = vadd.f32 %v5668, %v5892
          %v6085 = vadd.f32 %v5669, %v5896
          %v6086 = vadd.f32 %v5670, %v5900
          %v6087 = vadd.f32 %v5671, %v5904
          %v6088 = vadd.f32 %v5672, %v5908
          %v6089 = vadd.f32 %v5673, %v5888
          %v6090 = vadd.f32 %v5674, %v5892
          %v6091 = vadd.f32 %v5675, %v5896
          %v6092 = vadd.f32 %v5676, %v5900
          %v6093 = vadd.f32 %v5677, %v5904
          %v6094 = vadd.f32 %v5678, %v5908
          %v6095 = vadd.f32 %v5679, %v5888
          %v6096 = vadd.f32 %v5680, %v5892
          %v6097 = vadd.f32 %v5681, %v5896
          %v6098 = vadd.f32 %v5682, %v5900
          %v6099 = vadd.f32 %v5683, %v5904
          %v6100 = vadd.f32 %v5684, %v5908
          %v6101 = vadd.f32 %v5685, %v5888
          %v6102 = vadd.f32 %v5686, %v5892
          %v6103 = vadd.f32 %v5687, %v5896
          %v6104 = vadd.f32 %v5688, %v5900
          %v6105 = vadd.f32 %v5689, %v5904
          %v6106 = vadd.f32 %v5690, %v5908
          %v6107 = vadd.f32 %v5691, %v5888
          %v6108 = vadd.f32 %v5692, %v5892
          %v6109 = vadd.f32 %v5693, %v5896
          %v6110 = vadd.f32 %v5694, %v5900
          %v6111 = vadd.f32 %v5695, %v5904
          %v6112 = vadd.f32 %v5696, %v5908
          %v6113 = vadd.f32 %v5697, %v5888
          %v6114 = vadd.f32 %v5698, %v5892
          %v6115 = vadd.f32 %v5699, %v5896
          %v6116 = vadd.f32 %v5700, %v5900
          %v6117 = vadd.f32 %v5701, %v5904
          %v6118 = vadd.f32 %v5702, %v5908
          %v6119 = vadd.f32 %v5703, %v5888
          %v6120 = vadd.f32 %v5704, %v5892
          %v6121 = vadd.f32 %v5705, %v5896
          %v6122 = vadd.f32 %v5706, %v5900
          %v6123 = vadd.f32 %v5707, %v5904
          %v6124 = vadd.f32 %v5708, %v5908
          %v6125 = vadd.f32 %v5709, %v5888
          %v6126 = vadd.f32 %v5710, %v5892
          %v6127 = vadd.f32 %v5711, %v5896
          %v6128 = vadd.f32 %v5712, %v5900
          %v6129 = vadd.f32 %v5713, %v5904
          %v6130 = vadd.f32 %v5714, %v5908
          %v6131 = vadd.f32 %v5715, %v5888
          %v6132 = vadd.f32 %v5716, %v5892
          %v6133 = vadd.f32 %v5717, %v5896
          %v6134 = vadd.f32 %v5718, %v5900
          %v6135 = vadd.f32 %v5719, %v5904
          %v6136 = vadd.f32 %v5720, %v5908
          %v6137 = vadd.f32 %v5721, %v5888
          %v6138 = vadd.f32 %v5722, %v5892
          %v6139 = vadd.f32 %v5723, %v5896
          %v6140 = vadd.f32 %v5724, %v5900
          %v6141 = vadd.f32 %v5725, %v5904
          %v6142 = vadd.f32 %v5726, %v5908
          %v6143 = vadd.f32 %v5727, %v5888
          %v6144 = vadd.f32 %v5728, %v5892
          %v6145 = vadd.f32 %v5729, %v5896
          %v6146 = vadd.f32 %v5730, %v5900
          %v6147 = vadd.f32 %v5731, %v5904
          %v6148 = vadd.f32 %v5732, %v5908
          %v6149 = vadd.f32 %v5733, %v5888
          %v6150 = vadd.f32 %v5734, %v5892
          %v6151 = vadd.f32 %v5735, %v5896
          %v6152 = vadd.f32 %v5736, %v5900
          %v6153 = vadd.f32 %v5737, %v5904
          %v6154 = vadd.f32 %v5738, %v5908
          %v6155 = vadd.f32 %v5739, %v5888
          %v6156 = vadd.f32 %v5740, %v5892
          %v6157 = vadd.f32 %v5741, %v5896
          %v6158 = vadd.f32 %v5742, %v5900
          %v6159 = vadd.f32 %v5743, %v5904
          %v6160 = vadd.f32 %v5744, %v5908
          %v6161 = vadd.f32 %v5745, %v5888
          %v6162 = vadd.f32 %v5746, %v5892
          %v6163 = vadd.f32 %v5747, %v5896
          %v6164 = vadd.f32 %v5748, %v5900
          %v6165 = vadd.f32 %v5749, %v5904
          %v6166 = vadd.f32 %v5750, %v5908
          %v6167 = vadd.f32 %v5751, %v5888
          %v6168 = vadd.f32 %v5752, %v5892
          %v6169 = vadd.f32 %v5753, %v5896
          %v6170 = vadd.f32 %v5754, %v5900
          %v6171 = vadd.f32 %v5755, %v5904
          %v6172 = vadd.f32 %v5756, %v5908
          %v6173 = vadd.f32 %v5757, %v5888
          %v6174 = vadd.f32 %v5758, %v5892
          %v6175 = vadd.f32 %v5759, %v5896
          %v6176 = vadd.f32 %v5760, %v5900
          %v6177 = vadd.f32 %v5761, %v5904
          %v6178 = vadd.f32 %v5762, %v5908
          %v6179 = vadd.f32 %v5763, %v5888
          %v6180 = vadd.f32 %v5764, %v5892
          %v6181 = vadd.f32 %v5765, %v5896
          %v6182 = vadd.f32 %v5766, %v5900
          %v6183 = vadd.f32 %v5767, %v5904
          %v6184 = vadd.f32 %v5768, %v5908
          %v6185 = vadd.f32 %v5769, %v5888
          %v6186 = vadd.f32 %v5770, %v5892
          %v6187 = vadd.f32 %v5771, %v5896
          %v6188 = vadd.f32 %v5772, %v5900
          %v6189 = vadd.f32 %v5773, %v5904
          %v6190 = vadd.f32 %v5774, %v5908
          %v6191 = vadd.f32 %v5775, %v5888
          %v6192 = vadd.f32 %v5776, %v5892
          %v6193 = vadd.f32 %v5777, %v5896
          %v6194 = vadd.f32 %v5778, %v5900
          %v6195 = vadd.f32 %v5779, %v5904
          %v6196 = vadd.f32 %v5780, %v5908
          %v6197 = vadd.f32 %v5781, %v5888
          %v6198 = vadd.f32 %v5782, %v5892
          %v6199 = vadd.f32 %v5783, %v5896
          %v6200 = vadd.f32 %v5784, %v5900
          %v6201 = vadd.f32 %v5785, %v5904
          %v6202 = vadd.f32 %v5786, %v5908
          %v6203 = vadd.f32 %v5787, %v5888
          %v6204 = vadd.f32 %v5788, %v5892
          %v6205 = vadd.f32 %v5789, %v5896
          %v6206 = vadd.f32 %v5790, %v5900
          %v6207 = vadd.f32 %v5791, %v5904
          %v6208 = vadd.f32 %v5792, %v5908
          %v6209 = vadd.f32 %v5793, %v5888
          %v6210 = vadd.f32 %v5794, %v5892
          %v6211 = vadd.f32 %v5795, %v5896
          %v6212 = vadd.f32 %v5796, %v5900
          %v6213 = vadd.f32 %v5797, %v5904
          %v6214 = vadd.f32 %v5798, %v5908
          %v6215 = vadd.f32 %v5799, %v5888
          %v6216 = vadd.f32 %v5800, %v5892
          %v6217 = vadd.f32 %v5801, %v5896
          %v6218 = vadd.f32 %v5802, %v5900
          %v6219 = vadd.f32 %v5803, %v5904
          %v6220 = vadd.f32 %v5804, %v5908
          %v6221 = vadd.f32 %v5805, %v5888
          %v6222 = vadd.f32 %v5806, %v5892
          %v6223 = vadd.f32 %v5807, %v5896
          %v6224 = vadd.f32 %v5808, %v5900
          %v6225 = vadd.f32 %v5809, %v5904
          %v6226 = vadd.f32 %v5810, %v5908
          %v6227 = vadd.f32 %v5811, %v5888
          %v6228 = vadd.f32 %v5812, %v5892
          %v6229 = vadd.f32 %v5813, %v5896
          %v6230 = vadd.f32 %v5814, %v5900
          %v6231 = vadd.f32 %v5815, %v5904
          %v6232 = vadd.f32 %v5816, %v5908
          %v6233 = vadd.f32 %v5817, %v5888
          %v6234 = vadd.f32 %v5818, %v5892
          %v6235 = vadd.f32 %v5819, %v5896
          %v6236 = vadd.f32 %v5820, %v5900
          %v6237 = vadd.f32 %v5821, %v5904
          %v6238 = vadd.f32 %v5822, %v5908
          %v6239 = vadd.f32 %v5823, %v5888
          %v6240 = vadd.f32 %v5824, %v5892
          %v6241 = vadd.f32 %v5825, %v5896
          %v6242 = vadd.f32 %v5826, %v5900
          %v6243 = vadd.f32 %v5827, %v5904
          %v6244 = vadd.f32 %v5828, %v5908
          %v6245 = vadd.f32 %v5829, %v5888
          %v6246 = vadd.f32 %v5830, %v5892
          %v6247 = vadd.f32 %v5831, %v5896
          %v6248 = vadd.f32 %v5832, %v5900
          %v6249 = vadd.f32 %v5833, %v5904
          %v6250 = vadd.f32 %v5834, %v5908
          %v6251 = vadd.f32 %v5835, %v5888
          %v6252 = vadd.f32 %v5836, %v5892
          %v6253 = vadd.f32 %v5837, %v5896
          %v6254 = vadd.f32 %v5838, %v5900
          %v6255 = vadd.f32 %v5839, %v5904
          %v6256 = vadd.f32 %v5840, %v5908
          %v6257 = vadd.f32 %v5841, %v5888
          %v6258 = vadd.f32 %v5842, %v5892
          %v6259 = vadd.f32 %v5843, %v5896
          %v6260 = vadd.f32 %v5844, %v5900
          %v6261 = vadd.f32 %v5845, %v5904
          %v6262 = vadd.f32 %v5846, %v5908
          %v6263 = vadd.f32 %v5847, %v5888
          %v6264 = vadd.f32 %v5848, %v5892
          %v6265 = vadd.f32 %v5849, %v5896
          %v6266 = vadd.f32 %v5850, %v5900
          %v6267 = vadd.f32 %v5851, %v5904
          %v6268 = vadd.f32 %v5852, %v5908
          %v6269 = vadd.f32 %v5853, %v5888
          %v6270 = vadd.f32 %v5854, %v5892
          %v6271 = vadd.f32 %v5855, %v5896
          %v6272 = vadd.f32 %v5856, %v5900
          %v6273 = vadd.f32 %v5857, %v5904
          %v6274 = vadd.f32 %v5858, %v5908
          %v6275 = vadd.f32 %v5859, %v5888
          %v6276 = vadd.f32 %v5860, %v5892
          %v6277 = vadd.f32 %v5861, %v5896
          %v6278 = vadd.f32 %v5862, %v5900
          %v6279 = vadd.f32 %v5863, %v5904
          %v6280 = vadd.f32 %v5864, %v5908
          %v6281 = vadd.f32 %v5865, %v5888
          %v6282 = vadd.f32 %v5866, %v5892
          %v6283 = vadd.f32 %v5867, %v5896
          %v6284 = vadd.f32 %v5868, %v5900
          %v6285 = vadd.f32 %v5869, %v5904
          %v6286 = vadd.f32 %v5870, %v5908
          %v6287 = vadd.f32 %v5871, %v5888
          %v6288 = vadd.f32 %v5872, %v5892
          %v6289 = vadd.f32 %v5873, %v5896
          %v6290 = vadd.f32 %v5874, %v5900
          %v6291 = vadd.f32 %v5875, %v5904
          %v6292 = vadd.f32 %v5876, %v5908
          %v6293 = vadd.f32 %v5877, %v5888
          %v6294 = vadd.f32 %v5878, %v5892
          %v6295 = vadd.f32 %v5879, %v5896
          %v6296 = vadd.f32 %v5880, %v5900
          %v6297 = vadd.f32 %v5881, %v5904
          %v6298 = vadd.f32 %v5882, %v5908
          %v6299 = vpack.c.bf16 %v5921, %v5915
          %v6300 = vpack.c.bf16 %v5922, %v5916
          %v6301 = vpack.c.bf16 %v5923, %v5917
          %v6302 = vpack.c.bf16 %v5924, %v5918
          %v6303 = vpack.c.bf16 %v5925, %v5919
          %v6304 = vpack.c.bf16 %v5926, %v5920
          %v6305 = vpack.c.bf16 %v5933, %v5927
          %v6306 = vpack.c.bf16 %v5934, %v5928
          %v6307 = vpack.c.bf16 %v5935, %v5929
          %v6308 = vpack.c.bf16 %v5936, %v5930
          %v6309 = vpack.c.bf16 %v5937, %v5931
          %v6310 = vpack.c.bf16 %v5938, %v5932
          %v6311 = vpack.c.bf16 %v5945, %v5939
          %v6312 = vpack.c.bf16 %v5946, %v5940
          %v6313 = vpack.c.bf16 %v5947, %v5941
          %v6314 = vpack.c.bf16 %v5948, %v5942
          %v6315 = vpack.c.bf16 %v5949, %v5943
          %v6316 = vpack.c.bf16 %v5950, %v5944
          %v6317 = vpack.c.bf16 %v5957, %v5951
          %v6318 = vpack.c.bf16 %v5958, %v5952
          %v6319 = vpack.c.bf16 %v5959, %v5953
          %v6320 = vpack.c.bf16 %v5960, %v5954
          %v6321 = vpack.c.bf16 %v5961, %v5955
          %v6322 = vpack.c.bf16 %v5962, %v5956
          %v6323 = vpack.c.bf16 %v5969, %v5963
          %v6324 = vpack.c.bf16 %v5970, %v5964
          %v6325 = vpack.c.bf16 %v5971, %v5965
          %v6326 = vpack.c.bf16 %v5972, %v5966
          %v6327 = vpack.c.bf16 %v5973, %v5967
          %v6328 = vpack.c.bf16 %v5974, %v5968
          %v6329 = vpack.c.bf16 %v5981, %v5975
          %v6330 = vpack.c.bf16 %v5982, %v5976
          %v6331 = vpack.c.bf16 %v5983, %v5977
          %v6332 = vpack.c.bf16 %v5984, %v5978
          %v6333 = vpack.c.bf16 %v5985, %v5979
          %v6334 = vpack.c.bf16 %v5986, %v5980
          %v6335 = vpack.c.bf16 %v5993, %v5987
          %v6336 = vpack.c.bf16 %v5994, %v5988
          %v6337 = vpack.c.bf16 %v5995, %v5989
          %v6338 = vpack.c.bf16 %v5996, %v5990
          %v6339 = vpack.c.bf16 %v5997, %v5991
          %v6340 = vpack.c.bf16 %v5998, %v5992
          %v6341 = vpack.c.bf16 %v6005, %v5999
          %v6342 = vpack.c.bf16 %v6006, %v6000
          %v6343 = vpack.c.bf16 %v6007, %v6001
          %v6344 = vpack.c.bf16 %v6008, %v6002
          %v6345 = vpack.c.bf16 %v6009, %v6003
          %v6346 = vpack.c.bf16 %v6010, %v6004
          %v6347 = vpack.c.bf16 %v6017, %v6011
          %v6348 = vpack.c.bf16 %v6018, %v6012
          %v6349 = vpack.c.bf16 %v6019, %v6013
          %v6350 = vpack.c.bf16 %v6020, %v6014
          %v6351 = vpack.c.bf16 %v6021, %v6015
          %v6352 = vpack.c.bf16 %v6022, %v6016
          %v6353 = vpack.c.bf16 %v6029, %v6023
          %v6354 = vpack.c.bf16 %v6030, %v6024
          %v6355 = vpack.c.bf16 %v6031, %v6025
          %v6356 = vpack.c.bf16 %v6032, %v6026
          %v6357 = vpack.c.bf16 %v6033, %v6027
          %v6358 = vpack.c.bf16 %v6034, %v6028
          %v6359 = vpack.c.bf16 %v6041, %v6035
          %v6360 = vpack.c.bf16 %v6042, %v6036
          %v6361 = vpack.c.bf16 %v6043, %v6037
          %v6362 = vpack.c.bf16 %v6044, %v6038
          %v6363 = vpack.c.bf16 %v6045, %v6039
          %v6364 = vpack.c.bf16 %v6046, %v6040
          %v6365 = vpack.c.bf16 %v6053, %v6047
          %v6366 = vpack.c.bf16 %v6054, %v6048
          %v6367 = vpack.c.bf16 %v6055, %v6049
          %v6368 = vpack.c.bf16 %v6056, %v6050
          %v6369 = vpack.c.bf16 %v6057, %v6051
          %v6370 = vpack.c.bf16 %v6058, %v6052
          %v6371 = vpack.c.bf16 %v6065, %v6059
          %v6372 = vpack.c.bf16 %v6066, %v6060
          %v6373 = vpack.c.bf16 %v6067, %v6061
          %v6374 = vpack.c.bf16 %v6068, %v6062
          %v6375 = vpack.c.bf16 %v6069, %v6063
          %v6376 = vpack.c.bf16 %v6070, %v6064
          %v6377 = vpack.c.bf16 %v6077, %v6071
          %v6378 = vpack.c.bf16 %v6078, %v6072
          %v6379 = vpack.c.bf16 %v6079, %v6073
          %v6380 = vpack.c.bf16 %v6080, %v6074
          %v6381 = vpack.c.bf16 %v6081, %v6075
          %v6382 = vpack.c.bf16 %v6082, %v6076
          %v6383 = vpack.c.bf16 %v6089, %v6083
          %v6384 = vpack.c.bf16 %v6090, %v6084
          %v6385 = vpack.c.bf16 %v6091, %v6085
          %v6386 = vpack.c.bf16 %v6092, %v6086
          %v6387 = vpack.c.bf16 %v6093, %v6087
          %v6388 = vpack.c.bf16 %v6094, %v6088
          %v6389 = vpack.c.bf16 %v6101, %v6095
          %v6390 = vpack.c.bf16 %v6102, %v6096
          %v6391 = vpack.c.bf16 %v6103, %v6097
          %v6392 = vpack.c.bf16 %v6104, %v6098
          %v6393 = vpack.c.bf16 %v6105, %v6099
          %v6394 = vpack.c.bf16 %v6106, %v6100
          %v6395 = vpack.c.bf16 %v6113, %v6107
          %v6396 = vpack.c.bf16 %v6114, %v6108
          %v6397 = vpack.c.bf16 %v6115, %v6109
          %v6398 = vpack.c.bf16 %v6116, %v6110
          %v6399 = vpack.c.bf16 %v6117, %v6111
          %v6400 = vpack.c.bf16 %v6118, %v6112
          %v6401 = vpack.c.bf16 %v6125, %v6119
          %v6402 = vpack.c.bf16 %v6126, %v6120
          %v6403 = vpack.c.bf16 %v6127, %v6121
          %v6404 = vpack.c.bf16 %v6128, %v6122
          %v6405 = vpack.c.bf16 %v6129, %v6123
          %v6406 = vpack.c.bf16 %v6130, %v6124
          %v6407 = vpack.c.bf16 %v6137, %v6131
          %v6408 = vpack.c.bf16 %v6138, %v6132
          %v6409 = vpack.c.bf16 %v6139, %v6133
          %v6410 = vpack.c.bf16 %v6140, %v6134
          %v6411 = vpack.c.bf16 %v6141, %v6135
          %v6412 = vpack.c.bf16 %v6142, %v6136
          %v6413 = vpack.c.bf16 %v6149, %v6143
          %v6414 = vpack.c.bf16 %v6150, %v6144
          %v6415 = vpack.c.bf16 %v6151, %v6145
          %v6416 = vpack.c.bf16 %v6152, %v6146
          %v6417 = vpack.c.bf16 %v6153, %v6147
          %v6418 = vpack.c.bf16 %v6154, %v6148
          %v6419 = vpack.c.bf16 %v6161, %v6155
          %v6420 = vpack.c.bf16 %v6162, %v6156
          %v6421 = vpack.c.bf16 %v6163, %v6157
          %v6422 = vpack.c.bf16 %v6164, %v6158
          %v6423 = vpack.c.bf16 %v6165, %v6159
          %v6424 = vpack.c.bf16 %v6166, %v6160
          %v6425 = vpack.c.bf16 %v6173, %v6167
          %v6426 = vpack.c.bf16 %v6174, %v6168
          %v6427 = vpack.c.bf16 %v6175, %v6169
          %v6428 = vpack.c.bf16 %v6176, %v6170
          %v6429 = vpack.c.bf16 %v6177, %v6171
          %v6430 = vpack.c.bf16 %v6178, %v6172
          %v6431 = vpack.c.bf16 %v6185, %v6179
          %v6432 = vpack.c.bf16 %v6186, %v6180
          %v6433 = vpack.c.bf16 %v6187, %v6181
          %v6434 = vpack.c.bf16 %v6188, %v6182
          %v6435 = vpack.c.bf16 %v6189, %v6183
          %v6436 = vpack.c.bf16 %v6190, %v6184
          %v6437 = vpack.c.bf16 %v6197, %v6191
          %v6438 = vpack.c.bf16 %v6198, %v6192
          %v6439 = vpack.c.bf16 %v6199, %v6193
          %v6440 = vpack.c.bf16 %v6200, %v6194
          %v6441 = vpack.c.bf16 %v6201, %v6195
          %v6442 = vpack.c.bf16 %v6202, %v6196
          %v6443 = vpack.c.bf16 %v6209, %v6203
          %v6444 = vpack.c.bf16 %v6210, %v6204
          %v6445 = vpack.c.bf16 %v6211, %v6205
          %v6446 = vpack.c.bf16 %v6212, %v6206
          %v6447 = vpack.c.bf16 %v6213, %v6207
          %v6448 = vpack.c.bf16 %v6214, %v6208
          %v6449 = vpack.c.bf16 %v6221, %v6215
          %v6450 = vpack.c.bf16 %v6222, %v6216
          %v6451 = vpack.c.bf16 %v6223, %v6217
          %v6452 = vpack.c.bf16 %v6224, %v6218
          %v6453 = vpack.c.bf16 %v6225, %v6219
          %v6454 = vpack.c.bf16 %v6226, %v6220
          %v6455 = vpack.c.bf16 %v6233, %v6227
          %v6456 = vpack.c.bf16 %v6234, %v6228
          %v6457 = vpack.c.bf16 %v6235, %v6229
          %v6458 = vpack.c.bf16 %v6236, %v6230
          %v6459 = vpack.c.bf16 %v6237, %v6231
          %v6460 = vpack.c.bf16 %v6238, %v6232
          %v6461 = vpack.c.bf16 %v6245, %v6239
          %v6462 = vpack.c.bf16 %v6246, %v6240
          %v6463 = vpack.c.bf16 %v6247, %v6241
          %v6464 = vpack.c.bf16 %v6248, %v6242
          %v6465 = vpack.c.bf16 %v6249, %v6243
          %v6466 = vpack.c.bf16 %v6250, %v6244
          %v6467 = vpack.c.bf16 %v6257, %v6251
          %v6468 = vpack.c.bf16 %v6258, %v6252
          %v6469 = vpack.c.bf16 %v6259, %v6253
          %v6470 = vpack.c.bf16 %v6260, %v6254
          %v6471 = vpack.c.bf16 %v6261, %v6255
          %v6472 = vpack.c.bf16 %v6262, %v6256
          %v6473 = vpack.c.bf16 %v6269, %v6263
          %v6474 = vpack.c.bf16 %v6270, %v6264
          %v6475 = vpack.c.bf16 %v6271, %v6265
          %v6476 = vpack.c.bf16 %v6272, %v6266
          %v6477 = vpack.c.bf16 %v6273, %v6267
          %v6478 = vpack.c.bf16 %v6274, %v6268
          %v6479 = vpack.c.bf16 %v6281, %v6275
          %v6480 = vpack.c.bf16 %v6282, %v6276
          %v6481 = vpack.c.bf16 %v6283, %v6277
          %v6482 = vpack.c.bf16 %v6284, %v6278
          %v6483 = vpack.c.bf16 %v6285, %v6279
          %v6484 = vpack.c.bf16 %v6286, %v6280
          %v6485 = vpack.c.bf16 %v6293, %v6287
          %v6486 = vpack.c.bf16 %v6294, %v6288
          %v6487 = vpack.c.bf16 %v6295, %v6289
          %v6488 = vpack.c.bf16 %v6296, %v6290
          %v6489 = vpack.c.bf16 %v6297, %v6291
          %v6490 = vpack.c.bf16 %v6298, %v6292
          %v6683 = vunpack.c.l.b16 %v6299
          %v6684 = vunpack.c.l.b16 %v6300
          %v6685 = vunpack.c.l.b16 %v6301
          %v6686 = vunpack.c.l.b16 %v6302
          %v6687 = vunpack.c.l.b16 %v6303
          %v6688 = vunpack.c.l.b16 %v6304
          %v6689 = vunpack.c.h.b16 %v6299
          %v6690 = vunpack.c.h.b16 %v6300
          %v6691 = vunpack.c.h.b16 %v6301
          %v6692 = vunpack.c.h.b16 %v6302
          %v6693 = vunpack.c.h.b16 %v6303
          %v6694 = vunpack.c.h.b16 %v6304
          %v6695 = vunpack.c.l.b16 %v6305
          %v6696 = vunpack.c.l.b16 %v6306
          %v6697 = vunpack.c.l.b16 %v6307
          %v6698 = vunpack.c.l.b16 %v6308
          %v6699 = vunpack.c.l.b16 %v6309
          %v6700 = vunpack.c.l.b16 %v6310
          %v6701 = vunpack.c.h.b16 %v6305
          %v6702 = vunpack.c.h.b16 %v6306
          %v6703 = vunpack.c.h.b16 %v6307
          %v6704 = vunpack.c.h.b16 %v6308
          %v6705 = vunpack.c.h.b16 %v6309
          %v6706 = vunpack.c.h.b16 %v6310
          %v6707 = vunpack.c.l.b16 %v6311
          %v6708 = vunpack.c.l.b16 %v6312
          %v6709 = vunpack.c.l.b16 %v6313
          %v6710 = vunpack.c.l.b16 %v6314
          %v6711 = vunpack.c.l.b16 %v6315
          %v6712 = vunpack.c.l.b16 %v6316
          %v6713 = vunpack.c.h.b16 %v6311
          %v6714 = vunpack.c.h.b16 %v6312
          %v6715 = vunpack.c.h.b16 %v6313
          %v6716 = vunpack.c.h.b16 %v6314
          %v6717 = vunpack.c.h.b16 %v6315
          %v6718 = vunpack.c.h.b16 %v6316
          %v6719 = vunpack.c.l.b16 %v6317
          %v6720 = vunpack.c.l.b16 %v6318
          %v6721 = vunpack.c.l.b16 %v6319
          %v6722 = vunpack.c.l.b16 %v6320
          %v6723 = vunpack.c.l.b16 %v6321
          %v6724 = vunpack.c.l.b16 %v6322
          %v6725 = vunpack.c.h.b16 %v6317
          %v6726 = vunpack.c.h.b16 %v6318
          %v6727 = vunpack.c.h.b16 %v6319
          %v6728 = vunpack.c.h.b16 %v6320
          %v6729 = vunpack.c.h.b16 %v6321
          %v6730 = vunpack.c.h.b16 %v6322
          %v6731 = vunpack.c.l.b16 %v6323
          %v6732 = vunpack.c.l.b16 %v6324
          %v6733 = vunpack.c.l.b16 %v6325
          %v6734 = vunpack.c.l.b16 %v6326
          %v6735 = vunpack.c.l.b16 %v6327
          %v6736 = vunpack.c.l.b16 %v6328
          %v6737 = vunpack.c.h.b16 %v6323
          %v6738 = vunpack.c.h.b16 %v6324
          %v6739 = vunpack.c.h.b16 %v6325
          %v6740 = vunpack.c.h.b16 %v6326
          %v6741 = vunpack.c.h.b16 %v6327
          %v6742 = vunpack.c.h.b16 %v6328
          %v6743 = vunpack.c.l.b16 %v6329
          %v6744 = vunpack.c.l.b16 %v6330
          %v6745 = vunpack.c.l.b16 %v6331
          %v6746 = vunpack.c.l.b16 %v6332
          %v6747 = vunpack.c.l.b16 %v6333
          %v6748 = vunpack.c.l.b16 %v6334
          %v6749 = vunpack.c.h.b16 %v6329
          %v6750 = vunpack.c.h.b16 %v6330
          %v6751 = vunpack.c.h.b16 %v6331
          %v6752 = vunpack.c.h.b16 %v6332
          %v6753 = vunpack.c.h.b16 %v6333
          %v6754 = vunpack.c.h.b16 %v6334
          %v6755 = vunpack.c.l.b16 %v6335
          %v6756 = vunpack.c.l.b16 %v6336
          %v6757 = vunpack.c.l.b16 %v6337
          %v6758 = vunpack.c.l.b16 %v6338
          %v6759 = vunpack.c.l.b16 %v6339
          %v6760 = vunpack.c.l.b16 %v6340
          %v6761 = vunpack.c.h.b16 %v6335
          %v6762 = vunpack.c.h.b16 %v6336
          %v6763 = vunpack.c.h.b16 %v6337
          %v6764 = vunpack.c.h.b16 %v6338
          %v6765 = vunpack.c.h.b16 %v6339
          %v6766 = vunpack.c.h.b16 %v6340
          %v6767 = vunpack.c.l.b16 %v6341
          %v6768 = vunpack.c.l.b16 %v6342
          %v6769 = vunpack.c.l.b16 %v6343
          %v6770 = vunpack.c.l.b16 %v6344
          %v6771 = vunpack.c.l.b16 %v6345
          %v6772 = vunpack.c.l.b16 %v6346
          %v6773 = vunpack.c.h.b16 %v6341
          %v6774 = vunpack.c.h.b16 %v6342
          %v6775 = vunpack.c.h.b16 %v6343
          %v6776 = vunpack.c.h.b16 %v6344
          %v6777 = vunpack.c.h.b16 %v6345
          %v6778 = vunpack.c.h.b16 %v6346
          %v6779 = vunpack.c.l.b16 %v6347
          %v6780 = vunpack.c.l.b16 %v6348
          %v6781 = vunpack.c.l.b16 %v6349
          %v6782 = vunpack.c.l.b16 %v6350
          %v6783 = vunpack.c.l.b16 %v6351
          %v6784 = vunpack.c.l.b16 %v6352
          %v6785 = vunpack.c.h.b16 %v6347
          %v6786 = vunpack.c.h.b16 %v6348
          %v6787 = vunpack.c.h.b16 %v6349
          %v6788 = vunpack.c.h.b16 %v6350
          %v6789 = vunpack.c.h.b16 %v6351
          %v6790 = vunpack.c.h.b16 %v6352
          %v6791 = vunpack.c.l.b16 %v6353
          %v6792 = vunpack.c.l.b16 %v6354
          %v6793 = vunpack.c.l.b16 %v6355
          %v6794 = vunpack.c.l.b16 %v6356
          %v6795 = vunpack.c.l.b16 %v6357
          %v6796 = vunpack.c.l.b16 %v6358
          %v6797 = vunpack.c.h.b16 %v6353
          %v6798 = vunpack.c.h.b16 %v6354
          %v6799 = vunpack.c.h.b16 %v6355
          %v6800 = vunpack.c.h.b16 %v6356
          %v6801 = vunpack.c.h.b16 %v6357
          %v6802 = vunpack.c.h.b16 %v6358
          %v6803 = vunpack.c.l.b16 %v6359
          %v6804 = vunpack.c.l.b16 %v6360
          %v6805 = vunpack.c.l.b16 %v6361
          %v6806 = vunpack.c.l.b16 %v6362
          %v6807 = vunpack.c.l.b16 %v6363
          %v6808 = vunpack.c.l.b16 %v6364
          %v6809 = vunpack.c.h.b16 %v6359
          %v6810 = vunpack.c.h.b16 %v6360
          %v6811 = vunpack.c.h.b16 %v6361
          %v6812 = vunpack.c.h.b16 %v6362
          %v6813 = vunpack.c.h.b16 %v6363
          %v6814 = vunpack.c.h.b16 %v6364
          %v6815 = vunpack.c.l.b16 %v6365
          %v6816 = vunpack.c.l.b16 %v6366
          %v6817 = vunpack.c.l.b16 %v6367
          %v6818 = vunpack.c.l.b16 %v6368
          %v6819 = vunpack.c.l.b16 %v6369
          %v6820 = vunpack.c.l.b16 %v6370
          %v6821 = vunpack.c.h.b16 %v6365
          %v6822 = vunpack.c.h.b16 %v6366
          %v6823 = vunpack.c.h.b16 %v6367
          %v6824 = vunpack.c.h.b16 %v6368
          %v6825 = vunpack.c.h.b16 %v6369
          %v6826 = vunpack.c.h.b16 %v6370
          %v6827 = vunpack.c.l.b16 %v6371
          %v6828 = vunpack.c.l.b16 %v6372
          %v6829 = vunpack.c.l.b16 %v6373
          %v6830 = vunpack.c.l.b16 %v6374
          %v6831 = vunpack.c.l.b16 %v6375
          %v6832 = vunpack.c.l.b16 %v6376
          %v6833 = vunpack.c.h.b16 %v6371
          %v6834 = vunpack.c.h.b16 %v6372
          %v6835 = vunpack.c.h.b16 %v6373
          %v6836 = vunpack.c.h.b16 %v6374
          %v6837 = vunpack.c.h.b16 %v6375
          %v6838 = vunpack.c.h.b16 %v6376
          %v6839 = vunpack.c.l.b16 %v6377
          %v6840 = vunpack.c.l.b16 %v6378
          %v6841 = vunpack.c.l.b16 %v6379
          %v6842 = vunpack.c.l.b16 %v6380
          %v6843 = vunpack.c.l.b16 %v6381
          %v6844 = vunpack.c.l.b16 %v6382
          %v6845 = vunpack.c.h.b16 %v6377
          %v6846 = vunpack.c.h.b16 %v6378
          %v6847 = vunpack.c.h.b16 %v6379
          %v6848 = vunpack.c.h.b16 %v6380
          %v6849 = vunpack.c.h.b16 %v6381
          %v6850 = vunpack.c.h.b16 %v6382
          %v6851 = vunpack.c.l.b16 %v6383
          %v6852 = vunpack.c.l.b16 %v6384
          %v6853 = vunpack.c.l.b16 %v6385
          %v6854 = vunpack.c.l.b16 %v6386
          %v6855 = vunpack.c.l.b16 %v6387
          %v6856 = vunpack.c.l.b16 %v6388
          %v6857 = vunpack.c.h.b16 %v6383
          %v6858 = vunpack.c.h.b16 %v6384
          %v6859 = vunpack.c.h.b16 %v6385
          %v6860 = vunpack.c.h.b16 %v6386
          %v6861 = vunpack.c.h.b16 %v6387
          %v6862 = vunpack.c.h.b16 %v6388
          %v6863 = vunpack.c.l.b16 %v6389
          %v6864 = vunpack.c.l.b16 %v6390
          %v6865 = vunpack.c.l.b16 %v6391
          %v6866 = vunpack.c.l.b16 %v6392
          %v6867 = vunpack.c.l.b16 %v6393
          %v6868 = vunpack.c.l.b16 %v6394
          %v6869 = vunpack.c.h.b16 %v6389
          %v6870 = vunpack.c.h.b16 %v6390
          %v6871 = vunpack.c.h.b16 %v6391
          %v6872 = vunpack.c.h.b16 %v6392
          %v6873 = vunpack.c.h.b16 %v6393
          %v6874 = vunpack.c.h.b16 %v6394
          %v6875 = vunpack.c.l.b16 %v6395
          %v6876 = vunpack.c.l.b16 %v6396
          %v6877 = vunpack.c.l.b16 %v6397
          %v6878 = vunpack.c.l.b16 %v6398
          %v6879 = vunpack.c.l.b16 %v6399
          %v6880 = vunpack.c.l.b16 %v6400
          %v6881 = vunpack.c.h.b16 %v6395
          %v6882 = vunpack.c.h.b16 %v6396
          %v6883 = vunpack.c.h.b16 %v6397
          %v6884 = vunpack.c.h.b16 %v6398
          %v6885 = vunpack.c.h.b16 %v6399
          %v6886 = vunpack.c.h.b16 %v6400
          %v6887 = vunpack.c.l.b16 %v6401
          %v6888 = vunpack.c.l.b16 %v6402
          %v6889 = vunpack.c.l.b16 %v6403
          %v6890 = vunpack.c.l.b16 %v6404
          %v6891 = vunpack.c.l.b16 %v6405
          %v6892 = vunpack.c.l.b16 %v6406
          %v6893 = vunpack.c.h.b16 %v6401
          %v6894 = vunpack.c.h.b16 %v6402
          %v6895 = vunpack.c.h.b16 %v6403
          %v6896 = vunpack.c.h.b16 %v6404
          %v6897 = vunpack.c.h.b16 %v6405
          %v6898 = vunpack.c.h.b16 %v6406
          %v6899 = vunpack.c.l.b16 %v6407
          %v6900 = vunpack.c.l.b16 %v6408
          %v6901 = vunpack.c.l.b16 %v6409
          %v6902 = vunpack.c.l.b16 %v6410
          %v6903 = vunpack.c.l.b16 %v6411
          %v6904 = vunpack.c.l.b16 %v6412
          %v6905 = vunpack.c.h.b16 %v6407
          %v6906 = vunpack.c.h.b16 %v6408
          %v6907 = vunpack.c.h.b16 %v6409
          %v6908 = vunpack.c.h.b16 %v6410
          %v6909 = vunpack.c.h.b16 %v6411
          %v6910 = vunpack.c.h.b16 %v6412
          %v6911 = vunpack.c.l.b16 %v6413
          %v6912 = vunpack.c.l.b16 %v6414
          %v6913 = vunpack.c.l.b16 %v6415
          %v6914 = vunpack.c.l.b16 %v6416
          %v6915 = vunpack.c.l.b16 %v6417
          %v6916 = vunpack.c.l.b16 %v6418
          %v6917 = vunpack.c.h.b16 %v6413
          %v6918 = vunpack.c.h.b16 %v6414
          %v6919 = vunpack.c.h.b16 %v6415
          %v6920 = vunpack.c.h.b16 %v6416
          %v6921 = vunpack.c.h.b16 %v6417
          %v6922 = vunpack.c.h.b16 %v6418
          %v6923 = vunpack.c.l.b16 %v6419
          %v6924 = vunpack.c.l.b16 %v6420
          %v6925 = vunpack.c.l.b16 %v6421
          %v6926 = vunpack.c.l.b16 %v6422
          %v6927 = vunpack.c.l.b16 %v6423
          %v6928 = vunpack.c.l.b16 %v6424
          %v6929 = vunpack.c.h.b16 %v6419
          %v6930 = vunpack.c.h.b16 %v6420
          %v6931 = vunpack.c.h.b16 %v6421
          %v6932 = vunpack.c.h.b16 %v6422
          %v6933 = vunpack.c.h.b16 %v6423
          %v6934 = vunpack.c.h.b16 %v6424
          %v6935 = vunpack.c.l.b16 %v6425
          %v6936 = vunpack.c.l.b16 %v6426
          %v6937 = vunpack.c.l.b16 %v6427
          %v6938 = vunpack.c.l.b16 %v6428
          %v6939 = vunpack.c.l.b16 %v6429
          %v6940 = vunpack.c.l.b16 %v6430
          %v6941 = vunpack.c.h.b16 %v6425
          %v6942 = vunpack.c.h.b16 %v6426
          %v6943 = vunpack.c.h.b16 %v6427
          %v6944 = vunpack.c.h.b16 %v6428
          %v6945 = vunpack.c.h.b16 %v6429
          %v6946 = vunpack.c.h.b16 %v6430
          %v6947 = vunpack.c.l.b16 %v6431
          %v6948 = vunpack.c.l.b16 %v6432
          %v6949 = vunpack.c.l.b16 %v6433
          %v6950 = vunpack.c.l.b16 %v6434
          %v6951 = vunpack.c.l.b16 %v6435
          %v6952 = vunpack.c.l.b16 %v6436
          %v6953 = vunpack.c.h.b16 %v6431
          %v6954 = vunpack.c.h.b16 %v6432
          %v6955 = vunpack.c.h.b16 %v6433
          %v6956 = vunpack.c.h.b16 %v6434
          %v6957 = vunpack.c.h.b16 %v6435
          %v6958 = vunpack.c.h.b16 %v6436
          %v6959 = vunpack.c.l.b16 %v6437
          %v6960 = vunpack.c.l.b16 %v6438
          %v6961 = vunpack.c.l.b16 %v6439
          %v6962 = vunpack.c.l.b16 %v6440
          %v6963 = vunpack.c.l.b16 %v6441
          %v6964 = vunpack.c.l.b16 %v6442
          %v6965 = vunpack.c.h.b16 %v6437
          %v6966 = vunpack.c.h.b16 %v6438
          %v6967 = vunpack.c.h.b16 %v6439
          %v6968 = vunpack.c.h.b16 %v6440
          %v6969 = vunpack.c.h.b16 %v6441
          %v6970 = vunpack.c.h.b16 %v6442
          %v6971 = vunpack.c.l.b16 %v6443
          %v6972 = vunpack.c.l.b16 %v6444
          %v6973 = vunpack.c.l.b16 %v6445
          %v6974 = vunpack.c.l.b16 %v6446
          %v6975 = vunpack.c.l.b16 %v6447
          %v6976 = vunpack.c.l.b16 %v6448
          %v6977 = vunpack.c.h.b16 %v6443
          %v6978 = vunpack.c.h.b16 %v6444
          %v6979 = vunpack.c.h.b16 %v6445
          %v6980 = vunpack.c.h.b16 %v6446
          %v6981 = vunpack.c.h.b16 %v6447
          %v6982 = vunpack.c.h.b16 %v6448
          %v6983 = vunpack.c.l.b16 %v6449
          %v6984 = vunpack.c.l.b16 %v6450
          %v6985 = vunpack.c.l.b16 %v6451
          %v6986 = vunpack.c.l.b16 %v6452
          %v6987 = vunpack.c.l.b16 %v6453
          %v6988 = vunpack.c.l.b16 %v6454
          %v6989 = vunpack.c.h.b16 %v6449
          %v6990 = vunpack.c.h.b16 %v6450
          %v6991 = vunpack.c.h.b16 %v6451
          %v6992 = vunpack.c.h.b16 %v6452
          %v6993 = vunpack.c.h.b16 %v6453
          %v6994 = vunpack.c.h.b16 %v6454
          %v6995 = vunpack.c.l.b16 %v6455
          %v6996 = vunpack.c.l.b16 %v6456
          %v6997 = vunpack.c.l.b16 %v6457
          %v6998 = vunpack.c.l.b16 %v6458
          %v6999 = vunpack.c.l.b16 %v6459
          %v7000 = vunpack.c.l.b16 %v6460
          %v7001 = vunpack.c.h.b16 %v6455
          %v7002 = vunpack.c.h.b16 %v6456
          %v7003 = vunpack.c.h.b16 %v6457
          %v7004 = vunpack.c.h.b16 %v6458
          %v7005 = vunpack.c.h.b16 %v6459
          %v7006 = vunpack.c.h.b16 %v6460
          %v7007 = vunpack.c.l.b16 %v6461
          %v7008 = vunpack.c.l.b16 %v6462
          %v7009 = vunpack.c.l.b16 %v6463
          %v7010 = vunpack.c.l.b16 %v6464
          %v7011 = vunpack.c.l.b16 %v6465
          %v7012 = vunpack.c.l.b16 %v6466
          %v7013 = vunpack.c.h.b16 %v6461
          %v7014 = vunpack.c.h.b16 %v6462
          %v7015 = vunpack.c.h.b16 %v6463
          %v7016 = vunpack.c.h.b16 %v6464
          %v7017 = vunpack.c.h.b16 %v6465
          %v7018 = vunpack.c.h.b16 %v6466
          %v7019 = vunpack.c.l.b16 %v6467
          %v7020 = vunpack.c.l.b16 %v6468
          %v7021 = vunpack.c.l.b16 %v6469
          %v7022 = vunpack.c.l.b16 %v6470
          %v7023 = vunpack.c.l.b16 %v6471
          %v7024 = vunpack.c.l.b16 %v6472
          %v7025 = vunpack.c.h.b16 %v6467
          %v7026 = vunpack.c.h.b16 %v6468
          %v7027 = vunpack.c.h.b16 %v6469
          %v7028 = vunpack.c.h.b16 %v6470
          %v7029 = vunpack.c.h.b16 %v6471
          %v7030 = vunpack.c.h.b16 %v6472
          %v7031 = vunpack.c.l.b16 %v6473
          %v7032 = vunpack.c.l.b16 %v6474
          %v7033 = vunpack.c.l.b16 %v6475
          %v7034 = vunpack.c.l.b16 %v6476
          %v7035 = vunpack.c.l.b16 %v6477
          %v7036 = vunpack.c.l.b16 %v6478
          %v7037 = vunpack.c.h.b16 %v6473
          %v7038 = vunpack.c.h.b16 %v6474
          %v7039 = vunpack.c.h.b16 %v6475
          %v7040 = vunpack.c.h.b16 %v6476
          %v7041 = vunpack.c.h.b16 %v6477
          %v7042 = vunpack.c.h.b16 %v6478
          %v7043 = vunpack.c.l.b16 %v6479
          %v7044 = vunpack.c.l.b16 %v6480
          %v7045 = vunpack.c.l.b16 %v6481
          %v7046 = vunpack.c.l.b16 %v6482
          %v7047 = vunpack.c.l.b16 %v6483
          %v7048 = vunpack.c.l.b16 %v6484
          %v7049 = vunpack.c.h.b16 %v6479
          %v7050 = vunpack.c.h.b16 %v6480
          %v7051 = vunpack.c.h.b16 %v6481
          %v7052 = vunpack.c.h.b16 %v6482
          %v7053 = vunpack.c.h.b16 %v6483
          %v7054 = vunpack.c.h.b16 %v6484
          %v7055 = vunpack.c.l.b16 %v6485
          %v7056 = vunpack.c.l.b16 %v6486
          %v7057 = vunpack.c.l.b16 %v6487
          %v7058 = vunpack.c.l.b16 %v6488
          %v7059 = vunpack.c.l.b16 %v6489
          %v7060 = vunpack.c.l.b16 %v6490
          %v7061 = vunpack.c.h.b16 %v6485
          %v7062 = vunpack.c.h.b16 %v6486
          %v7063 = vunpack.c.h.b16 %v6487
          %v7064 = vunpack.c.h.b16 %v6488
          %v7065 = vunpack.c.h.b16 %v6489
          %v7066 = vunpack.c.h.b16 %v6490
          %v7067 = vpack.c.b16 %v6684, %v6683
          %v7068 = vpack.c.b16 %v6686, %v6685
          %v7069 = vpack.c.b16 %v6688, %v6687
          %v7070 = vpack.c.b16 %v6690, %v6689
          %v7071 = vpack.c.b16 %v6692, %v6691
          %v7072 = vpack.c.b16 %v6694, %v6693
          %v7073 = vpack.c.b16 %v6696, %v6695
          %v7074 = vpack.c.b16 %v6698, %v6697
          %v7075 = vpack.c.b16 %v6700, %v6699
          %v7076 = vpack.c.b16 %v6702, %v6701
          %v7077 = vpack.c.b16 %v6704, %v6703
          %v7078 = vpack.c.b16 %v6706, %v6705
          %v7079 = vpack.c.b16 %v6708, %v6707
          %v7080 = vpack.c.b16 %v6710, %v6709
          %v7081 = vpack.c.b16 %v6712, %v6711
          %v7082 = vpack.c.b16 %v6714, %v6713
          %v7083 = vpack.c.b16 %v6716, %v6715
          %v7084 = vpack.c.b16 %v6718, %v6717
          %v7085 = vpack.c.b16 %v6720, %v6719
          %v7086 = vpack.c.b16 %v6722, %v6721
          %v7087 = vpack.c.b16 %v6724, %v6723
          %v7088 = vpack.c.b16 %v6726, %v6725
          %v7089 = vpack.c.b16 %v6728, %v6727
          %v7090 = vpack.c.b16 %v6730, %v6729
          %v7091 = vpack.c.b16 %v6732, %v6731
          %v7092 = vpack.c.b16 %v6734, %v6733
          %v7093 = vpack.c.b16 %v6736, %v6735
          %v7094 = vpack.c.b16 %v6738, %v6737
          %v7095 = vpack.c.b16 %v6740, %v6739
          %v7096 = vpack.c.b16 %v6742, %v6741
          %v7097 = vpack.c.b16 %v6744, %v6743
          %v7098 = vpack.c.b16 %v6746, %v6745
          %v7099 = vpack.c.b16 %v6748, %v6747
          %v7100 = vpack.c.b16 %v6750, %v6749
          %v7101 = vpack.c.b16 %v6752, %v6751
          %v7102 = vpack.c.b16 %v6754, %v6753
          %v7103 = vpack.c.b16 %v6756, %v6755
          %v7104 = vpack.c.b16 %v6758, %v6757
          %v7105 = vpack.c.b16 %v6760, %v6759
          %v7106 = vpack.c.b16 %v6762, %v6761
          %v7107 = vpack.c.b16 %v6764, %v6763
          %v7108 = vpack.c.b16 %v6766, %v6765
          %v7109 = vpack.c.b16 %v6768, %v6767
          %v7110 = vpack.c.b16 %v6770, %v6769
          %v7111 = vpack.c.b16 %v6772, %v6771
          %v7112 = vpack.c.b16 %v6774, %v6773
          %v7113 = vpack.c.b16 %v6776, %v6775
          %v7114 = vpack.c.b16 %v6778, %v6777
          %v7115 = vpack.c.b16 %v6780, %v6779
          %v7116 = vpack.c.b16 %v6782, %v6781
          %v7117 = vpack.c.b16 %v6784, %v6783
          %v7118 = vpack.c.b16 %v6786, %v6785
          %v7119 = vpack.c.b16 %v6788, %v6787
          %v7120 = vpack.c.b16 %v6790, %v6789
          %v7121 = vpack.c.b16 %v6792, %v6791
          %v7122 = vpack.c.b16 %v6794, %v6793
          %v7123 = vpack.c.b16 %v6796, %v6795
          %v7124 = vpack.c.b16 %v6798, %v6797
          %v7125 = vpack.c.b16 %v6800, %v6799
          %v7126 = vpack.c.b16 %v6802, %v6801
          %v7127 = vpack.c.b16 %v6804, %v6803
          %v7128 = vpack.c.b16 %v6806, %v6805
          %v7129 = vpack.c.b16 %v6808, %v6807
          %v7130 = vpack.c.b16 %v6810, %v6809
          %v7131 = vpack.c.b16 %v6812, %v6811
          %v7132 = vpack.c.b16 %v6814, %v6813
          %v7133 = vpack.c.b16 %v6816, %v6815
          %v7134 = vpack.c.b16 %v6818, %v6817
          %v7135 = vpack.c.b16 %v6820, %v6819
          %v7136 = vpack.c.b16 %v6822, %v6821
          %v7137 = vpack.c.b16 %v6824, %v6823
          %v7138 = vpack.c.b16 %v6826, %v6825
          %v7139 = vpack.c.b16 %v6828, %v6827
          %v7140 = vpack.c.b16 %v6830, %v6829
          %v7141 = vpack.c.b16 %v6832, %v6831
          %v7142 = vpack.c.b16 %v6834, %v6833
          %v7143 = vpack.c.b16 %v6836, %v6835
          %v7144 = vpack.c.b16 %v6838, %v6837
          %v7145 = vpack.c.b16 %v6840, %v6839
          %v7146 = vpack.c.b16 %v6842, %v6841
          %v7147 = vpack.c.b16 %v6844, %v6843
          %v7148 = vpack.c.b16 %v6846, %v6845
          %v7149 = vpack.c.b16 %v6848, %v6847
          %v7150 = vpack.c.b16 %v6850, %v6849
          %v7151 = vpack.c.b16 %v6852, %v6851
          %v7152 = vpack.c.b16 %v6854, %v6853
          %v7153 = vpack.c.b16 %v6856, %v6855
          %v7154 = vpack.c.b16 %v6858, %v6857
          %v7155 = vpack.c.b16 %v6860, %v6859
          %v7156 = vpack.c.b16 %v6862, %v6861
          %v7157 = vpack.c.b16 %v6864, %v6863
          %v7158 = vpack.c.b16 %v6866, %v6865
          %v7159 = vpack.c.b16 %v6868, %v6867
          %v7160 = vpack.c.b16 %v6870, %v6869
          %v7161 = vpack.c.b16 %v6872, %v6871
          %v7162 = vpack.c.b16 %v6874, %v6873
          %v7163 = vpack.c.b16 %v6876, %v6875
          %v7164 = vpack.c.b16 %v6878, %v6877
          %v7165 = vpack.c.b16 %v6880, %v6879
          %v7166 = vpack.c.b16 %v6882, %v6881
          %v7167 = vpack.c.b16 %v6884, %v6883
          %v7168 = vpack.c.b16 %v6886, %v6885
          %v7169 = vpack.c.b16 %v6888, %v6887
          %v7170 = vpack.c.b16 %v6890, %v6889
          %v7171 = vpack.c.b16 %v6892, %v6891
          %v7172 = vpack.c.b16 %v6894, %v6893
          %v7173 = vpack.c.b16 %v6896, %v6895
          %v7174 = vpack.c.b16 %v6898, %v6897
          %v7175 = vpack.c.b16 %v6900, %v6899
          %v7176 = vpack.c.b16 %v6902, %v6901
          %v7177 = vpack.c.b16 %v6904, %v6903
          %v7178 = vpack.c.b16 %v6906, %v6905
          %v7179 = vpack.c.b16 %v6908, %v6907
          %v7180 = vpack.c.b16 %v6910, %v6909
          %v7181 = vpack.c.b16 %v6912, %v6911
          %v7182 = vpack.c.b16 %v6914, %v6913
          %v7183 = vpack.c.b16 %v6916, %v6915
          %v7184 = vpack.c.b16 %v6918, %v6917
          %v7185 = vpack.c.b16 %v6920, %v6919
          %v7186 = vpack.c.b16 %v6922, %v6921
          %v7187 = vpack.c.b16 %v6924, %v6923
          %v7188 = vpack.c.b16 %v6926, %v6925
          %v7189 = vpack.c.b16 %v6928, %v6927
          %v7190 = vpack.c.b16 %v6930, %v6929
          %v7191 = vpack.c.b16 %v6932, %v6931
          %v7192 = vpack.c.b16 %v6934, %v6933
          %v7193 = vpack.c.b16 %v6936, %v6935
          %v7194 = vpack.c.b16 %v6938, %v6937
          %v7195 = vpack.c.b16 %v6940, %v6939
          %v7196 = vpack.c.b16 %v6942, %v6941
          %v7197 = vpack.c.b16 %v6944, %v6943
          %v7198 = vpack.c.b16 %v6946, %v6945
          %v7199 = vpack.c.b16 %v6948, %v6947
          %v7200 = vpack.c.b16 %v6950, %v6949
          %v7201 = vpack.c.b16 %v6952, %v6951
          %v7202 = vpack.c.b16 %v6954, %v6953
          %v7203 = vpack.c.b16 %v6956, %v6955
          %v7204 = vpack.c.b16 %v6958, %v6957
          %v7205 = vpack.c.b16 %v6960, %v6959
          %v7206 = vpack.c.b16 %v6962, %v6961
          %v7207 = vpack.c.b16 %v6964, %v6963
          %v7208 = vpack.c.b16 %v6966, %v6965
          %v7209 = vpack.c.b16 %v6968, %v6967
          %v7210 = vpack.c.b16 %v6970, %v6969
          %v7211 = vpack.c.b16 %v6972, %v6971
          %v7212 = vpack.c.b16 %v6974, %v6973
          %v7213 = vpack.c.b16 %v6976, %v6975
          %v7214 = vpack.c.b16 %v6978, %v6977
          %v7215 = vpack.c.b16 %v6980, %v6979
          %v7216 = vpack.c.b16 %v6982, %v6981
          %v7217 = vpack.c.b16 %v6984, %v6983
          %v7218 = vpack.c.b16 %v6986, %v6985
          %v7219 = vpack.c.b16 %v6988, %v6987
          %v7220 = vpack.c.b16 %v6990, %v6989
          %v7221 = vpack.c.b16 %v6992, %v6991
          %v7222 = vpack.c.b16 %v6994, %v6993
          %v7223 = vpack.c.b16 %v6996, %v6995
          %v7224 = vpack.c.b16 %v6998, %v6997
          %v7225 = vpack.c.b16 %v7000, %v6999
          %v7226 = vpack.c.b16 %v7002, %v7001
          %v7227 = vpack.c.b16 %v7004, %v7003
          %v7228 = vpack.c.b16 %v7006, %v7005
          %v7229 = vpack.c.b16 %v7008, %v7007
          %v7230 = vpack.c.b16 %v7010, %v7009
          %v7231 = vpack.c.b16 %v7012, %v7011
          %v7232 = vpack.c.b16 %v7014, %v7013
          %v7233 = vpack.c.b16 %v7016, %v7015
          %v7234 = vpack.c.b16 %v7018, %v7017
          %v7235 = vpack.c.b16 %v7020, %v7019
          %v7236 = vpack.c.b16 %v7022, %v7021
          %v7237 = vpack.c.b16 %v7024, %v7023
          %v7238 = vpack.c.b16 %v7026, %v7025
          %v7239 = vpack.c.b16 %v7028, %v7027
          %v7240 = vpack.c.b16 %v7030, %v7029
          %v7241 = vpack.c.b16 %v7032, %v7031
          %v7242 = vpack.c.b16 %v7034, %v7033
          %v7243 = vpack.c.b16 %v7036, %v7035
          %v7244 = vpack.c.b16 %v7038, %v7037
          %v7245 = vpack.c.b16 %v7040, %v7039
          %v7246 = vpack.c.b16 %v7042, %v7041
          %v7247 = vpack.c.b16 %v7044, %v7043
          %v7248 = vpack.c.b16 %v7046, %v7045
          %v7249 = vpack.c.b16 %v7048, %v7047
          %v7250 = vpack.c.b16 %v7050, %v7049
          %v7251 = vpack.c.b16 %v7052, %v7051
          %v7252 = vpack.c.b16 %v7054, %v7053
          %v7253 = vpack.c.b16 %v7056, %v7055
          %v7254 = vpack.c.b16 %v7058, %v7057
          %v7255 = vpack.c.b16 %v7060, %v7059
          %v7256 = vpack.c.b16 %v7062, %v7061
          %v7257 = vpack.c.b16 %v7064, %v7063
          %v7258 = vpack.c.b16 %v7066, %v7065
          %7451 = vst [vmem:[%s294] sm:$0xff] %v7067
          %7452 = vst [vmem:[%s294 + $0x8] sm:$0xff] %v7068
          %7453 = vst [vmem:[%s294 + $0x10] sm:$0xff] %v7069
          %7454 = vst [vmem:[%s294 + $0x18] sm:$0xff] %v7070
          %7455 = vst [vmem:[%s294 + $0x20] sm:$0xff] %v7071
          %7456 = vst [vmem:[%s294 + $0x28] sm:$0xff] %v7072
          %7457 = vst [vmem:[%s294 + $0x30] sm:$0xff] %v7073
          %7458 = vst [vmem:[%s294 + $0x38] sm:$0xff] %v7074
          %7459 = vst [vmem:[%s294 + $0x40] sm:$0xff] %v7075
          %7460 = vst [vmem:[%s294 + $0x48] sm:$0xff] %v7076
          %7461 = vst [vmem:[%s294 + $0x50] sm:$0xff] %v7077
          %7462 = vst [vmem:[%s294 + $0x58] sm:$0xff] %v7078
          %7463 = vst [vmem:[%s294 + $0x60] sm:$0xff] %v7079
          %7464 = vst [vmem:[%s294 + $0x68] sm:$0xff] %v7080
          %7465 = vst [vmem:[%s294 + $0x70] sm:$0xff] %v7081
          %7466 = vst [vmem:[%s294 + $0x78] sm:$0xff] %v7082
          %7467 = vst [vmem:[%s294 + $0x80] sm:$0xff] %v7083
          %7468 = vst [vmem:[%s294 + $0x88] sm:$0xff] %v7084
          %7469 = vst [vmem:[%s294 + $0x90] sm:$0xff] %v7085
          %7470 = vst [vmem:[%s294 + $0x98] sm:$0xff] %v7086
          %7471 = vst [vmem:[%s294 + $0xa0] sm:$0xff] %v7087
          %7472 = vst [vmem:[%s294 + $0xa8] sm:$0xff] %v7088
          %7473 = vst [vmem:[%s294 + $0xb0] sm:$0xff] %v7089
          %7474 = vst [vmem:[%s294 + $0xb8] sm:$0xff] %v7090
          %7475 = vst [vmem:[%s294 + $0xc0] sm:$0xff] %v7091
          %7476 = vst [vmem:[%s294 + $0xc8] sm:$0xff] %v7092
          %7477 = vst [vmem:[%s294 + $0xd0] sm:$0xff] %v7093
          %7478 = vst [vmem:[%s294 + $0xd8] sm:$0xff] %v7094
          %7479 = vst [vmem:[%s294 + $0xe0] sm:$0xff] %v7095
          %7480 = vst [vmem:[%s294 + $0xe8] sm:$0xff] %v7096
          %7481 = vst [vmem:[%s294 + $0xf0] sm:$0xff] %v7097
          %7482 = vst [vmem:[%s294 + $0xf8] sm:$0xff] %v7098
          %7483 = vst [vmem:[%s294 + $0x100] sm:$0xff] %v7099
          %7484 = vst [vmem:[%s294 + $0x108] sm:$0xff] %v7100
          %7485 = vst [vmem:[%s294 + $0x110] sm:$0xff] %v7101
          %7486 = vst [vmem:[%s294 + $0x118] sm:$0xff] %v7102
          %7487 = vst [vmem:[%s294 + $0x120] sm:$0xff] %v7103
          %7488 = vst [vmem:[%s294 + $0x128] sm:$0xff] %v7104
          %7489 = vst [vmem:[%s294 + $0x130] sm:$0xff] %v7105
          %7490 = vst [vmem:[%s294 + $0x138] sm:$0xff] %v7106
          %7491 = vst [vmem:[%s294 + $0x140] sm:$0xff] %v7107
          %7492 = vst [vmem:[%s294 + $0x148] sm:$0xff] %v7108
          %7493 = vst [vmem:[%s294 + $0x150] sm:$0xff] %v7109
          %7494 = vst [vmem:[%s294 + $0x158] sm:$0xff] %v7110
          %7495 = vst [vmem:[%s294 + $0x160] sm:$0xff] %v7111
          %7496 = vst [vmem:[%s294 + $0x168] sm:$0xff] %v7112
          %7497 = vst [vmem:[%s294 + $0x170] sm:$0xff] %v7113
          %7498 = vst [vmem:[%s294 + $0x178] sm:$0xff] %v7114
          %7499 = vst [vmem:[%s294 + $0x180] sm:$0xff] %v7115
          %7500 = vst [vmem:[%s294 + $0x188] sm:$0xff] %v7116
          %7501 = vst [vmem:[%s294 + $0x190] sm:$0xff] %v7117
          %7502 = vst [vmem:[%s294 + $0x198] sm:$0xff] %v7118
          %7503 = vst [vmem:[%s294 + $0x1a0] sm:$0xff] %v7119
          %7504 = vst [vmem:[%s294 + $0x1a8] sm:$0xff] %v7120
          %7505 = vst [vmem:[%s294 + $0x1b0] sm:$0xff] %v7121
          %7506 = vst [vmem:[%s294 + $0x1b8] sm:$0xff] %v7122
          %7507 = vst [vmem:[%s294 + $0x1c0] sm:$0xff] %v7123
          %7508 = vst [vmem:[%s294 + $0x1c8] sm:$0xff] %v7124
          %7509 = vst [vmem:[%s294 + $0x1d0] sm:$0xff] %v7125
          %7510 = vst [vmem:[%s294 + $0x1d8] sm:$0xff] %v7126
          %7511 = vst [vmem:[%s294 + $0x1e0] sm:$0xff] %v7127
          %7512 = vst [vmem:[%s294 + $0x1e8] sm:$0xff] %v7128
          %7513 = vst [vmem:[%s294 + $0x1f0] sm:$0xff] %v7129
          %7514 = vst [vmem:[%s294 + $0x1f8] sm:$0xff] %v7130
          %7515 = vst [vmem:[%s294 + $0x200] sm:$0xff] %v7131
          %7516 = vst [vmem:[%s294 + $0x208] sm:$0xff] %v7132
          %7517 = vst [vmem:[%s294 + $0x210] sm:$0xff] %v7133
          %7518 = vst [vmem:[%s294 + $0x218] sm:$0xff] %v7134
          %7519 = vst [vmem:[%s294 + $0x220] sm:$0xff] %v7135
          %7520 = vst [vmem:[%s294 + $0x228] sm:$0xff] %v7136
          %7521 = vst [vmem:[%s294 + $0x230] sm:$0xff] %v7137
          %7522 = vst [vmem:[%s294 + $0x238] sm:$0xff] %v7138
          %7523 = vst [vmem:[%s294 + $0x240] sm:$0xff] %v7139
          %7524 = vst [vmem:[%s294 + $0x248] sm:$0xff] %v7140
          %7525 = vst [vmem:[%s294 + $0x250] sm:$0xff] %v7141
          %7526 = vst [vmem:[%s294 + $0x258] sm:$0xff] %v7142
          %7527 = vst [vmem:[%s294 + $0x260] sm:$0xff] %v7143
          %7528 = vst [vmem:[%s294 + $0x268] sm:$0xff] %v7144
          %7529 = vst [vmem:[%s294 + $0x270] sm:$0xff] %v7145
          %7530 = vst [vmem:[%s294 + $0x278] sm:$0xff] %v7146
          %7531 = vst [vmem:[%s294 + $0x280] sm:$0xff] %v7147
          %7532 = vst [vmem:[%s294 + $0x288] sm:$0xff] %v7148
          %7533 = vst [vmem:[%s294 + $0x290] sm:$0xff] %v7149
          %7534 = vst [vmem:[%s294 + $0x298] sm:$0xff] %v7150
          %7535 = vst [vmem:[%s294 + $0x2a0] sm:$0xff] %v7151
          %7536 = vst [vmem:[%s294 + $0x2a8] sm:$0xff] %v7152
          %7537 = vst [vmem:[%s294 + $0x2b0] sm:$0xff] %v7153
          %7538 = vst [vmem:[%s294 + $0x2b8] sm:$0xff] %v7154
          %7539 = vst [vmem:[%s294 + $0x2c0] sm:$0xff] %v7155
          %7540 = vst [vmem:[%s294 + $0x2c8] sm:$0xff] %v7156
          %7541 = vst [vmem:[%s294 + $0x2d0] sm:$0xff] %v7157
          %7542 = vst [vmem:[%s294 + $0x2d8] sm:$0xff] %v7158
          %7543 = vst [vmem:[%s294 + $0x2e0] sm:$0xff] %v7159
          %7544 = vst [vmem:[%s294 + $0x2e8] sm:$0xff] %v7160
          %7545 = vst [vmem:[%s294 + $0x2f0] sm:$0xff] %v7161
          %7546 = vst [vmem:[%s294 + $0x2f8] sm:$0xff] %v7162
          %7547 = vst [vmem:[%s294 + $0x300] sm:$0xff] %v7163
          %7548 = vst [vmem:[%s294 + $0x308] sm:$0xff] %v7164
          %7549 = vst [vmem:[%s294 + $0x310] sm:$0xff] %v7165
          %7550 = vst [vmem:[%s294 + $0x318] sm:$0xff] %v7166
          %7551 = vst [vmem:[%s294 + $0x320] sm:$0xff] %v7167
          %7552 = vst [vmem:[%s294 + $0x328] sm:$0xff] %v7168
          %7553 = vst [vmem:[%s294 + $0x330] sm:$0xff] %v7169
          %7554 = vst [vmem:[%s294 + $0x338] sm:$0xff] %v7170
          %7555 = vst [vmem:[%s294 + $0x340] sm:$0xff] %v7171
          %7556 = vst [vmem:[%s294 + $0x348] sm:$0xff] %v7172
          %7557 = vst [vmem:[%s294 + $0x350] sm:$0xff] %v7173
          %7558 = vst [vmem:[%s294 + $0x358] sm:$0xff] %v7174
          %7559 = vst [vmem:[%s294 + $0x360] sm:$0xff] %v7175
          %7560 = vst [vmem:[%s294 + $0x368] sm:$0xff] %v7176
          %7561 = vst [vmem:[%s294 + $0x370] sm:$0xff] %v7177
          %7562 = vst [vmem:[%s294 + $0x378] sm:$0xff] %v7178
          %7563 = vst [vmem:[%s294 + $0x380] sm:$0xff] %v7179
          %7564 = vst [vmem:[%s294 + $0x388] sm:$0xff] %v7180
          %7565 = vst [vmem:[%s294 + $0x390] sm:$0xff] %v7181
          %7566 = vst [vmem:[%s294 + $0x398] sm:$0xff] %v7182
          %7567 = vst [vmem:[%s294 + $0x3a0] sm:$0xff] %v7183
          %7568 = vst [vmem:[%s294 + $0x3a8] sm:$0xff] %v7184
          %7569 = vst [vmem:[%s294 + $0x3b0] sm:$0xff] %v7185
          %7570 = vst [vmem:[%s294 + $0x3b8] sm:$0xff] %v7186
          %7571 = vst [vmem:[%s294 + $0x3c0] sm:$0xff] %v7187
          %7572 = vst [vmem:[%s294 + $0x3c8] sm:$0xff] %v7188
          %7573 = vst [vmem:[%s294 + $0x3d0] sm:$0xff] %v7189
          %7574 = vst [vmem:[%s294 + $0x3d8] sm:$0xff] %v7190
          %7575 = vst [vmem:[%s294 + $0x3e0] sm:$0xff] %v7191
          %7576 = vst [vmem:[%s294 + $0x3e8] sm:$0xff] %v7192
          %7577 = vst [vmem:[%s294 + $0x3f0] sm:$0xff] %v7193
          %7578 = vst [vmem:[%s294 + $0x3f8] sm:$0xff] %v7194
          %7579 = vst [vmem:[%s294 + $0x400] sm:$0xff] %v7195
          %7580 = vst [vmem:[%s294 + $0x408] sm:$0xff] %v7196
          %7581 = vst [vmem:[%s294 + $0x410] sm:$0xff] %v7197
          %7582 = vst [vmem:[%s294 + $0x418] sm:$0xff] %v7198
          %7583 = vst [vmem:[%s294 + $0x420] sm:$0xff] %v7199
          %7584 = vst [vmem:[%s294 + $0x428] sm:$0xff] %v7200
          %7585 = vst [vmem:[%s294 + $0x430] sm:$0xff] %v7201
          %7586 = vst [vmem:[%s294 + $0x438] sm:$0xff] %v7202
          %7587 = vst [vmem:[%s294 + $0x440] sm:$0xff] %v7203
          %7588 = vst [vmem:[%s294 + $0x448] sm:$0xff] %v7204
          %7589 = vst [vmem:[%s294 + $0x450] sm:$0xff] %v7205
          %7590 = vst [vmem:[%s294 + $0x458] sm:$0xff] %v7206
          %7591 = vst [vmem:[%s294 + $0x460] sm:$0xff] %v7207
          %7592 = vst [vmem:[%s294 + $0x468] sm:$0xff] %v7208
          %7593 = vst [vmem:[%s294 + $0x470] sm:$0xff] %v7209
          %7594 = vst [vmem:[%s294 + $0x478] sm:$0xff] %v7210
          %7595 = vst [vmem:[%s294 + $0x480] sm:$0xff] %v7211
          %7596 = vst [vmem:[%s294 + $0x488] sm:$0xff] %v7212
          %7597 = vst [vmem:[%s294 + $0x490] sm:$0xff] %v7213
          %7598 = vst [vmem:[%s294 + $0x498] sm:$0xff] %v7214
          %7599 = vst [vmem:[%s294 + $0x4a0] sm:$0xff] %v7215
          %7600 = vst [vmem:[%s294 + $0x4a8] sm:$0xff] %v7216
          %7601 = vst [vmem:[%s294 + $0x4b0] sm:$0xff] %v7217
          %7602 = vst [vmem:[%s294 + $0x4b8] sm:$0xff] %v7218
          %7603 = vst [vmem:[%s294 + $0x4c0] sm:$0xff] %v7219
          %7604 = vst [vmem:[%s294 + $0x4c8] sm:$0xff] %v7220
          %7605 = vst [vmem:[%s294 + $0x4d0] sm:$0xff] %v7221
          %7606 = vst [vmem:[%s294 + $0x4d8] sm:$0xff] %v7222
          %7607 = vst [vmem:[%s294 + $0x4e0] sm:$0xff] %v7223
          %7608 = vst [vmem:[%s294 + $0x4e8] sm:$0xff] %v7224
          %7609 = vst [vmem:[%s294 + $0x4f0] sm:$0xff] %v7225
          %7610 = vst [vmem:[%s294 + $0x4f8] sm:$0xff] %v7226
          %7611 = vst [vmem:[%s294 + $0x500] sm:$0xff] %v7227
          %7612 = vst [vmem:[%s294 + $0x508] sm:$0xff] %v7228
          %7613 = vst [vmem:[%s294 + $0x510] sm:$0xff] %v7229
          %7614 = vst [vmem:[%s294 + $0x518] sm:$0xff] %v7230
          %7615 = vst [vmem:[%s294 + $0x520] sm:$0xff] %v7231
          %7616 = vst [vmem:[%s294 + $0x528] sm:$0xff] %v7232
          %7617 = vst [vmem:[%s294 + $0x530] sm:$0xff] %v7233
          %7618 = vst [vmem:[%s294 + $0x538] sm:$0xff] %v7234
          %7619 = vst [vmem:[%s294 + $0x540] sm:$0xff] %v7235
          %7620 = vst [vmem:[%s294 + $0x548] sm:$0xff] %v7236
          %7621 = vst [vmem:[%s294 + $0x550] sm:$0xff] %v7237
          %7622 = vst [vmem:[%s294 + $0x558] sm:$0xff] %v7238
          %7623 = vst [vmem:[%s294 + $0x560] sm:$0xff] %v7239
          %7624 = vst [vmem:[%s294 + $0x568] sm:$0xff] %v7240
          %7625 = vst [vmem:[%s294 + $0x570] sm:$0xff] %v7241
          %7626 = vst [vmem:[%s294 + $0x578] sm:$0xff] %v7242
          %7627 = vst [vmem:[%s294 + $0x580] sm:$0xff] %v7243
          %7628 = vst [vmem:[%s294 + $0x588] sm:$0xff] %v7244
          %7629 = vst [vmem:[%s294 + $0x590] sm:$0xff] %v7245
          %7630 = vst [vmem:[%s294 + $0x598] sm:$0xff] %v7246
          %7631 = vst [vmem:[%s294 + $0x5a0] sm:$0xff] %v7247
          %7632 = vst [vmem:[%s294 + $0x5a8] sm:$0xff] %v7248
          %7633 = vst [vmem:[%s294 + $0x5b0] sm:$0xff] %v7249
          %7634 = vst [vmem:[%s294 + $0x5b8] sm:$0xff] %v7250
          %7635 = vst [vmem:[%s294 + $0x5c0] sm:$0xff] %v7251
          %7636 = vst [vmem:[%s294 + $0x5c8] sm:$0xff] %v7252
          %7637 = vst [vmem:[%s294 + $0x5d0] sm:$0xff] %v7253
          %7638 = vst [vmem:[%s294 + $0x5d8] sm:$0xff] %v7254
          %7639 = vst [vmem:[%s294 + $0x5e0] sm:$0xff] %v7255
          %7640 = vst [vmem:[%s294 + $0x5e8] sm:$0xff] %v7256
          %7641 = vst [vmem:[%s294 + $0x5f0] sm:$0xff] %v7257
          %7642 = vst [vmem:[%s294 + $0x5f8] sm:$0xff] %v7258
        $region52: #{tpu_custom_call.1} parent=31 // pred_fallthru
          _
        %s7643 = sand.u32 %s134, 1
        %s7644 = scalar_lea.sflag [#allocation5], %s7643
        %s7645 = sand.u32 %s134, 1
        %s7646 = smul.addr %s7645, 1536
        %s7647 = scalar_lea.vmem [#allocation9], %s7646
        // Predicated region
        $region53: #{tpu_custom_call.1} parent=31 // pred_check
          %p7648 = pneg %p144
        $region54: #{tpu_custom_call.1} parent=31 // pred_check_branch
          %7650 = sbr.rel (%p7648) target = $region56
        $region55: #{tpu_custom_call.1} parent=31 // pred_region
          %s7651 = smul.u32 64, %s28
          %s7652 = smul.u32 6, %s29
          %s7654 = ssub.s32 24576, 24576
          %7655 = vsyncadd %s7644, %s7654
          %s7656 = smul.addr %s7651, 12
          %s7657 = sadd.s32 %s7652, %s7656
          %s7658 = smul.addr %s7657, 64
          %s7659 = scalar_lea.hbm %s3, %s7658
          %s7660 = sshll.u32 %s7647, 4
          %s7661 = int_to_ptr.vmem [resolvable:$true] %s7660
          %7666 = dma.vmem_to_hbm [thread:$0]  %s7661, 24576, %s7659, %s7644, 384, 768, 24
        $region56: #{tpu_custom_call.1} parent=31 // pred_fallthru
          _
      $region32: #{tpu_custom_call.1} parent=5 // pred_fallthru
        _
      %p7667 = scmp.le.s32.totalorder 2, %s18
      // Predicated region
      $region57: #{tpu_custom_call.1} parent=5 // pred_check
        %p7668 = pneg %p7667
      $region58: #{tpu_custom_call.1} parent=5 // pred_check_branch
        %7670 = sbr.rel (%p7668) target = $region60
      $region59: #{tpu_custom_call.1} parent=5 // pred_region
        %s7671 = ssub.s32 %s18, 2
        // Predicated region
        $region61: #{tpu_custom_call.1} parent=59 // pred_check
          %p7672 = pneg %p150
        $region62: #{tpu_custom_call.1} parent=59 // pred_check_branch
          %7674 = sbr.rel (%p7672) target = $region64
        $region63: #{tpu_custom_call.1} parent=59 // pred_region
          %s7675 = sand.u32 %s135, 1
          %s7676 = scalar_lea.sflag [#allocation5], %s7675
          %s7677 = sand.u32 %s135, 1
          %s7678 = smul.addr %s7677, 1536
          %s7679 = scalar_lea.vmem [#allocation9], %s7678
          %7680 = dma.done %s7676, 24576
        $region64: #{tpu_custom_call.1} parent=59 // pred_fallthru
          _
      $region60: #{tpu_custom_call.1} parent=5 // pred_fallthru
        _
    $region6: #{tpu_custom_call.1} parent=1 // loop_footer
      %s22 = sadd.s32 1, %s18
    $region7: #{tpu_custom_call.1} parent=1 // loop_footer_branch
      %17 = sbr.rel target = $region3
    $region8: #{tpu_custom_call.1} parent=1 // loop_exit
      _
    %7681 = vsyncpa [#allocation4], 1
    %s7682 = scalar_lea.sflag [#allocation4], 1
    %7683 = vsyncpa %s7682, 1
    %7684 = vsyncpa [#allocation7], 1
    %s7685 = scalar_lea.sflag [#allocation7], 1
    %7686 = vsyncpa %s7685, 1
    %7687 = vsyncpa [#allocation5], 1
    %s7688 = scalar_lea.sflag [#allocation5], 1
    %7689 = vsyncpa %s7688, 1

</llo_original>
